<compile_context>
chip_gen: v5e
topology: v5e:2x2
jax: 0.10.0
libtpu: 0.0.40
codegen_flags: <defaults>
</compile_context>

<pallas_src>
import functools

import numpy as np
import jax
import jax.numpy as jnp
from jax import lax
from jax.experimental import pallas as pl
from jax.experimental.pallas import tpu as pltpu

LANE = 128                       # output channels padded to a multiple of this
TM = 512                         # row tile for the 1x1x1 matmuls (rows = N*D*H*W)
VMEM_LIMIT = 48 * 1024 * 1024    # explicit scoped-VMEM budget (v7x-safe)


def _round_up(x, m):
    return (x + m - 1) // m * m


def _pick_div(n, cands):
    for c in cands:
        if c <= n and n % c == 0:
            return c
    return n  # full axis is always a legal block


# ----------------------------------------------------------------------------
# Kernel 1: fused matmul + bias + ReLU with column-split outputs
#           (used for the fused b0/b1_0/b2_0 stem and for branch3's 1x1x1)
# ----------------------------------------------------------------------------
def _mm_split_kernel(offs, x_ref, w_ref, b_ref, *o_refs):
    acc = jnp.dot(x_ref[...], w_ref[...], preferred_element_type=jnp.float32)
    y = jnp.maximum(acc + b_ref[...], 0.0)
    for idx, o_ref in enumerate(o_refs):
        o_ref[...] = y[:, offs[idx]:offs[idx + 1]].astype(o_ref.dtype)


def matmul_bias_relu_split(x2d, w, bias, widths, dtypes):
    """relu(x2d @ w + bias) written to several 128-aligned column slices.

    x2d: (M, K) bf16, w: (K, sum(widths)) bf16 (BN scale pre-folded),
    bias: (1, sum(widths)) f32.  Returns a tuple of (Mp, widths[i]) arrays
    where Mp is M rounded up to the row tile; callers slice back to M rows.
    """
    M, K = x2d.shape
    Ctot = w.shape[1]
    assert sum(widths) == Ctot and bias.shape == (1, Ctot)
    if M >= TM:
        Mp, tm = _round_up(M, TM), TM
    else:
        Mp = _round_up(M, 8)
        tm = Mp
    if Mp != M:
        x2d = jnp.pad(x2d, ((0, Mp - M), (0, 0)))
    offs = [int(o) for o in np.cumsum([0] + list(widths))]

    outs = pl.pallas_call(
        functools.partial(_mm_split_kernel, offs),
        out_shape=tuple(jax.ShapeDtypeStruct((Mp, wd), dt)
                        for wd, dt in zip(widths, dtypes)),
        grid=(Mp // tm,),
        in_specs=[
            pl.BlockSpec((tm, K), lambda i: (i, 0)),
            pl.BlockSpec((K, Ctot), lambda i: (0, 0)),
            pl.BlockSpec((1, Ctot), lambda i: (0, 0)),
        ],
        out_specs=tuple(pl.BlockSpec((tm, wd), lambda i: (i, 0)) for wd in widths),
        compiler_params=pltpu.CompilerParams(
            dimension_semantics=("parallel",), vmem_limit_bytes=VMEM_LIMIT),
    )(x2d, w, bias)
    if not isinstance(outs, (list, tuple)):
        outs = (outs,)
    return tuple(outs)


# ----------------------------------------------------------------------------
# Kernel 2: (1,3,3) conv + bias + ReLU — halo block in VMEM, 9 in-kernel taps
# ----------------------------------------------------------------------------
def _spatial_kernel(x_ref, w_ref, b_ref, o_ref):
    td, hp, wp, c = x_ref.shape
    h, w = hp - 2, wp - 2
    coutp = o_ref.shape[-1]
    xb = x_ref[...]
    acc = None
    for kh in range(3):
        for kw in range(3):
            patch = xb[:, kh:kh + h, kw:kw + w, :].reshape(td * h * w, c)
            part = jnp.dot(patch, w_ref[kh * 3 + kw],
                           preferred_element_type=jnp.float32)
            acc = part if acc is None else acc + part
    y = jnp.maximum(acc + b_ref[...], 0.0)
    o_ref[...] = y.reshape(td, h, w, coutp).astype(o_ref.dtype)


def spatial_conv_1x3x3(t, w, bias, out_dtype):
    """t: (N*D, H, W, C) bf16, w: (9, C, CoutP) bf16, bias: (1, CoutP) f32."""
    nd, h, wd, c = t.shape
    coutp = w.shape[-1]
    tp = jnp.pad(t, ((0, 0), (1, 1), (1, 1), (0, 0)))   # zero pad = conv padding
    td = _pick_div(nd, (8, 4, 2, 1))
    return pl.pallas_call(
        _spatial_kernel,
        out_shape=jax.ShapeDtypeStruct((nd, h, wd, coutp), out_dtype),
        grid=(nd // td,),
        in_specs=[
            pl.BlockSpec((td, h + 2, wd + 2, c), lambda i: (i, 0, 0, 0)),
            pl.BlockSpec((9, c, coutp), lambda i: (0, 0, 0)),
            pl.BlockSpec((1, coutp), lambda i: (0, 0)),
        ],
        out_specs=pl.BlockSpec((td, h, wd, coutp), lambda i: (i, 0, 0, 0)),
        compiler_params=pltpu.CompilerParams(
            dimension_semantics=("parallel",), vmem_limit_bytes=VMEM_LIMIT),
    )(tp, w, bias)


# ----------------------------------------------------------------------------
# Kernel 3: (3,1,1) conv + bias + ReLU — D-haloed block, 3 in-kernel taps
# ----------------------------------------------------------------------------
def _temporal_kernel(x_ref, w_ref, b_ref, o_ref):
    dp, ts, c = x_ref.shape
    d = dp - 2
    coutp = o_ref.shape[-1]
    xb = x_ref[...]
    acc = None
    for kt in range(3):
        part = jnp.dot(xb[kt:kt + d].reshape(d * ts, c), w_ref[kt],
                       preferred_element_type=jnp.float32)
        acc = part if acc is None else acc + part
    y = jnp.maximum(acc + b_ref[...], 0.0)
    o_ref[...] = y.reshape(d, ts, coutp).astype(o_ref.dtype)


def temporal_conv_3x1x1(t, w, bias, out_dtype):
    """t: (N, D, S, C) bf16, w: (3, C, CoutP) bf16, bias: (1, CoutP) f32."""
    n, d, s, c = t.shape
    coutp = w.shape[-1]
    tp = jnp.pad(t, ((0, 0), (1, 1), (0, 0), (0, 0)))   # zero pad along D
    if s % 8 == 0 and s > 256:
        ts = _pick_div(s, (256, 128, 64, 32, 16, 8))
    else:
        ts = s
    return pl.pallas_call(
        _temporal_kernel,
        out_shape=jax.ShapeDtypeStruct((n, d, s, coutp), out_dtype),
        grid=(n, s // ts),
        in_specs=[
            pl.BlockSpec((None, d + 2, ts, c), lambda i, j: (i, 0, j, 0)),
            pl.BlockSpec((3, c, coutp), lambda i, j: (0, 0, 0)),
            pl.BlockSpec((1, coutp), lambda i, j: (0, 0)),
        ],
        out_specs=pl.BlockSpec((None, d, ts, coutp), lambda i, j: (i, 0, j, 0)),
        compiler_params=pltpu.CompilerParams(
            dimension_semantics=("parallel", "parallel"),
            vmem_limit_bytes=VMEM_LIMIT),
    )(tp, w, bias)


# ----------------------------------------------------------------------------
# Kernel 4: MaxPool3d(kernel=3, stride=1, padding=1) — separable + tiled
# ----------------------------------------------------------------------------
def _maxpool_kernel(x0_ref, x1_ref, x2_ref, o_ref):
    # three D-adjacent (H+2, W+2, C) frames padded with -inf
    m = jnp.maximum(jnp.maximum(x0_ref[...], x1_ref[...]), x2_ref[...])   # D max
    hp, wp, _ = m.shape
    h, w = hp - 2, wp - 2
    mw = jnp.maximum(jnp.maximum(m[:, 0:w, :], m[:, 1:w + 1, :]),
                     m[:, 2:w + 2, :])                                    # W max
    mh = jnp.maximum(jnp.maximum(mw[0:h], mw[1:h + 1]), mw[2:h + 2])      # H max
    o_ref[...] = mh.astype(o_ref.dtype)


def maxpool3d_3x3x3(x):
    """PyTorch MaxPool3d((3,3,3), stride=1, padding=1) on NDHWC (-inf pad)."""
    n, d, h, w, c = x.shape
    xp = jnp.pad(x, ((0, 0), (1, 1), (1, 1), (1, 1), (0, 0)),
                 constant_values=-jnp.inf)

    def shifted_spec(dd):
        return pl.BlockSpec((None, None, h + 2, w + 2, c),
                            lambda i, j, dd=dd: (i, j + dd, 0, 0, 0))

    return pl.pallas_call(
        _maxpool_kernel,
        out_shape=jax.ShapeDtypeStruct((n, d, h, w, c), x.dtype),
        grid=(n, d),
        in_specs=[shifted_spec(0), shifted_spec(1), shifted_spec(2)],
        out_specs=pl.BlockSpec((None, None, h, w, c),
                               lambda i, j: (i, j, 0, 0, 0)),
        compiler_params=pltpu.CompilerParams(
            dimension_semantics=("parallel", "parallel"),
            vmem_limit_bytes=VMEM_LIMIT),
    )(xp, xp, xp)


# ----------------------------------------------------------------------------
# Parameters: Conv3d(bias=False) + BatchNorm3d(eval) + ReLU, folded offline.
# ----------------------------------------------------------------------------
def make_cba_raw(key, cin, cout, ksize):
    k1, k2, k3, k4, k5 = jax.random.split(key, 5)
    w = jax.random.normal(k1, (cout, cin) + ksize, jnp.float32) * 0.1
    gamma = 1.0 + 0.1 * jax.random.normal(k2, (cout,), jnp.float32)
    beta = 0.1 * jax.random.normal(k3, (cout,), jnp.float32)
    mean = 0.1 * jax.random.normal(k4, (cout,), jnp.float32)
    var = jax.random.uniform(k5, (cout,), jnp.float32, minval=0.5, maxval=1.5)
    eps = 1e-3                          # torchvision S3D uses BatchNorm3d(eps=0.001)
    scale = gamma / jnp.sqrt(var + eps)
    bias = beta - mean * scale
    wf = w * scale[:, None, None, None, None]            # BN scale folded into W
    wf = wf.astype(jnp.bfloat16).astype(jnp.float32)     # shared bf16 quantization
    return {"wf": wf, "bias": bias, "pad": tuple((k - 1) // 2 for k in ksize),
            "cin": cin, "cout": cout}


def make_block_raw(key, in_planes, b0, b1m, b1o, b2m, b2o, b3):
    ks = jax.random.split(key, 8)
    return {
        "b0":   make_cba_raw(ks[0], in_planes, b0, (1, 1, 1)),
        "b1_0": make_cba_raw(ks[1], in_planes, b1m, (1, 1, 1)),
        "b1_s": make_cba_raw(ks[2], b1m, b1o, (1, 3, 3)),
        "b1_t": make_cba_raw(ks[3], b1o, b1o, (3, 1, 1)),
        "b2_0": make_cba_raw(ks[4], in_planes, b2m, (1, 1, 1)),
        "b2_s": make_cba_raw(ks[5], b2m, b2o, (1, 3, 3)),
        "b2_t": make_cba_raw(ks[6], b2o, b2o, (3, 1, 1)),
        "b3":   make_cba_raw(ks[7], in_planes, b3, (1, 1, 1)),
    }


def _fold_for_kernel(entry, cin_pad, cout_pad):
    wf, bias = entry["wf"], entry["bias"]
    cout, cin = wf.shape[0], wf.shape[1]
    taps = int(np.prod(wf.shape[2:]))
    wk = jnp.transpose(wf, (2, 3, 4, 1, 0)).reshape(taps, cin, cout)
    wk = jnp.pad(wk, ((0, 0), (0, cin_pad - cin), (0, cout_pad - cout)))
    bk = jnp.pad(bias, (0, cout_pad - cout)).reshape(1, cout_pad)
    return wk.astype(jnp.bfloat16), bk.astype(jnp.float32)


def prepare_kernel_params(raw):
    cfg = {"cin": raw["b0"]["cin"],
           "b0": raw["b0"]["cout"], "b1m": raw["b1_0"]["cout"],
           "b1o": raw["b1_s"]["cout"], "b2m": raw["b2_0"]["cout"],
           "b2o": raw["b2_s"]["cout"], "b3": raw["b3"]["cout"]}
    for k in ("b0", "b1m", "b1o", "b2m", "b2o", "b3"):
        cfg[k + "p"] = _round_up(cfg[k], LANE)   # lane-dense padded widths
    cin = cfg["cin"]

    w_b0, b_b0 = _fold_for_kernel(raw["b0"], cin, cfg["b0p"])
    w_b10, b_b10 = _fold_for_kernel(raw["b1_0"], cin, cfg["b1mp"])
    w_b20, b_b20 = _fold_for_kernel(raw["b2_0"], cin, cfg["b2mp"])
    w_b1s, b_b1s = _fold_for_kernel(raw["b1_s"], cfg["b1mp"], cfg["b1op"])
    w_b1t, b_b1t = _fold_for_kernel(raw["b1_t"], cfg["b1op"], cfg["b1op"])
    w_b2s, b_b2s = _fold_for_kernel(raw["b2_s"], cfg["b2mp"], cfg["b2op"])
    w_b2t, b_b2t = _fold_for_kernel(raw["b2_t"], cfg["b2op"], cfg["b2op"])
    w_b3, b_b3 = _fold_for_kernel(raw["b3"], cin, cfg["b3p"])

    params = {
        # the three 1x1x1 convs sharing the same input, fused into one matmul
        "w_stem": jnp.concatenate([w_b0[0], w_b10[0], w_b20[0]], axis=-1),
        "b_stem": jnp.concatenate([b_b0, b_b10, b_b20], axis=-1),
        "w_b1s": w_b1s, "b_b1s": b_b1s, "w_b1t": w_b1t, "b_b1t": b_b1t,
        "w_b2s": w_b2s, "b_b2s": b_b2s, "w_b2t": w_b2t, "b_b2t": b_b2t,
        "w_b3": w_b3[0], "b_b3": b_b3,
    }
    return params, cfg


# ----------------------------------------------------------------------------
# Forward pass (Pallas)
# ----------------------------------------------------------------------------
def sep_inception_block3d(x_ncdhw, P, cfg):
    n, cin, d, h, w = x_ncdhw.shape
    hw = h * w
    m = n * d * hw
    x = jnp.transpose(x_ncdhw, (0, 2, 3, 4, 1)).astype(jnp.bfloat16)   # NDHWC

    # --- fused stem: branch0 + branch1[0] + branch2[0] share one matmul ---
    y0p, t1, t2 = matmul_bias_relu_split(
        x.reshape(m, cin), P["w_stem"], P["b_stem"],
        widths=(cfg["b0p"], cfg["b1mp"], cfg["b2mp"]),
        dtypes=(jnp.float32, jnp.bfloat16, jnp.bfloat16))

    def separable(tmid, cmidp, w_s, b_s, w_t, b_t):
        t_sp = spatial_conv_1x3x3(tmid[:m].reshape(n * d, h, w, cmidp),
                                  w_s, b_s, jnp.bfloat16)
        t_sp = t_sp.reshape(n, d, hw, t_sp.shape[-1])
        return temporal_conv_3x1x1(t_sp, w_t, b_t, jnp.float32)

    y1 = separable(t1, cfg["b1mp"], P["w_b1s"], P["b_b1s"], P["w_b1t"], P["b_b1t"])
    y2 = separable(t2, cfg["b2mp"], P["w_b2s"], P["b_b2s"], P["w_b2t"], P["b_b2t"])

    # --- branch3: tiled separable max-pool, then 1x1x1 conv ---
    xpool = maxpool3d_3x3x3(x)
    (y3p,) = matmul_bias_relu_split(
        xpool.reshape(m, cin), P["w_b3"], P["b_b3"],
        widths=(cfg["b3p"],), dtypes=(jnp.float32,))

    out = jnp.concatenate([
        y0p[:m, :cfg["b0"]].reshape(n, d, h, w, cfg["b0"]),
        y1[..., :cfg["b1o"]].reshape(n, d, h, w, cfg["b1o"]),
        y2[..., :cfg["b2o"]].reshape(n, d, h, w, cfg["b2o"]),
        y3p[:m, :cfg["b3"]].reshape(n, d, h, w, cfg["b3"]),
    ], axis=-1)
    # TODO(synk): the final NDHWC->NCDHW transpose is one extra HBM pass, kept
    # only to return the module's PyTorch layout.
    return jnp.transpose(out, (0, 4, 1, 2, 3))


# ----------------------------------------------------------------------------
# Pure-JAX reference (same bf16-quantized inputs/weights, f32 compute)
# ----------------------------------------------------------------------------
def _cba_ref(x_ncdhw, entry):
    pad = entry["pad"]
    y = lax.conv_general_dilated(
        x_ncdhw, entry["wf"], window_strides=(1, 1, 1),
        padding=[(pad[0], pad[0]), (pad[1], pad[1]), (pad[2], pad[2])],
        dimension_numbers=("NCDHW", "OIDHW", "NCDHW"))
    return jnp.maximum(y + entry["bias"][None, :, None, None, None], 0.0)


def sep_inception_block3d_ref(x_ncdhw, raw):
    x = x_ncdhw.astype(jnp.bfloat16).astype(jnp.float32)
    y0 = _cba_ref(x, raw["b0"])
    y1 = _cba_ref(_cba_ref(_cba_ref(x, raw["b1_0"]), raw["b1_s"]), raw["b1_t"])
    y2 = _cba_ref(_cba_ref(_cba_ref(x, raw["b2_0"]), raw["b2_s"]), raw["b2_t"])
    xp = lax.reduce_window(
        x, -jnp.inf, lax.max,
        window_dimensions=(1, 1, 3, 3, 3), window_strides=(1, 1, 1, 1, 1),
        padding=[(0, 0), (0, 0), (1, 1), (1, 1), (1, 1)])
    y3 = _cba_ref(xp, raw["b3"])
    return jnp.concatenate([y0, y1, y2, y3], axis=1)


# ----------------------------------------------------------------------------
if __name__ == "__main__":
    key = jax.random.PRNGKey(0)
    kx, kp = jax.random.split(key)

    # Small shapes: N=2, in_planes=16, D=4, H=W=8  (N*D*H*W = 512 rows)
    N, Cin, D, H, W = 2, 16, 4, 8, 8
    b0, b1m, b1o, b2m, b2o, b3 = 8, 8, 12, 8, 12, 8

    x = jax.random.normal(kx, (N, Cin, D, H, W), jnp.float32)
    raw = make_block_raw(kp, Cin, b0, b1m, b1o, b2m, b2o, b3)
    params, cfg = prepare_kernel_params(raw)

    fwd = jax.jit(lambda xx, pp: sep_inception_block3d(xx, pp, cfg))
    out = jax.block_until_ready(fwd(x, params))
    ref = jax.block_until_ready(sep_inception_block3d_ref(x, raw))

    assert out.shape == (N, b0 + b1o + b2o + b3, D, H, W), out.shape
    assert bool(jnp.all(jnp.isfinite(out)))
    max_err = float(jnp.max(jnp.abs(out - ref)))
    # bf16 activations/weights with f32 accumulation: allow a few e-2 absolute.
    assert max_err < 5e-2, f"max abs error vs reference: {max_err}"
    print("KERNEL_OK")
</pallas_src>

<mosaic_0001>
module attributes {stable_mosaic.version = 11 : i64} {
  func.func @_maxpool_kernel(%arg0: i32, %arg1: i32, %arg2: memref<1x1x10x10x16xbf16, #tpu.memory_space<vmem>>, %arg3: memref<1x1x10x10x16xbf16, #tpu.memory_space<vmem>>, %arg4: memref<1x1x10x10x16xbf16, #tpu.memory_space<vmem>>, %arg5: memref<1x1x8x8x16xbf16, #tpu.memory_space<vmem>>) attributes {dimension_semantics = [#tpu.dimension_semantics<parallel>, #tpu.dimension_semantics<parallel>], iteration_bounds = array<i64: 2, 4>, scalar_prefetch = 0 : i64, scratch_operands = 0 : i64, tpu.core_type = #tpu.core_type<tc>, window_params = [{transform_indices = @transform_0, window_bounds = array<i64: 1, 1, 10, 10, 16>}, {transform_indices = @transform_1, window_bounds = array<i64: 1, 1, 10, 10, 16>}, {transform_indices = @transform_2, window_bounds = array<i64: 1, 1, 10, 10, 16>}, {transform_indices = @transform_3, window_bounds = array<i64: 1, 1, 8, 8, 16>}]} {
    %c0 = arith.constant 0 : index
    %c0_0 = arith.constant 0 : index
    %c0_1 = arith.constant 0 : index
    %c0_2 = arith.constant 0 : index
    %c0_3 = arith.constant 0 : index
    %0 = vector.load %arg2[%c0, %c0_0, %c0_1, %c0_2, %c0_3] : memref<1x1x10x10x16xbf16, #tpu.memory_space<vmem>>, vector<1x1x10x10x16xbf16>
    %1 = vector.shape_cast %0 : vector<1x1x10x10x16xbf16> to vector<10x10x16xbf16>
    %c0_4 = arith.constant 0 : index
    %c0_5 = arith.constant 0 : index
    %c0_6 = arith.constant 0 : index
    %c0_7 = arith.constant 0 : index
    %c0_8 = arith.constant 0 : index
    %2 = vector.load %arg3[%c0_4, %c0_5, %c0_6, %c0_7, %c0_8] : memref<1x1x10x10x16xbf16, #tpu.memory_space<vmem>>, vector<1x1x10x10x16xbf16>
    %3 = vector.shape_cast %2 : vector<1x1x10x10x16xbf16> to vector<10x10x16xbf16>
    %4 = arith.maximumf %1, %3 : vector<10x10x16xbf16>
    %c0_9 = arith.constant 0 : index
    %c0_10 = arith.constant 0 : index
    %c0_11 = arith.constant 0 : index
    %c0_12 = arith.constant 0 : index
    %c0_13 = arith.constant 0 : index
    %5 = vector.load %arg4[%c0_9, %c0_10, %c0_11, %c0_12, %c0_13] : memref<1x1x10x10x16xbf16, #tpu.memory_space<vmem>>, vector<1x1x10x10x16xbf16>
    %6 = vector.shape_cast %5 : vector<1x1x10x10x16xbf16> to vector<10x10x16xbf16>
    %7 = arith.maximumf %4, %6 : vector<10x10x16xbf16>
    %8 = vector.extract_strided_slice %7 {offsets = [0, 0, 0], sizes = [10, 8, 16], strides = [1, 1, 1]} : vector<10x10x16xbf16> to vector<10x8x16xbf16>
    %9 = vector.extract_strided_slice %7 {offsets = [0, 1, 0], sizes = [10, 8, 16], strides = [1, 1, 1]} : vector<10x10x16xbf16> to vector<10x8x16xbf16>
    %10 = arith.maximumf %8, %9 : vector<10x8x16xbf16>
    %11 = vector.extract_strided_slice %7 {offsets = [0, 2, 0], sizes = [10, 8, 16], strides = [1, 1, 1]} : vector<10x10x16xbf16> to vector<10x8x16xbf16>
    %12 = arith.maximumf %10, %11 : vector<10x8x16xbf16>
    %13 = vector.extract_strided_slice %12 {offsets = [0, 0, 0], sizes = [8, 8, 16], strides = [1, 1, 1]} : vector<10x8x16xbf16> to vector<8x8x16xbf16>
    %14 = vector.extract_strided_slice %12 {offsets = [1, 0, 0], sizes = [8, 8, 16], strides = [1, 1, 1]} : vector<10x8x16xbf16> to vector<8x8x16xbf16>
    %15 = arith.maximumf %13, %14 : vector<8x8x16xbf16>
    %16 = vector.extract_strided_slice %12 {offsets = [2, 0, 0], sizes = [8, 8, 16], strides = [1, 1, 1]} : vector<10x8x16xbf16> to vector<8x8x16xbf16>
    %17 = arith.maximumf %15, %16 : vector<8x8x16xbf16>
    %c0_14 = arith.constant 0 : index
    %c0_15 = arith.constant 0 : index
    %c0_16 = arith.constant 0 : index
    %c0_17 = arith.constant 0 : index
    %c0_18 = arith.constant 0 : index
    %18 = vector.load %arg5[%c0_14, %c0_15, %c0_16, %c0_17, %c0_18] : memref<1x1x8x8x16xbf16, #tpu.memory_space<vmem>>, vector<1x1x8x8x16xbf16>
    %19 = vector.shape_cast %18 : vector<1x1x8x8x16xbf16> to vector<8x8x16xbf16>
    %20 = vector.shape_cast %17 : vector<8x8x16xbf16> to vector<1x1x8x8x16xbf16>
    tpu.vector_store %arg5[%c0_14, %c0_15, %c0_16, %c0_17, %c0_18], %20 {strides = array<i32>} : memref<1x1x8x8x16xbf16, #tpu.memory_space<vmem>>, vector<1x1x8x8x16xbf16>,
    return
  }
  func.func @transform_0(%arg0: i32, %arg1: i32) -> (i32, i32, i32, i32, i32) {
    %c0_i32 = arith.constant 0 : i32
    %0 = arith.addi %arg1, %c0_i32 : i32
    %c0_i32_0 = arith.constant 0 : i32
    %c0_i32_1 = arith.constant 0 : i32
    %c0_i32_2 = arith.constant 0 : i32
    %c0_i32_3 = arith.constant 0 : i32
    return %arg0, %0, %c0_i32_0, %c0_i32_1, %c0_i32_2 : i32, i32, i32, i32, i32
  }
  func.func @transform_1(%arg0: i32, %arg1: i32) -> (i32, i32, i32, i32, i32) {
    %c1_i32 = arith.constant 1 : i32
    %0 = arith.addi %arg1, %c1_i32 : i32
    %c0_i32 = arith.constant 0 : i32
    %c0_i32_0 = arith.constant 0 : i32
    %c0_i32_1 = arith.constant 0 : i32
    %c0_i32_2 = arith.constant 0 : i32
    return %arg0, %0, %c0_i32, %c0_i32_0, %c0_i32_1 : i32, i32, i32, i32, i32
  }
  func.func @transform_2(%arg0: i32, %arg1: i32) -> (i32, i32, i32, i32, i32) {
    %c2_i32 = arith.constant 2 : i32
    %0 = arith.addi %arg1, %c2_i32 : i32
    %c0_i32 = arith.constant 0 : i32
    %c0_i32_0 = arith.constant 0 : i32
    %c0_i32_1 = arith.constant 0 : i32
    %c0_i32_2 = arith.constant 0 : i32
    return %arg0, %0, %c0_i32, %c0_i32_0, %c0_i32_1 : i32, i32, i32, i32, i32
  }
  func.func @transform_3(%arg0: i32, %arg1: i32) -> (i32, i32, i32, i32, i32) {
    %c0_i32 = arith.constant 0 : i32
    %c0_i32_0 = arith.constant 0 : i32
    %c0_i32_1 = arith.constant 0 : i32
    %c0_i32_2 = arith.constant 0 : i32
    return %arg0, %arg1, %c0_i32, %c0_i32_0, %c0_i32_1 : i32, i32, i32, i32, i32
  }
}

module attributes {stable_mosaic.version = 11 : i64} {
  func.func @_mm_split_kernel(%arg0: i32, %arg1: memref<512x16xbf16, #tpu.memory_space<vmem>>, %arg2: memref<16x128xbf16, #tpu.memory_space<vmem>>, %arg3: memref<1x128xf32, #tpu.memory_space<vmem>>, %arg4: memref<512x128xf32, #tpu.memory_space<vmem>>) attributes {dimension_semantics = [#tpu.dimension_semantics<parallel>], iteration_bounds = array<i64: 1>, scalar_prefetch = 0 : i64, scratch_operands = 0 : i64, tpu.core_type = #tpu.core_type<tc>, window_params = [{transform_indices = @transform_0, window_bounds = array<i64: 512, 16>}, {pipeline_mode = #tpu.pipeline_mode<synchronous>, transform_indices = @transform_1, window_bounds = array<i64: 16, 128>}, {pipeline_mode = #tpu.pipeline_mode<synchronous>, transform_indices = @transform_2, window_bounds = array<i64: 1, 128>}, {transform_indices = @transform_3, window_bounds = array<i64: 512, 128>}]} {
    %c0 = arith.constant 0 : index
    %c0_0 = arith.constant 0 : index
    %0 = vector.load %arg1[%c0, %c0_0] : memref<512x16xbf16, #tpu.memory_space<vmem>>, vector<512x16xbf16>
    %c0_1 = arith.constant 0 : index
    %c0_2 = arith.constant 0 : index
    %1 = vector.load %arg2[%c0_1, %c0_2] : memref<16x128xbf16, #tpu.memory_space<vmem>>, vector<16x128xbf16>
    %cst = arith.constant dense<0.000000e+00> : vector<512x128xf32>
    %2 = tpu.matmul %0, %1, %cst {dimension_numbers = #tpu.dot_dimension_numbers<[1], [0], [0], [1], [0, 0, 1, 1], [], []>} : vector<512x16xbf16>, vector<16x128xbf16>, vector<512x128xf32> -> vector<512x128xf32>
    %c0_3 = arith.constant 0 : index
    %c0_4 = arith.constant 0 : index
    %3 = vector.load %arg3[%c0_3, %c0_4] : memref<1x128xf32, #tpu.memory_space<vmem>>, vector<1x128xf32>
    %4 = vector.broadcast %3 : vector<1x128xf32> to vector<512x128xf32>
    %5 = arith.addf %2, %4 : vector<512x128xf32>
    %cst_5 = arith.constant 0.000000e+00 : f32
    %6 = vector.broadcast %cst_5 : f32 to vector<512x128xf32>
    %7 = arith.maximumf %5, %6 : vector<512x128xf32>
    %c0_6 = arith.constant 0 : index
    %c0_7 = arith.constant 0 : index
    %8 = vector.load %arg4[%c0_6, %c0_7] : memref<512x128xf32, #tpu.memory_space<vmem>>, vector<512x128xf32>
    tpu.vector_store %arg4[%c0_6, %c0_7], %7 {strides = array<i32>} : memref<512x128xf32, #tpu.memory_space<vmem>>, vector<512x128xf32>,
    return
  }
  func.func @transform_0(%arg0: i32) -> (i32, i32) {
    %c0_i32 = arith.constant 0 : i32
    %c0_i32_0 = arith.constant 0 : i32
    return %arg0, %c0_i32 : i32, i32
  }
  func.func @transform_1(%arg0: i32) -> (i32, i32) {
    %c0_i32 = arith.constant 0 : i32
    %c0_i32_0 = arith.constant 0 : i32
    %c0_i32_1 = arith.constant 0 : i32
    return %c0_i32, %c0_i32_0 : i32, i32
  }
  func.func @transform_2(%arg0: i32) -> (i32, i32) {
    %c0_i32 = arith.constant 0 : i32
    %c0_i32_0 = arith.constant 0 : i32
    %c0_i32_1 = arith.constant 0 : i32
    return %c0_i32, %c0_i32_0 : i32, i32
  }
  func.func @transform_3(%arg0: i32) -> (i32, i32) {
    %c0_i32 = arith.constant 0 : i32
    %c0_i32_0 = arith.constant 0 : i32
    return %arg0, %c0_i32 : i32, i32
  }
}

module attributes {stable_mosaic.version = 11 : i64} {
  func.func @_mm_split_kernel(%arg0: i32, %arg1: memref<512x16xbf16, #tpu.memory_space<vmem>>, %arg2: memref<16x384xbf16, #tpu.memory_space<vmem>>, %arg3: memref<1x384xf32, #tpu.memory_space<vmem>>, %arg4: memref<512x128xf32, #tpu.memory_space<vmem>>, %arg5: memref<512x128xbf16, #tpu.memory_space<vmem>>, %arg6: memref<512x128xbf16, #tpu.memory_space<vmem>>) attributes {dimension_semantics = [#tpu.dimension_semantics<parallel>], iteration_bounds = array<i64: 1>, scalar_prefetch = 0 : i64, scratch_operands = 0 : i64, tpu.core_type = #tpu.core_type<tc>, window_params = [{transform_indices = @transform_0, window_bounds = array<i64: 512, 16>}, {pipeline_mode = #tpu.pipeline_mode<synchronous>, transform_indices = @transform_1, window_bounds = array<i64: 16, 384>}, {pipeline_mode = #tpu.pipeline_mode<synchronous>, transform_indices = @transform_2, window_bounds = array<i64: 1, 384>}, {transform_indices = @transform_3, window_bounds = array<i64: 512, 128>}, {transform_indices = @transform_4, window_bounds = array<i64: 512, 128>}, {transform_indices = @transform_5, window_bounds = array<i64: 512, 128>}]} {
    %c0 = arith.constant 0 : index
    %c0_0 = arith.constant 0 : index
    %0 = vector.load %arg1[%c0, %c0_0] : memref<512x16xbf16, #tpu.memory_space<vmem>>, vector<512x16xbf16>
    %c0_1 = arith.constant 0 : index
    %c0_2 = arith.constant 0 : index
    %1 = vector.load %arg2[%c0_1, %c0_2] : memref<16x384xbf16, #tpu.memory_space<vmem>>, vector<16x384xbf16>
    %cst = arith.constant dense<0.000000e+00> : vector<512x384xf32>
    %2 = tpu.matmul %0, %1, %cst {dimension_numbers = #tpu.dot_dimension_numbers<[1], [0], [0], [1], [0, 0, 1, 1], [], []>} : vector<512x16xbf16>, vector<16x384xbf16>, vector<512x384xf32> -> vector<512x384xf32>
    %c0_3 = arith.constant 0 : index
    %c0_4 = arith.constant 0 : index
    %3 = vector.load %arg3[%c0_3, %c0_4] : memref<1x384xf32, #tpu.memory_space<vmem>>, vector<1x384xf32>
    %4 = vector.broadcast %3 : vector<1x384xf32> to vector<512x384xf32>
    %5 = arith.addf %2, %4 : vector<512x384xf32>
    %cst_5 = arith.constant 0.000000e+00 : f32
    %6 = vector.broadcast %cst_5 : f32 to vector<512x384xf32>
    %7 = arith.maximumf %5, %6 : vector<512x384xf32>
    %8 = vector.extract_strided_slice %7 {offsets = [0, 0], sizes = [512, 128], strides = [1, 1]} : vector<512x384xf32> to vector<512x128xf32>
    %c0_6 = arith.constant 0 : index
    %c0_7 = arith.constant 0 : index
    %9 = vector.load %arg4[%c0_6, %c0_7] : memref<512x128xf32, #tpu.memory_space<vmem>>, vector<512x128xf32>
    tpu.vector_store %arg4[%c0_6, %c0_7], %8 {strides = array<i32>} : memref<512x128xf32, #tpu.memory_space<vmem>>, vector<512x128xf32>,
    %10 = vector.extract_strided_slice %7 {offsets = [0, 128], sizes = [512, 128], strides = [1, 1]} : vector<512x384xf32> to vector<512x128xf32>
    %11 = arith.truncf %10 : vector<512x128xf32> to vector<512x128xbf16>
    %c0_8 = arith.constant 0 : index
    %c0_9 = arith.constant 0 : index
    %12 = vector.load %arg5[%c0_8, %c0_9] : memref<512x128xbf16, #tpu.memory_space<vmem>>, vector<512x128xbf16>
    tpu.vector_store %arg5[%c0_8, %c0_9], %11 {strides = array<i32>} : memref<512x128xbf16, #tpu.memory_space<vmem>>, vector<512x128xbf16>,
    %13 = vector.extract_strided_slice %7 {offsets = [0, 256], sizes = [512, 128], strides = [1, 1]} : vector<512x384xf32> to vector<512x128xf32>
    %14 = arith.truncf %13 : vector<512x128xf32> to vector<512x128xbf16>
    %c0_10 = arith.constant 0 : index
    %c0_11 = arith.constant 0 : index
    %15 = vector.load %arg6[%c0_10, %c0_11] : memref<512x128xbf16, #tpu.memory_space<vmem>>, vector<512x128xbf16>
    tpu.vector_store %arg6[%c0_10, %c0_11], %14 {strides = array<i32>} : memref<512x128xbf16, #tpu.memory_space<vmem>>, vector<512x128xbf16>,
    return
  }
  func.func @transform_0(%arg0: i32) -> (i32, i32) {
    %c0_i32 = arith.constant 0 : i32
    %c0_i32_0 = arith.constant 0 : i32
    return %arg0, %c0_i32 : i32, i32
  }
  func.func @transform_1(%arg0: i32) -> (i32, i32) {
    %c0_i32 = arith.constant 0 : i32
    %c0_i32_0 = arith.constant 0 : i32
    %c0_i32_1 = arith.constant 0 : i32
    return %c0_i32, %c0_i32_0 : i32, i32
  }
  func.func @transform_2(%arg0: i32) -> (i32, i32) {
    %c0_i32 = arith.constant 0 : i32
    %c0_i32_0 = arith.constant 0 : i32
    %c0_i32_1 = arith.constant 0 : i32
    return %c0_i32, %c0_i32_0 : i32, i32
  }
  func.func @transform_3(%arg0: i32) -> (i32, i32) {
    %c0_i32 = arith.constant 0 : i32
    %c0_i32_0 = arith.constant 0 : i32
    return %arg0, %c0_i32 : i32, i32
  }
  func.func @transform_4(%arg0: i32) -> (i32, i32) {
    %c0_i32 = arith.constant 0 : i32
    %c0_i32_0 = arith.constant 0 : i32
    return %arg0, %c0_i32 : i32, i32
  }
  func.func @transform_5(%arg0: i32) -> (i32, i32) {
    %c0_i32 = arith.constant 0 : i32
    %c0_i32_0 = arith.constant 0 : i32
    return %arg0, %c0_i32 : i32, i32
  }
}

module attributes {stable_mosaic.version = 11 : i64} {
  func.func @_spatial_kernel(%arg0: i32, %arg1: memref<8x10x10x128xbf16, #tpu.memory_space<vmem>>, %arg2: memref<9x128x128xbf16, #tpu.memory_space<vmem>>, %arg3: memref<1x128xf32, #tpu.memory_space<vmem>>, %arg4: memref<8x8x8x128xbf16, #tpu.memory_space<vmem>>) attributes {dimension_semantics = [#tpu.dimension_semantics<parallel>], iteration_bounds = array<i64: 1>, scalar_prefetch = 0 : i64, scratch_operands = 0 : i64, tpu.core_type = #tpu.core_type<tc>, window_params = [{transform_indices = @transform_0, window_bounds = array<i64: 8, 10, 10, 128>}, {pipeline_mode = #tpu.pipeline_mode<synchronous>, transform_indices = @transform_1, window_bounds = array<i64: 9, 128, 128>}, {pipeline_mode = #tpu.pipeline_mode<synchronous>, transform_indices = @transform_2, window_bounds = array<i64: 1, 128>}, {transform_indices = @transform_3, window_bounds = array<i64: 8, 8, 8, 128>}]} {
    %c0 = arith.constant 0 : index
    %c0_0 = arith.constant 0 : index
    %c0_1 = arith.constant 0 : index
    %c0_2 = arith.constant 0 : index
    %0 = vector.load %arg1[%c0, %c0_0, %c0_1, %c0_2] : memref<8x10x10x128xbf16, #tpu.memory_space<vmem>>, vector<8x10x10x128xbf16>
    %1 = vector.extract_strided_slice %0 {offsets = [0, 0, 0, 0], sizes = [8, 8, 8, 128], strides = [1, 1, 1, 1]} : vector<8x10x10x128xbf16> to vector<8x8x8x128xbf16>
    %2 = vector.shape_cast %1 : vector<8x8x8x128xbf16> to vector<512x128xbf16>
    %c0_3 = arith.constant 0 : index
    %c0_4 = arith.constant 0 : index
    %c0_5 = arith.constant 0 : index
    %3 = vector.load %arg2[%c0_3, %c0_4, %c0_5] : memref<9x128x128xbf16, #tpu.memory_space<vmem>>, vector<1x128x128xbf16>
    %4 = vector.shape_cast %3 : vector<1x128x128xbf16> to vector<128x128xbf16>
    %cst = arith.constant dense<0.000000e+00> : vector<512x128xf32>
    %5 = tpu.matmul %2, %4, %cst {dimension_numbers = #tpu.dot_dimension_numbers<[1], [0], [0], [1], [0, 0, 1, 1], [], []>} : vector<512x128xbf16>, vector<128x128xbf16>, vector<512x128xf32> -> vector<512x128xf32>
    %6 = vector.extract_strided_slice %0 {offsets = [0, 0, 1, 0], sizes = [8, 8, 8, 128], strides = [1, 1, 1, 1]} : vector<8x10x10x128xbf16> to vector<8x8x8x128xbf16>
    %7 = vector.shape_cast %6 : vector<8x8x8x128xbf16> to vector<512x128xbf16>
    %c1 = arith.constant 1 : index
    %c0_6 = arith.constant 0 : index
    %c0_7 = arith.constant 0 : index
    %8 = vector.load %arg2[%c1, %c0_6, %c0_7] : memref<9x128x128xbf16, #tpu.memory_space<vmem>>, vector<1x128x128xbf16>
    %9 = vector.shape_cast %8 : vector<1x128x128xbf16> to vector<128x128xbf16>
    %cst_8 = arith.constant dense<0.000000e+00> : vector<512x128xf32>
    %10 = tpu.matmul %7, %9, %cst_8 {dimension_numbers = #tpu.dot_dimension_numbers<[1], [0], [0], [1], [0, 0, 1, 1], [], []>} : vector<512x128xbf16>, vector<128x128xbf16>, vector<512x128xf32> -> vector<512x128xf32>
    %11 = arith.addf %5, %10 : vector<512x128xf32>
    %12 = vector.extract_strided_slice %0 {offsets = [0, 0, 2, 0], sizes = [8, 8, 8, 128], strides = [1, 1, 1, 1]} : vector<8x10x10x128xbf16> to vector<8x8x8x128xbf16>
    %13 = vector.shape_cast %12 : vector<8x8x8x128xbf16> to vector<512x128xbf16>
    %c2 = arith.constant 2 : index
    %c0_9 = arith.constant 0 : index
    %c0_10 = arith.constant 0 : index
    %14 = vector.load %arg2[%c2, %c0_9, %c0_10] : memref<9x128x128xbf16, #tpu.memory_space<vmem>>, vector<1x128x128xbf16>
    %15 = vector.shape_cast %14 : vector<1x128x128xbf16> to vector<128x128xbf16>
    %cst_11 = arith.constant dense<0.000000e+00> : vector<512x128xf32>
    %16 = tpu.matmul %13, %15, %cst_11 {dimension_numbers = #tpu.dot_dimension_numbers<[1], [0], [0], [1], [0, 0, 1, 1], [], []>} : vector<512x128xbf16>, vector<128x128xbf16>, vector<512x128xf32> -> vector<512x128xf32>
    %17 = arith.addf %11, %16 : vector<512x128xf32>
    %18 = vector.extract_strided_slice %0 {offsets = [0, 1, 0, 0], sizes = [8, 8, 8, 128], strides = [1, 1, 1, 1]} : vector<8x10x10x128xbf16> to vector<8x8x8x128xbf16>
    %19 = vector.shape_cast %18 : vector<8x8x8x128xbf16> to vector<512x128xbf16>
    %c3 = arith.constant 3 : index
    %c0_12 = arith.constant 0 : index
    %c0_13 = arith.constant 0 : index
    %20 = vector.load %arg2[%c3, %c0_12, %c0_13] : memref<9x128x128xbf16, #tpu.memory_space<vmem>>, vector<1x128x128xbf16>
    %21 = vector.shape_cast %20 : vector<1x128x128xbf16> to vector<128x128xbf16>
    %cst_14 = arith.constant dense<0.000000e+00> : vector<512x128xf32>
    %22 = tpu.matmul %19, %21, %cst_14 {dimension_numbers = #tpu.dot_dimension_numbers<[1], [0], [0], [1], [0, 0, 1, 1], [], []>} : vector<512x128xbf16>, vector<128x128xbf16>, vector<512x128xf32> -> vector<512x128xf32>
    %23 = arith.addf %17, %22 : vector<512x128xf32>
    %24 = vector.extract_strided_slice %0 {offsets = [0, 1, 1, 0], sizes = [8, 8, 8, 128], strides = [1, 1, 1, 1]} : vector<8x10x10x128xbf16> to vector<8x8x8x128xbf16>
    %25 = vector.shape_cast %24 : vector<8x8x8x128xbf16> to vector<512x128xbf16>
    %c4 = arith.constant 4 : index
    %c0_15 = arith.constant 0 : index
    %c0_16 = arith.constant 0 : index
    %26 = vector.load %arg2[%c4, %c0_15, %c0_16] : memref<9x128x128xbf16, #tpu.memory_space<vmem>>, vector<1x128x128xbf16>
    %27 = vector.shape_cast %26 : vector<1x128x128xbf16> to vector<128x128xbf16>
    %cst_17 = arith.constant dense<0.000000e+00> : vector<512x128xf32>
    %28 = tpu.matmul %25, %27, %cst_17 {dimension_numbers = #tpu.dot_dimension_numbers<[1], [0], [0], [1], [0, 0, 1, 1], [], []>} : vector<512x128xbf16>, vector<128x128xbf16>, vector<512x128xf32> -> vector<512x128xf32>
    %29 = arith.addf %23, %28 : vector<512x128xf32>
    %30 = vector.extract_strided_slice %0 {offsets = [0, 1, 2, 0], sizes = [8, 8, 8, 128], strides = [1, 1, 1, 1]} : vector<8x10x10x128xbf16> to vector<8x8x8x128xbf16>
    %31 = vector.shape_cast %30 : vector<8x8x8x128xbf16> to vector<512x128xbf16>
    %c5 = arith.constant 5 : index
    %c0_18 = arith.constant 0 : index
    %c0_19 = arith.constant 0 : index
    %32 = vector.load %arg2[%c5, %c0_18, %c0_19] : memref<9x128x128xbf16, #tpu.memory_space<vmem>>, vector<1x128x128xbf16>
    %33 = vector.shape_cast %32 : vector<1x128x128xbf16> to vector<128x128xbf16>
    %cst_20 = arith.constant dense<0.000000e+00> : vector<512x128xf32>
    %34 = tpu.matmul %31, %33, %cst_20 {dimension_numbers = #tpu.dot_dimension_numbers<[1], [0], [0], [1], [0, 0, 1, 1], [], []>} : vector<512x128xbf16>, vector<128x128xbf16>, vector<512x128xf32> -> vector<512x128xf32>
    %35 = arith.addf %29, %34 : vector<512x128xf32>
    %36 = vector.extract_strided_slice %0 {offsets = [0, 2, 0, 0], sizes = [8, 8, 8, 128], strides = [1, 1, 1, 1]} : vector<8x10x10x128xbf16> to vector<8x8x8x128xbf16>
    %37 = vector.shape_cast %36 : vector<8x8x8x128xbf16> to vector<512x128xbf16>
    %c6 = arith.constant 6 : index
    %c0_21 = arith.constant 0 : index
    %c0_22 = arith.constant 0 : index
    %38 = vector.load %arg2[%c6, %c0_21, %c0_22] : memref<9x128x128xbf16, #tpu.memory_space<vmem>>, vector<1x128x128xbf16>
    %39 = vector.shape_cast %38 : vector<1x128x128xbf16> to vector<128x128xbf16>
    %cst_23 = arith.constant dense<0.000000e+00> : vector<512x128xf32>
    %40 = tpu.matmul %37, %39, %cst_23 {dimension_numbers = #tpu.dot_dimension_numbers<[1], [0], [0], [1], [0, 0, 1, 1], [], []>} : vector<512x128xbf16>, vector<128x128xbf16>, vector<512x128xf32> -> vector<512x128xf32>
    %41 = arith.addf %35, %40 : vector<512x128xf32>
    %42 = vector.extract_strided_slice %0 {offsets = [0, 2, 1, 0], sizes = [8, 8, 8, 128], strides = [1, 1, 1, 1]} : vector<8x10x10x128xbf16> to vector<8x8x8x128xbf16>
    %43 = vector.shape_cast %42 : vector<8x8x8x128xbf16> to vector<512x128xbf16>
    %c7 = arith.constant 7 : index
    %c0_24 = arith.constant 0 : index
    %c0_25 = arith.constant 0 : index
    %44 = vector.load %arg2[%c7, %c0_24, %c0_25] : memref<9x128x128xbf16, #tpu.memory_space<vmem>>, vector<1x128x128xbf16>
    %45 = vector.shape_cast %44 : vector<1x128x128xbf16> to vector<128x128xbf16>
    %cst_26 = arith.constant dense<0.000000e+00> : vector<512x128xf32>
    %46 = tpu.matmul %43, %45, %cst_26 {dimension_numbers = #tpu.dot_dimension_numbers<[1], [0], [0], [1], [0, 0, 1, 1], [], []>} : vector<512x128xbf16>, vector<128x128xbf16>, vector<512x128xf32> -> vector<512x128xf32>
    %47 = arith.addf %41, %46 : vector<512x128xf32>
    %48 = vector.extract_strided_slice %0 {offsets = [0, 2, 2, 0], sizes = [8, 8, 8, 128], strides = [1, 1, 1, 1]} : vector<8x10x10x128xbf16> to vector<8x8x8x128xbf16>
    %49 = vector.shape_cast %48 : vector<8x8x8x128xbf16> to vector<512x128xbf16>
    %c8 = arith.constant 8 : index
    %c0_27 = arith.constant 0 : index
    %c0_28 = arith.constant 0 : index
    %50 = vector.load %arg2[%c8, %c0_27, %c0_28] : memref<9x128x128xbf16, #tpu.memory_space<vmem>>, vector<1x128x128xbf16>
    %51 = vector.shape_cast %50 : vector<1x128x128xbf16> to vector<128x128xbf16>
    %cst_29 = arith.constant dense<0.000000e+00> : vector<512x128xf32>
    %52 = tpu.matmul %49, %51, %cst_29 {dimension_numbers = #tpu.dot_dimension_numbers<[1], [0], [0], [1], [0, 0, 1, 1], [], []>} : vector<512x128xbf16>, vector<128x128xbf16>, vector<512x128xf32> -> vector<512x128xf32>
    %53 = arith.addf %47, %52 : vector<512x128xf32>
    %c0_30 = arith.constant 0 : index
    %c0_31 = arith.constant 0 : index
    %54 = vector.load %arg3[%c0_30, %c0_31] : memref<1x128xf32, #tpu.memory_space<vmem>>, vector<1x128xf32>
    %55 = vector.broadcast %54 : vector<1x128xf32> to vector<512x128xf32>
    %56 = arith.addf %53, %55 : vector<512x128xf32>
    %cst_32 = arith.constant 0.000000e+00 : f32
    %57 = vector.broadcast %cst_32 : f32 to vector<512x128xf32>
    %58 = arith.maximumf %56, %57 : vector<512x128xf32>
    %59 = vector.shape_cast %58 : vector<512x128xf32> to vector<8x8x8x128xf32>
    %60 = arith.truncf %59 : vector<8x8x8x128xf32> to vector<8x8x8x128xbf16>
    %c0_33 = arith.constant 0 : index
    %c0_34 = arith.constant 0 : index
    %c0_35 = arith.constant 0 : index
    %c0_36 = arith.constant 0 : index
    %61 = vector.load %arg4[%c0_33, %c0_34, %c0_35, %c0_36] : memref<8x8x8x128xbf16, #tpu.memory_space<vmem>>, vector<8x8x8x128xbf16>
    tpu.vector_store %arg4[%c0_33, %c0_34, %c0_35, %c0_36], %60 {strides = array<i32>} : memref<8x8x8x128xbf16, #tpu.memory_space<vmem>>, vector<8x8x8x128xbf16>,
    return
  }
  func.func @transform_0(%arg0: i32) -> (i32, i32, i32, i32) {
    %c0_i32 = arith.constant 0 : i32
    %c0_i32_0 = arith.constant 0 : i32
    %c0_i32_1 = arith.constant 0 : i32
    %c0_i32_2 = arith.constant 0 : i32
    return %arg0, %c0_i32, %c0_i32_0, %c0_i32_1 : i32, i32, i32, i32
  }
  func.func @transform_1(%arg0: i32) -> (i32, i32, i32) {
    %c0_i32 = arith.constant 0 : i32
    %c0_i32_0 = arith.constant 0 : i32
    %c0_i32_1 = arith.constant 0 : i32
    %c0_i32_2 = arith.constant 0 : i32
    return %c0_i32, %c0_i32_0, %c0_i32_1 : i32, i32, i32
  }
  func.func @transform_2(%arg0: i32) -> (i32, i32) {
    %c0_i32 = arith.constant 0 : i32
    %c0_i32_0 = arith.constant 0 : i32
    %c0_i32_1 = arith.constant 0 : i32
    return %c0_i32, %c0_i32_0 : i32, i32
  }
  func.func @transform_3(%arg0: i32) -> (i32, i32, i32, i32) {
    %c0_i32 = arith.constant 0 : i32
    %c0_i32_0 = arith.constant 0 : i32
    %c0_i32_1 = arith.constant 0 : i32
    %c0_i32_2 = arith.constant 0 : i32
    return %arg0, %c0_i32, %c0_i32_0, %c0_i32_1 : i32, i32, i32, i32
  }
}

module attributes {stable_mosaic.version = 11 : i64} {
  func.func @_temporal_kernel(%arg0: i32, %arg1: i32, %arg2: memref<1x6x64x128xbf16, #tpu.memory_space<vmem>>, %arg3: memref<3x128x128xbf16, #tpu.memory_space<vmem>>, %arg4: memref<1x128xf32, #tpu.memory_space<vmem>>, %arg5: memref<1x4x64x128xf32, #tpu.memory_space<vmem>>) attributes {dimension_semantics = [#tpu.dimension_semantics<parallel>, #tpu.dimension_semantics<parallel>], iteration_bounds = array<i64: 2, 1>, scalar_prefetch = 0 : i64, scratch_operands = 0 : i64, tpu.core_type = #tpu.core_type<tc>, window_params = [{transform_indices = @transform_0, window_bounds = array<i64: 1, 6, 64, 128>}, {pipeline_mode = #tpu.pipeline_mode<synchronous>, transform_indices = @transform_1, window_bounds = array<i64: 3, 128, 128>}, {pipeline_mode = #tpu.pipeline_mode<synchronous>, transform_indices = @transform_2, window_bounds = array<i64: 1, 128>}, {transform_indices = @transform_3, window_bounds = array<i64: 1, 4, 64, 128>}]} {
    %c0 = arith.constant 0 : index
    %c0_0 = arith.constant 0 : index
    %c0_1 = arith.constant 0 : index
    %c0_2 = arith.constant 0 : index
    %0 = vector.load %arg2[%c0, %c0_0, %c0_1, %c0_2] : memref<1x6x64x128xbf16, #tpu.memory_space<vmem>>, vector<1x6x64x128xbf16>
    %1 = vector.shape_cast %0 : vector<1x6x64x128xbf16> to vector<6x64x128xbf16>
    %2 = vector.extract_strided_slice %1 {offsets = [0, 0, 0], sizes = [4, 64, 128], strides = [1, 1, 1]} : vector<6x64x128xbf16> to vector<4x64x128xbf16>
    %3 = vector.shape_cast %2 : vector<4x64x128xbf16> to vector<256x128xbf16>
    %c0_3 = arith.constant 0 : index
    %c0_4 = arith.constant 0 : index
    %c0_5 = arith.constant 0 : index
    %4 = vector.load %arg3[%c0_3, %c0_4, %c0_5] : memref<3x128x128xbf16, #tpu.memory_space<vmem>>, vector<1x128x128xbf16>
    %5 = vector.shape_cast %4 : vector<1x128x128xbf16> to vector<128x128xbf16>
    %cst = arith.constant dense<0.000000e+00> : vector<256x128xf32>
    %6 = tpu.matmul %3, %5, %cst {dimension_numbers = #tpu.dot_dimension_numbers<[1], [0], [0], [1], [0, 0, 1, 1], [], []>} : vector<256x128xbf16>, vector<128x128xbf16>, vector<256x128xf32> -> vector<256x128xf32>
    %7 = vector.extract_strided_slice %1 {offsets = [1, 0, 0], sizes = [4, 64, 128], strides = [1, 1, 1]} : vector<6x64x128xbf16> to vector<4x64x128xbf16>
    %8 = vector.shape_cast %7 : vector<4x64x128xbf16> to vector<256x128xbf16>
    %c1 = arith.constant 1 : index
    %c0_6 = arith.constant 0 : index
    %c0_7 = arith.constant 0 : index
    %9 = vector.load %arg3[%c1, %c0_6, %c0_7] : memref<3x128x128xbf16, #tpu.memory_space<vmem>>, vector<1x128x128xbf16>
    %10 = vector.shape_cast %9 : vector<1x128x128xbf16> to vector<128x128xbf16>
    %cst_8 = arith.constant dense<0.000000e+00> : vector<256x128xf32>
    %11 = tpu.matmul %8, %10, %cst_8 {dimension_numbers = #tpu.dot_dimension_numbers<[1], [0], [0], [1], [0, 0, 1, 1], [], []>} : vector<256x128xbf16>, vector<128x128xbf16>, vector<256x128xf32> -> vector<256x128xf32>
    %12 = arith.addf %6, %11 : vector<256x128xf32>
    %13 = vector.extract_strided_slice %1 {offsets = [2, 0, 0], sizes = [4, 64, 128], strides = [1, 1, 1]} : vector<6x64x128xbf16> to vector<4x64x128xbf16>
    %14 = vector.shape_cast %13 : vector<4x64x128xbf16> to vector<256x128xbf16>
    %c2 = arith.constant 2 : index
    %c0_9 = arith.constant 0 : index
    %c0_10 = arith.constant 0 : index
    %15 = vector.load %arg3[%c2, %c0_9, %c0_10] : memref<3x128x128xbf16, #tpu.memory_space<vmem>>, vector<1x128x128xbf16>
    %16 = vector.shape_cast %15 : vector<1x128x128xbf16> to vector<128x128xbf16>
    %cst_11 = arith.constant dense<0.000000e+00> : vector<256x128xf32>
    %17 = tpu.matmul %14, %16, %cst_11 {dimension_numbers = #tpu.dot_dimension_numbers<[1], [0], [0], [1], [0, 0, 1, 1], [], []>} : vector<256x128xbf16>, vector<128x128xbf16>, vector<256x128xf32> -> vector<256x128xf32>
    %18 = arith.addf %12, %17 : vector<256x128xf32>
    %c0_12 = arith.constant 0 : index
    %c0_13 = arith.constant 0 : index
    %19 = vector.load %arg4[%c0_12, %c0_13] : memref<1x128xf32, #tpu.memory_space<vmem>>, vector<1x128xf32>
    %20 = vector.broadcast %19 : vector<1x128xf32> to vector<256x128xf32>
    %21 = arith.addf %18, %20 : vector<256x128xf32>
    %cst_14 = arith.constant 0.000000e+00 : f32
    %22 = vector.broadcast %cst_14 : f32 to vector<256x128xf32>
    %23 = arith.maximumf %21, %22 : vector<256x128xf32>
    %24 = vector.shape_cast %23 : vector<256x128xf32> to vector<4x64x128xf32>
    %c0_15 = arith.constant 0 : index
    %c0_16 = arith.constant 0 : index
    %c0_17 = arith.constant 0 : index
    %c0_18 = arith.constant 0 : index
    %25 = vector.load %arg5[%c0_15, %c0_16, %c0_17, %c0_18] : memref<1x4x64x128xf32, #tpu.memory_space<vmem>>, vector<1x4x64x128xf32>
    %26 = vector.shape_cast %25 : vector<1x4x64x128xf32> to vector<4x64x128xf32>
    %27 = vector.shape_cast %24 : vector<4x64x128xf32> to vector<1x4x64x128xf32>
    tpu.vector_store %arg5[%c0_15, %c0_16, %c0_17, %c0_18], %27 {strides = array<i32>} : memref<1x4x64x128xf32, #tpu.memory_space<vmem>>, vector<1x4x64x128xf32>,
    return
  }
  func.func @transform_0(%arg0: i32, %arg1: i32) -> (i32, i32, i32, i32) {
    %c0_i32 = arith.constant 0 : i32
    %c0_i32_0 = arith.constant 0 : i32
    %c0_i32_1 = arith.constant 0 : i32
    return %arg0, %c0_i32, %arg1, %c0_i32_0 : i32, i32, i32, i32
  }
  func.func @transform_1(%arg0: i32, %arg1: i32) -> (i32, i32, i32) {
    %c0_i32 = arith.constant 0 : i32
    %c0_i32_0 = arith.constant 0 : i32
    %c0_i32_1 = arith.constant 0 : i32
    %c0_i32_2 = arith.constant 0 : i32
    return %c0_i32, %c0_i32_0, %c0_i32_1 : i32, i32, i32
  }
  func.func @transform_2(%arg0: i32, %arg1: i32) -> (i32, i32) {
    %c0_i32 = arith.constant 0 : i32
    %c0_i32_0 = arith.constant 0 : i32
    %c0_i32_1 = arith.constant 0 : i32
    return %c0_i32, %c0_i32_0 : i32, i32
  }
  func.func @transform_3(%arg0: i32, %arg1: i32) -> (i32, i32, i32, i32) {
    %c0_i32 = arith.constant 0 : i32
    %c0_i32_0 = arith.constant 0 : i32
    %c0_i32_1 = arith.constant 0 : i32
    return %arg0, %c0_i32, %arg1, %c0_i32_0 : i32, i32, i32, i32
  }
}

</mosaic_0001>

<llo_original>
// kernel: _lambda_.12
$region0: #{_lambda_.12}
  #allocation0 [shape = 'u32[]', space=smem, size = 0x4, offset = 0x4, fixed_abs, tag = 'smem constant byte address 0x4 - core index']
  #allocation1 [shape = 'u32[72,128]{1,0:T(1,128)}', space=vmem, size = 0x9000, scoped, tag = 'internal scratch']
  %s0 = inlined_call_operand.vmem [shape: bf16[2,6,10,10,16], index: 0, kind: input, shape index: {}, may-alias: {0,1,2}]
  %s1 = inlined_call_operand.vmem [shape: bf16[2,6,10,10,16], index: 1, kind: input, shape index: {}, may-alias: {0,1,2}]
  %s2 = inlined_call_operand.vmem [shape: bf16[2,6,10,10,16], index: 2, kind: input, shape index: {}, may-alias: {0,1,2}]
  %s3 = inlined_call_operand.vmem [shape: bf16[2,4,8,8,16], index: 3, kind: output, shape index: {}]
  %s4 = sld [smem:[#allocation0]]
  $region45: #{_lambda_.12} parent=0
    _
  %s6 = ssub.s32 1, %s4
  %s7 = scalar_select 0, %s6, %s4
  loop: start=0, step=1, limit=10
  $region2: #{_lambda_.12} parent=0 // loop_pre_header
    _
  $region3: #{_lambda_.12} parent=0 // loop_header
    %s9 = sphi 0, %s13
    %p10 = scmp.ge.s32.totalorder %s9, 10
    %s16 = sphi 0, %s28
    %s17 = sphi 0, %s24
    %s18 = sphi 0, %s16
    %s19 = sphi 0, %s17
    %s20 = sphi 0, %s18
    %s21 = sphi 0, %s19
    %s33 = sphi 0, %s35
    %s36 = sphi 0, %s33
    %s37 = sphi 0, %s36
    %s53 = sphi 0, %s37
    %s63 = sphi 0, %s65
    %s66 = sphi 0, %s63
    %s67 = sphi 0, %s66
    %s83 = sphi 0, %s67
    %s93 = sphi 0, %s95
    %s96 = sphi 0, %s93
    %s97 = sphi 0, %s96
    %s113 = sphi 0, %s97
    %s121 = sphi 0, %s123
    %s124 = sphi 0, %s121
    %s125 = sphi 0, %s124
    %s141 = sphi 0, %s125
  $region4: #{_lambda_.12} parent=0 // loop_header_branch
    %12 = sbr.rel (%p10) target = $region8
  $region5: #{_lambda_.12} parent=0 // loop_body
    %s14 = ssub.s32 %s9, 1
    %s15 = ssub.s32 %s9, 2
    %s22 = sadd.s32 1, %s17
    %p23 = scmp.ge.s32.totalorder %s22, 4
    %s24 = scalar_select %p23, 0, %s22
    %s25 = sadd.s32 1, %s16
    %s26 = scalar_select %p23, %s25, %s16
    %p27 = scmp.ge.s32.totalorder %s26, 2
    %s28 = scalar_select %p27, 0, %s26
    %s29 = ssub.s32 %s16, %s28
    %s30 = ssub.s32 %s17, %s24
    %s31 = sor.u32 %s29, %s30
    %p32 = scmp.eq.s32.totalorder %s31, 0
    %s34 = sadd.s32 %s33, 1
    %s35 = scalar_select %p32, %s33, %s34
    %p38 = pneg %p32
    %p39 = scmp.eq.s32.totalorder %s9, 7
    %p40 = por %p38, %p39
    %p41 = scmp.ne.s32.totalorder %s33, %s36
    %p42 = scmp.eq.s32.totalorder %s9, 0
    %p43 = por %p41, %p42
    %p44 = scmp.ne.s32.totalorder %s33, %s36
    %p45 = scmp.eq.s32.totalorder %s14, 7
    %p46 = por %p44, %p45
    %p47 = scmp.ne.s32.totalorder %s36, %s37
    %p48 = scmp.eq.s32.totalorder %s14, 0
    %p49 = por %p47, %p48
    %p50 = scmp.ne.s32.totalorder %s36, %s37
    %p51 = scmp.eq.s32.totalorder %s15, 7
    %p52 = por %p50, %p51
    %p54 = scmp.ne.s32.totalorder %s37, %s53
    %p55 = scmp.eq.s32.totalorder %s15, 0
    %p56 = por %p54, %p55
    %s57 = sadd.s32 %s17, 1
    %s58 = sadd.s32 %s24, 1
    %s59 = ssub.s32 %s16, %s28
    %s60 = ssub.s32 %s57, %s58
    %s61 = sor.u32 %s59, %s60
    %p62 = scmp.eq.s32.totalorder %s61, 0
    %s64 = sadd.s32 %s63, 1
    %s65 = scalar_select %p62, %s63, %s64
    %p68 = pneg %p62
    %p69 = scmp.eq.s32.totalorder %s9, 7
    %p70 = por %p68, %p69
    %p71 = scmp.ne.s32.totalorder %s63, %s66
    %p72 = scmp.eq.s32.totalorder %s9, 0
    %p73 = por %p71, %p72
    %p74 = scmp.ne.s32.totalorder %s63, %s66
    %p75 = scmp.eq.s32.totalorder %s14, 7
    %p76 = por %p74, %p75
    %p77 = scmp.ne.s32.totalorder %s66, %s67
    %p78 = scmp.eq.s32.totalorder %s14, 0
    %p79 = por %p77, %p78
    %p80 = scmp.ne.s32.totalorder %s66, %s67
    %p81 = scmp.eq.s32.totalorder %s15, 7
    %p82 = por %p80, %p81
    %p84 = scmp.ne.s32.totalorder %s67, %s83
    %p85 = scmp.eq.s32.totalorder %s15, 0
    %p86 = por %p84, %p85
    %s87 = sadd.s32 %s17, 2
    %s88 = sadd.s32 %s24, 2
    %s89 = ssub.s32 %s16, %s28
    %s90 = ssub.s32 %s87, %s88
    %s91 = sor.u32 %s89, %s90
    %p92 = scmp.eq.s32.totalorder %s91, 0
    %s94 = sadd.s32 %s93, 1
    %s95 = scalar_select %p92, %s93, %s94
    %p98 = pneg %p92
    %p99 = scmp.eq.s32.totalorder %s9, 7
    %p100 = por %p98, %p99
    %p101 = scmp.ne.s32.totalorder %s93, %s96
    %p102 = scmp.eq.s32.totalorder %s9, 0
    %p103 = por %p101, %p102
    %p104 = scmp.ne.s32.totalorder %s93, %s96
    %p105 = scmp.eq.s32.totalorder %s14, 7
    %p106 = por %p104, %p105
    %p107 = scmp.ne.s32.totalorder %s96, %s97
    %p108 = scmp.eq.s32.totalorder %s14, 0
    %p109 = por %p107, %p108
    %p110 = scmp.ne.s32.totalorder %s96, %s97
    %p111 = scmp.eq.s32.totalorder %s15, 7
    %p112 = por %p110, %p111
    %p114 = scmp.ne.s32.totalorder %s97, %s113
    %p115 = scmp.eq.s32.totalorder %s15, 0
    %p116 = por %p114, %p115
    %s117 = ssub.s32 %s16, %s28
    %s118 = ssub.s32 %s17, %s24
    %s119 = sor.u32 %s117, %s118
    %p120 = scmp.eq.s32.totalorder %s119, 0
    %s122 = sadd.s32 %s121, 1
    %s123 = scalar_select %p120, %s121, %s122
    %p126 = pneg %p120
    %p127 = scmp.eq.s32.totalorder %s9, 7
    %p128 = por %p126, %p127
    %p129 = scmp.ne.s32.totalorder %s121, %s124
    %p130 = scmp.eq.s32.totalorder %s9, 0
    %p131 = por %p129, %p130
    %p132 = scmp.ne.s32.totalorder %s121, %s124
    %p133 = scmp.eq.s32.totalorder %s14, 7
    %p134 = por %p132, %p133
    %p135 = scmp.ne.s32.totalorder %s124, %s125
    %p136 = scmp.eq.s32.totalorder %s14, 0
    %p137 = por %p135, %p136
    %p138 = scmp.ne.s32.totalorder %s124, %s125
    %p139 = scmp.eq.s32.totalorder %s15, 7
    %p140 = por %p138, %p139
    %p142 = scmp.ne.s32.totalorder %s125, %s141
    %p143 = scmp.eq.s32.totalorder %s15, 0
    %p144 = por %p142, %p143
    %p145 = scmp.le.s32.totalorder 1, %s9
    %p146 = scmp.lt.s32.totalorder %s9, 9
    %p147 = pnand %p145, %p146
    %p148 = pneg %p147
    // Predicated region
    $region9: #{_lambda_.12} parent=5 // pred_check
      _
    $region10: #{_lambda_.12} parent=5 // pred_check_branch
      %150 = sbr.rel (%p147) target = $region12
    $region11: #{_lambda_.12} parent=5 // pred_region
      %s151 = ssub.s32 %s9, 1
    $region12: #{_lambda_.12} parent=5 // pred_fallthru
      _
    %p152 = scmp.lt.s32.totalorder %s9, 8
    // Predicated region
    $region13: #{_lambda_.12} parent=5 // pred_check
      %p153 = pneg %p152
    $region14: #{_lambda_.12} parent=5 // pred_check_branch
      %155 = sbr.rel (%p153) target = $region16
    $region15: #{_lambda_.12} parent=5 // pred_region
      // Predicated region
      $region17: #{_lambda_.12} parent=15 // pred_check
        %p156 = pneg %p43
      $region18: #{_lambda_.12} parent=15 // pred_check_branch
        %158 = sbr.rel (%p156) target = $region20
      $region19: #{_lambda_.12} parent=15 // pred_region
        %p159 = scmp.lt.s32.totalorder %s16, 1
        %s160 = scalar_select %p159, %s16, 1
        %p161 = scmp.lt.s32.totalorder %s17, 5
        %s162 = scalar_select %p161, %s17, 5
        %s163 = smul.addr %s162, 20
        %s164 = smul.addr %s160, 120
        %s165 = sadd.s32 %s163, %s164
        %s166 = smul.addr %s165, 4
        %s167 = scalar_lea.vmem %s0, %s166
      $region20: #{_lambda_.12} parent=15 // pred_fallthru
        _
      // Predicated region
      $region21: #{_lambda_.12} parent=15 // pred_check
        %p168 = pneg %p73
      $region22: #{_lambda_.12} parent=15 // pred_check_branch
        %170 = sbr.rel (%p168) target = $region24
      $region23: #{_lambda_.12} parent=15 // pred_region
        %s171 = sadd.s32 %s17, 1
        %p172 = scmp.lt.s32.totalorder %s16, 1
        %s173 = scalar_select %p172, %s16, 1
        %p174 = scmp.lt.s32.totalorder %s171, 5
        %s175 = scalar_select %p174, %s171, 5
        %s176 = smul.addr %s175, 20
        %s177 = smul.addr %s173, 120
        %s178 = sadd.s32 %s176, %s177
        %s179 = smul.addr %s178, 4
        %s180 = scalar_lea.vmem %s1, %s179
        %s181 = sadd.s32 %s17, 1
      $region24: #{_lambda_.12} parent=15 // pred_fallthru
        _
      // Predicated region
      $region25: #{_lambda_.12} parent=15 // pred_check
        %p182 = pneg %p103
      $region26: #{_lambda_.12} parent=15 // pred_check_branch
        %184 = sbr.rel (%p182) target = $region28
      $region27: #{_lambda_.12} parent=15 // pred_region
        %s185 = sadd.s32 %s17, 2
        %p186 = scmp.lt.s32.totalorder %s16, 1
        %s187 = scalar_select %p186, %s16, 1
        %p188 = scmp.lt.s32.totalorder %s185, 5
        %s189 = scalar_select %p188, %s185, 5
        %s190 = smul.addr %s189, 20
        %s191 = smul.addr %s187, 120
        %s192 = sadd.s32 %s190, %s191
        %s193 = smul.addr %s192, 4
        %s194 = scalar_lea.vmem %s2, %s193
        %s195 = sadd.s32 %s17, 2
      $region28: #{_lambda_.12} parent=15 // pred_fallthru
        _
    $region16: #{_lambda_.12} parent=5 // pred_fallthru
      _
    %p196 = scmp.le.s32.totalorder 1, %s9
    %p197 = scmp.lt.s32.totalorder %s9, 9
    %p198 = pnand %p196, %p197
    %p199 = pneg %p198
    // Predicated region
    $region29: #{_lambda_.12} parent=5 // pred_check
      _
    $region30: #{_lambda_.12} parent=5 // pred_check_branch
      %201 = sbr.rel (%p198) target = $region32
    $region31: #{_lambda_.12} parent=5 // pred_region
      %s202 = ssub.s32 %s9, 1
      %p203 = scmp.lt.s32.totalorder %s18, 1
      %s204 = scalar_select %p203, %s18, 1
      %p205 = scmp.lt.s32.totalorder %s19, 5
      %s206 = scalar_select %p205, %s19, 5
      %s207 = smul.addr %s206, 20
      %s208 = smul.addr %s204, 120
      %s209 = sadd.s32 %s207, %s208
      %s210 = smul.addr %s209, 4
      %s211 = scalar_lea.vmem %s0, %s210
      %p212 = pneg %p49
      %p213 = pneg %p46
      %s214 = sadd.s32 %s19, 1
      %p215 = scmp.lt.s32.totalorder %s18, 1
      %s216 = scalar_select %p215, %s18, 1
      %p217 = scmp.lt.s32.totalorder %s214, 5
      %s218 = scalar_select %p217, %s214, 5
      %s219 = smul.addr %s218, 20
      %s220 = smul.addr %s216, 120
      %s221 = sadd.s32 %s219, %s220
      %s222 = smul.addr %s221, 4
      %s223 = scalar_lea.vmem %s1, %s222
      %p224 = pneg %p79
      %p225 = pneg %p76
      %s226 = sadd.s32 %s19, 2
      %p227 = scmp.lt.s32.totalorder %s18, 1
      %s228 = scalar_select %p227, %s18, 1
      %p229 = scmp.lt.s32.totalorder %s226, 5
      %s230 = scalar_select %p229, %s226, 5
      %s231 = smul.addr %s230, 20
      %s232 = smul.addr %s228, 120
      %s233 = sadd.s32 %s231, %s232
      %s234 = smul.addr %s233, 4
      %s235 = scalar_lea.vmem %s2, %s234
      %p236 = pneg %p109
      %p237 = pneg %p106
      %p238 = pneg %p137
      %p239 = pneg %p134
      %p240 = scmp.lt.s32.totalorder %s18, 1
      %s241 = scalar_select %p240, %s18, 1
      %p242 = scmp.lt.s32.totalorder %s19, 3
      %s243 = scalar_select %p242, %s19, 3
      %s244 = smul.addr %s243, 8
      %s245 = smul.addr %s241, 32
      %s246 = sadd.s32 %s244, %s245
      %s247 = smul.addr %s246, 4
      %s248 = scalar_lea.vmem %s3, %s247
      %p249 = scmp.lt.s32.totalorder %s18, 1
      %s250 = scalar_select %p249, %s18, 1
      %p251 = scmp.lt.s32.totalorder %s19, 5
      %s252 = scalar_select %p251, %s19, 5
      %s253 = smul.addr %s252, 20
      %s254 = smul.addr %s250, 120
      %s255 = sadd.s32 %s253, %s254
      %s256 = smul.addr %s255, 4
      %s257 = scalar_lea.vmem %s0, %s256
      %s258 = sadd.s32 %s19, 1
      %p259 = scmp.lt.s32.totalorder %s18, 1
      %s260 = scalar_select %p259, %s18, 1
      %p261 = scmp.lt.s32.totalorder %s258, 5
      %s262 = scalar_select %p261, %s258, 5
      %s263 = smul.addr %s262, 20
      %s264 = smul.addr %s260, 120
      %s265 = sadd.s32 %s263, %s264
      %s266 = smul.addr %s265, 4
      %s267 = scalar_lea.vmem %s1, %s266
      %s268 = sadd.s32 %s19, 1
      %s269 = sadd.s32 %s19, 2
      %p270 = scmp.lt.s32.totalorder %s18, 1
      %s271 = scalar_select %p270, %s18, 1
      %p272 = scmp.lt.s32.totalorder %s269, 5
      %s273 = scalar_select %p272, %s269, 5
      %s274 = smul.addr %s273, 20
      %s275 = smul.addr %s271, 120
      %s276 = sadd.s32 %s274, %s275
      %s277 = smul.addr %s276, 4
      %s278 = scalar_lea.vmem %s2, %s277
      %s279 = sadd.s32 %s19, 2
      %p280 = scmp.lt.s32.totalorder %s18, 1
      %s281 = scalar_select %p280, %s18, 1
      %p282 = scmp.lt.s32.totalorder %s19, 3
      %s283 = scalar_select %p282, %s19, 3
      %s284 = smul.addr %s283, 8
      %s285 = smul.addr %s281, 32
      %s286 = sadd.s32 %s284, %s285
      %s287 = smul.addr %s286, 4
      %s288 = scalar_lea.vmem %s3, %s287
      %v289 = vld [vmem:[%s257] sm:$0xf]
      %v290 = vld [vmem:[%s257 + $0x4] sm:$0x1]
      %v291 = vld [vmem:[%s257 + $0x8] sm:$0xf]
      %v292 = vld [vmem:[%s257 + $0xc] sm:$0x1]
      %v293 = vld [vmem:[%s257 + $0x10] sm:$0xf]
      %v294 = vld [vmem:[%s257 + $0x14] sm:$0x1]
      %v295 = vld [vmem:[%s257 + $0x18] sm:$0xf]
      %v296 = vld [vmem:[%s257 + $0x1c] sm:$0x1]
      %v297 = vld [vmem:[%s257 + $0x20] sm:$0xf]
      %v298 = vld [vmem:[%s257 + $0x24] sm:$0x1]
      %v299 = vld [vmem:[%s257 + $0x28] sm:$0xf]
      %v300 = vld [vmem:[%s257 + $0x2c] sm:$0x1]
      %v301 = vld [vmem:[%s257 + $0x30] sm:$0xf]
      %v302 = vld [vmem:[%s257 + $0x34] sm:$0x1]
      %v303 = vld [vmem:[%s257 + $0x38] sm:$0xf]
      %v304 = vld [vmem:[%s257 + $0x3c] sm:$0x1]
      %v305 = vld [vmem:[%s257 + $0x40] sm:$0xf]
      %v306 = vld [vmem:[%s257 + $0x44] sm:$0x1]
      %v307 = vld [vmem:[%s257 + $0x48] sm:$0xf]
      %v308 = vld [vmem:[%s257 + $0x4c] sm:$0x1]
      %v309 = vld [vmem:[%s267] sm:$0xf]
      %v310 = vld [vmem:[%s267 + $0x4] sm:$0x1]
      %v311 = vld [vmem:[%s267 + $0x8] sm:$0xf]
      %v312 = vld [vmem:[%s267 + $0xc] sm:$0x1]
      %v313 = vld [vmem:[%s267 + $0x10] sm:$0xf]
      %v314 = vld [vmem:[%s267 + $0x14] sm:$0x1]
      %v315 = vld [vmem:[%s267 + $0x18] sm:$0xf]
      %v316 = vld [vmem:[%s267 + $0x1c] sm:$0x1]
      %v317 = vld [vmem:[%s267 + $0x20] sm:$0xf]
      %v318 = vld [vmem:[%s267 + $0x24] sm:$0x1]
      %v319 = vld [vmem:[%s267 + $0x28] sm:$0xf]
      %v320 = vld [vmem:[%s267 + $0x2c] sm:$0x1]
      %v321 = vld [vmem:[%s267 + $0x30] sm:$0xf]
      %v322 = vld [vmem:[%s267 + $0x34] sm:$0x1]
      %v323 = vld [vmem:[%s267 + $0x38] sm:$0xf]
      %v324 = vld [vmem:[%s267 + $0x3c] sm:$0x1]
      %v325 = vld [vmem:[%s267 + $0x40] sm:$0xf]
      %v326 = vld [vmem:[%s267 + $0x44] sm:$0x1]
      %v327 = vld [vmem:[%s267 + $0x48] sm:$0xf]
      %v328 = vld [vmem:[%s267 + $0x4c] sm:$0x1]
      %v329 = vunpack.c.l.bf16 %v289
      %v330 = vunpack.c.l.bf16 %v290
      %v331 = vunpack.c.l.bf16 %v291
      %v332 = vunpack.c.l.bf16 %v292
      %v333 = vunpack.c.l.bf16 %v293
      %v334 = vunpack.c.l.bf16 %v294
      %v335 = vunpack.c.l.bf16 %v295
      %v336 = vunpack.c.l.bf16 %v296
      %v337 = vunpack.c.l.bf16 %v297
      %v338 = vunpack.c.l.bf16 %v298
      %v339 = vunpack.c.l.bf16 %v299
      %v340 = vunpack.c.l.bf16 %v300
      %v341 = vunpack.c.l.bf16 %v301
      %v342 = vunpack.c.l.bf16 %v302
      %v343 = vunpack.c.l.bf16 %v303
      %v344 = vunpack.c.l.bf16 %v304
      %v345 = vunpack.c.l.bf16 %v305
      %v346 = vunpack.c.l.bf16 %v306
      %v347 = vunpack.c.l.bf16 %v307
      %v348 = vunpack.c.l.bf16 %v308
      %v349 = vunpack.c.l.bf16 %v309
      %v350 = vunpack.c.l.bf16 %v310
      %v351 = vunpack.c.l.bf16 %v311
      %v352 = vunpack.c.l.bf16 %v312
      %v353 = vunpack.c.l.bf16 %v313
      %v354 = vunpack.c.l.bf16 %v314
      %v355 = vunpack.c.l.bf16 %v315
      %v356 = vunpack.c.l.bf16 %v316
      %v357 = vunpack.c.l.bf16 %v317
      %v358 = vunpack.c.l.bf16 %v318
      %v359 = vunpack.c.l.bf16 %v319
      %v360 = vunpack.c.l.bf16 %v320
      %v361 = vunpack.c.l.bf16 %v321
      %v362 = vunpack.c.l.bf16 %v322
      %v363 = vunpack.c.l.bf16 %v323
      %v364 = vunpack.c.l.bf16 %v324
      %v365 = vunpack.c.l.bf16 %v325
      %v366 = vunpack.c.l.bf16 %v326
      %v367 = vunpack.c.l.bf16 %v327
      %v368 = vunpack.c.l.bf16 %v328
      %v369 = vmax.f32 %v329, %v349
      %v370 = vmax.f32 %v330, %v350
      %v371 = vmax.f32 %v331, %v351
      %v372 = vmax.f32 %v332, %v352
      %v373 = vmax.f32 %v333, %v353
      %v374 = vmax.f32 %v334, %v354
      %v375 = vmax.f32 %v335, %v355
      %v376 = vmax.f32 %v336, %v356
      %v377 = vmax.f32 %v337, %v357
      %v378 = vmax.f32 %v338, %v358
      %v379 = vmax.f32 %v339, %v359
      %v380 = vmax.f32 %v340, %v360
      %v381 = vmax.f32 %v341, %v361
      %v382 = vmax.f32 %v342, %v362
      %v383 = vmax.f32 %v343, %v363
      %v384 = vmax.f32 %v344, %v364
      %v385 = vmax.f32 %v345, %v365
      %v386 = vmax.f32 %v346, %v366
      %v387 = vmax.f32 %v347, %v367
      %v388 = vmax.f32 %v348, %v368
      %v389 = vpack.c.bf16 %v369, %v369
      %v390 = vpack.c.bf16 %v370, %v370
      %v391 = vpack.c.bf16 %v371, %v371
      %v392 = vpack.c.bf16 %v372, %v372
      %v393 = vpack.c.bf16 %v373, %v373
      %v394 = vpack.c.bf16 %v374, %v374
      %v395 = vpack.c.bf16 %v375, %v375
      %v396 = vpack.c.bf16 %v376, %v376
      %v397 = vpack.c.bf16 %v377, %v377
      %v398 = vpack.c.bf16 %v378, %v378
      %v399 = vpack.c.bf16 %v379, %v379
      %v400 = vpack.c.bf16 %v380, %v380
      %v401 = vpack.c.bf16 %v381, %v381
      %v402 = vpack.c.bf16 %v382, %v382
      %v403 = vpack.c.bf16 %v383, %v383
      %v404 = vpack.c.bf16 %v384, %v384
      %v405 = vpack.c.bf16 %v385, %v385
      %v406 = vpack.c.bf16 %v386, %v386
      %v407 = vpack.c.bf16 %v387, %v387
      %v408 = vpack.c.bf16 %v388, %v388
      %v409 = vld [vmem:[%s278] sm:$0xf]
      %v410 = vld [vmem:[%s278 + $0x4] sm:$0x1]
      %v411 = vld [vmem:[%s278 + $0x8] sm:$0xf]
      %v412 = vld [vmem:[%s278 + $0xc] sm:$0x1]
      %v413 = vld [vmem:[%s278 + $0x10] sm:$0xf]
      %v414 = vld [vmem:[%s278 + $0x14] sm:$0x1]
      %v415 = vld [vmem:[%s278 + $0x18] sm:$0xf]
      %v416 = vld [vmem:[%s278 + $0x1c] sm:$0x1]
      %v417 = vld [vmem:[%s278 + $0x20] sm:$0xf]
      %v418 = vld [vmem:[%s278 + $0x24] sm:$0x1]
      %v419 = vld [vmem:[%s278 + $0x28] sm:$0xf]
      %v420 = vld [vmem:[%s278 + $0x2c] sm:$0x1]
      %v421 = vld [vmem:[%s278 + $0x30] sm:$0xf]
      %v422 = vld [vmem:[%s278 + $0x34] sm:$0x1]
      %v423 = vld [vmem:[%s278 + $0x38] sm:$0xf]
      %v424 = vld [vmem:[%s278 + $0x3c] sm:$0x1]
      %v425 = vld [vmem:[%s278 + $0x40] sm:$0xf]
      %v426 = vld [vmem:[%s278 + $0x44] sm:$0x1]
      %v427 = vld [vmem:[%s278 + $0x48] sm:$0xf]
      %v428 = vld [vmem:[%s278 + $0x4c] sm:$0x1]
      %v429 = vunpack.c.l.bf16 %v389
      %v430 = vunpack.c.l.bf16 %v390
      %v431 = vunpack.c.l.bf16 %v391
      %v432 = vunpack.c.l.bf16 %v392
      %v433 = vunpack.c.l.bf16 %v393
      %v434 = vunpack.c.l.bf16 %v394
      %v435 = vunpack.c.l.bf16 %v395
      %v436 = vunpack.c.l.bf16 %v396
      %v437 = vunpack.c.l.bf16 %v397
      %v438 = vunpack.c.l.bf16 %v398
      %v439 = vunpack.c.l.bf16 %v399
      %v440 = vunpack.c.l.bf16 %v400
      %v441 = vunpack.c.l.bf16 %v401
      %v442 = vunpack.c.l.bf16 %v402
      %v443 = vunpack.c.l.bf16 %v403
      %v444 = vunpack.c.l.bf16 %v404
      %v445 = vunpack.c.l.bf16 %v405
      %v446 = vunpack.c.l.bf16 %v406
      %v447 = vunpack.c.l.bf16 %v407
      %v448 = vunpack.c.l.bf16 %v408
      %v449 = vunpack.c.l.bf16 %v409
      %v450 = vunpack.c.l.bf16 %v410
      %v451 = vunpack.c.l.bf16 %v411
      %v452 = vunpack.c.l.bf16 %v412
      %v453 = vunpack.c.l.bf16 %v413
      %v454 = vunpack.c.l.bf16 %v414
      %v455 = vunpack.c.l.bf16 %v415
      %v456 = vunpack.c.l.bf16 %v416
      %v457 = vunpack.c.l.bf16 %v417
      %v458 = vunpack.c.l.bf16 %v418
      %v459 = vunpack.c.l.bf16 %v419
      %v460 = vunpack.c.l.bf16 %v420
      %v461 = vunpack.c.l.bf16 %v421
      %v462 = vunpack.c.l.bf16 %v422
      %v463 = vunpack.c.l.bf16 %v423
      %v464 = vunpack.c.l.bf16 %v424
      %v465 = vunpack.c.l.bf16 %v425
      %v466 = vunpack.c.l.bf16 %v426
      %v467 = vunpack.c.l.bf16 %v427
      %v468 = vunpack.c.l.bf16 %v428
      %v469 = vmax.f32 %v429, %v449
      %v470 = vmax.f32 %v430, %v450
      %v471 = vmax.f32 %v431, %v451
      %v472 = vmax.f32 %v432, %v452
      %v473 = vmax.f32 %v433, %v453
      %v474 = vmax.f32 %v434, %v454
      %v475 = vmax.f32 %v435, %v455
      %v476 = vmax.f32 %v436, %v456
      %v477 = vmax.f32 %v437, %v457
      %v478 = vmax.f32 %v438, %v458
      %v479 = vmax.f32 %v439, %v459
      %v480 = vmax.f32 %v440, %v460
      %v481 = vmax.f32 %v441, %v461
      %v482 = vmax.f32 %v442, %v462
      %v483 = vmax.f32 %v443, %v463
      %v484 = vmax.f32 %v444, %v464
      %v485 = vmax.f32 %v445, %v465
      %v486 = vmax.f32 %v446, %v466
      %v487 = vmax.f32 %v447, %v467
      %v488 = vmax.f32 %v448, %v468
      %v489 = vpack.c.bf16 %v469, %v469
      %v490 = vpack.c.bf16 %v470, %v470
      %v491 = vpack.c.bf16 %v471, %v471
      %v492 = vpack.c.bf16 %v472, %v472
      %v493 = vpack.c.bf16 %v473, %v473
      %v494 = vpack.c.bf16 %v474, %v474
      %v495 = vpack.c.bf16 %v475, %v475
      %v496 = vpack.c.bf16 %v476, %v476
      %v497 = vpack.c.bf16 %v477, %v477
      %v498 = vpack.c.bf16 %v478, %v478
      %v499 = vpack.c.bf16 %v479, %v479
      %v500 = vpack.c.bf16 %v480, %v480
      %v501 = vpack.c.bf16 %v481, %v481
      %v502 = vpack.c.bf16 %v482, %v482
      %v503 = vpack.c.bf16 %v483, %v483
      %v504 = vpack.c.bf16 %v484, %v484
      %v505 = vpack.c.bf16 %v485, %v485
      %v506 = vpack.c.bf16 %v486, %v486
      %v507 = vpack.c.bf16 %v487, %v487
      %v508 = vpack.c.bf16 %v488, %v488
      %v509 = vunpack.c.l.bf16 %v489
      %v510 = vunpack.c.l.bf16 %v491
      %v511 = vunpack.c.l.bf16 %v493
      %v512 = vunpack.c.l.bf16 %v495
      %v513 = vunpack.c.l.bf16 %v497
      %v514 = vunpack.c.l.bf16 %v499
      %v515 = vunpack.c.l.bf16 %v501
      %v516 = vunpack.c.l.bf16 %v503
      %v517 = vunpack.c.l.bf16 %v505
      %v518 = vunpack.c.l.bf16 %v507
      %v519 = vunpack.c.l.bf16 %v490
      %v520 = vunpack.c.l.bf16 %v492
      %v521 = vunpack.c.l.bf16 %v494
      %v522 = vunpack.c.l.bf16 %v496
      %v523 = vunpack.c.l.bf16 %v498
      %v524 = vunpack.c.l.bf16 %v500
      %v525 = vunpack.c.l.bf16 %v502
      %v526 = vunpack.c.l.bf16 %v504
      %v527 = vunpack.c.l.bf16 %v506
      %v528 = vunpack.c.l.bf16 %v508
      %vm549 = vcmask 1046528
      %v550 = vrot.slane %v509, 1
      %v551 = vrot.slane %v519, 1
      %v552 = vsel %vm549, %v550, %v551
      %v553 = vrot.slane %v510, 1
      %v554 = vrot.slane %v520, 1
      %v555 = vsel %vm549, %v553, %v554
      %v556 = vrot.slane %v511, 1
      %v557 = vrot.slane %v521, 1
      %v558 = vsel %vm549, %v556, %v557
      %v559 = vrot.slane %v512, 1
      %v560 = vrot.slane %v522, 1
      %v561 = vsel %vm549, %v559, %v560
      %v562 = vrot.slane %v513, 1
      %v563 = vrot.slane %v523, 1
      %v564 = vsel %vm549, %v562, %v563
      %v565 = vrot.slane %v514, 1
      %v566 = vrot.slane %v524, 1
      %v567 = vsel %vm549, %v565, %v566
      %v568 = vrot.slane %v515, 1
      %v569 = vrot.slane %v525, 1
      %v570 = vsel %vm549, %v568, %v569
      %v571 = vrot.slane %v516, 1
      %v572 = vrot.slane %v526, 1
      %v573 = vsel %vm549, %v571, %v572
      %v574 = vrot.slane %v517, 1
      %v575 = vrot.slane %v527, 1
      %v576 = vsel %vm549, %v574, %v575
      %v577 = vrot.slane %v518, 1
      %v578 = vrot.slane %v528, 1
      %v579 = vsel %vm549, %v577, %v578
      %v590 = vmax.f32 %v509, %v552
      %v591 = vmax.f32 %v510, %v555
      %v592 = vmax.f32 %v511, %v558
      %v593 = vmax.f32 %v512, %v561
      %v594 = vmax.f32 %v513, %v564
      %v595 = vmax.f32 %v514, %v567
      %v596 = vmax.f32 %v515, %v570
      %v597 = vmax.f32 %v516, %v573
      %v598 = vmax.f32 %v517, %v576
      %v599 = vmax.f32 %v518, %v579
      %v600 = vpack.c.bf16 %v590, %v590
      %v601 = vpack.c.bf16 %v591, %v591
      %v602 = vpack.c.bf16 %v592, %v592
      %v603 = vpack.c.bf16 %v593, %v593
      %v604 = vpack.c.bf16 %v594, %v594
      %v605 = vpack.c.bf16 %v595, %v595
      %v606 = vpack.c.bf16 %v596, %v596
      %v607 = vpack.c.bf16 %v597, %v597
      %v608 = vpack.c.bf16 %v598, %v598
      %v609 = vpack.c.bf16 %v599, %v599
      %v610 = vunpack.c.l.bf16 %v600
      %v611 = vunpack.c.l.bf16 %v601
      %v612 = vunpack.c.l.bf16 %v602
      %v613 = vunpack.c.l.bf16 %v603
      %v614 = vunpack.c.l.bf16 %v604
      %v615 = vunpack.c.l.bf16 %v605
      %v616 = vunpack.c.l.bf16 %v606
      %v617 = vunpack.c.l.bf16 %v607
      %v618 = vunpack.c.l.bf16 %v608
      %v619 = vunpack.c.l.bf16 %v609
      %vm620 = vcmask 1045504
      %v621 = vrot.slane %v509, 2
      %v622 = vrot.slane %v519, 2
      %v623 = vsel %vm620, %v621, %v622
      %v624 = vrot.slane %v510, 2
      %v625 = vrot.slane %v520, 2
      %v626 = vsel %vm620, %v624, %v625
      %v627 = vrot.slane %v511, 2
      %v628 = vrot.slane %v521, 2
      %v629 = vsel %vm620, %v627, %v628
      %v630 = vrot.slane %v512, 2
      %v631 = vrot.slane %v522, 2
      %v632 = vsel %vm620, %v630, %v631
      %v633 = vrot.slane %v513, 2
      %v634 = vrot.slane %v523, 2
      %v635 = vsel %vm620, %v633, %v634
      %v636 = vrot.slane %v514, 2
      %v637 = vrot.slane %v524, 2
      %v638 = vsel %vm620, %v636, %v637
      %v639 = vrot.slane %v515, 2
      %v640 = vrot.slane %v525, 2
      %v641 = vsel %vm620, %v639, %v640
      %v642 = vrot.slane %v516, 2
      %v643 = vrot.slane %v526, 2
      %v644 = vsel %vm620, %v642, %v643
      %v645 = vrot.slane %v517, 2
      %v646 = vrot.slane %v527, 2
      %v647 = vsel %vm620, %v645, %v646
      %v648 = vrot.slane %v518, 2
      %v649 = vrot.slane %v528, 2
      %v650 = vsel %vm620, %v648, %v649
      %v661 = vmax.f32 %v610, %v623
      %v662 = vmax.f32 %v611, %v626
      %v663 = vmax.f32 %v612, %v629
      %v664 = vmax.f32 %v613, %v632
      %v665 = vmax.f32 %v614, %v635
      %v666 = vmax.f32 %v615, %v638
      %v667 = vmax.f32 %v616, %v641
      %v668 = vmax.f32 %v617, %v644
      %v669 = vmax.f32 %v618, %v647
      %v670 = vmax.f32 %v619, %v650
      %v671 = vpack.c.bf16 %v661, %v661
      %v672 = vpack.c.bf16 %v662, %v662
      %v673 = vpack.c.bf16 %v663, %v663
      %v674 = vpack.c.bf16 %v664, %v664
      %v675 = vpack.c.bf16 %v665, %v665
      %v676 = vpack.c.bf16 %v666, %v666
      %v677 = vpack.c.bf16 %v667, %v667
      %v678 = vpack.c.bf16 %v668, %v668
      %v679 = vpack.c.bf16 %v669, %v669
      %v680 = vpack.c.bf16 %v670, %v670
      %v681 = vunpack.c.l.bf16 %v671
      %v682 = vunpack.c.l.bf16 %v672
      %v683 = vunpack.c.l.bf16 %v673
      %v684 = vunpack.c.l.bf16 %v674
      %v685 = vunpack.c.l.bf16 %v675
      %v686 = vunpack.c.l.bf16 %v676
      %v687 = vunpack.c.l.bf16 %v677
      %v688 = vunpack.c.l.bf16 %v678
      %v689 = vunpack.c.l.bf16 %v679
      %v690 = vmax.f32 %v681, %v682
      %v691 = vmax.f32 %v682, %v683
      %v692 = vmax.f32 %v683, %v684
      %v693 = vmax.f32 %v684, %v685
      %v694 = vmax.f32 %v685, %v686
      %v695 = vmax.f32 %v686, %v687
      %v696 = vmax.f32 %v687, %v688
      %v697 = vmax.f32 %v688, %v689
      %v698 = vpack.c.bf16 %v690, %v690
      %v699 = vpack.c.bf16 %v691, %v691
      %v700 = vpack.c.bf16 %v692, %v692
      %v701 = vpack.c.bf16 %v693, %v693
      %v702 = vpack.c.bf16 %v694, %v694
      %v703 = vpack.c.bf16 %v695, %v695
      %v704 = vpack.c.bf16 %v696, %v696
      %v705 = vpack.c.bf16 %v697, %v697
      %v706 = vunpack.c.l.bf16 %v698
      %v707 = vunpack.c.l.bf16 %v699
      %v708 = vunpack.c.l.bf16 %v700
      %v709 = vunpack.c.l.bf16 %v701
      %v710 = vunpack.c.l.bf16 %v702
      %v711 = vunpack.c.l.bf16 %v703
      %v712 = vunpack.c.l.bf16 %v704
      %v713 = vunpack.c.l.bf16 %v705
      %v714 = vunpack.c.l.bf16 %v680
      %v715 = vmax.f32 %v706, %v683
      %v716 = vmax.f32 %v707, %v684
      %v717 = vmax.f32 %v708, %v685
      %v718 = vmax.f32 %v709, %v686
      %v719 = vmax.f32 %v710, %v687
      %v720 = vmax.f32 %v711, %v688
      %v721 = vmax.f32 %v712, %v689
      %v722 = vmax.f32 %v713, %v714
      %v723 = vpack.c.bf16 %v715, %v715
      %v724 = vpack.c.bf16 %v716, %v716
      %v725 = vpack.c.bf16 %v717, %v717
      %v726 = vpack.c.bf16 %v718, %v718
      %v727 = vpack.c.bf16 %v719, %v719
      %v728 = vpack.c.bf16 %v720, %v720
      %v729 = vpack.c.bf16 %v721, %v721
      %v730 = vpack.c.bf16 %v722, %v722
      %vm731 = vcmask 125952
      %732 = vst.msk [vmem:[%s288] sm:$0xf] %vm731, %v723
      %733 = vst.msk [vmem:[%s288 + $0x4] sm:$0xf] %vm731, %v724
      %734 = vst.msk [vmem:[%s288 + $0x8] sm:$0xf] %vm731, %v725
      %735 = vst.msk [vmem:[%s288 + $0xc] sm:$0xf] %vm731, %v726
      %736 = vst.msk [vmem:[%s288 + $0x10] sm:$0xf] %vm731, %v727
      %737 = vst.msk [vmem:[%s288 + $0x14] sm:$0xf] %vm731, %v728
      %738 = vst.msk [vmem:[%s288 + $0x18] sm:$0xf] %vm731, %v729
      %739 = vst.msk [vmem:[%s288 + $0x1c] sm:$0xf] %vm731, %v730
      %p740 = scmp.lt.s32.totalorder %s18, 1
      %s741 = scalar_select %p740, %s18, 1
      %p742 = scmp.lt.s32.totalorder %s19, 3
      %s743 = scalar_select %p742, %s19, 3
      %s744 = smul.addr %s743, 8
      %s745 = smul.addr %s741, 32
      %s746 = sadd.s32 %s744, %s745
      %s747 = smul.addr %s746, 4
      %s748 = scalar_lea.vmem %s3, %s747
      // Predicated region
      $region33: #{_lambda_.12} parent=31 // pred_check
        %p749 = pneg %p134
      $region34: #{_lambda_.12} parent=31 // pred_check_branch
        %751 = sbr.rel (%p749) target = $region36
      $region35: #{_lambda_.12} parent=31 // pred_region
        _
      $region36: #{_lambda_.12} parent=31 // pred_fallthru
        _
    $region32: #{_lambda_.12} parent=5 // pred_fallthru
      _
    %p752 = scmp.le.s32.totalorder 2, %s9
    // Predicated region
    $region37: #{_lambda_.12} parent=5 // pred_check
      %p753 = pneg %p752
    $region38: #{_lambda_.12} parent=5 // pred_check_branch
      %755 = sbr.rel (%p753) target = $region40
    $region39: #{_lambda_.12} parent=5 // pred_region
      %s756 = ssub.s32 %s9, 2
      // Predicated region
      $region41: #{_lambda_.12} parent=39 // pred_check
        %p757 = pneg %p140
      $region42: #{_lambda_.12} parent=39 // pred_check_branch
        %759 = sbr.rel (%p757) target = $region44
      $region43: #{_lambda_.12} parent=39 // pred_region
        %p760 = scmp.lt.s32.totalorder %s20, 1
        %s761 = scalar_select %p760, %s20, 1
        %p762 = scmp.lt.s32.totalorder %s21, 3
        %s763 = scalar_select %p762, %s21, 3
        %s764 = smul.addr %s763, 8
        %s765 = smul.addr %s761, 32
        %s766 = sadd.s32 %s764, %s765
        %s767 = smul.addr %s766, 4
        %s768 = scalar_lea.vmem %s3, %s767
      $region44: #{_lambda_.12} parent=39 // pred_fallthru
        _
    $region40: #{_lambda_.12} parent=5 // pred_fallthru
      _
  $region6: #{_lambda_.12} parent=0 // loop_footer
    %s13 = sadd.s32 1, %s9
  $region7: #{_lambda_.12} parent=0 // loop_footer_branch
    %8 = sbr.rel target = $region3
  $region8: #{_lambda_.12} parent=0 // loop_exit
    _

// kernel: _lambda_.13
$region0: #{_lambda_.13}
  #allocation0 [shape = 'u32[]', space=smem, size = 0x4, offset = 0x4, fixed_abs, tag = 'smem constant byte address 0x4 - core index']
  #allocation1 [shape = 'u32[72,128]{1,0:T(1,128)}', space=vmem, size = 0x9000, scoped, tag = 'internal scratch']
  %s0 = inlined_call_operand.vmem [shape: bf16[512,16], index: 0, kind: input, shape index: {}]
  %s1 = inlined_call_operand.vmem [shape: bf16[16,128], index: 1, kind: input, shape index: {}]
  %s2 = inlined_call_operand.vmem [shape: f32[1,128], index: 2, kind: input, shape index: {}]
  %s3 = inlined_call_operand.vmem [shape: f32[512,128], index: 3, kind: output, shape index: {}]
  %s4 = sld [smem:[#allocation0]]
  $region22: #{_lambda_.13} parent=0
    _
  %s6 = ssub.s32 1, %s4
  %s7 = scalar_select 0, %s6, %s4
  // Predicated region
  $region2: #{_lambda_.13} parent=0 // pred_check
    _
  $region3: #{_lambda_.13} parent=0 // pred_check_branch
    %9 = sbr.rel (0) target = $region5
  $region4: #{_lambda_.13} parent=0 // pred_region
    _
  $region5: #{_lambda_.13} parent=0 // pred_fallthru
    _
  // Predicated region
  $region6: #{_lambda_.13} parent=0 // pred_check
    _
  $region7: #{_lambda_.13} parent=0 // pred_check_branch
    %11 = sbr.rel (0) target = $region9
  $region8: #{_lambda_.13} parent=0 // pred_region
    _
  $region9: #{_lambda_.13} parent=0 // pred_fallthru
    _
  // Predicated region
  $region10: #{_lambda_.13} parent=0 // pred_check
    _
  $region11: #{_lambda_.13} parent=0 // pred_check_branch
    %13 = sbr.rel (0) target = $region13
  $region12: #{_lambda_.13} parent=0 // pred_region
    _
  $region13: #{_lambda_.13} parent=0 // pred_fallthru
    _
  %v15 = vld [vmem:[%s0] sm:$0xf]
  %v16 = vld [vmem:[%s0 + $0x4] sm:$0xf]
  %v17 = vld [vmem:[%s0 + $0x8] sm:$0xf]
  %v18 = vld [vmem:[%s0 + $0xc] sm:$0xf]
  %v19 = vld [vmem:[%s0 + $0x10] sm:$0xf]
  %v20 = vld [vmem:[%s0 + $0x14] sm:$0xf]
  %v21 = vld [vmem:[%s0 + $0x18] sm:$0xf]
  %v22 = vld [vmem:[%s0 + $0x1c] sm:$0xf]
  %v23 = vld [vmem:[%s0 + $0x20] sm:$0xf]
  %v24 = vld [vmem:[%s0 + $0x24] sm:$0xf]
  %v25 = vld [vmem:[%s0 + $0x28] sm:$0xf]
  %v26 = vld [vmem:[%s0 + $0x2c] sm:$0xf]
  %v27 = vld [vmem:[%s0 + $0x30] sm:$0xf]
  %v28 = vld [vmem:[%s0 + $0x34] sm:$0xf]
  %v29 = vld [vmem:[%s0 + $0x38] sm:$0xf]
  %v30 = vld [vmem:[%s0 + $0x3c] sm:$0xf]
  %v31 = vld [vmem:[%s0 + $0x40] sm:$0xf]
  %v32 = vld [vmem:[%s0 + $0x44] sm:$0xf]
  %v33 = vld [vmem:[%s0 + $0x48] sm:$0xf]
  %v34 = vld [vmem:[%s0 + $0x4c] sm:$0xf]
  %v35 = vld [vmem:[%s0 + $0x50] sm:$0xf]
  %v36 = vld [vmem:[%s0 + $0x54] sm:$0xf]
  %v37 = vld [vmem:[%s0 + $0x58] sm:$0xf]
  %v38 = vld [vmem:[%s0 + $0x5c] sm:$0xf]
  %v39 = vld [vmem:[%s0 + $0x60] sm:$0xf]
  %v40 = vld [vmem:[%s0 + $0x64] sm:$0xf]
  %v41 = vld [vmem:[%s0 + $0x68] sm:$0xf]
  %v42 = vld [vmem:[%s0 + $0x6c] sm:$0xf]
  %v43 = vld [vmem:[%s0 + $0x70] sm:$0xf]
  %v44 = vld [vmem:[%s0 + $0x74] sm:$0xf]
  %v45 = vld [vmem:[%s0 + $0x78] sm:$0xf]
  %v46 = vld [vmem:[%s0 + $0x7c] sm:$0xf]
  %v47 = vld [vmem:[%s0 + $0x80] sm:$0xf]
  %v48 = vld [vmem:[%s0 + $0x84] sm:$0xf]
  %v49 = vld [vmem:[%s0 + $0x88] sm:$0xf]
  %v50 = vld [vmem:[%s0 + $0x8c] sm:$0xf]
  %v51 = vld [vmem:[%s0 + $0x90] sm:$0xf]
  %v52 = vld [vmem:[%s0 + $0x94] sm:$0xf]
  %v53 = vld [vmem:[%s0 + $0x98] sm:$0xf]
  %v54 = vld [vmem:[%s0 + $0x9c] sm:$0xf]
  %v55 = vld [vmem:[%s0 + $0xa0] sm:$0xf]
  %v56 = vld [vmem:[%s0 + $0xa4] sm:$0xf]
  %v57 = vld [vmem:[%s0 + $0xa8] sm:$0xf]
  %v58 = vld [vmem:[%s0 + $0xac] sm:$0xf]
  %v59 = vld [vmem:[%s0 + $0xb0] sm:$0xf]
  %v60 = vld [vmem:[%s0 + $0xb4] sm:$0xf]
  %v61 = vld [vmem:[%s0 + $0xb8] sm:$0xf]
  %v62 = vld [vmem:[%s0 + $0xbc] sm:$0xf]
  %v63 = vld [vmem:[%s0 + $0xc0] sm:$0xf]
  %v64 = vld [vmem:[%s0 + $0xc4] sm:$0xf]
  %v65 = vld [vmem:[%s0 + $0xc8] sm:$0xf]
  %v66 = vld [vmem:[%s0 + $0xcc] sm:$0xf]
  %v67 = vld [vmem:[%s0 + $0xd0] sm:$0xf]
  %v68 = vld [vmem:[%s0 + $0xd4] sm:$0xf]
  %v69 = vld [vmem:[%s0 + $0xd8] sm:$0xf]
  %v70 = vld [vmem:[%s0 + $0xdc] sm:$0xf]
  %v71 = vld [vmem:[%s0 + $0xe0] sm:$0xf]
  %v72 = vld [vmem:[%s0 + $0xe4] sm:$0xf]
  %v73 = vld [vmem:[%s0 + $0xe8] sm:$0xf]
  %v74 = vld [vmem:[%s0 + $0xec] sm:$0xf]
  %v75 = vld [vmem:[%s0 + $0xf0] sm:$0xf]
  %v76 = vld [vmem:[%s0 + $0xf4] sm:$0xf]
  %v77 = vld [vmem:[%s0 + $0xf8] sm:$0xf]
  %v78 = vld [vmem:[%s0 + $0xfc] sm:$0xf]
  %v79 = vld [vmem:[%s1] sm:$0xf]
  %v80 = vld [vmem:[%s1 + $0x4] sm:$0xf]
  %v81 = vld [vmem:[%s2] sm:$0x1]
  %v83 = vperm.slane %v81, 0
  %v149 = vunpack.c.l.b16 %v15
  %v150 = vunpack.c.l.b16 %v16
  %v151 = vunpack.c.l.b16 %v17
  %v152 = vunpack.c.l.b16 %v18
  %v153 = vunpack.c.l.b16 %v19
  %v154 = vunpack.c.l.b16 %v20
  %v155 = vunpack.c.l.b16 %v21
  %v156 = vunpack.c.l.b16 %v22
  %v157 = vunpack.c.l.b16 %v23
  %v158 = vunpack.c.l.b16 %v24
  %v159 = vunpack.c.l.b16 %v25
  %v160 = vunpack.c.l.b16 %v26
  %v161 = vunpack.c.l.b16 %v27
  %v162 = vunpack.c.l.b16 %v28
  %v163 = vunpack.c.l.b16 %v29
  %v164 = vunpack.c.l.b16 %v30
  %v165 = vunpack.c.l.b16 %v31
  %v166 = vunpack.c.l.b16 %v32
  %v167 = vunpack.c.l.b16 %v33
  %v168 = vunpack.c.l.b16 %v34
  %v169 = vunpack.c.l.b16 %v35
  %v170 = vunpack.c.l.b16 %v36
  %v171 = vunpack.c.l.b16 %v37
  %v172 = vunpack.c.l.b16 %v38
  %v173 = vunpack.c.l.b16 %v39
  %v174 = vunpack.c.l.b16 %v40
  %v175 = vunpack.c.l.b16 %v41
  %v176 = vunpack.c.l.b16 %v42
  %v177 = vunpack.c.l.b16 %v43
  %v178 = vunpack.c.l.b16 %v44
  %v179 = vunpack.c.l.b16 %v45
  %v180 = vunpack.c.l.b16 %v46
  %v181 = vunpack.c.l.b16 %v47
  %v182 = vunpack.c.l.b16 %v48
  %v183 = vunpack.c.l.b16 %v49
  %v184 = vunpack.c.l.b16 %v50
  %v185 = vunpack.c.l.b16 %v51
  %v186 = vunpack.c.l.b16 %v52
  %v187 = vunpack.c.l.b16 %v53
  %v188 = vunpack.c.l.b16 %v54
  %v189 = vunpack.c.l.b16 %v55
  %v190 = vunpack.c.l.b16 %v56
  %v191 = vunpack.c.l.b16 %v57
  %v192 = vunpack.c.l.b16 %v58
  %v193 = vunpack.c.l.b16 %v59
  %v194 = vunpack.c.l.b16 %v60
  %v195 = vunpack.c.l.b16 %v61
  %v196 = vunpack.c.l.b16 %v62
  %v197 = vunpack.c.l.b16 %v63
  %v198 = vunpack.c.l.b16 %v64
  %v199 = vunpack.c.l.b16 %v65
  %v200 = vunpack.c.l.b16 %v66
  %v201 = vunpack.c.l.b16 %v67
  %v202 = vunpack.c.l.b16 %v68
  %v203 = vunpack.c.l.b16 %v69
  %v204 = vunpack.c.l.b16 %v70
  %v205 = vunpack.c.l.b16 %v71
  %v206 = vunpack.c.l.b16 %v72
  %v207 = vunpack.c.l.b16 %v73
  %v208 = vunpack.c.l.b16 %v74
  %v209 = vunpack.c.l.b16 %v75
  %v210 = vunpack.c.l.b16 %v76
  %v211 = vunpack.c.l.b16 %v77
  %v212 = vunpack.c.l.b16 %v78
  %v213 = vpack.c.b16 %v150, %v149
  %v214 = vpack.c.b16 %v152, %v151
  %v215 = vpack.c.b16 %v154, %v153
  %v216 = vpack.c.b16 %v156, %v155
  %v217 = vpack.c.b16 %v158, %v157
  %v218 = vpack.c.b16 %v160, %v159
  %v219 = vpack.c.b16 %v162, %v161
  %v220 = vpack.c.b16 %v164, %v163
  %v221 = vpack.c.b16 %v166, %v165
  %v222 = vpack.c.b16 %v168, %v167
  %v223 = vpack.c.b16 %v170, %v169
  %v224 = vpack.c.b16 %v172, %v171
  %v225 = vpack.c.b16 %v174, %v173
  %v226 = vpack.c.b16 %v176, %v175
  %v227 = vpack.c.b16 %v178, %v177
  %v228 = vpack.c.b16 %v180, %v179
  %v229 = vpack.c.b16 %v182, %v181
  %v230 = vpack.c.b16 %v184, %v183
  %v231 = vpack.c.b16 %v186, %v185
  %v232 = vpack.c.b16 %v188, %v187
  %v233 = vpack.c.b16 %v190, %v189
  %v234 = vpack.c.b16 %v192, %v191
  %v235 = vpack.c.b16 %v194, %v193
  %v236 = vpack.c.b16 %v196, %v195
  %v237 = vpack.c.b16 %v198, %v197
  %v238 = vpack.c.b16 %v200, %v199
  %v239 = vpack.c.b16 %v202, %v201
  %v240 = vpack.c.b16 %v204, %v203
  %v241 = vpack.c.b16 %v206, %v205
  %v242 = vpack.c.b16 %v208, %v207
  %v243 = vpack.c.b16 %v210, %v209
  %v244 = vpack.c.b16 %v212, %v211
  %v247 = vunpack.c.l.b16 %v79
  %v248 = vunpack.c.l.b16 %v80
  %v249 = vpack.c.b16 %v248, %v247
  %vm251 = vcmask 130048
  %v253 = vsel %vm251, %v213, 0
  %v256 = vsel %vm251, %v214, 0
  %v259 = vsel %vm251, %v215, 0
  %v262 = vsel %vm251, %v216, 0
  %v265 = vsel %vm251, %v217, 0
  %v268 = vsel %vm251, %v218, 0
  %v271 = vsel %vm251, %v219, 0
  %v274 = vsel %vm251, %v220, 0
  %v277 = vsel %vm251, %v221, 0
  %v280 = vsel %vm251, %v222, 0
  %v283 = vsel %vm251, %v223, 0
  %v286 = vsel %vm251, %v224, 0
  %v289 = vsel %vm251, %v225, 0
  %v292 = vsel %vm251, %v226, 0
  %v295 = vsel %vm251, %v227, 0
  %v298 = vsel %vm251, %v228, 0
  %v301 = vsel %vm251, %v229, 0
  %v304 = vsel %vm251, %v230, 0
  %v307 = vsel %vm251, %v231, 0
  %v310 = vsel %vm251, %v232, 0
  %v313 = vsel %vm251, %v233, 0
  %v316 = vsel %vm251, %v234, 0
  %v319 = vsel %vm251, %v235, 0
  %v322 = vsel %vm251, %v236, 0
  %v325 = vsel %vm251, %v237, 0
  %v328 = vsel %vm251, %v238, 0
  %v331 = vsel %vm251, %v239, 0
  %v334 = vsel %vm251, %v240, 0
  %v337 = vsel %vm251, %v241, 0
  %v340 = vsel %vm251, %v242, 0
  %v343 = vsel %vm251, %v243, 0
  %v346 = vsel %vm251, %v244, 0
  %348 = vmatpush.bf16.msra.mxu0 0
  %349 = vmatpush.bf16.msra.mxu0 0
  %350 = vmatpush.bf16.msra.mxu0 0
  %351 = vmatpush.bf16.msra.mxu0 0
  %352 = vmatpush.bf16.msra.mxu0 0
  %353 = vmatpush.bf16.msra.mxu0 0
  %354 = vmatpush.bf16.msra.mxu0 0
  %355 = vmatpush.bf16.msra.mxu0 %v249
  %356 = vmatmul.bf16.gmra.mxu0 %v253
  %v357 = vpop.f32.mrf.mxu0
  %v358 = vadd.f32 %v83, %v357
  %v359 = vpop.f32.mrf.mxu0
  %v360 = vadd.f32 %v83, %v359
  %361 = vmatmul.bf16.gmra.mxu0 %v256
  %v362 = vpop.f32.mrf.mxu0
  %v363 = vadd.f32 %v83, %v362
  %v364 = vpop.f32.mrf.mxu0
  %v365 = vadd.f32 %v83, %v364
  %366 = vmatmul.bf16.gmra.mxu0 %v259
  %v367 = vpop.f32.mrf.mxu0
  %v368 = vadd.f32 %v83, %v367
  %v369 = vpop.f32.mrf.mxu0
  %v370 = vadd.f32 %v83, %v369
  %371 = vmatmul.bf16.gmra.mxu0 %v262
  %v372 = vpop.f32.mrf.mxu0
  %v373 = vadd.f32 %v83, %v372
  %v374 = vpop.f32.mrf.mxu0
  %v375 = vadd.f32 %v83, %v374
  %376 = vmatmul.bf16.gmra.mxu0 %v265
  %v377 = vpop.f32.mrf.mxu0
  %v378 = vadd.f32 %v83, %v377
  %v379 = vpop.f32.mrf.mxu0
  %v380 = vadd.f32 %v83, %v379
  %381 = vmatmul.bf16.gmra.mxu0 %v268
  %v382 = vpop.f32.mrf.mxu0
  %v383 = vadd.f32 %v83, %v382
  %v384 = vpop.f32.mrf.mxu0
  %v385 = vadd.f32 %v83, %v384
  %386 = vmatmul.bf16.gmra.mxu0 %v271
  %v387 = vpop.f32.mrf.mxu0
  %v388 = vadd.f32 %v83, %v387
  %v389 = vpop.f32.mrf.mxu0
  %v390 = vadd.f32 %v83, %v389
  %391 = vmatmul.bf16.gmra.mxu0 %v274
  %v392 = vpop.f32.mrf.mxu0
  %v393 = vadd.f32 %v83, %v392
  %v394 = vpop.f32.mrf.mxu0
  %v395 = vadd.f32 %v83, %v394
  %396 = vmatmul.bf16.gmra.mxu0 %v277
  %v397 = vpop.f32.mrf.mxu0
  %v398 = vadd.f32 %v83, %v397
  %v399 = vpop.f32.mrf.mxu0
  %v400 = vadd.f32 %v83, %v399
  %401 = vmatmul.bf16.gmra.mxu0 %v280
  %v402 = vpop.f32.mrf.mxu0
  %v403 = vadd.f32 %v83, %v402
  %v404 = vpop.f32.mrf.mxu0
  %v405 = vadd.f32 %v83, %v404
  %406 = vmatmul.bf16.gmra.mxu0 %v283
  %v407 = vpop.f32.mrf.mxu0
  %v408 = vadd.f32 %v83, %v407
  %v409 = vpop.f32.mrf.mxu0
  %v410 = vadd.f32 %v83, %v409
  %411 = vmatmul.bf16.gmra.mxu0 %v286
  %v412 = vpop.f32.mrf.mxu0
  %v413 = vadd.f32 %v83, %v412
  %v414 = vpop.f32.mrf.mxu0
  %v415 = vadd.f32 %v83, %v414
  %416 = vmatmul.bf16.gmra.mxu0 %v289
  %v417 = vpop.f32.mrf.mxu0
  %v418 = vadd.f32 %v83, %v417
  %v419 = vpop.f32.mrf.mxu0
  %v420 = vadd.f32 %v83, %v419
  %421 = vmatmul.bf16.gmra.mxu0 %v292
  %v422 = vpop.f32.mrf.mxu0
  %v423 = vadd.f32 %v83, %v422
  %v424 = vpop.f32.mrf.mxu0
  %v425 = vadd.f32 %v83, %v424
  %426 = vmatmul.bf16.gmra.mxu0 %v295
  %v427 = vpop.f32.mrf.mxu0
  %v428 = vadd.f32 %v83, %v427
  %v429 = vpop.f32.mrf.mxu0
  %v430 = vadd.f32 %v83, %v429
  %431 = vmatmul.bf16.gmra.mxu0 %v298
  %v432 = vpop.f32.mrf.mxu0
  %v433 = vadd.f32 %v83, %v432
  %v434 = vpop.f32.mrf.mxu0
  %v435 = vadd.f32 %v83, %v434
  %436 = vmatmul.bf16.gmra.mxu0 %v301
  %v437 = vpop.f32.mrf.mxu0
  %v438 = vadd.f32 %v83, %v437
  %v439 = vpop.f32.mrf.mxu0
  %v440 = vadd.f32 %v83, %v439
  %441 = vmatmul.bf16.gmra.mxu0 %v304
  %v442 = vpop.f32.mrf.mxu0
  %v443 = vadd.f32 %v83, %v442
  %v444 = vpop.f32.mrf.mxu0
  %v445 = vadd.f32 %v83, %v444
  %446 = vmatmul.bf16.gmra.mxu0 %v307
  %v447 = vpop.f32.mrf.mxu0
  %v448 = vadd.f32 %v83, %v447
  %v449 = vpop.f32.mrf.mxu0
  %v450 = vadd.f32 %v83, %v449
  %451 = vmatmul.bf16.gmra.mxu0 %v310
  %v452 = vpop.f32.mrf.mxu0
  %v453 = vadd.f32 %v83, %v452
  %v454 = vpop.f32.mrf.mxu0
  %v455 = vadd.f32 %v83, %v454
  %456 = vmatmul.bf16.gmra.mxu0 %v313
  %v457 = vpop.f32.mrf.mxu0
  %v458 = vadd.f32 %v83, %v457
  %v459 = vpop.f32.mrf.mxu0
  %v460 = vadd.f32 %v83, %v459
  %461 = vmatmul.bf16.gmra.mxu0 %v316
  %v462 = vpop.f32.mrf.mxu0
  %v463 = vadd.f32 %v83, %v462
  %v464 = vpop.f32.mrf.mxu0
  %v465 = vadd.f32 %v83, %v464
  %466 = vmatmul.bf16.gmra.mxu0 %v319
  %v467 = vpop.f32.mrf.mxu0
  %v468 = vadd.f32 %v83, %v467
  %v469 = vpop.f32.mrf.mxu0
  %v470 = vadd.f32 %v83, %v469
  %471 = vmatmul.bf16.gmra.mxu0 %v322
  %v472 = vpop.f32.mrf.mxu0
  %v473 = vadd.f32 %v83, %v472
  %v474 = vpop.f32.mrf.mxu0
  %v475 = vadd.f32 %v83, %v474
  %476 = vmatmul.bf16.gmra.mxu0 %v325
  %v477 = vpop.f32.mrf.mxu0
  %v478 = vadd.f32 %v83, %v477
  %v479 = vpop.f32.mrf.mxu0
  %v480 = vadd.f32 %v83, %v479
  %481 = vmatmul.bf16.gmra.mxu0 %v328
  %v482 = vpop.f32.mrf.mxu0
  %v483 = vadd.f32 %v83, %v482
  %v484 = vpop.f32.mrf.mxu0
  %v485 = vadd.f32 %v83, %v484
  %486 = vmatmul.bf16.gmra.mxu0 %v331
  %v487 = vpop.f32.mrf.mxu0
  %v488 = vadd.f32 %v83, %v487
  %v489 = vpop.f32.mrf.mxu0
  %v490 = vadd.f32 %v83, %v489
  %491 = vmatmul.bf16.gmra.mxu0 %v334
  %v492 = vpop.f32.mrf.mxu0
  %v493 = vadd.f32 %v83, %v492
  %v494 = vpop.f32.mrf.mxu0
  %v495 = vadd.f32 %v83, %v494
  %496 = vmatmul.bf16.gmra.mxu0 %v337
  %v497 = vpop.f32.mrf.mxu0
  %v498 = vadd.f32 %v83, %v497
  %v499 = vpop.f32.mrf.mxu0
  %v500 = vadd.f32 %v83, %v499
  %501 = vmatmul.bf16.gmra.mxu0 %v340
  %v502 = vpop.f32.mrf.mxu0
  %v503 = vadd.f32 %v83, %v502
  %v504 = vpop.f32.mrf.mxu0
  %v505 = vadd.f32 %v83, %v504
  %506 = vmatmul.bf16.gmra.mxu0 %v343
  %v507 = vpop.f32.mrf.mxu0
  %v508 = vadd.f32 %v83, %v507
  %v509 = vpop.f32.mrf.mxu0
  %v510 = vadd.f32 %v83, %v509
  %511 = vmatmul.bf16.gmra.mxu0 %v346
  %v512 = vpop.f32.mrf.mxu0
  %v513 = vadd.f32 %v83, %v512
  %v514 = vpop.f32.mrf.mxu0
  %v515 = vadd.f32 %v83, %v514
  %516 = vdwg.mxu0
  %v517 = vmax.f32 %v358, 0.0
  %v518 = vmax.f32 %v360, 0.0
  %v519 = vmax.f32 %v363, 0.0
  %v520 = vmax.f32 %v365, 0.0
  %v521 = vmax.f32 %v368, 0.0
  %v522 = vmax.f32 %v370, 0.0
  %v523 = vmax.f32 %v373, 0.0
  %v524 = vmax.f32 %v375, 0.0
  %v525 = vmax.f32 %v378, 0.0
  %v526 = vmax.f32 %v380, 0.0
  %v527 = vmax.f32 %v383, 0.0
  %v528 = vmax.f32 %v385, 0.0
  %v529 = vmax.f32 %v388, 0.0
  %v530 = vmax.f32 %v390, 0.0
  %v531 = vmax.f32 %v393, 0.0
  %v532 = vmax.f32 %v395, 0.0
  %v533 = vmax.f32 %v398, 0.0
  %v534 = vmax.f32 %v400, 0.0
  %v535 = vmax.f32 %v403, 0.0
  %v536 = vmax.f32 %v405, 0.0
  %v537 = vmax.f32 %v408, 0.0
  %v538 = vmax.f32 %v410, 0.0
  %v539 = vmax.f32 %v413, 0.0
  %v540 = vmax.f32 %v415, 0.0
  %v541 = vmax.f32 %v418, 0.0
  %v542 = vmax.f32 %v420, 0.0
  %v543 = vmax.f32 %v423, 0.0
  %v544 = vmax.f32 %v425, 0.0
  %v545 = vmax.f32 %v428, 0.0
  %v546 = vmax.f32 %v430, 0.0
  %v547 = vmax.f32 %v433, 0.0
  %v548 = vmax.f32 %v435, 0.0
  %v549 = vmax.f32 %v438, 0.0
  %v550 = vmax.f32 %v440, 0.0
  %v551 = vmax.f32 %v443, 0.0
  %v552 = vmax.f32 %v445, 0.0
  %v553 = vmax.f32 %v448, 0.0
  %v554 = vmax.f32 %v450, 0.0
  %v555 = vmax.f32 %v453, 0.0
  %v556 = vmax.f32 %v455, 0.0
  %v557 = vmax.f32 %v458, 0.0
  %v558 = vmax.f32 %v460, 0.0
  %v559 = vmax.f32 %v463, 0.0
  %v560 = vmax.f32 %v465, 0.0
  %v561 = vmax.f32 %v468, 0.0
  %v562 = vmax.f32 %v470, 0.0
  %v563 = vmax.f32 %v473, 0.0
  %v564 = vmax.f32 %v475, 0.0
  %v565 = vmax.f32 %v478, 0.0
  %v566 = vmax.f32 %v480, 0.0
  %v567 = vmax.f32 %v483, 0.0
  %v568 = vmax.f32 %v485, 0.0
  %v569 = vmax.f32 %v488, 0.0
  %v570 = vmax.f32 %v490, 0.0
  %v571 = vmax.f32 %v493, 0.0
  %v572 = vmax.f32 %v495, 0.0
  %v573 = vmax.f32 %v498, 0.0
  %v574 = vmax.f32 %v500, 0.0
  %v575 = vmax.f32 %v503, 0.0
  %v576 = vmax.f32 %v505, 0.0
  %v577 = vmax.f32 %v508, 0.0
  %v578 = vmax.f32 %v510, 0.0
  %v579 = vmax.f32 %v513, 0.0
  %v580 = vmax.f32 %v515, 0.0
  %581 = vst [vmem:[%s3] sm:$0xff] %v517
  %582 = vst [vmem:[%s3 + $0x8] sm:$0xff] %v518
  %583 = vst [vmem:[%s3 + $0x10] sm:$0xff] %v519
  %584 = vst [vmem:[%s3 + $0x18] sm:$0xff] %v520
  %585 = vst [vmem:[%s3 + $0x20] sm:$0xff] %v521
  %586 = vst [vmem:[%s3 + $0x28] sm:$0xff] %v522
  %587 = vst [vmem:[%s3 + $0x30] sm:$0xff] %v523
  %588 = vst [vmem:[%s3 + $0x38] sm:$0xff] %v524
  %589 = vst [vmem:[%s3 + $0x40] sm:$0xff] %v525
  %590 = vst [vmem:[%s3 + $0x48] sm:$0xff] %v526
  %591 = vst [vmem:[%s3 + $0x50] sm:$0xff] %v527
  %592 = vst [vmem:[%s3 + $0x58] sm:$0xff] %v528
  %593 = vst [vmem:[%s3 + $0x60] sm:$0xff] %v529
  %594 = vst [vmem:[%s3 + $0x68] sm:$0xff] %v530
  %595 = vst [vmem:[%s3 + $0x70] sm:$0xff] %v531
  %596 = vst [vmem:[%s3 + $0x78] sm:$0xff] %v532
  %597 = vst [vmem:[%s3 + $0x80] sm:$0xff] %v533
  %598 = vst [vmem:[%s3 + $0x88] sm:$0xff] %v534
  %599 = vst [vmem:[%s3 + $0x90] sm:$0xff] %v535
  %600 = vst [vmem:[%s3 + $0x98] sm:$0xff] %v536
  %601 = vst [vmem:[%s3 + $0xa0] sm:$0xff] %v537
  %602 = vst [vmem:[%s3 + $0xa8] sm:$0xff] %v538
  %603 = vst [vmem:[%s3 + $0xb0] sm:$0xff] %v539
  %604 = vst [vmem:[%s3 + $0xb8] sm:$0xff] %v540
  %605 = vst [vmem:[%s3 + $0xc0] sm:$0xff] %v541
  %606 = vst [vmem:[%s3 + $0xc8] sm:$0xff] %v542
  %607 = vst [vmem:[%s3 + $0xd0] sm:$0xff] %v543
  %608 = vst [vmem:[%s3 + $0xd8] sm:$0xff] %v544
  %609 = vst [vmem:[%s3 + $0xe0] sm:$0xff] %v545
  %610 = vst [vmem:[%s3 + $0xe8] sm:$0xff] %v546
  %611 = vst [vmem:[%s3 + $0xf0] sm:$0xff] %v547
  %612 = vst [vmem:[%s3 + $0xf8] sm:$0xff] %v548
  %613 = vst [vmem:[%s3 + $0x100] sm:$0xff] %v549
  %614 = vst [vmem:[%s3 + $0x108] sm:$0xff] %v550
  %615 = vst [vmem:[%s3 + $0x110] sm:$0xff] %v551
  %616 = vst [vmem:[%s3 + $0x118] sm:$0xff] %v552
  %617 = vst [vmem:[%s3 + $0x120] sm:$0xff] %v553
  %618 = vst [vmem:[%s3 + $0x128] sm:$0xff] %v554
  %619 = vst [vmem:[%s3 + $0x130] sm:$0xff] %v555
  %620 = vst [vmem:[%s3 + $0x138] sm:$0xff] %v556
  %621 = vst [vmem:[%s3 + $0x140] sm:$0xff] %v557
  %622 = vst [vmem:[%s3 + $0x148] sm:$0xff] %v558
  %623 = vst [vmem:[%s3 + $0x150] sm:$0xff] %v559
  %624 = vst [vmem:[%s3 + $0x158] sm:$0xff] %v560
  %625 = vst [vmem:[%s3 + $0x160] sm:$0xff] %v561
  %626 = vst [vmem:[%s3 + $0x168] sm:$0xff] %v562
  %627 = vst [vmem:[%s3 + $0x170] sm:$0xff] %v563
  %628 = vst [vmem:[%s3 + $0x178] sm:$0xff] %v564
  %629 = vst [vmem:[%s3 + $0x180] sm:$0xff] %v565
  %630 = vst [vmem:[%s3 + $0x188] sm:$0xff] %v566
  %631 = vst [vmem:[%s3 + $0x190] sm:$0xff] %v567
  %632 = vst [vmem:[%s3 + $0x198] sm:$0xff] %v568
  %633 = vst [vmem:[%s3 + $0x1a0] sm:$0xff] %v569
  %634 = vst [vmem:[%s3 + $0x1a8] sm:$0xff] %v570
  %635 = vst [vmem:[%s3 + $0x1b0] sm:$0xff] %v571
  %636 = vst [vmem:[%s3 + $0x1b8] sm:$0xff] %v572
  %637 = vst [vmem:[%s3 + $0x1c0] sm:$0xff] %v573
  %638 = vst [vmem:[%s3 + $0x1c8] sm:$0xff] %v574
  %639 = vst [vmem:[%s3 + $0x1d0] sm:$0xff] %v575
  %640 = vst [vmem:[%s3 + $0x1d8] sm:$0xff] %v576
  %641 = vst [vmem:[%s3 + $0x1e0] sm:$0xff] %v577
  %642 = vst [vmem:[%s3 + $0x1e8] sm:$0xff] %v578
  %643 = vst [vmem:[%s3 + $0x1f0] sm:$0xff] %v579
  %644 = vst [vmem:[%s3 + $0x1f8] sm:$0xff] %v580
  // Predicated region
  $region14: #{_lambda_.13} parent=0 // pred_check
    _
  $region15: #{_lambda_.13} parent=0 // pred_check_branch
    %646 = sbr.rel (0) target = $region17
  $region16: #{_lambda_.13} parent=0 // pred_region
    _
  $region17: #{_lambda_.13} parent=0 // pred_fallthru
    _
  // Predicated region
  $region18: #{_lambda_.13} parent=0 // pred_check
    _
  $region19: #{_lambda_.13} parent=0 // pred_check_branch
    %648 = sbr.rel (0) target = $region21
  $region20: #{_lambda_.13} parent=0 // pred_region
    _
  $region21: #{_lambda_.13} parent=0 // pred_fallthru
    _

// kernel: _lambda_.7
$region0: #{_lambda_.7}
  #allocation0 [shape = 'u32[]', space=smem, size = 0x4, offset = 0x4, fixed_abs, tag = 'smem constant byte address 0x4 - core index']
  #allocation1 [shape = 'u32[72,128]{1,0:T(1,128)}', space=vmem, size = 0x9000, scoped, tag = 'internal scratch']
  %s0 = inlined_call_operand.vmem [shape: bf16[512,16], index: 0, kind: input, shape index: {}]
  %s1 = inlined_call_operand.vmem [shape: bf16[16,384], index: 1, kind: input, shape index: {}]
  %s2 = inlined_call_operand.vmem [shape: f32[1,384], index: 2, kind: input, shape index: {}]
  %s3 = inlined_call_operand.vmem [shape: f32[512,128], index: 3, kind: output, shape index: {0}]
  %s4 = inlined_call_operand.vmem [shape: bf16[512,128], index: 4, kind: output, shape index: {1}]
  %s5 = inlined_call_operand.vmem [shape: bf16[512,128], index: 5, kind: output, shape index: {2}]
  %6 = xla_tuple %s3, %s4, %s5
  %s7 = sld [smem:[#allocation0]]
  $region38: #{_lambda_.7} parent=0
    _
  %s9 = ssub.s32 1, %s7
  %s10 = scalar_select 0, %s9, %s7
  // Predicated region
  $region2: #{_lambda_.7} parent=0 // pred_check
    _
  $region3: #{_lambda_.7} parent=0 // pred_check_branch
    %12 = sbr.rel (0) target = $region5
  $region4: #{_lambda_.7} parent=0 // pred_region
    _
  $region5: #{_lambda_.7} parent=0 // pred_fallthru
    _
  // Predicated region
  $region6: #{_lambda_.7} parent=0 // pred_check
    _
  $region7: #{_lambda_.7} parent=0 // pred_check_branch
    %14 = sbr.rel (0) target = $region9
  $region8: #{_lambda_.7} parent=0 // pred_region
    _
  $region9: #{_lambda_.7} parent=0 // pred_fallthru
    _
  // Predicated region
  $region10: #{_lambda_.7} parent=0 // pred_check
    _
  $region11: #{_lambda_.7} parent=0 // pred_check_branch
    %16 = sbr.rel (0) target = $region13
  $region12: #{_lambda_.7} parent=0 // pred_region
    _
  $region13: #{_lambda_.7} parent=0 // pred_fallthru
    _
  %v18 = vld [vmem:[%s0] sm:$0xf]
  %v19 = vld [vmem:[%s0 + $0x4] sm:$0xf]
  %v20 = vld [vmem:[%s0 + $0x8] sm:$0xf]
  %v21 = vld [vmem:[%s0 + $0xc] sm:$0xf]
  %v22 = vld [vmem:[%s0 + $0x10] sm:$0xf]
  %v23 = vld [vmem:[%s0 + $0x14] sm:$0xf]
  %v24 = vld [vmem:[%s0 + $0x18] sm:$0xf]
  %v25 = vld [vmem:[%s0 + $0x1c] sm:$0xf]
  %v26 = vld [vmem:[%s0 + $0x20] sm:$0xf]
  %v27 = vld [vmem:[%s0 + $0x24] sm:$0xf]
  %v28 = vld [vmem:[%s0 + $0x28] sm:$0xf]
  %v29 = vld [vmem:[%s0 + $0x2c] sm:$0xf]
  %v30 = vld [vmem:[%s0 + $0x30] sm:$0xf]
  %v31 = vld [vmem:[%s0 + $0x34] sm:$0xf]
  %v32 = vld [vmem:[%s0 + $0x38] sm:$0xf]
  %v33 = vld [vmem:[%s0 + $0x3c] sm:$0xf]
  %v34 = vld [vmem:[%s0 + $0x40] sm:$0xf]
  %v35 = vld [vmem:[%s0 + $0x44] sm:$0xf]
  %v36 = vld [vmem:[%s0 + $0x48] sm:$0xf]
  %v37 = vld [vmem:[%s0 + $0x4c] sm:$0xf]
  %v38 = vld [vmem:[%s0 + $0x50] sm:$0xf]
  %v39 = vld [vmem:[%s0 + $0x54] sm:$0xf]
  %v40 = vld [vmem:[%s0 + $0x58] sm:$0xf]
  %v41 = vld [vmem:[%s0 + $0x5c] sm:$0xf]
  %v42 = vld [vmem:[%s0 + $0x60] sm:$0xf]
  %v43 = vld [vmem:[%s0 + $0x64] sm:$0xf]
  %v44 = vld [vmem:[%s0 + $0x68] sm:$0xf]
  %v45 = vld [vmem:[%s0 + $0x6c] sm:$0xf]
  %v46 = vld [vmem:[%s0 + $0x70] sm:$0xf]
  %v47 = vld [vmem:[%s0 + $0x74] sm:$0xf]
  %v48 = vld [vmem:[%s0 + $0x78] sm:$0xf]
  %v49 = vld [vmem:[%s0 + $0x7c] sm:$0xf]
  %v50 = vld [vmem:[%s0 + $0x80] sm:$0xf]
  %v51 = vld [vmem:[%s0 + $0x84] sm:$0xf]
  %v52 = vld [vmem:[%s0 + $0x88] sm:$0xf]
  %v53 = vld [vmem:[%s0 + $0x8c] sm:$0xf]
  %v54 = vld [vmem:[%s0 + $0x90] sm:$0xf]
  %v55 = vld [vmem:[%s0 + $0x94] sm:$0xf]
  %v56 = vld [vmem:[%s0 + $0x98] sm:$0xf]
  %v57 = vld [vmem:[%s0 + $0x9c] sm:$0xf]
  %v58 = vld [vmem:[%s0 + $0xa0] sm:$0xf]
  %v59 = vld [vmem:[%s0 + $0xa4] sm:$0xf]
  %v60 = vld [vmem:[%s0 + $0xa8] sm:$0xf]
  %v61 = vld [vmem:[%s0 + $0xac] sm:$0xf]
  %v62 = vld [vmem:[%s0 + $0xb0] sm:$0xf]
  %v63 = vld [vmem:[%s0 + $0xb4] sm:$0xf]
  %v64 = vld [vmem:[%s0 + $0xb8] sm:$0xf]
  %v65 = vld [vmem:[%s0 + $0xbc] sm:$0xf]
  %v66 = vld [vmem:[%s0 + $0xc0] sm:$0xf]
  %v67 = vld [vmem:[%s0 + $0xc4] sm:$0xf]
  %v68 = vld [vmem:[%s0 + $0xc8] sm:$0xf]
  %v69 = vld [vmem:[%s0 + $0xcc] sm:$0xf]
  %v70 = vld [vmem:[%s0 + $0xd0] sm:$0xf]
  %v71 = vld [vmem:[%s0 + $0xd4] sm:$0xf]
  %v72 = vld [vmem:[%s0 + $0xd8] sm:$0xf]
  %v73 = vld [vmem:[%s0 + $0xdc] sm:$0xf]
  %v74 = vld [vmem:[%s0 + $0xe0] sm:$0xf]
  %v75 = vld [vmem:[%s0 + $0xe4] sm:$0xf]
  %v76 = vld [vmem:[%s0 + $0xe8] sm:$0xf]
  %v77 = vld [vmem:[%s0 + $0xec] sm:$0xf]
  %v78 = vld [vmem:[%s0 + $0xf0] sm:$0xf]
  %v79 = vld [vmem:[%s0 + $0xf4] sm:$0xf]
  %v80 = vld [vmem:[%s0 + $0xf8] sm:$0xf]
  %v81 = vld [vmem:[%s0 + $0xfc] sm:$0xf]
  %v82 = vld [vmem:[%s1] sm:$0xff]
  %v83 = vld [vmem:[%s1 + $0x8] sm:$0xf]
  %v84 = vld [vmem:[%s1 + $0xc] sm:$0xff]
  %v85 = vld [vmem:[%s1 + $0x14] sm:$0xf]
  %v86 = vld [vmem:[%s2] sm:$0x7]
  %v88 = vperm.slane %v86, 0
  %v89 = vperm.slane %v86, 1
  %v90 = vperm.slane %v86, 2
  %v158 = vunpack.c.l.b16 %v18
  %v159 = vunpack.c.l.b16 %v19
  %v160 = vunpack.c.l.b16 %v20
  %v161 = vunpack.c.l.b16 %v21
  %v162 = vunpack.c.l.b16 %v22
  %v163 = vunpack.c.l.b16 %v23
  %v164 = vunpack.c.l.b16 %v24
  %v165 = vunpack.c.l.b16 %v25
  %v166 = vunpack.c.l.b16 %v26
  %v167 = vunpack.c.l.b16 %v27
  %v168 = vunpack.c.l.b16 %v28
  %v169 = vunpack.c.l.b16 %v29
  %v170 = vunpack.c.l.b16 %v30
  %v171 = vunpack.c.l.b16 %v31
  %v172 = vunpack.c.l.b16 %v32
  %v173 = vunpack.c.l.b16 %v33
  %v174 = vunpack.c.l.b16 %v34
  %v175 = vunpack.c.l.b16 %v35
  %v176 = vunpack.c.l.b16 %v36
  %v177 = vunpack.c.l.b16 %v37
  %v178 = vunpack.c.l.b16 %v38
  %v179 = vunpack.c.l.b16 %v39
  %v180 = vunpack.c.l.b16 %v40
  %v181 = vunpack.c.l.b16 %v41
  %v182 = vunpack.c.l.b16 %v42
  %v183 = vunpack.c.l.b16 %v43
  %v184 = vunpack.c.l.b16 %v44
  %v185 = vunpack.c.l.b16 %v45
  %v186 = vunpack.c.l.b16 %v46
  %v187 = vunpack.c.l.b16 %v47
  %v188 = vunpack.c.l.b16 %v48
  %v189 = vunpack.c.l.b16 %v49
  %v190 = vunpack.c.l.b16 %v50
  %v191 = vunpack.c.l.b16 %v51
  %v192 = vunpack.c.l.b16 %v52
  %v193 = vunpack.c.l.b16 %v53
  %v194 = vunpack.c.l.b16 %v54
  %v195 = vunpack.c.l.b16 %v55
  %v196 = vunpack.c.l.b16 %v56
  %v197 = vunpack.c.l.b16 %v57
  %v198 = vunpack.c.l.b16 %v58
  %v199 = vunpack.c.l.b16 %v59
  %v200 = vunpack.c.l.b16 %v60
  %v201 = vunpack.c.l.b16 %v61
  %v202 = vunpack.c.l.b16 %v62
  %v203 = vunpack.c.l.b16 %v63
  %v204 = vunpack.c.l.b16 %v64
  %v205 = vunpack.c.l.b16 %v65
  %v206 = vunpack.c.l.b16 %v66
  %v207 = vunpack.c.l.b16 %v67
  %v208 = vunpack.c.l.b16 %v68
  %v209 = vunpack.c.l.b16 %v69
  %v210 = vunpack.c.l.b16 %v70
  %v211 = vunpack.c.l.b16 %v71
  %v212 = vunpack.c.l.b16 %v72
  %v213 = vunpack.c.l.b16 %v73
  %v214 = vunpack.c.l.b16 %v74
  %v215 = vunpack.c.l.b16 %v75
  %v216 = vunpack.c.l.b16 %v76
  %v217 = vunpack.c.l.b16 %v77
  %v218 = vunpack.c.l.b16 %v78
  %v219 = vunpack.c.l.b16 %v79
  %v220 = vunpack.c.l.b16 %v80
  %v221 = vunpack.c.l.b16 %v81
  %v222 = vpack.c.b16 %v159, %v158
  %v223 = vpack.c.b16 %v161, %v160
  %v224 = vpack.c.b16 %v163, %v162
  %v225 = vpack.c.b16 %v165, %v164
  %v226 = vpack.c.b16 %v167, %v166
  %v227 = vpack.c.b16 %v169, %v168
  %v228 = vpack.c.b16 %v171, %v170
  %v229 = vpack.c.b16 %v173, %v172
  %v230 = vpack.c.b16 %v175, %v174
  %v231 = vpack.c.b16 %v177, %v176
  %v232 = vpack.c.b16 %v179, %v178
  %v233 = vpack.c.b16 %v181, %v180
  %v234 = vpack.c.b16 %v183, %v182
  %v235 = vpack.c.b16 %v185, %v184
  %v236 = vpack.c.b16 %v187, %v186
  %v237 = vpack.c.b16 %v189, %v188
  %v238 = vpack.c.b16 %v191, %v190
  %v239 = vpack.c.b16 %v193, %v192
  %v240 = vpack.c.b16 %v195, %v194
  %v241 = vpack.c.b16 %v197, %v196
  %v242 = vpack.c.b16 %v199, %v198
  %v243 = vpack.c.b16 %v201, %v200
  %v244 = vpack.c.b16 %v203, %v202
  %v245 = vpack.c.b16 %v205, %v204
  %v246 = vpack.c.b16 %v207, %v206
  %v247 = vpack.c.b16 %v209, %v208
  %v248 = vpack.c.b16 %v211, %v210
  %v249 = vpack.c.b16 %v213, %v212
  %v250 = vpack.c.b16 %v215, %v214
  %v251 = vpack.c.b16 %v217, %v216
  %v252 = vpack.c.b16 %v219, %v218
  %v253 = vpack.c.b16 %v221, %v220
  %v258 = vunpack.c.l.b16 %v82
  %v259 = vunpack.c.h.b16 %v82
  %v260 = vunpack.c.l.b16 %v83
  %v261 = vunpack.c.l.b16 %v84
  %v262 = vunpack.c.h.b16 %v84
  %v263 = vunpack.c.l.b16 %v85
  %v264 = vpack.c.b16 %v261, %v258
  %v265 = vpack.c.b16 %v262, %v259
  %v266 = vpack.c.b16 %v263, %v260
  %vm270 = vcmask 130048
  %v272 = vsel %vm270, %v222, 0
  %v275 = vsel %vm270, %v223, 0
  %v278 = vsel %vm270, %v224, 0
  %v281 = vsel %vm270, %v225, 0
  %v284 = vsel %vm270, %v226, 0
  %v287 = vsel %vm270, %v227, 0
  %v290 = vsel %vm270, %v228, 0
  %v293 = vsel %vm270, %v229, 0
  %v296 = vsel %vm270, %v230, 0
  %v299 = vsel %vm270, %v231, 0
  %v302 = vsel %vm270, %v232, 0
  %v305 = vsel %vm270, %v233, 0
  %v308 = vsel %vm270, %v234, 0
  %v311 = vsel %vm270, %v235, 0
  %v314 = vsel %vm270, %v236, 0
  %v317 = vsel %vm270, %v237, 0
  %v320 = vsel %vm270, %v238, 0
  %v323 = vsel %vm270, %v239, 0
  %v326 = vsel %vm270, %v240, 0
  %v329 = vsel %vm270, %v241, 0
  %v332 = vsel %vm270, %v242, 0
  %v335 = vsel %vm270, %v243, 0
  %v338 = vsel %vm270, %v244, 0
  %v341 = vsel %vm270, %v245, 0
  %v344 = vsel %vm270, %v246, 0
  %v347 = vsel %vm270, %v247, 0
  %v350 = vsel %vm270, %v248, 0
  %v353 = vsel %vm270, %v249, 0
  %v356 = vsel %vm270, %v250, 0
  %v359 = vsel %vm270, %v251, 0
  %v362 = vsel %vm270, %v252, 0
  %v365 = vsel %vm270, %v253, 0
  %367 = vmatpush.bf16.msra.mxu0 0
  %368 = vmatpush.bf16.msra.mxu0 0
  %369 = vmatpush.bf16.msra.mxu0 0
  %370 = vmatpush.bf16.msra.mxu0 0
  %371 = vmatpush.bf16.msra.mxu0 0
  %372 = vmatpush.bf16.msra.mxu0 0
  %373 = vmatpush.bf16.msra.mxu0 0
  %374 = vmatpush.bf16.msra.mxu0 %v264
  %375 = vmatmul.bf16.gmra.mxu0 %v272
  %v376 = vpop.f32.mrf.mxu0
  %v377 = vadd.f32 %v88, %v376
  %v378 = vpop.f32.mrf.mxu0
  %v379 = vadd.f32 %v88, %v378
  %380 = vmatmul.bf16.gmra.mxu0 %v275
  %v381 = vpop.f32.mrf.mxu0
  %v382 = vadd.f32 %v88, %v381
  %v383 = vpop.f32.mrf.mxu0
  %v384 = vadd.f32 %v88, %v383
  %385 = vmatmul.bf16.gmra.mxu0 %v278
  %v386 = vpop.f32.mrf.mxu0
  %v387 = vadd.f32 %v88, %v386
  %v388 = vpop.f32.mrf.mxu0
  %v389 = vadd.f32 %v88, %v388
  %390 = vmatmul.bf16.gmra.mxu0 %v281
  %v391 = vpop.f32.mrf.mxu0
  %v392 = vadd.f32 %v88, %v391
  %v393 = vpop.f32.mrf.mxu0
  %v394 = vadd.f32 %v88, %v393
  %395 = vmatmul.bf16.gmra.mxu0 %v284
  %v396 = vpop.f32.mrf.mxu0
  %v397 = vadd.f32 %v88, %v396
  %v398 = vpop.f32.mrf.mxu0
  %v399 = vadd.f32 %v88, %v398
  %400 = vmatmul.bf16.gmra.mxu0 %v287
  %v401 = vpop.f32.mrf.mxu0
  %v402 = vadd.f32 %v88, %v401
  %v403 = vpop.f32.mrf.mxu0
  %v404 = vadd.f32 %v88, %v403
  %405 = vmatmul.bf16.gmra.mxu0 %v290
  %v406 = vpop.f32.mrf.mxu0
  %v407 = vadd.f32 %v88, %v406
  %v408 = vpop.f32.mrf.mxu0
  %v409 = vadd.f32 %v88, %v408
  %410 = vmatmul.bf16.gmra.mxu0 %v293
  %v411 = vpop.f32.mrf.mxu0
  %v412 = vadd.f32 %v88, %v411
  %v413 = vpop.f32.mrf.mxu0
  %v414 = vadd.f32 %v88, %v413
  %415 = vmatmul.bf16.gmra.mxu0 %v296
  %v416 = vpop.f32.mrf.mxu0
  %v417 = vadd.f32 %v88, %v416
  %v418 = vpop.f32.mrf.mxu0
  %v419 = vadd.f32 %v88, %v418
  %420 = vmatmul.bf16.gmra.mxu0 %v299
  %v421 = vpop.f32.mrf.mxu0
  %v422 = vadd.f32 %v88, %v421
  %v423 = vpop.f32.mrf.mxu0
  %v424 = vadd.f32 %v88, %v423
  %425 = vmatmul.bf16.gmra.mxu0 %v302
  %v426 = vpop.f32.mrf.mxu0
  %v427 = vadd.f32 %v88, %v426
  %v428 = vpop.f32.mrf.mxu0
  %v429 = vadd.f32 %v88, %v428
  %430 = vmatmul.bf16.gmra.mxu0 %v305
  %v431 = vpop.f32.mrf.mxu0
  %v432 = vadd.f32 %v88, %v431
  %v433 = vpop.f32.mrf.mxu0
  %v434 = vadd.f32 %v88, %v433
  %435 = vmatmul.bf16.gmra.mxu0 %v308
  %v436 = vpop.f32.mrf.mxu0
  %v437 = vadd.f32 %v88, %v436
  %v438 = vpop.f32.mrf.mxu0
  %v439 = vadd.f32 %v88, %v438
  %440 = vmatmul.bf16.gmra.mxu0 %v311
  %v441 = vpop.f32.mrf.mxu0
  %v442 = vadd.f32 %v88, %v441
  %v443 = vpop.f32.mrf.mxu0
  %v444 = vadd.f32 %v88, %v443
  %445 = vmatmul.bf16.gmra.mxu0 %v314
  %v446 = vpop.f32.mrf.mxu0
  %v447 = vadd.f32 %v88, %v446
  %v448 = vpop.f32.mrf.mxu0
  %v449 = vadd.f32 %v88, %v448
  %450 = vmatmul.bf16.gmra.mxu0 %v317
  %v451 = vpop.f32.mrf.mxu0
  %v452 = vadd.f32 %v88, %v451
  %v453 = vpop.f32.mrf.mxu0
  %v454 = vadd.f32 %v88, %v453
  %455 = vmatmul.bf16.gmra.mxu0 %v320
  %v456 = vpop.f32.mrf.mxu0
  %v457 = vadd.f32 %v88, %v456
  %v458 = vpop.f32.mrf.mxu0
  %v459 = vadd.f32 %v88, %v458
  %460 = vmatmul.bf16.gmra.mxu0 %v323
  %v461 = vpop.f32.mrf.mxu0
  %v462 = vadd.f32 %v88, %v461
  %v463 = vpop.f32.mrf.mxu0
  %v464 = vadd.f32 %v88, %v463
  %465 = vmatmul.bf16.gmra.mxu0 %v326
  %v466 = vpop.f32.mrf.mxu0
  %v467 = vadd.f32 %v88, %v466
  %v468 = vpop.f32.mrf.mxu0
  %v469 = vadd.f32 %v88, %v468
  %470 = vmatmul.bf16.gmra.mxu0 %v329
  %v471 = vpop.f32.mrf.mxu0
  %v472 = vadd.f32 %v88, %v471
  %v473 = vpop.f32.mrf.mxu0
  %v474 = vadd.f32 %v88, %v473
  %475 = vmatmul.bf16.gmra.mxu0 %v332
  %v476 = vpop.f32.mrf.mxu0
  %v477 = vadd.f32 %v88, %v476
  %v478 = vpop.f32.mrf.mxu0
  %v479 = vadd.f32 %v88, %v478
  %480 = vmatmul.bf16.gmra.mxu0 %v335
  %v481 = vpop.f32.mrf.mxu0
  %v482 = vadd.f32 %v88, %v481
  %v483 = vpop.f32.mrf.mxu0
  %v484 = vadd.f32 %v88, %v483
  %485 = vmatmul.bf16.gmra.mxu0 %v338
  %v486 = vpop.f32.mrf.mxu0
  %v487 = vadd.f32 %v88, %v486
  %v488 = vpop.f32.mrf.mxu0
  %v489 = vadd.f32 %v88, %v488
  %490 = vmatmul.bf16.gmra.mxu0 %v341
  %v491 = vpop.f32.mrf.mxu0
  %v492 = vadd.f32 %v88, %v491
  %v493 = vpop.f32.mrf.mxu0
  %v494 = vadd.f32 %v88, %v493
  %495 = vmatmul.bf16.gmra.mxu0 %v344
  %v496 = vpop.f32.mrf.mxu0
  %v497 = vadd.f32 %v88, %v496
  %v498 = vpop.f32.mrf.mxu0
  %v499 = vadd.f32 %v88, %v498
  %500 = vmatmul.bf16.gmra.mxu0 %v347
  %v501 = vpop.f32.mrf.mxu0
  %v502 = vadd.f32 %v88, %v501
  %v503 = vpop.f32.mrf.mxu0
  %v504 = vadd.f32 %v88, %v503
  %505 = vmatmul.bf16.gmra.mxu0 %v350
  %v506 = vpop.f32.mrf.mxu0
  %v507 = vadd.f32 %v88, %v506
  %v508 = vpop.f32.mrf.mxu0
  %v509 = vadd.f32 %v88, %v508
  %510 = vmatmul.bf16.gmra.mxu0 %v353
  %v511 = vpop.f32.mrf.mxu0
  %v512 = vadd.f32 %v88, %v511
  %v513 = vpop.f32.mrf.mxu0
  %v514 = vadd.f32 %v88, %v513
  %515 = vmatmul.bf16.gmra.mxu0 %v356
  %v516 = vpop.f32.mrf.mxu0
  %v517 = vadd.f32 %v88, %v516
  %v518 = vpop.f32.mrf.mxu0
  %v519 = vadd.f32 %v88, %v518
  %520 = vmatmul.bf16.gmra.mxu0 %v359
  %v521 = vpop.f32.mrf.mxu0
  %v522 = vadd.f32 %v88, %v521
  %v523 = vpop.f32.mrf.mxu0
  %v524 = vadd.f32 %v88, %v523
  %525 = vmatmul.bf16.gmra.mxu0 %v362
  %v526 = vpop.f32.mrf.mxu0
  %v527 = vadd.f32 %v88, %v526
  %v528 = vpop.f32.mrf.mxu0
  %v529 = vadd.f32 %v88, %v528
  %530 = vmatmul.bf16.gmra.mxu0 %v365
  %v531 = vpop.f32.mrf.mxu0
  %v532 = vadd.f32 %v88, %v531
  %v533 = vpop.f32.mrf.mxu0
  %v534 = vadd.f32 %v88, %v533
  %535 = vdwg.mxu0
  %536 = vmatpush.bf16.msra.mxu0 0
  %537 = vmatpush.bf16.msra.mxu0 0
  %538 = vmatpush.bf16.msra.mxu0 0
  %539 = vmatpush.bf16.msra.mxu0 0
  %540 = vmatpush.bf16.msra.mxu0 0
  %541 = vmatpush.bf16.msra.mxu0 0
  %542 = vmatpush.bf16.msra.mxu0 0
  %543 = vmatpush.bf16.msra.mxu0 %v265
  %544 = vmatmul.bf16.gmra.mxu0 %v272
  %v545 = vpop.f32.mrf.mxu0
  %v546 = vadd.f32 %v89, %v545
  %v547 = vpop.f32.mrf.mxu0
  %v548 = vadd.f32 %v89, %v547
  %549 = vmatmul.bf16.gmra.mxu0 %v275
  %v550 = vpop.f32.mrf.mxu0
  %v551 = vadd.f32 %v89, %v550
  %v552 = vpop.f32.mrf.mxu0
  %v553 = vadd.f32 %v89, %v552
  %554 = vmatmul.bf16.gmra.mxu0 %v278
  %v555 = vpop.f32.mrf.mxu0
  %v556 = vadd.f32 %v89, %v555
  %v557 = vpop.f32.mrf.mxu0
  %v558 = vadd.f32 %v89, %v557
  %559 = vmatmul.bf16.gmra.mxu0 %v281
  %v560 = vpop.f32.mrf.mxu0
  %v561 = vadd.f32 %v89, %v560
  %v562 = vpop.f32.mrf.mxu0
  %v563 = vadd.f32 %v89, %v562
  %564 = vmatmul.bf16.gmra.mxu0 %v284
  %v565 = vpop.f32.mrf.mxu0
  %v566 = vadd.f32 %v89, %v565
  %v567 = vpop.f32.mrf.mxu0
  %v568 = vadd.f32 %v89, %v567
  %569 = vmatmul.bf16.gmra.mxu0 %v287
  %v570 = vpop.f32.mrf.mxu0
  %v571 = vadd.f32 %v89, %v570
  %v572 = vpop.f32.mrf.mxu0
  %v573 = vadd.f32 %v89, %v572
  %574 = vmatmul.bf16.gmra.mxu0 %v290
  %v575 = vpop.f32.mrf.mxu0
  %v576 = vadd.f32 %v89, %v575
  %v577 = vpop.f32.mrf.mxu0
  %v578 = vadd.f32 %v89, %v577
  %579 = vmatmul.bf16.gmra.mxu0 %v293
  %v580 = vpop.f32.mrf.mxu0
  %v581 = vadd.f32 %v89, %v580
  %v582 = vpop.f32.mrf.mxu0
  %v583 = vadd.f32 %v89, %v582
  %584 = vmatmul.bf16.gmra.mxu0 %v296
  %v585 = vpop.f32.mrf.mxu0
  %v586 = vadd.f32 %v89, %v585
  %v587 = vpop.f32.mrf.mxu0
  %v588 = vadd.f32 %v89, %v587
  %589 = vmatmul.bf16.gmra.mxu0 %v299
  %v590 = vpop.f32.mrf.mxu0
  %v591 = vadd.f32 %v89, %v590
  %v592 = vpop.f32.mrf.mxu0
  %v593 = vadd.f32 %v89, %v592
  %594 = vmatmul.bf16.gmra.mxu0 %v302
  %v595 = vpop.f32.mrf.mxu0
  %v596 = vadd.f32 %v89, %v595
  %v597 = vpop.f32.mrf.mxu0
  %v598 = vadd.f32 %v89, %v597
  %599 = vmatmul.bf16.gmra.mxu0 %v305
  %v600 = vpop.f32.mrf.mxu0
  %v601 = vadd.f32 %v89, %v600
  %v602 = vpop.f32.mrf.mxu0
  %v603 = vadd.f32 %v89, %v602
  %604 = vmatmul.bf16.gmra.mxu0 %v308
  %v605 = vpop.f32.mrf.mxu0
  %v606 = vadd.f32 %v89, %v605
  %v607 = vpop.f32.mrf.mxu0
  %v608 = vadd.f32 %v89, %v607
  %609 = vmatmul.bf16.gmra.mxu0 %v311
  %v610 = vpop.f32.mrf.mxu0
  %v611 = vadd.f32 %v89, %v610
  %v612 = vpop.f32.mrf.mxu0
  %v613 = vadd.f32 %v89, %v612
  %614 = vmatmul.bf16.gmra.mxu0 %v314
  %v615 = vpop.f32.mrf.mxu0
  %v616 = vadd.f32 %v89, %v615
  %v617 = vpop.f32.mrf.mxu0
  %v618 = vadd.f32 %v89, %v617
  %619 = vmatmul.bf16.gmra.mxu0 %v317
  %v620 = vpop.f32.mrf.mxu0
  %v621 = vadd.f32 %v89, %v620
  %v622 = vpop.f32.mrf.mxu0
  %v623 = vadd.f32 %v89, %v622
  %624 = vmatmul.bf16.gmra.mxu0 %v320
  %v625 = vpop.f32.mrf.mxu0
  %v626 = vadd.f32 %v89, %v625
  %v627 = vpop.f32.mrf.mxu0
  %v628 = vadd.f32 %v89, %v627
  %629 = vmatmul.bf16.gmra.mxu0 %v323
  %v630 = vpop.f32.mrf.mxu0
  %v631 = vadd.f32 %v89, %v630
  %v632 = vpop.f32.mrf.mxu0
  %v633 = vadd.f32 %v89, %v632
  %634 = vmatmul.bf16.gmra.mxu0 %v326
  %v635 = vpop.f32.mrf.mxu0
  %v636 = vadd.f32 %v89, %v635
  %v637 = vpop.f32.mrf.mxu0
  %v638 = vadd.f32 %v89, %v637
  %639 = vmatmul.bf16.gmra.mxu0 %v329
  %v640 = vpop.f32.mrf.mxu0
  %v641 = vadd.f32 %v89, %v640
  %v642 = vpop.f32.mrf.mxu0
  %v643 = vadd.f32 %v89, %v642
  %644 = vmatmul.bf16.gmra.mxu0 %v332
  %v645 = vpop.f32.mrf.mxu0
  %v646 = vadd.f32 %v89, %v645
  %v647 = vpop.f32.mrf.mxu0
  %v648 = vadd.f32 %v89, %v647
  %649 = vmatmul.bf16.gmra.mxu0 %v335
  %v650 = vpop.f32.mrf.mxu0
  %v651 = vadd.f32 %v89, %v650
  %v652 = vpop.f32.mrf.mxu0
  %v653 = vadd.f32 %v89, %v652
  %654 = vmatmul.bf16.gmra.mxu0 %v338
  %v655 = vpop.f32.mrf.mxu0
  %v656 = vadd.f32 %v89, %v655
  %v657 = vpop.f32.mrf.mxu0
  %v658 = vadd.f32 %v89, %v657
  %659 = vmatmul.bf16.gmra.mxu0 %v341
  %v660 = vpop.f32.mrf.mxu0
  %v661 = vadd.f32 %v89, %v660
  %v662 = vpop.f32.mrf.mxu0
  %v663 = vadd.f32 %v89, %v662
  %664 = vmatmul.bf16.gmra.mxu0 %v344
  %v665 = vpop.f32.mrf.mxu0
  %v666 = vadd.f32 %v89, %v665
  %v667 = vpop.f32.mrf.mxu0
  %v668 = vadd.f32 %v89, %v667
  %669 = vmatmul.bf16.gmra.mxu0 %v347
  %v670 = vpop.f32.mrf.mxu0
  %v671 = vadd.f32 %v89, %v670
  %v672 = vpop.f32.mrf.mxu0
  %v673 = vadd.f32 %v89, %v672
  %674 = vmatmul.bf16.gmra.mxu0 %v350
  %v675 = vpop.f32.mrf.mxu0
  %v676 = vadd.f32 %v89, %v675
  %v677 = vpop.f32.mrf.mxu0
  %v678 = vadd.f32 %v89, %v677
  %679 = vmatmul.bf16.gmra.mxu0 %v353
  %v680 = vpop.f32.mrf.mxu0
  %v681 = vadd.f32 %v89, %v680
  %v682 = vpop.f32.mrf.mxu0
  %v683 = vadd.f32 %v89, %v682
  %684 = vmatmul.bf16.gmra.mxu0 %v356
  %v685 = vpop.f32.mrf.mxu0
  %v686 = vadd.f32 %v89, %v685
  %v687 = vpop.f32.mrf.mxu0
  %v688 = vadd.f32 %v89, %v687
  %689 = vmatmul.bf16.gmra.mxu0 %v359
  %v690 = vpop.f32.mrf.mxu0
  %v691 = vadd.f32 %v89, %v690
  %v692 = vpop.f32.mrf.mxu0
  %v693 = vadd.f32 %v89, %v692
  %694 = vmatmul.bf16.gmra.mxu0 %v362
  %v695 = vpop.f32.mrf.mxu0
  %v696 = vadd.f32 %v89, %v695
  %v697 = vpop.f32.mrf.mxu0
  %v698 = vadd.f32 %v89, %v697
  %699 = vmatmul.bf16.gmra.mxu0 %v365
  %v700 = vpop.f32.mrf.mxu0
  %v701 = vadd.f32 %v89, %v700
  %v702 = vpop.f32.mrf.mxu0
  %v703 = vadd.f32 %v89, %v702
  %704 = vdwg.mxu0
  %705 = vmatpush.bf16.msra.mxu0 0
  %706 = vmatpush.bf16.msra.mxu0 0
  %707 = vmatpush.bf16.msra.mxu0 0
  %708 = vmatpush.bf16.msra.mxu0 0
  %709 = vmatpush.bf16.msra.mxu0 0
  %710 = vmatpush.bf16.msra.mxu0 0
  %711 = vmatpush.bf16.msra.mxu0 0
  %712 = vmatpush.bf16.msra.mxu0 %v266
  %713 = vmatmul.bf16.gmra.mxu0 %v272
  %v714 = vpop.f32.mrf.mxu0
  %v715 = vadd.f32 %v90, %v714
  %v716 = vpop.f32.mrf.mxu0
  %v717 = vadd.f32 %v90, %v716
  %718 = vmatmul.bf16.gmra.mxu0 %v275
  %v719 = vpop.f32.mrf.mxu0
  %v720 = vadd.f32 %v90, %v719
  %v721 = vpop.f32.mrf.mxu0
  %v722 = vadd.f32 %v90, %v721
  %723 = vmatmul.bf16.gmra.mxu0 %v278
  %v724 = vpop.f32.mrf.mxu0
  %v725 = vadd.f32 %v90, %v724
  %v726 = vpop.f32.mrf.mxu0
  %v727 = vadd.f32 %v90, %v726
  %728 = vmatmul.bf16.gmra.mxu0 %v281
  %v729 = vpop.f32.mrf.mxu0
  %v730 = vadd.f32 %v90, %v729
  %v731 = vpop.f32.mrf.mxu0
  %v732 = vadd.f32 %v90, %v731
  %733 = vmatmul.bf16.gmra.mxu0 %v284
  %v734 = vpop.f32.mrf.mxu0
  %v735 = vadd.f32 %v90, %v734
  %v736 = vpop.f32.mrf.mxu0
  %v737 = vadd.f32 %v90, %v736
  %738 = vmatmul.bf16.gmra.mxu0 %v287
  %v739 = vpop.f32.mrf.mxu0
  %v740 = vadd.f32 %v90, %v739
  %v741 = vpop.f32.mrf.mxu0
  %v742 = vadd.f32 %v90, %v741
  %743 = vmatmul.bf16.gmra.mxu0 %v290
  %v744 = vpop.f32.mrf.mxu0
  %v745 = vadd.f32 %v90, %v744
  %v746 = vpop.f32.mrf.mxu0
  %v747 = vadd.f32 %v90, %v746
  %748 = vmatmul.bf16.gmra.mxu0 %v293
  %v749 = vpop.f32.mrf.mxu0
  %v750 = vadd.f32 %v90, %v749
  %v751 = vpop.f32.mrf.mxu0
  %v752 = vadd.f32 %v90, %v751
  %753 = vmatmul.bf16.gmra.mxu0 %v296
  %v754 = vpop.f32.mrf.mxu0
  %v755 = vadd.f32 %v90, %v754
  %v756 = vpop.f32.mrf.mxu0
  %v757 = vadd.f32 %v90, %v756
  %758 = vmatmul.bf16.gmra.mxu0 %v299
  %v759 = vpop.f32.mrf.mxu0
  %v760 = vadd.f32 %v90, %v759
  %v761 = vpop.f32.mrf.mxu0
  %v762 = vadd.f32 %v90, %v761
  %763 = vmatmul.bf16.gmra.mxu0 %v302
  %v764 = vpop.f32.mrf.mxu0
  %v765 = vadd.f32 %v90, %v764
  %v766 = vpop.f32.mrf.mxu0
  %v767 = vadd.f32 %v90, %v766
  %768 = vmatmul.bf16.gmra.mxu0 %v305
  %v769 = vpop.f32.mrf.mxu0
  %v770 = vadd.f32 %v90, %v769
  %v771 = vpop.f32.mrf.mxu0
  %v772 = vadd.f32 %v90, %v771
  %773 = vmatmul.bf16.gmra.mxu0 %v308
  %v774 = vpop.f32.mrf.mxu0
  %v775 = vadd.f32 %v90, %v774
  %v776 = vpop.f32.mrf.mxu0
  %v777 = vadd.f32 %v90, %v776
  %778 = vmatmul.bf16.gmra.mxu0 %v311
  %v779 = vpop.f32.mrf.mxu0
  %v780 = vadd.f32 %v90, %v779
  %v781 = vpop.f32.mrf.mxu0
  %v782 = vadd.f32 %v90, %v781
  %783 = vmatmul.bf16.gmra.mxu0 %v314
  %v784 = vpop.f32.mrf.mxu0
  %v785 = vadd.f32 %v90, %v784
  %v786 = vpop.f32.mrf.mxu0
  %v787 = vadd.f32 %v90, %v786
  %788 = vmatmul.bf16.gmra.mxu0 %v317
  %v789 = vpop.f32.mrf.mxu0
  %v790 = vadd.f32 %v90, %v789
  %v791 = vpop.f32.mrf.mxu0
  %v792 = vadd.f32 %v90, %v791
  %793 = vmatmul.bf16.gmra.mxu0 %v320
  %v794 = vpop.f32.mrf.mxu0
  %v795 = vadd.f32 %v90, %v794
  %v796 = vpop.f32.mrf.mxu0
  %v797 = vadd.f32 %v90, %v796
  %798 = vmatmul.bf16.gmra.mxu0 %v323
  %v799 = vpop.f32.mrf.mxu0
  %v800 = vadd.f32 %v90, %v799
  %v801 = vpop.f32.mrf.mxu0
  %v802 = vadd.f32 %v90, %v801
  %803 = vmatmul.bf16.gmra.mxu0 %v326
  %v804 = vpop.f32.mrf.mxu0
  %v805 = vadd.f32 %v90, %v804
  %v806 = vpop.f32.mrf.mxu0
  %v807 = vadd.f32 %v90, %v806
  %808 = vmatmul.bf16.gmra.mxu0 %v329
  %v809 = vpop.f32.mrf.mxu0
  %v810 = vadd.f32 %v90, %v809
  %v811 = vpop.f32.mrf.mxu0
  %v812 = vadd.f32 %v90, %v811
  %813 = vmatmul.bf16.gmra.mxu0 %v332
  %v814 = vpop.f32.mrf.mxu0
  %v815 = vadd.f32 %v90, %v814
  %v816 = vpop.f32.mrf.mxu0
  %v817 = vadd.f32 %v90, %v816
  %818 = vmatmul.bf16.gmra.mxu0 %v335
  %v819 = vpop.f32.mrf.mxu0
  %v820 = vadd.f32 %v90, %v819
  %v821 = vpop.f32.mrf.mxu0
  %v822 = vadd.f32 %v90, %v821
  %823 = vmatmul.bf16.gmra.mxu0 %v338
  %v824 = vpop.f32.mrf.mxu0
  %v825 = vadd.f32 %v90, %v824
  %v826 = vpop.f32.mrf.mxu0
  %v827 = vadd.f32 %v90, %v826
  %828 = vmatmul.bf16.gmra.mxu0 %v341
  %v829 = vpop.f32.mrf.mxu0
  %v830 = vadd.f32 %v90, %v829
  %v831 = vpop.f32.mrf.mxu0
  %v832 = vadd.f32 %v90, %v831
  %833 = vmatmul.bf16.gmra.mxu0 %v344
  %v834 = vpop.f32.mrf.mxu0
  %v835 = vadd.f32 %v90, %v834
  %v836 = vpop.f32.mrf.mxu0
  %v837 = vadd.f32 %v90, %v836
  %838 = vmatmul.bf16.gmra.mxu0 %v347
  %v839 = vpop.f32.mrf.mxu0
  %v840 = vadd.f32 %v90, %v839
  %v841 = vpop.f32.mrf.mxu0
  %v842 = vadd.f32 %v90, %v841
  %843 = vmatmul.bf16.gmra.mxu0 %v350
  %v844 = vpop.f32.mrf.mxu0
  %v845 = vadd.f32 %v90, %v844
  %v846 = vpop.f32.mrf.mxu0
  %v847 = vadd.f32 %v90, %v846
  %848 = vmatmul.bf16.gmra.mxu0 %v353
  %v849 = vpop.f32.mrf.mxu0
  %v850 = vadd.f32 %v90, %v849
  %v851 = vpop.f32.mrf.mxu0
  %v852 = vadd.f32 %v90, %v851
  %853 = vmatmul.bf16.gmra.mxu0 %v356
  %v854 = vpop.f32.mrf.mxu0
  %v855 = vadd.f32 %v90, %v854
  %v856 = vpop.f32.mrf.mxu0
  %v857 = vadd.f32 %v90, %v856
  %858 = vmatmul.bf16.gmra.mxu0 %v359
  %v859 = vpop.f32.mrf.mxu0
  %v860 = vadd.f32 %v90, %v859
  %v861 = vpop.f32.mrf.mxu0
  %v862 = vadd.f32 %v90, %v861
  %863 = vmatmul.bf16.gmra.mxu0 %v362
  %v864 = vpop.f32.mrf.mxu0
  %v865 = vadd.f32 %v90, %v864
  %v866 = vpop.f32.mrf.mxu0
  %v867 = vadd.f32 %v90, %v866
  %868 = vmatmul.bf16.gmra.mxu0 %v365
  %v869 = vpop.f32.mrf.mxu0
  %v870 = vadd.f32 %v90, %v869
  %v871 = vpop.f32.mrf.mxu0
  %v872 = vadd.f32 %v90, %v871
  %873 = vdwg.mxu0
  %v874 = vmax.f32 %v377, 0.0
  %v875 = vmax.f32 %v546, 0.0
  %v876 = vmax.f32 %v715, 0.0
  %v877 = vmax.f32 %v379, 0.0
  %v878 = vmax.f32 %v548, 0.0
  %v879 = vmax.f32 %v717, 0.0
  %v880 = vmax.f32 %v382, 0.0
  %v881 = vmax.f32 %v551, 0.0
  %v882 = vmax.f32 %v720, 0.0
  %v883 = vmax.f32 %v384, 0.0
  %v884 = vmax.f32 %v553, 0.0
  %v885 = vmax.f32 %v722, 0.0
  %v886 = vmax.f32 %v387, 0.0
  %v887 = vmax.f32 %v556, 0.0
  %v888 = vmax.f32 %v725, 0.0
  %v889 = vmax.f32 %v389, 0.0
  %v890 = vmax.f32 %v558, 0.0
  %v891 = vmax.f32 %v727, 0.0
  %v892 = vmax.f32 %v392, 0.0
  %v893 = vmax.f32 %v561, 0.0
  %v894 = vmax.f32 %v730, 0.0
  %v895 = vmax.f32 %v394, 0.0
  %v896 = vmax.f32 %v563, 0.0
  %v897 = vmax.f32 %v732, 0.0
  %v898 = vmax.f32 %v397, 0.0
  %v899 = vmax.f32 %v566, 0.0
  %v900 = vmax.f32 %v735, 0.0
  %v901 = vmax.f32 %v399, 0.0
  %v902 = vmax.f32 %v568, 0.0
  %v903 = vmax.f32 %v737, 0.0
  %v904 = vmax.f32 %v402, 0.0
  %v905 = vmax.f32 %v571, 0.0
  %v906 = vmax.f32 %v740, 0.0
  %v907 = vmax.f32 %v404, 0.0
  %v908 = vmax.f32 %v573, 0.0
  %v909 = vmax.f32 %v742, 0.0
  %v910 = vmax.f32 %v407, 0.0
  %v911 = vmax.f32 %v576, 0.0
  %v912 = vmax.f32 %v745, 0.0
  %v913 = vmax.f32 %v409, 0.0
  %v914 = vmax.f32 %v578, 0.0
  %v915 = vmax.f32 %v747, 0.0
  %v916 = vmax.f32 %v412, 0.0
  %v917 = vmax.f32 %v581, 0.0
  %v918 = vmax.f32 %v750, 0.0
  %v919 = vmax.f32 %v414, 0.0
  %v920 = vmax.f32 %v583, 0.0
  %v921 = vmax.f32 %v752, 0.0
  %v922 = vmax.f32 %v417, 0.0
  %v923 = vmax.f32 %v586, 0.0
  %v924 = vmax.f32 %v755, 0.0
  %v925 = vmax.f32 %v419, 0.0
  %v926 = vmax.f32 %v588, 0.0
  %v927 = vmax.f32 %v757, 0.0
  %v928 = vmax.f32 %v422, 0.0
  %v929 = vmax.f32 %v591, 0.0
  %v930 = vmax.f32 %v760, 0.0
  %v931 = vmax.f32 %v424, 0.0
  %v932 = vmax.f32 %v593, 0.0
  %v933 = vmax.f32 %v762, 0.0
  %v934 = vmax.f32 %v427, 0.0
  %v935 = vmax.f32 %v596, 0.0
  %v936 = vmax.f32 %v765, 0.0
  %v937 = vmax.f32 %v429, 0.0
  %v938 = vmax.f32 %v598, 0.0
  %v939 = vmax.f32 %v767, 0.0
  %v940 = vmax.f32 %v432, 0.0
  %v941 = vmax.f32 %v601, 0.0
  %v942 = vmax.f32 %v770, 0.0
  %v943 = vmax.f32 %v434, 0.0
  %v944 = vmax.f32 %v603, 0.0
  %v945 = vmax.f32 %v772, 0.0
  %v946 = vmax.f32 %v437, 0.0
  %v947 = vmax.f32 %v606, 0.0
  %v948 = vmax.f32 %v775, 0.0
  %v949 = vmax.f32 %v439, 0.0
  %v950 = vmax.f32 %v608, 0.0
  %v951 = vmax.f32 %v777, 0.0
  %v952 = vmax.f32 %v442, 0.0
  %v953 = vmax.f32 %v611, 0.0
  %v954 = vmax.f32 %v780, 0.0
  %v955 = vmax.f32 %v444, 0.0
  %v956 = vmax.f32 %v613, 0.0
  %v957 = vmax.f32 %v782, 0.0
  %v958 = vmax.f32 %v447, 0.0
  %v959 = vmax.f32 %v616, 0.0
  %v960 = vmax.f32 %v785, 0.0
  %v961 = vmax.f32 %v449, 0.0
  %v962 = vmax.f32 %v618, 0.0
  %v963 = vmax.f32 %v787, 0.0
  %v964 = vmax.f32 %v452, 0.0
  %v965 = vmax.f32 %v621, 0.0
  %v966 = vmax.f32 %v790, 0.0
  %v967 = vmax.f32 %v454, 0.0
  %v968 = vmax.f32 %v623, 0.0
  %v969 = vmax.f32 %v792, 0.0
  %v970 = vmax.f32 %v457, 0.0
  %v971 = vmax.f32 %v626, 0.0
  %v972 = vmax.f32 %v795, 0.0
  %v973 = vmax.f32 %v459, 0.0
  %v974 = vmax.f32 %v628, 0.0
  %v975 = vmax.f32 %v797, 0.0
  %v976 = vmax.f32 %v462, 0.0
  %v977 = vmax.f32 %v631, 0.0
  %v978 = vmax.f32 %v800, 0.0
  %v979 = vmax.f32 %v464, 0.0
  %v980 = vmax.f32 %v633, 0.0
  %v981 = vmax.f32 %v802, 0.0
  %v982 = vmax.f32 %v467, 0.0
  %v983 = vmax.f32 %v636, 0.0
  %v984 = vmax.f32 %v805, 0.0
  %v985 = vmax.f32 %v469, 0.0
  %v986 = vmax.f32 %v638, 0.0
  %v987 = vmax.f32 %v807, 0.0
  %v988 = vmax.f32 %v472, 0.0
  %v989 = vmax.f32 %v641, 0.0
  %v990 = vmax.f32 %v810, 0.0
  %v991 = vmax.f32 %v474, 0.0
  %v992 = vmax.f32 %v643, 0.0
  %v993 = vmax.f32 %v812, 0.0
  %v994 = vmax.f32 %v477, 0.0
  %v995 = vmax.f32 %v646, 0.0
  %v996 = vmax.f32 %v815, 0.0
  %v997 = vmax.f32 %v479, 0.0
  %v998 = vmax.f32 %v648, 0.0
  %v999 = vmax.f32 %v817, 0.0
  %v1000 = vmax.f32 %v482, 0.0
  %v1001 = vmax.f32 %v651, 0.0
  %v1002 = vmax.f32 %v820, 0.0
  %v1003 = vmax.f32 %v484, 0.0
  %v1004 = vmax.f32 %v653, 0.0
  %v1005 = vmax.f32 %v822, 0.0
  %v1006 = vmax.f32 %v487, 0.0
  %v1007 = vmax.f32 %v656, 0.0
  %v1008 = vmax.f32 %v825, 0.0
  %v1009 = vmax.f32 %v489, 0.0
  %v1010 = vmax.f32 %v658, 0.0
  %v1011 = vmax.f32 %v827, 0.0
  %v1012 = vmax.f32 %v492, 0.0
  %v1013 = vmax.f32 %v661, 0.0
  %v1014 = vmax.f32 %v830, 0.0
  %v1015 = vmax.f32 %v494, 0.0
  %v1016 = vmax.f32 %v663, 0.0
  %v1017 = vmax.f32 %v832, 0.0
  %v1018 = vmax.f32 %v497, 0.0
  %v1019 = vmax.f32 %v666, 0.0
  %v1020 = vmax.f32 %v835, 0.0
  %v1021 = vmax.f32 %v499, 0.0
  %v1022 = vmax.f32 %v668, 0.0
  %v1023 = vmax.f32 %v837, 0.0
  %v1024 = vmax.f32 %v502, 0.0
  %v1025 = vmax.f32 %v671, 0.0
  %v1026 = vmax.f32 %v840, 0.0
  %v1027 = vmax.f32 %v504, 0.0
  %v1028 = vmax.f32 %v673, 0.0
  %v1029 = vmax.f32 %v842, 0.0
  %v1030 = vmax.f32 %v507, 0.0
  %v1031 = vmax.f32 %v676, 0.0
  %v1032 = vmax.f32 %v845, 0.0
  %v1033 = vmax.f32 %v509, 0.0
  %v1034 = vmax.f32 %v678, 0.0
  %v1035 = vmax.f32 %v847, 0.0
  %v1036 = vmax.f32 %v512, 0.0
  %v1037 = vmax.f32 %v681, 0.0
  %v1038 = vmax.f32 %v850, 0.0
  %v1039 = vmax.f32 %v514, 0.0
  %v1040 = vmax.f32 %v683, 0.0
  %v1041 = vmax.f32 %v852, 0.0
  %v1042 = vmax.f32 %v517, 0.0
  %v1043 = vmax.f32 %v686, 0.0
  %v1044 = vmax.f32 %v855, 0.0
  %v1045 = vmax.f32 %v519, 0.0
  %v1046 = vmax.f32 %v688, 0.0
  %v1047 = vmax.f32 %v857, 0.0
  %v1048 = vmax.f32 %v522, 0.0
  %v1049 = vmax.f32 %v691, 0.0
  %v1050 = vmax.f32 %v860, 0.0
  %v1051 = vmax.f32 %v524, 0.0
  %v1052 = vmax.f32 %v693, 0.0
  %v1053 = vmax.f32 %v862, 0.0
  %v1054 = vmax.f32 %v527, 0.0
  %v1055 = vmax.f32 %v696, 0.0
  %v1056 = vmax.f32 %v865, 0.0
  %v1057 = vmax.f32 %v529, 0.0
  %v1058 = vmax.f32 %v698, 0.0
  %v1059 = vmax.f32 %v867, 0.0
  %v1060 = vmax.f32 %v532, 0.0
  %v1061 = vmax.f32 %v701, 0.0
  %v1062 = vmax.f32 %v870, 0.0
  %v1063 = vmax.f32 %v534, 0.0
  %v1064 = vmax.f32 %v703, 0.0
  %v1065 = vmax.f32 %v872, 0.0
  %1066 = vst [vmem:[%s3] sm:$0xff] %v874
  %1067 = vst [vmem:[%s3 + $0x8] sm:$0xff] %v877
  %1068 = vst [vmem:[%s3 + $0x10] sm:$0xff] %v880
  %1069 = vst [vmem:[%s3 + $0x18] sm:$0xff] %v883
  %1070 = vst [vmem:[%s3 + $0x20] sm:$0xff] %v886
  %1071 = vst [vmem:[%s3 + $0x28] sm:$0xff] %v889
  %1072 = vst [vmem:[%s3 + $0x30] sm:$0xff] %v892
  %1073 = vst [vmem:[%s3 + $0x38] sm:$0xff] %v895
  %1074 = vst [vmem:[%s3 + $0x40] sm:$0xff] %v898
  %1075 = vst [vmem:[%s3 + $0x48] sm:$0xff] %v901
  %1076 = vst [vmem:[%s3 + $0x50] sm:$0xff] %v904
  %1077 = vst [vmem:[%s3 + $0x58] sm:$0xff] %v907
  %1078 = vst [vmem:[%s3 + $0x60] sm:$0xff] %v910
  %1079 = vst [vmem:[%s3 + $0x68] sm:$0xff] %v913
  %1080 = vst [vmem:[%s3 + $0x70] sm:$0xff] %v916
  %1081 = vst [vmem:[%s3 + $0x78] sm:$0xff] %v919
  %1082 = vst [vmem:[%s3 + $0x80] sm:$0xff] %v922
  %1083 = vst [vmem:[%s3 + $0x88] sm:$0xff] %v925
  %1084 = vst [vmem:[%s3 + $0x90] sm:$0xff] %v928
  %1085 = vst [vmem:[%s3 + $0x98] sm:$0xff] %v931
  %1086 = vst [vmem:[%s3 + $0xa0] sm:$0xff] %v934
  %1087 = vst [vmem:[%s3 + $0xa8] sm:$0xff] %v937
  %1088 = vst [vmem:[%s3 + $0xb0] sm:$0xff] %v940
  %1089 = vst [vmem:[%s3 + $0xb8] sm:$0xff] %v943
  %1090 = vst [vmem:[%s3 + $0xc0] sm:$0xff] %v946
  %1091 = vst [vmem:[%s3 + $0xc8] sm:$0xff] %v949
  %1092 = vst [vmem:[%s3 + $0xd0] sm:$0xff] %v952
  %1093 = vst [vmem:[%s3 + $0xd8] sm:$0xff] %v955
  %1094 = vst [vmem:[%s3 + $0xe0] sm:$0xff] %v958
  %1095 = vst [vmem:[%s3 + $0xe8] sm:$0xff] %v961
  %1096 = vst [vmem:[%s3 + $0xf0] sm:$0xff] %v964
  %1097 = vst [vmem:[%s3 + $0xf8] sm:$0xff] %v967
  %1098 = vst [vmem:[%s3 + $0x100] sm:$0xff] %v970
  %1099 = vst [vmem:[%s3 + $0x108] sm:$0xff] %v973
  %1100 = vst [vmem:[%s3 + $0x110] sm:$0xff] %v976
  %1101 = vst [vmem:[%s3 + $0x118] sm:$0xff] %v979
  %1102 = vst [vmem:[%s3 + $0x120] sm:$0xff] %v982
  %1103 = vst [vmem:[%s3 + $0x128] sm:$0xff] %v985
  %1104 = vst [vmem:[%s3 + $0x130] sm:$0xff] %v988
  %1105 = vst [vmem:[%s3 + $0x138] sm:$0xff] %v991
  %1106 = vst [vmem:[%s3 + $0x140] sm:$0xff] %v994
  %1107 = vst [vmem:[%s3 + $0x148] sm:$0xff] %v997
  %1108 = vst [vmem:[%s3 + $0x150] sm:$0xff] %v1000
  %1109 = vst [vmem:[%s3 + $0x158] sm:$0xff] %v1003
  %1110 = vst [vmem:[%s3 + $0x160] sm:$0xff] %v1006
  %1111 = vst [vmem:[%s3 + $0x168] sm:$0xff] %v1009
  %1112 = vst [vmem:[%s3 + $0x170] sm:$0xff] %v1012
  %1113 = vst [vmem:[%s3 + $0x178] sm:$0xff] %v1015
  %1114 = vst [vmem:[%s3 + $0x180] sm:$0xff] %v1018
  %1115 = vst [vmem:[%s3 + $0x188] sm:$0xff] %v1021
  %1116 = vst [vmem:[%s3 + $0x190] sm:$0xff] %v1024
  %1117 = vst [vmem:[%s3 + $0x198] sm:$0xff] %v1027
  %1118 = vst [vmem:[%s3 + $0x1a0] sm:$0xff] %v1030
  %1119 = vst [vmem:[%s3 + $0x1a8] sm:$0xff] %v1033
  %1120 = vst [vmem:[%s3 + $0x1b0] sm:$0xff] %v1036
  %1121 = vst [vmem:[%s3 + $0x1b8] sm:$0xff] %v1039
  %1122 = vst [vmem:[%s3 + $0x1c0] sm:$0xff] %v1042
  %1123 = vst [vmem:[%s3 + $0x1c8] sm:$0xff] %v1045
  %1124 = vst [vmem:[%s3 + $0x1d0] sm:$0xff] %v1048
  %1125 = vst [vmem:[%s3 + $0x1d8] sm:$0xff] %v1051
  %1126 = vst [vmem:[%s3 + $0x1e0] sm:$0xff] %v1054
  %1127 = vst [vmem:[%s3 + $0x1e8] sm:$0xff] %v1057
  %1128 = vst [vmem:[%s3 + $0x1f0] sm:$0xff] %v1060
  %1129 = vst [vmem:[%s3 + $0x1f8] sm:$0xff] %v1063
  %v1130 = vpack.c.bf16 %v875, %v875
  %v1131 = vpack.c.bf16 %v878, %v878
  %v1132 = vpack.c.bf16 %v881, %v881
  %v1133 = vpack.c.bf16 %v884, %v884
  %v1134 = vpack.c.bf16 %v887, %v887
  %v1135 = vpack.c.bf16 %v890, %v890
  %v1136 = vpack.c.bf16 %v893, %v893
  %v1137 = vpack.c.bf16 %v896, %v896
  %v1138 = vpack.c.bf16 %v899, %v899
  %v1139 = vpack.c.bf16 %v902, %v902
  %v1140 = vpack.c.bf16 %v905, %v905
  %v1141 = vpack.c.bf16 %v908, %v908
  %v1142 = vpack.c.bf16 %v911, %v911
  %v1143 = vpack.c.bf16 %v914, %v914
  %v1144 = vpack.c.bf16 %v917, %v917
  %v1145 = vpack.c.bf16 %v920, %v920
  %v1146 = vpack.c.bf16 %v923, %v923
  %v1147 = vpack.c.bf16 %v926, %v926
  %v1148 = vpack.c.bf16 %v929, %v929
  %v1149 = vpack.c.bf16 %v932, %v932
  %v1150 = vpack.c.bf16 %v935, %v935
  %v1151 = vpack.c.bf16 %v938, %v938
  %v1152 = vpack.c.bf16 %v941, %v941
  %v1153 = vpack.c.bf16 %v944, %v944
  %v1154 = vpack.c.bf16 %v947, %v947
  %v1155 = vpack.c.bf16 %v950, %v950
  %v1156 = vpack.c.bf16 %v953, %v953
  %v1157 = vpack.c.bf16 %v956, %v956
  %v1158 = vpack.c.bf16 %v959, %v959
  %v1159 = vpack.c.bf16 %v962, %v962
  %v1160 = vpack.c.bf16 %v965, %v965
  %v1161 = vpack.c.bf16 %v968, %v968
  %v1162 = vpack.c.bf16 %v971, %v971
  %v1163 = vpack.c.bf16 %v974, %v974
  %v1164 = vpack.c.bf16 %v977, %v977
  %v1165 = vpack.c.bf16 %v980, %v980
  %v1166 = vpack.c.bf16 %v983, %v983
  %v1167 = vpack.c.bf16 %v986, %v986
  %v1168 = vpack.c.bf16 %v989, %v989
  %v1169 = vpack.c.bf16 %v992, %v992
  %v1170 = vpack.c.bf16 %v995, %v995
  %v1171 = vpack.c.bf16 %v998, %v998
  %v1172 = vpack.c.bf16 %v1001, %v1001
  %v1173 = vpack.c.bf16 %v1004, %v1004
  %v1174 = vpack.c.bf16 %v1007, %v1007
  %v1175 = vpack.c.bf16 %v1010, %v1010
  %v1176 = vpack.c.bf16 %v1013, %v1013
  %v1177 = vpack.c.bf16 %v1016, %v1016
  %v1178 = vpack.c.bf16 %v1019, %v1019
  %v1179 = vpack.c.bf16 %v1022, %v1022
  %v1180 = vpack.c.bf16 %v1025, %v1025
  %v1181 = vpack.c.bf16 %v1028, %v1028
  %v1182 = vpack.c.bf16 %v1031, %v1031
  %v1183 = vpack.c.bf16 %v1034, %v1034
  %v1184 = vpack.c.bf16 %v1037, %v1037
  %v1185 = vpack.c.bf16 %v1040, %v1040
  %v1186 = vpack.c.bf16 %v1043, %v1043
  %v1187 = vpack.c.bf16 %v1046, %v1046
  %v1188 = vpack.c.bf16 %v1049, %v1049
  %v1189 = vpack.c.bf16 %v1052, %v1052
  %v1190 = vpack.c.bf16 %v1055, %v1055
  %v1191 = vpack.c.bf16 %v1058, %v1058
  %v1192 = vpack.c.bf16 %v1061, %v1061
  %v1193 = vpack.c.bf16 %v1064, %v1064
  %1194 = vst [vmem:[%s4] sm:$0xf] %v1130
  %1195 = vst [vmem:[%s4 + $0x4] sm:$0xf] %v1131
  %1196 = vst [vmem:[%s4 + $0x8] sm:$0xf] %v1132
  %1197 = vst [vmem:[%s4 + $0xc] sm:$0xf] %v1133
  %1198 = vst [vmem:[%s4 + $0x10] sm:$0xf] %v1134
  %1199 = vst [vmem:[%s4 + $0x14] sm:$0xf] %v1135
  %1200 = vst [vmem:[%s4 + $0x18] sm:$0xf] %v1136
  %1201 = vst [vmem:[%s4 + $0x1c] sm:$0xf] %v1137
  %1202 = vst [vmem:[%s4 + $0x20] sm:$0xf] %v1138
  %1203 = vst [vmem:[%s4 + $0x24] sm:$0xf] %v1139
  %1204 = vst [vmem:[%s4 + $0x28] sm:$0xf] %v1140
  %1205 = vst [vmem:[%s4 + $0x2c] sm:$0xf] %v1141
  %1206 = vst [vmem:[%s4 + $0x30] sm:$0xf] %v1142
  %1207 = vst [vmem:[%s4 + $0x34] sm:$0xf] %v1143
  %1208 = vst [vmem:[%s4 + $0x38] sm:$0xf] %v1144
  %1209 = vst [vmem:[%s4 + $0x3c] sm:$0xf] %v1145
  %1210 = vst [vmem:[%s4 + $0x40] sm:$0xf] %v1146
  %1211 = vst [vmem:[%s4 + $0x44] sm:$0xf] %v1147
  %1212 = vst [vmem:[%s4 + $0x48] sm:$0xf] %v1148
  %1213 = vst [vmem:[%s4 + $0x4c] sm:$0xf] %v1149
  %1214 = vst [vmem:[%s4 + $0x50] sm:$0xf] %v1150
  %1215 = vst [vmem:[%s4 + $0x54] sm:$0xf] %v1151
  %1216 = vst [vmem:[%s4 + $0x58] sm:$0xf] %v1152
  %1217 = vst [vmem:[%s4 + $0x5c] sm:$0xf] %v1153
  %1218 = vst [vmem:[%s4 + $0x60] sm:$0xf] %v1154
  %1219 = vst [vmem:[%s4 + $0x64] sm:$0xf] %v1155
  %1220 = vst [vmem:[%s4 + $0x68] sm:$0xf] %v1156
  %1221 = vst [vmem:[%s4 + $0x6c] sm:$0xf] %v1157
  %1222 = vst [vmem:[%s4 + $0x70] sm:$0xf] %v1158
  %1223 = vst [vmem:[%s4 + $0x74] sm:$0xf] %v1159
  %1224 = vst [vmem:[%s4 + $0x78] sm:$0xf] %v1160
  %1225 = vst [vmem:[%s4 + $0x7c] sm:$0xf] %v1161
  %1226 = vst [vmem:[%s4 + $0x80] sm:$0xf] %v1162
  %1227 = vst [vmem:[%s4 + $0x84] sm:$0xf] %v1163
  %1228 = vst [vmem:[%s4 + $0x88] sm:$0xf] %v1164
  %1229 = vst [vmem:[%s4 + $0x8c] sm:$0xf] %v1165
  %1230 = vst [vmem:[%s4 + $0x90] sm:$0xf] %v1166
  %1231 = vst [vmem:[%s4 + $0x94] sm:$0xf] %v1167
  %1232 = vst [vmem:[%s4 + $0x98] sm:$0xf] %v1168
  %1233 = vst [vmem:[%s4 + $0x9c] sm:$0xf] %v1169
  %1234 = vst [vmem:[%s4 + $0xa0] sm:$0xf] %v1170
  %1235 = vst [vmem:[%s4 + $0xa4] sm:$0xf] %v1171
  %1236 = vst [vmem:[%s4 + $0xa8] sm:$0xf] %v1172
  %1237 = vst [vmem:[%s4 + $0xac] sm:$0xf] %v1173
  %1238 = vst [vmem:[%s4 + $0xb0] sm:$0xf] %v1174
  %1239 = vst [vmem:[%s4 + $0xb4] sm:$0xf] %v1175
  %1240 = vst [vmem:[%s4 + $0xb8] sm:$0xf] %v1176
  %1241 = vst [vmem:[%s4 + $0xbc] sm:$0xf] %v1177
  %1242 = vst [vmem:[%s4 + $0xc0] sm:$0xf] %v1178
  %1243 = vst [vmem:[%s4 + $0xc4] sm:$0xf] %v1179
  %1244 = vst [vmem:[%s4 + $0xc8] sm:$0xf] %v1180
  %1245 = vst [vmem:[%s4 + $0xcc] sm:$0xf] %v1181
  %1246 = vst [vmem:[%s4 + $0xd0] sm:$0xf] %v1182
  %1247 = vst [vmem:[%s4 + $0xd4] sm:$0xf] %v1183
  %1248 = vst [vmem:[%s4 + $0xd8] sm:$0xf] %v1184
  %1249 = vst [vmem:[%s4 + $0xdc] sm:$0xf] %v1185
  %1250 = vst [vmem:[%s4 + $0xe0] sm:$0xf] %v1186
  %1251 = vst [vmem:[%s4 + $0xe4] sm:$0xf] %v1187
  %1252 = vst [vmem:[%s4 + $0xe8] sm:$0xf] %v1188
  %1253 = vst [vmem:[%s4 + $0xec] sm:$0xf] %v1189
  %1254 = vst [vmem:[%s4 + $0xf0] sm:$0xf] %v1190
  %1255 = vst [vmem:[%s4 + $0xf4] sm:$0xf] %v1191
  %1256 = vst [vmem:[%s4 + $0xf8] sm:$0xf] %v1192
  %1257 = vst [vmem:[%s4 + $0xfc] sm:$0xf] %v1193
  %v1258 = vpack.c.bf16 %v876, %v876
  %v1259 = vpack.c.bf16 %v879, %v879
  %v1260 = vpack.c.bf16 %v882, %v882
  %v1261 = vpack.c.bf16 %v885, %v885
  %v1262 = vpack.c.bf16 %v888, %v888
  %v1263 = vpack.c.bf16 %v891, %v891
  %v1264 = vpack.c.bf16 %v894, %v894
  %v1265 = vpack.c.bf16 %v897, %v897
  %v1266 = vpack.c.bf16 %v900, %v900
  %v1267 = vpack.c.bf16 %v903, %v903
  %v1268 = vpack.c.bf16 %v906, %v906
  %v1269 = vpack.c.bf16 %v909, %v909
  %v1270 = vpack.c.bf16 %v912, %v912
  %v1271 = vpack.c.bf16 %v915, %v915
  %v1272 = vpack.c.bf16 %v918, %v918
  %v1273 = vpack.c.bf16 %v921, %v921
  %v1274 = vpack.c.bf16 %v924, %v924
  %v1275 = vpack.c.bf16 %v927, %v927
  %v1276 = vpack.c.bf16 %v930, %v930
  %v1277 = vpack.c.bf16 %v933, %v933
  %v1278 = vpack.c.bf16 %v936, %v936
  %v1279 = vpack.c.bf16 %v939, %v939
  %v1280 = vpack.c.bf16 %v942, %v942
  %v1281 = vpack.c.bf16 %v945, %v945
  %v1282 = vpack.c.bf16 %v948, %v948
  %v1283 = vpack.c.bf16 %v951, %v951
  %v1284 = vpack.c.bf16 %v954, %v954
  %v1285 = vpack.c.bf16 %v957, %v957
  %v1286 = vpack.c.bf16 %v960, %v960
  %v1287 = vpack.c.bf16 %v963, %v963
  %v1288 = vpack.c.bf16 %v966, %v966
  %v1289 = vpack.c.bf16 %v969, %v969
  %v1290 = vpack.c.bf16 %v972, %v972
  %v1291 = vpack.c.bf16 %v975, %v975
  %v1292 = vpack.c.bf16 %v978, %v978
  %v1293 = vpack.c.bf16 %v981, %v981
  %v1294 = vpack.c.bf16 %v984, %v984
  %v1295 = vpack.c.bf16 %v987, %v987
  %v1296 = vpack.c.bf16 %v990, %v990
  %v1297 = vpack.c.bf16 %v993, %v993
  %v1298 = vpack.c.bf16 %v996, %v996
  %v1299 = vpack.c.bf16 %v999, %v999
  %v1300 = vpack.c.bf16 %v1002, %v1002
  %v1301 = vpack.c.bf16 %v1005, %v1005
  %v1302 = vpack.c.bf16 %v1008, %v1008
  %v1303 = vpack.c.bf16 %v1011, %v1011
  %v1304 = vpack.c.bf16 %v1014, %v1014
  %v1305 = vpack.c.bf16 %v1017, %v1017
  %v1306 = vpack.c.bf16 %v1020, %v1020
  %v1307 = vpack.c.bf16 %v1023, %v1023
  %v1308 = vpack.c.bf16 %v1026, %v1026
  %v1309 = vpack.c.bf16 %v1029, %v1029
  %v1310 = vpack.c.bf16 %v1032, %v1032
  %v1311 = vpack.c.bf16 %v1035, %v1035
  %v1312 = vpack.c.bf16 %v1038, %v1038
  %v1313 = vpack.c.bf16 %v1041, %v1041
  %v1314 = vpack.c.bf16 %v1044, %v1044
  %v1315 = vpack.c.bf16 %v1047, %v1047
  %v1316 = vpack.c.bf16 %v1050, %v1050
  %v1317 = vpack.c.bf16 %v1053, %v1053
  %v1318 = vpack.c.bf16 %v1056, %v1056
  %v1319 = vpack.c.bf16 %v1059, %v1059
  %v1320 = vpack.c.bf16 %v1062, %v1062
  %v1321 = vpack.c.bf16 %v1065, %v1065
  %1322 = vst [vmem:[%s5] sm:$0xf] %v1258
  %1323 = vst [vmem:[%s5 + $0x4] sm:$0xf] %v1259
  %1324 = vst [vmem:[%s5 + $0x8] sm:$0xf] %v1260
  %1325 = vst [vmem:[%s5 + $0xc] sm:$0xf] %v1261
  %1326 = vst [vmem:[%s5 + $0x10] sm:$0xf] %v1262
  %1327 = vst [vmem:[%s5 + $0x14] sm:$0xf] %v1263
  %1328 = vst [vmem:[%s5 + $0x18] sm:$0xf] %v1264
  %1329 = vst [vmem:[%s5 + $0x1c] sm:$0xf] %v1265
  %1330 = vst [vmem:[%s5 + $0x20] sm:$0xf] %v1266
  %1331 = vst [vmem:[%s5 + $0x24] sm:$0xf] %v1267
  %1332 = vst [vmem:[%s5 + $0x28] sm:$0xf] %v1268
  %1333 = vst [vmem:[%s5 + $0x2c] sm:$0xf] %v1269
  %1334 = vst [vmem:[%s5 + $0x30] sm:$0xf] %v1270
  %1335 = vst [vmem:[%s5 + $0x34] sm:$0xf] %v1271
  %1336 = vst [vmem:[%s5 + $0x38] sm:$0xf] %v1272
  %1337 = vst [vmem:[%s5 + $0x3c] sm:$0xf] %v1273
  %1338 = vst [vmem:[%s5 + $0x40] sm:$0xf] %v1274
  %1339 = vst [vmem:[%s5 + $0x44] sm:$0xf] %v1275
  %1340 = vst [vmem:[%s5 + $0x48] sm:$0xf] %v1276
  %1341 = vst [vmem:[%s5 + $0x4c] sm:$0xf] %v1277
  %1342 = vst [vmem:[%s5 + $0x50] sm:$0xf] %v1278
  %1343 = vst [vmem:[%s5 + $0x54] sm:$0xf] %v1279
  %1344 = vst [vmem:[%s5 + $0x58] sm:$0xf] %v1280
  %1345 = vst [vmem:[%s5 + $0x5c] sm:$0xf] %v1281
  %1346 = vst [vmem:[%s5 + $0x60] sm:$0xf] %v1282
  %1347 = vst [vmem:[%s5 + $0x64] sm:$0xf] %v1283
  %1348 = vst [vmem:[%s5 + $0x68] sm:$0xf] %v1284
  %1349 = vst [vmem:[%s5 + $0x6c] sm:$0xf] %v1285
  %1350 = vst [vmem:[%s5 + $0x70] sm:$0xf] %v1286
  %1351 = vst [vmem:[%s5 + $0x74] sm:$0xf] %v1287
  %1352 = vst [vmem:[%s5 + $0x78] sm:$0xf] %v1288
  %1353 = vst [vmem:[%s5 + $0x7c] sm:$0xf] %v1289
  %1354 = vst [vmem:[%s5 + $0x80] sm:$0xf] %v1290
  %1355 = vst [vmem:[%s5 + $0x84] sm:$0xf] %v1291
  %1356 = vst [vmem:[%s5 + $0x88] sm:$0xf] %v1292
  %1357 = vst [vmem:[%s5 + $0x8c] sm:$0xf] %v1293
  %1358 = vst [vmem:[%s5 + $0x90] sm:$0xf] %v1294
  %1359 = vst [vmem:[%s5 + $0x94] sm:$0xf] %v1295
  %1360 = vst [vmem:[%s5 + $0x98] sm:$0xf] %v1296
  %1361 = vst [vmem:[%s5 + $0x9c] sm:$0xf] %v1297
  %1362 = vst [vmem:[%s5 + $0xa0] sm:$0xf] %v1298
  %1363 = vst [vmem:[%s5 + $0xa4] sm:$0xf] %v1299
  %1364 = vst [vmem:[%s5 + $0xa8] sm:$0xf] %v1300
  %1365 = vst [vmem:[%s5 + $0xac] sm:$0xf] %v1301
  %1366 = vst [vmem:[%s5 + $0xb0] sm:$0xf] %v1302
  %1367 = vst [vmem:[%s5 + $0xb4] sm:$0xf] %v1303
  %1368 = vst [vmem:[%s5 + $0xb8] sm:$0xf] %v1304
  %1369 = vst [vmem:[%s5 + $0xbc] sm:$0xf] %v1305
  %1370 = vst [vmem:[%s5 + $0xc0] sm:$0xf] %v1306
  %1371 = vst [vmem:[%s5 + $0xc4] sm:$0xf] %v1307
  %1372 = vst [vmem:[%s5 + $0xc8] sm:$0xf] %v1308
  %1373 = vst [vmem:[%s5 + $0xcc] sm:$0xf] %v1309
  %1374 = vst [vmem:[%s5 + $0xd0] sm:$0xf] %v1310
  %1375 = vst [vmem:[%s5 + $0xd4] sm:$0xf] %v1311
  %1376 = vst [vmem:[%s5 + $0xd8] sm:$0xf] %v1312
  %1377 = vst [vmem:[%s5 + $0xdc] sm:$0xf] %v1313
  %1378 = vst [vmem:[%s5 + $0xe0] sm:$0xf] %v1314
  %1379 = vst [vmem:[%s5 + $0xe4] sm:$0xf] %v1315
  %1380 = vst [vmem:[%s5 + $0xe8] sm:$0xf] %v1316
  %1381 = vst [vmem:[%s5 + $0xec] sm:$0xf] %v1317
  %1382 = vst [vmem:[%s5 + $0xf0] sm:$0xf] %v1318
  %1383 = vst [vmem:[%s5 + $0xf4] sm:$0xf] %v1319
  %1384 = vst [vmem:[%s5 + $0xf8] sm:$0xf] %v1320
  %1385 = vst [vmem:[%s5 + $0xfc] sm:$0xf] %v1321
  // Predicated region
  $region14: #{_lambda_.7} parent=0 // pred_check
    _
  $region15: #{_lambda_.7} parent=0 // pred_check_branch
    %1387 = sbr.rel (0) target = $region17
  $region16: #{_lambda_.7} parent=0 // pred_region
    _
  $region17: #{_lambda_.7} parent=0 // pred_fallthru
    _
  // Predicated region
  $region18: #{_lambda_.7} parent=0 // pred_check
    _
  $region19: #{_lambda_.7} parent=0 // pred_check_branch
    %1389 = sbr.rel (0) target = $region21
  $region20: #{_lambda_.7} parent=0 // pred_region
    _
  $region21: #{_lambda_.7} parent=0 // pred_fallthru
    _
  // Predicated region
  $region22: #{_lambda_.7} parent=0 // pred_check
    _
  $region23: #{_lambda_.7} parent=0 // pred_check_branch
    %1391 = sbr.rel (0) target = $region25
  $region24: #{_lambda_.7} parent=0 // pred_region
    _
  $region25: #{_lambda_.7} parent=0 // pred_fallthru
    _
  // Predicated region
  $region26: #{_lambda_.7} parent=0 // pred_check
    _
  $region27: #{_lambda_.7} parent=0 // pred_check_branch
    %1393 = sbr.rel (0) target = $region29
  $region28: #{_lambda_.7} parent=0 // pred_region
    _
  $region29: #{_lambda_.7} parent=0 // pred_fallthru
    _
  // Predicated region
  $region30: #{_lambda_.7} parent=0 // pred_check
    _
  $region31: #{_lambda_.7} parent=0 // pred_check_branch
    %1395 = sbr.rel (0) target = $region33
  $region32: #{_lambda_.7} parent=0 // pred_region
    _
  $region33: #{_lambda_.7} parent=0 // pred_fallthru
    _
  // Predicated region
  $region34: #{_lambda_.7} parent=0 // pred_check
    _
  $region35: #{_lambda_.7} parent=0 // pred_check_branch
    %1397 = sbr.rel (0) target = $region37
  $region36: #{_lambda_.7} parent=0 // pred_region
    _
  $region37: #{_lambda_.7} parent=0 // pred_fallthru
    _

// kernel: _lambda_.9
$region0: #{_lambda_.9}
  #allocation0 [shape = 'u32[]', space=smem, size = 0x4, offset = 0x4, fixed_abs, tag = 'smem constant byte address 0x4 - core index']
  #allocation1 [shape = 'u32[72,128]{1,0:T(1,128)}', space=vmem, size = 0x9000, scoped, tag = 'internal scratch']
  %s0 = inlined_call_operand.vmem [shape: bf16[2,6,64,128], index: 0, kind: input, shape index: {}]
  %s1 = inlined_call_operand.vmem [shape: bf16[3,128,128], index: 1, kind: input, shape index: {}]
  %s2 = inlined_call_operand.vmem [shape: f32[1,128], index: 2, kind: input, shape index: {}]
  %s3 = inlined_call_operand.vmem [shape: f32[2,4,64,128], index: 3, kind: output, shape index: {}]
  %s4 = sld [smem:[#allocation0]]
  $region45: #{_lambda_.9} parent=0
    _
  %s6 = ssub.s32 1, %s4
  %s7 = scalar_select 0, %s6, %s4
  loop: start=0, step=1, limit=4
  $region2: #{_lambda_.9} parent=0 // loop_pre_header
    _
  $region3: #{_lambda_.9} parent=0 // loop_header
    %s9 = sphi 0, %s13
    %p10 = scmp.ge.s32.totalorder %s9, 4
    %s16 = sphi 0, %s28
    %s17 = sphi 0, %s24
    %s18 = sphi 0, %s16
    %s19 = sphi 0, %s17
    %s20 = sphi 0, %s18
    %s21 = sphi 0, %s19
    %s33 = sphi 0, %s35
    %s36 = sphi 0, %s33
    %s37 = sphi 0, %s36
    %s53 = sphi 0, %s37
    %s57 = sphi 0, %s57
    %s59 = sphi 0, %s57
    %s60 = sphi 0, %s59
    %s74 = sphi 0, %s60
    %s78 = sphi 0, %s78
    %s80 = sphi 0, %s78
    %s81 = sphi 0, %s80
    %s95 = sphi 0, %s81
    %s103 = sphi 0, %s105
    %s106 = sphi 0, %s103
    %s107 = sphi 0, %s106
    %s123 = sphi 0, %s107
  $region4: #{_lambda_.9} parent=0 // loop_header_branch
    %12 = sbr.rel (%p10) target = $region8
  $region5: #{_lambda_.9} parent=0 // loop_body
    %s14 = ssub.s32 %s9, 1
    %s15 = ssub.s32 %s9, 2
    %s22 = sadd.s32 1, %s17
    %p23 = scmp.ge.s32.totalorder %s22, 1
    %s24 = scalar_select %p23, 0, %s22
    %s25 = sadd.s32 1, %s16
    %s26 = scalar_select %p23, %s25, %s16
    %p27 = scmp.ge.s32.totalorder %s26, 2
    %s28 = scalar_select %p27, 0, %s26
    %s29 = ssub.s32 %s16, %s28
    %s30 = ssub.s32 %s17, %s24
    %s31 = sor.u32 %s29, %s30
    %p32 = scmp.eq.s32.totalorder %s31, 0
    %s34 = sadd.s32 %s33, 1
    %s35 = scalar_select %p32, %s33, %s34
    %p38 = pneg %p32
    %p39 = scmp.eq.s32.totalorder %s9, 1
    %p40 = por %p38, %p39
    %p41 = scmp.ne.s32.totalorder %s33, %s36
    %p42 = scmp.eq.s32.totalorder %s9, 0
    %p43 = por %p41, %p42
    %p44 = scmp.ne.s32.totalorder %s33, %s36
    %p45 = scmp.eq.s32.totalorder %s14, 1
    %p46 = por %p44, %p45
    %p47 = scmp.ne.s32.totalorder %s36, %s37
    %p48 = scmp.eq.s32.totalorder %s14, 0
    %p49 = por %p47, %p48
    %p50 = scmp.ne.s32.totalorder %s36, %s37
    %p51 = scmp.eq.s32.totalorder %s15, 1
    %p52 = por %p50, %p51
    %p54 = scmp.ne.s32.totalorder %s37, %s53
    %p55 = scmp.eq.s32.totalorder %s15, 0
    %p56 = por %p54, %p55
    %s58 = sadd.s32 %s57, 1
    %p61 = scmp.eq.s32.totalorder %s9, 1
    %p62 = scmp.ne.s32.totalorder %s57, %s59
    %p63 = scmp.eq.s32.totalorder %s9, 0
    %p64 = por %p62, %p63
    %p65 = scmp.ne.s32.totalorder %s57, %s59
    %p66 = scmp.eq.s32.totalorder %s14, 1
    %p67 = por %p65, %p66
    %p68 = scmp.ne.s32.totalorder %s59, %s60
    %p69 = scmp.eq.s32.totalorder %s14, 0
    %p70 = por %p68, %p69
    %p71 = scmp.ne.s32.totalorder %s59, %s60
    %p72 = scmp.eq.s32.totalorder %s15, 1
    %p73 = por %p71, %p72
    %p75 = scmp.ne.s32.totalorder %s60, %s74
    %p76 = scmp.eq.s32.totalorder %s15, 0
    %p77 = por %p75, %p76
    %s79 = sadd.s32 %s78, 1
    %p82 = scmp.eq.s32.totalorder %s9, 1
    %p83 = scmp.ne.s32.totalorder %s78, %s80
    %p84 = scmp.eq.s32.totalorder %s9, 0
    %p85 = por %p83, %p84
    %p86 = scmp.ne.s32.totalorder %s78, %s80
    %p87 = scmp.eq.s32.totalorder %s14, 1
    %p88 = por %p86, %p87
    %p89 = scmp.ne.s32.totalorder %s80, %s81
    %p90 = scmp.eq.s32.totalorder %s14, 0
    %p91 = por %p89, %p90
    %p92 = scmp.ne.s32.totalorder %s80, %s81
    %p93 = scmp.eq.s32.totalorder %s15, 1
    %p94 = por %p92, %p93
    %p96 = scmp.ne.s32.totalorder %s81, %s95
    %p97 = scmp.eq.s32.totalorder %s15, 0
    %p98 = por %p96, %p97
    %s99 = ssub.s32 %s16, %s28
    %s100 = ssub.s32 %s17, %s24
    %s101 = sor.u32 %s99, %s100
    %p102 = scmp.eq.s32.totalorder %s101, 0
    %s104 = sadd.s32 %s103, 1
    %s105 = scalar_select %p102, %s103, %s104
    %p108 = pneg %p102
    %p109 = scmp.eq.s32.totalorder %s9, 1
    %p110 = por %p108, %p109
    %p111 = scmp.ne.s32.totalorder %s103, %s106
    %p112 = scmp.eq.s32.totalorder %s9, 0
    %p113 = por %p111, %p112
    %p114 = scmp.ne.s32.totalorder %s103, %s106
    %p115 = scmp.eq.s32.totalorder %s14, 1
    %p116 = por %p114, %p115
    %p117 = scmp.ne.s32.totalorder %s106, %s107
    %p118 = scmp.eq.s32.totalorder %s14, 0
    %p119 = por %p117, %p118
    %p120 = scmp.ne.s32.totalorder %s106, %s107
    %p121 = scmp.eq.s32.totalorder %s15, 1
    %p122 = por %p120, %p121
    %p124 = scmp.ne.s32.totalorder %s107, %s123
    %p125 = scmp.eq.s32.totalorder %s15, 0
    %p126 = por %p124, %p125
    %p127 = scmp.le.s32.totalorder 1, %s9
    %p128 = scmp.lt.s32.totalorder %s9, 3
    %p129 = pnand %p127, %p128
    %p130 = pneg %p129
    // Predicated region
    $region9: #{_lambda_.9} parent=5 // pred_check
      _
    $region10: #{_lambda_.9} parent=5 // pred_check_branch
      %132 = sbr.rel (%p129) target = $region12
    $region11: #{_lambda_.9} parent=5 // pred_region
      %s133 = ssub.s32 %s9, 1
      // Predicated region
      $region13: #{_lambda_.9} parent=11 // pred_check
        %p134 = pneg %p70
      $region14: #{_lambda_.9} parent=11 // pred_check_branch
        %136 = sbr.rel (%p134) target = $region16
      $region15: #{_lambda_.9} parent=11 // pred_region
        _
      $region16: #{_lambda_.9} parent=11 // pred_fallthru
        _
      // Predicated region
      $region17: #{_lambda_.9} parent=11 // pred_check
        %p137 = pneg %p91
      $region18: #{_lambda_.9} parent=11 // pred_check_branch
        %139 = sbr.rel (%p137) target = $region20
      $region19: #{_lambda_.9} parent=11 // pred_region
        _
      $region20: #{_lambda_.9} parent=11 // pred_fallthru
        _
    $region12: #{_lambda_.9} parent=5 // pred_fallthru
      _
    %p140 = scmp.lt.s32.totalorder %s9, 2
    // Predicated region
    $region21: #{_lambda_.9} parent=5 // pred_check
      %p141 = pneg %p140
    $region22: #{_lambda_.9} parent=5 // pred_check_branch
      %143 = sbr.rel (%p141) target = $region24
    $region23: #{_lambda_.9} parent=5 // pred_region
      // Predicated region
      $region25: #{_lambda_.9} parent=23 // pred_check
        %p144 = pneg %p43
      $region26: #{_lambda_.9} parent=23 // pred_check_branch
        %146 = sbr.rel (%p144) target = $region28
      $region27: #{_lambda_.9} parent=23 // pred_region
        %s147 = smul.u32 8, %s17
        %p148 = scmp.lt.s32.totalorder %s16, 1
        %s149 = scalar_select %p148, %s16, 1
        %p150 = scmp.lt.s32.totalorder %s147, 7
        %s151 = scalar_select %p150, %s147, 7
        %s152 = smul.addr %s149, 48
        %s153 = sadd.s32 %s151, %s152
        %s154 = smul.addr %s153, 4
        %s155 = scalar_lea.vmem %s0, %s154
        %s156 = smul.u32 8, %s17
      $region28: #{_lambda_.9} parent=23 // pred_fallthru
        _
    $region24: #{_lambda_.9} parent=5 // pred_fallthru
      _
    %p157 = scmp.le.s32.totalorder 1, %s9
    %p158 = scmp.lt.s32.totalorder %s9, 3
    %p159 = pnand %p157, %p158
    %p160 = pneg %p159
    // Predicated region
    $region29: #{_lambda_.9} parent=5 // pred_check
      _
    $region30: #{_lambda_.9} parent=5 // pred_check_branch
      %162 = sbr.rel (%p159) target = $region32
    $region31: #{_lambda_.9} parent=5 // pred_region
      %s163 = ssub.s32 %s9, 1
      %s164 = smul.u32 8, %s19
      %p165 = scmp.lt.s32.totalorder %s18, 1
      %s166 = scalar_select %p165, %s18, 1
      %p167 = scmp.lt.s32.totalorder %s164, 7
      %s168 = scalar_select %p167, %s164, 7
      %s169 = smul.addr %s166, 48
      %s170 = sadd.s32 %s168, %s169
      %s171 = smul.addr %s170, 4
      %s172 = scalar_lea.vmem %s0, %s171
      %p173 = pneg %p49
      %p174 = pneg %p46
      %p175 = pneg %p70
      %p176 = pneg %p67
      %p177 = pneg %p91
      %p178 = pneg %p88
      %p179 = pneg %p119
      %p180 = pneg %p116
      %s181 = smul.u32 8, %s19
      %p182 = scmp.lt.s32.totalorder %s18, 1
      %s183 = scalar_select %p182, %s18, 1
      %p184 = scmp.lt.s32.totalorder %s181, 7
      %s185 = scalar_select %p184, %s181, 7
      %s186 = smul.addr %s183, 32
      %s187 = sadd.s32 %s185, %s186
      %s188 = smul.addr %s187, 8
      %s189 = scalar_lea.vmem %s3, %s188
      %s190 = smul.u32 8, %s19
      %p191 = scmp.lt.s32.totalorder %s18, 1
      %s192 = scalar_select %p191, %s18, 1
      %p193 = scmp.lt.s32.totalorder %s190, 7
      %s194 = scalar_select %p193, %s190, 7
      %s195 = smul.addr %s192, 48
      %s196 = sadd.s32 %s194, %s195
      %s197 = smul.addr %s196, 4
      %s198 = scalar_lea.vmem %s0, %s197
      %s199 = smul.u32 8, %s19
      %s200 = smul.u32 8, %s19
      %p201 = scmp.lt.s32.totalorder %s18, 1
      %s202 = scalar_select %p201, %s18, 1
      %p203 = scmp.lt.s32.totalorder %s200, 7
      %s204 = scalar_select %p203, %s200, 7
      %s205 = smul.addr %s202, 32
      %s206 = sadd.s32 %s204, %s205
      %s207 = smul.addr %s206, 8
      %s208 = scalar_lea.vmem %s3, %s207
      %s209 = smul.u32 8, %s19
      %v210 = vld [vmem:[%s198] sm:$0xf]
      %v211 = vld [vmem:[%s198 + $0x4] sm:$0xf]
      %v212 = vld [vmem:[%s198 + $0x8] sm:$0xf]
      %v213 = vld [vmem:[%s198 + $0xc] sm:$0xf]
      %v214 = vld [vmem:[%s198 + $0x10] sm:$0xf]
      %v215 = vld [vmem:[%s198 + $0x14] sm:$0xf]
      %v216 = vld [vmem:[%s198 + $0x18] sm:$0xf]
      %v217 = vld [vmem:[%s198 + $0x1c] sm:$0xf]
      %v218 = vld [vmem:[%s198 + $0x20] sm:$0xf]
      %v219 = vld [vmem:[%s198 + $0x24] sm:$0xf]
      %v220 = vld [vmem:[%s198 + $0x28] sm:$0xf]
      %v221 = vld [vmem:[%s198 + $0x2c] sm:$0xf]
      %v222 = vld [vmem:[%s198 + $0x30] sm:$0xf]
      %v223 = vld [vmem:[%s198 + $0x34] sm:$0xf]
      %v224 = vld [vmem:[%s198 + $0x38] sm:$0xf]
      %v225 = vld [vmem:[%s198 + $0x3c] sm:$0xf]
      %v226 = vld [vmem:[%s198 + $0x40] sm:$0xf]
      %v227 = vld [vmem:[%s198 + $0x44] sm:$0xf]
      %v228 = vld [vmem:[%s198 + $0x48] sm:$0xf]
      %v229 = vld [vmem:[%s198 + $0x4c] sm:$0xf]
      %v230 = vld [vmem:[%s198 + $0x50] sm:$0xf]
      %v231 = vld [vmem:[%s198 + $0x54] sm:$0xf]
      %v232 = vld [vmem:[%s198 + $0x58] sm:$0xf]
      %v233 = vld [vmem:[%s198 + $0x5c] sm:$0xf]
      %v234 = vld [vmem:[%s198 + $0x60] sm:$0xf]
      %v235 = vld [vmem:[%s198 + $0x64] sm:$0xf]
      %v236 = vld [vmem:[%s198 + $0x68] sm:$0xf]
      %v237 = vld [vmem:[%s198 + $0x6c] sm:$0xf]
      %v238 = vld [vmem:[%s198 + $0x70] sm:$0xf]
      %v239 = vld [vmem:[%s198 + $0x74] sm:$0xf]
      %v240 = vld [vmem:[%s198 + $0x78] sm:$0xf]
      %v241 = vld [vmem:[%s198 + $0x7c] sm:$0xf]
      %v242 = vld [vmem:[%s198 + $0x80] sm:$0xf]
      %v243 = vld [vmem:[%s198 + $0x84] sm:$0xf]
      %v244 = vld [vmem:[%s198 + $0x88] sm:$0xf]
      %v245 = vld [vmem:[%s198 + $0x8c] sm:$0xf]
      %v246 = vld [vmem:[%s198 + $0x90] sm:$0xf]
      %v247 = vld [vmem:[%s198 + $0x94] sm:$0xf]
      %v248 = vld [vmem:[%s198 + $0x98] sm:$0xf]
      %v249 = vld [vmem:[%s198 + $0x9c] sm:$0xf]
      %v250 = vld [vmem:[%s198 + $0xa0] sm:$0xf]
      %v251 = vld [vmem:[%s198 + $0xa4] sm:$0xf]
      %v252 = vld [vmem:[%s198 + $0xa8] sm:$0xf]
      %v253 = vld [vmem:[%s198 + $0xac] sm:$0xf]
      %v254 = vld [vmem:[%s198 + $0xb0] sm:$0xf]
      %v255 = vld [vmem:[%s198 + $0xb4] sm:$0xf]
      %v256 = vld [vmem:[%s198 + $0xb8] sm:$0xf]
      %v257 = vld [vmem:[%s198 + $0xbc] sm:$0xf]
      %v258 = vld [vmem:[%s1] sm:$0xf]
      %v259 = vld [vmem:[%s1 + $0x4] sm:$0xf]
      %v260 = vld [vmem:[%s1 + $0x8] sm:$0xf]
      %v261 = vld [vmem:[%s1 + $0xc] sm:$0xf]
      %v262 = vld [vmem:[%s1 + $0x10] sm:$0xf]
      %v263 = vld [vmem:[%s1 + $0x14] sm:$0xf]
      %v264 = vld [vmem:[%s1 + $0x18] sm:$0xf]
      %v265 = vld [vmem:[%s1 + $0x1c] sm:$0xf]
      %v266 = vld [vmem:[%s1 + $0x20] sm:$0xf]
      %v267 = vld [vmem:[%s1 + $0x24] sm:$0xf]
      %v268 = vld [vmem:[%s1 + $0x28] sm:$0xf]
      %v269 = vld [vmem:[%s1 + $0x2c] sm:$0xf]
      %v270 = vld [vmem:[%s1 + $0x30] sm:$0xf]
      %v271 = vld [vmem:[%s1 + $0x34] sm:$0xf]
      %v272 = vld [vmem:[%s1 + $0x38] sm:$0xf]
      %v273 = vld [vmem:[%s1 + $0x3c] sm:$0xf]
      %s274 = scalar_lea.vmem %s1, 64
      %v275 = vld [vmem:[%s274] sm:$0xf]
      %v276 = vld [vmem:[%s274 + $0x4] sm:$0xf]
      %v277 = vld [vmem:[%s274 + $0x8] sm:$0xf]
      %v278 = vld [vmem:[%s274 + $0xc] sm:$0xf]
      %v279 = vld [vmem:[%s274 + $0x10] sm:$0xf]
      %v280 = vld [vmem:[%s274 + $0x14] sm:$0xf]
      %v281 = vld [vmem:[%s274 + $0x18] sm:$0xf]
      %v282 = vld [vmem:[%s274 + $0x1c] sm:$0xf]
      %v283 = vld [vmem:[%s274 + $0x20] sm:$0xf]
      %v284 = vld [vmem:[%s274 + $0x24] sm:$0xf]
      %v285 = vld [vmem:[%s274 + $0x28] sm:$0xf]
      %v286 = vld [vmem:[%s274 + $0x2c] sm:$0xf]
      %v287 = vld [vmem:[%s274 + $0x30] sm:$0xf]
      %v288 = vld [vmem:[%s274 + $0x34] sm:$0xf]
      %v289 = vld [vmem:[%s274 + $0x38] sm:$0xf]
      %v290 = vld [vmem:[%s274 + $0x3c] sm:$0xf]
      %v323 = vunpack.c.l.b16 %v218
      %v324 = vunpack.c.l.b16 %v219
      %v325 = vunpack.c.l.b16 %v220
      %v326 = vunpack.c.l.b16 %v221
      %v327 = vunpack.c.l.b16 %v222
      %v328 = vunpack.c.l.b16 %v223
      %v329 = vunpack.c.l.b16 %v224
      %v330 = vunpack.c.l.b16 %v225
      %v331 = vunpack.c.l.b16 %v226
      %v332 = vunpack.c.l.b16 %v227
      %v333 = vunpack.c.l.b16 %v228
      %v334 = vunpack.c.l.b16 %v229
      %v335 = vunpack.c.l.b16 %v230
      %v336 = vunpack.c.l.b16 %v231
      %v337 = vunpack.c.l.b16 %v232
      %v338 = vunpack.c.l.b16 %v233
      %v339 = vunpack.c.l.b16 %v234
      %v340 = vunpack.c.l.b16 %v235
      %v341 = vunpack.c.l.b16 %v236
      %v342 = vunpack.c.l.b16 %v237
      %v343 = vunpack.c.l.b16 %v238
      %v344 = vunpack.c.l.b16 %v239
      %v345 = vunpack.c.l.b16 %v240
      %v346 = vunpack.c.l.b16 %v241
      %v347 = vunpack.c.l.b16 %v242
      %v348 = vunpack.c.l.b16 %v243
      %v349 = vunpack.c.l.b16 %v244
      %v350 = vunpack.c.l.b16 %v245
      %v351 = vunpack.c.l.b16 %v246
      %v352 = vunpack.c.l.b16 %v247
      %v353 = vunpack.c.l.b16 %v248
      %v354 = vunpack.c.l.b16 %v249
      %v355 = vpack.c.b16 %v324, %v323
      %v356 = vpack.c.b16 %v326, %v325
      %v357 = vpack.c.b16 %v328, %v327
      %v358 = vpack.c.b16 %v330, %v329
      %v359 = vpack.c.b16 %v332, %v331
      %v360 = vpack.c.b16 %v334, %v333
      %v361 = vpack.c.b16 %v336, %v335
      %v362 = vpack.c.b16 %v338, %v337
      %v363 = vpack.c.b16 %v340, %v339
      %v364 = vpack.c.b16 %v342, %v341
      %v365 = vpack.c.b16 %v344, %v343
      %v366 = vpack.c.b16 %v346, %v345
      %v367 = vpack.c.b16 %v348, %v347
      %v368 = vpack.c.b16 %v350, %v349
      %v369 = vpack.c.b16 %v352, %v351
      %v370 = vpack.c.b16 %v354, %v353
      %v403 = vunpack.c.l.b16 %v275
      %v404 = vunpack.c.l.b16 %v276
      %v405 = vunpack.c.l.b16 %v277
      %v406 = vunpack.c.l.b16 %v278
      %v407 = vunpack.c.l.b16 %v279
      %v408 = vunpack.c.l.b16 %v280
      %v409 = vunpack.c.l.b16 %v281
      %v410 = vunpack.c.l.b16 %v282
      %v411 = vunpack.c.l.b16 %v283
      %v412 = vunpack.c.l.b16 %v284
      %v413 = vunpack.c.l.b16 %v285
      %v414 = vunpack.c.l.b16 %v286
      %v415 = vunpack.c.l.b16 %v287
      %v416 = vunpack.c.l.b16 %v288
      %v417 = vunpack.c.l.b16 %v289
      %v418 = vunpack.c.l.b16 %v290
      %v419 = vpack.c.b16 %v404, %v403
      %v420 = vpack.c.b16 %v406, %v405
      %v421 = vpack.c.b16 %v408, %v407
      %v422 = vpack.c.b16 %v410, %v409
      %v423 = vpack.c.b16 %v412, %v411
      %v424 = vpack.c.b16 %v414, %v413
      %v425 = vpack.c.b16 %v416, %v415
      %v426 = vpack.c.b16 %v418, %v417
      %435 = vmatpush.bf16.msra.mxu0 %v426
      %436 = vmatpush.bf16.msra.mxu0 %v425
      %437 = vmatpush.bf16.msra.mxu0 %v424
      %438 = vmatpush.bf16.msra.mxu0 %v423
      %439 = vmatpush.bf16.msra.mxu0 %v422
      %440 = vmatpush.bf16.msra.mxu0 %v421
      %441 = vmatpush.bf16.msra.mxu0 %v420
      %442 = vmatpush.bf16.msra.mxu0 %v419
      %443 = vmatmul.bf16.gmra.mxu0 %v355
      %v444 = vpop.f32.mrf.mxu0
      %v445 = vadd.f32 0.0, %v444
      %v446 = vpop.f32.mrf.mxu0
      %v447 = vadd.f32 0.0, %v446
      %448 = vmatmul.bf16.gmra.mxu0 %v356
      %v449 = vpop.f32.mrf.mxu0
      %v450 = vadd.f32 0.0, %v449
      %v451 = vpop.f32.mrf.mxu0
      %v452 = vadd.f32 0.0, %v451
      %453 = vmatmul.bf16.gmra.mxu0 %v357
      %v454 = vpop.f32.mrf.mxu0
      %v455 = vadd.f32 0.0, %v454
      %v456 = vpop.f32.mrf.mxu0
      %v457 = vadd.f32 0.0, %v456
      %458 = vmatmul.bf16.gmra.mxu0 %v358
      %v459 = vpop.f32.mrf.mxu0
      %v460 = vadd.f32 0.0, %v459
      %v461 = vpop.f32.mrf.mxu0
      %v462 = vadd.f32 0.0, %v461
      %463 = vmatmul.bf16.gmra.mxu0 %v359
      %v464 = vpop.f32.mrf.mxu0
      %v465 = vadd.f32 0.0, %v464
      %v466 = vpop.f32.mrf.mxu0
      %v467 = vadd.f32 0.0, %v466
      %468 = vmatmul.bf16.gmra.mxu0 %v360
      %v469 = vpop.f32.mrf.mxu0
      %v470 = vadd.f32 0.0, %v469
      %v471 = vpop.f32.mrf.mxu0
      %v472 = vadd.f32 0.0, %v471
      %473 = vmatmul.bf16.gmra.mxu0 %v361
      %v474 = vpop.f32.mrf.mxu0
      %v475 = vadd.f32 0.0, %v474
      %v476 = vpop.f32.mrf.mxu0
      %v477 = vadd.f32 0.0, %v476
      %478 = vmatmul.bf16.gmra.mxu0 %v362
      %v479 = vpop.f32.mrf.mxu0
      %v480 = vadd.f32 0.0, %v479
      %v481 = vpop.f32.mrf.mxu0
      %v482 = vadd.f32 0.0, %v481
      %483 = vmatmul.bf16.gmra.mxu0 %v363
      %v484 = vpop.f32.mrf.mxu0
      %v485 = vadd.f32 0.0, %v484
      %v486 = vpop.f32.mrf.mxu0
      %v487 = vadd.f32 0.0, %v486
      %488 = vmatmul.bf16.gmra.mxu0 %v364
      %v489 = vpop.f32.mrf.mxu0
      %v490 = vadd.f32 0.0, %v489
      %v491 = vpop.f32.mrf.mxu0
      %v492 = vadd.f32 0.0, %v491
      %493 = vmatmul.bf16.gmra.mxu0 %v365
      %v494 = vpop.f32.mrf.mxu0
      %v495 = vadd.f32 0.0, %v494
      %v496 = vpop.f32.mrf.mxu0
      %v497 = vadd.f32 0.0, %v496
      %498 = vmatmul.bf16.gmra.mxu0 %v366
      %v499 = vpop.f32.mrf.mxu0
      %v500 = vadd.f32 0.0, %v499
      %v501 = vpop.f32.mrf.mxu0
      %v502 = vadd.f32 0.0, %v501
      %503 = vmatmul.bf16.gmra.mxu0 %v367
      %v504 = vpop.f32.mrf.mxu0
      %v505 = vadd.f32 0.0, %v504
      %v506 = vpop.f32.mrf.mxu0
      %v507 = vadd.f32 0.0, %v506
      %508 = vmatmul.bf16.gmra.mxu0 %v368
      %v509 = vpop.f32.mrf.mxu0
      %v510 = vadd.f32 0.0, %v509
      %v511 = vpop.f32.mrf.mxu0
      %v512 = vadd.f32 0.0, %v511
      %513 = vmatmul.bf16.gmra.mxu0 %v369
      %v514 = vpop.f32.mrf.mxu0
      %v515 = vadd.f32 0.0, %v514
      %v516 = vpop.f32.mrf.mxu0
      %v517 = vadd.f32 0.0, %v516
      %518 = vmatmul.bf16.gmra.mxu0 %v370
      %v519 = vpop.f32.mrf.mxu0
      %v520 = vadd.f32 0.0, %v519
      %v521 = vpop.f32.mrf.mxu0
      %v522 = vadd.f32 0.0, %v521
      %523 = vdwg.mxu0
      %v532 = vunpack.c.l.b16 %v210
      %v533 = vunpack.c.l.b16 %v211
      %v534 = vunpack.c.l.b16 %v212
      %v535 = vunpack.c.l.b16 %v213
      %v536 = vunpack.c.l.b16 %v214
      %v537 = vunpack.c.l.b16 %v215
      %v538 = vunpack.c.l.b16 %v216
      %v539 = vunpack.c.l.b16 %v217
      %v540 = vpack.c.b16 %v533, %v532
      %v541 = vpack.c.b16 %v535, %v534
      %v542 = vpack.c.b16 %v537, %v536
      %v543 = vpack.c.b16 %v539, %v538
      %v564 = vunpack.c.l.b16 %v258
      %v565 = vunpack.c.l.b16 %v259
      %v566 = vunpack.c.l.b16 %v260
      %v567 = vunpack.c.l.b16 %v261
      %v568 = vunpack.c.l.b16 %v262
      %v569 = vunpack.c.l.b16 %v263
      %v570 = vunpack.c.l.b16 %v264
      %v571 = vunpack.c.l.b16 %v265
      %v572 = vunpack.c.l.b16 %v266
      %v573 = vunpack.c.l.b16 %v267
      %v574 = vunpack.c.l.b16 %v268
      %v575 = vunpack.c.l.b16 %v269
      %v576 = vunpack.c.l.b16 %v270
      %v577 = vunpack.c.l.b16 %v271
      %v578 = vunpack.c.l.b16 %v272
      %v579 = vunpack.c.l.b16 %v273
      %v580 = vpack.c.b16 %v565, %v564
      %v581 = vpack.c.b16 %v567, %v566
      %v582 = vpack.c.b16 %v569, %v568
      %v583 = vpack.c.b16 %v571, %v570
      %v584 = vpack.c.b16 %v573, %v572
      %v585 = vpack.c.b16 %v575, %v574
      %v586 = vpack.c.b16 %v577, %v576
      %v587 = vpack.c.b16 %v579, %v578
      %596 = vmatpush.bf16.msra.mxu0 %v587
      %597 = vmatpush.bf16.msra.mxu0 %v586
      %598 = vmatpush.bf16.msra.mxu0 %v585
      %599 = vmatpush.bf16.msra.mxu0 %v584
      %600 = vmatpush.bf16.msra.mxu0 %v583
      %601 = vmatpush.bf16.msra.mxu0 %v582
      %602 = vmatpush.bf16.msra.mxu0 %v581
      %603 = vmatpush.bf16.msra.mxu0 %v580
      %604 = vmatmul.bf16.gmra.mxu0 %v540
      %v605 = vpop.f32.mrf.mxu0
      %v606 = vadd.f32 %v445, %v605
      %v607 = vpop.f32.mrf.mxu0
      %v608 = vadd.f32 %v447, %v607
      %609 = vmatmul.bf16.gmra.mxu0 %v541
      %v610 = vpop.f32.mrf.mxu0
      %v611 = vadd.f32 %v450, %v610
      %v612 = vpop.f32.mrf.mxu0
      %v613 = vadd.f32 %v452, %v612
      %614 = vmatmul.bf16.gmra.mxu0 %v542
      %v615 = vpop.f32.mrf.mxu0
      %v616 = vadd.f32 %v455, %v615
      %v617 = vpop.f32.mrf.mxu0
      %v618 = vadd.f32 %v457, %v617
      %619 = vmatmul.bf16.gmra.mxu0 %v543
      %v620 = vpop.f32.mrf.mxu0
      %v621 = vadd.f32 %v460, %v620
      %v622 = vpop.f32.mrf.mxu0
      %v623 = vadd.f32 %v462, %v622
      %624 = vmatmul.bf16.gmra.mxu0 %v355
      %v625 = vpop.f32.mrf.mxu0
      %v626 = vadd.f32 %v465, %v625
      %v627 = vpop.f32.mrf.mxu0
      %v628 = vadd.f32 %v467, %v627
      %629 = vmatmul.bf16.gmra.mxu0 %v356
      %v630 = vpop.f32.mrf.mxu0
      %v631 = vadd.f32 %v470, %v630
      %v632 = vpop.f32.mrf.mxu0
      %v633 = vadd.f32 %v472, %v632
      %634 = vmatmul.bf16.gmra.mxu0 %v357
      %v635 = vpop.f32.mrf.mxu0
      %v636 = vadd.f32 %v475, %v635
      %v637 = vpop.f32.mrf.mxu0
      %v638 = vadd.f32 %v477, %v637
      %639 = vmatmul.bf16.gmra.mxu0 %v358
      %v640 = vpop.f32.mrf.mxu0
      %v641 = vadd.f32 %v480, %v640
      %v642 = vpop.f32.mrf.mxu0
      %v643 = vadd.f32 %v482, %v642
      %644 = vmatmul.bf16.gmra.mxu0 %v359
      %v645 = vpop.f32.mrf.mxu0
      %v646 = vadd.f32 %v485, %v645
      %v647 = vpop.f32.mrf.mxu0
      %v648 = vadd.f32 %v487, %v647
      %649 = vmatmul.bf16.gmra.mxu0 %v360
      %v650 = vpop.f32.mrf.mxu0
      %v651 = vadd.f32 %v490, %v650
      %v652 = vpop.f32.mrf.mxu0
      %v653 = vadd.f32 %v492, %v652
      %654 = vmatmul.bf16.gmra.mxu0 %v361
      %v655 = vpop.f32.mrf.mxu0
      %v656 = vadd.f32 %v495, %v655
      %v657 = vpop.f32.mrf.mxu0
      %v658 = vadd.f32 %v497, %v657
      %659 = vmatmul.bf16.gmra.mxu0 %v362
      %v660 = vpop.f32.mrf.mxu0
      %v661 = vadd.f32 %v500, %v660
      %v662 = vpop.f32.mrf.mxu0
      %v663 = vadd.f32 %v502, %v662
      %664 = vmatmul.bf16.gmra.mxu0 %v363
      %v665 = vpop.f32.mrf.mxu0
      %v666 = vadd.f32 %v505, %v665
      %v667 = vpop.f32.mrf.mxu0
      %v668 = vadd.f32 %v507, %v667
      %669 = vmatmul.bf16.gmra.mxu0 %v364
      %v670 = vpop.f32.mrf.mxu0
      %v671 = vadd.f32 %v510, %v670
      %v672 = vpop.f32.mrf.mxu0
      %v673 = vadd.f32 %v512, %v672
      %674 = vmatmul.bf16.gmra.mxu0 %v365
      %v675 = vpop.f32.mrf.mxu0
      %v676 = vadd.f32 %v515, %v675
      %v677 = vpop.f32.mrf.mxu0
      %v678 = vadd.f32 %v517, %v677
      %679 = vmatmul.bf16.gmra.mxu0 %v366
      %v680 = vpop.f32.mrf.mxu0
      %v681 = vadd.f32 %v520, %v680
      %v682 = vpop.f32.mrf.mxu0
      %v683 = vadd.f32 %v522, %v682
      %684 = vdwg.mxu0
      %s685 = scalar_lea.vmem %s1, 128
      %v686 = vld [vmem:[%s685] sm:$0xf]
      %v687 = vld [vmem:[%s685 + $0x4] sm:$0xf]
      %v688 = vld [vmem:[%s685 + $0x8] sm:$0xf]
      %v689 = vld [vmem:[%s685 + $0xc] sm:$0xf]
      %v690 = vld [vmem:[%s685 + $0x10] sm:$0xf]
      %v691 = vld [vmem:[%s685 + $0x14] sm:$0xf]
      %v692 = vld [vmem:[%s685 + $0x18] sm:$0xf]
      %v693 = vld [vmem:[%s685 + $0x1c] sm:$0xf]
      %v694 = vld [vmem:[%s685 + $0x20] sm:$0xf]
      %v695 = vld [vmem:[%s685 + $0x24] sm:$0xf]
      %v696 = vld [vmem:[%s685 + $0x28] sm:$0xf]
      %v697 = vld [vmem:[%s685 + $0x2c] sm:$0xf]
      %v698 = vld [vmem:[%s685 + $0x30] sm:$0xf]
      %v699 = vld [vmem:[%s685 + $0x34] sm:$0xf]
      %v700 = vld [vmem:[%s685 + $0x38] sm:$0xf]
      %v701 = vld [vmem:[%s685 + $0x3c] sm:$0xf]
      %v710 = vunpack.c.l.b16 %v250
      %v711 = vunpack.c.l.b16 %v251
      %v712 = vunpack.c.l.b16 %v252
      %v713 = vunpack.c.l.b16 %v253
      %v714 = vunpack.c.l.b16 %v254
      %v715 = vunpack.c.l.b16 %v255
      %v716 = vunpack.c.l.b16 %v256
      %v717 = vunpack.c.l.b16 %v257
      %v718 = vpack.c.b16 %v711, %v710
      %v719 = vpack.c.b16 %v713, %v712
      %v720 = vpack.c.b16 %v715, %v714
      %v721 = vpack.c.b16 %v717, %v716
      %v742 = vunpack.c.l.b16 %v686
      %v743 = vunpack.c.l.b16 %v687
      %v744 = vunpack.c.l.b16 %v688
      %v745 = vunpack.c.l.b16 %v689
      %v746 = vunpack.c.l.b16 %v690
      %v747 = vunpack.c.l.b16 %v691
      %v748 = vunpack.c.l.b16 %v692
      %v749 = vunpack.c.l.b16 %v693
      %v750 = vunpack.c.l.b16 %v694
      %v751 = vunpack.c.l.b16 %v695
      %v752 = vunpack.c.l.b16 %v696
      %v753 = vunpack.c.l.b16 %v697
      %v754 = vunpack.c.l.b16 %v698
      %v755 = vunpack.c.l.b16 %v699
      %v756 = vunpack.c.l.b16 %v700
      %v757 = vunpack.c.l.b16 %v701
      %v758 = vpack.c.b16 %v743, %v742
      %v759 = vpack.c.b16 %v745, %v744
      %v760 = vpack.c.b16 %v747, %v746
      %v761 = vpack.c.b16 %v749, %v748
      %v762 = vpack.c.b16 %v751, %v750
      %v763 = vpack.c.b16 %v753, %v752
      %v764 = vpack.c.b16 %v755, %v754
      %v765 = vpack.c.b16 %v757, %v756
      %774 = vmatpush.bf16.msra.mxu0 %v765
      %775 = vmatpush.bf16.msra.mxu0 %v764
      %776 = vmatpush.bf16.msra.mxu0 %v763
      %777 = vmatpush.bf16.msra.mxu0 %v762
      %778 = vmatpush.bf16.msra.mxu0 %v761
      %779 = vmatpush.bf16.msra.mxu0 %v760
      %780 = vmatpush.bf16.msra.mxu0 %v759
      %781 = vmatpush.bf16.msra.mxu0 %v758
      %782 = vmatmul.bf16.gmra.mxu0 %v359
      %v783 = vpop.f32.mrf.mxu0
      %v784 = vadd.f32 0.0, %v783
      %v785 = vpop.f32.mrf.mxu0
      %v786 = vadd.f32 0.0, %v785
      %787 = vmatmul.bf16.gmra.mxu0 %v360
      %v788 = vpop.f32.mrf.mxu0
      %v789 = vadd.f32 0.0, %v788
      %v790 = vpop.f32.mrf.mxu0
      %v791 = vadd.f32 0.0, %v790
      %792 = vmatmul.bf16.gmra.mxu0 %v361
      %v793 = vpop.f32.mrf.mxu0
      %v794 = vadd.f32 0.0, %v793
      %v795 = vpop.f32.mrf.mxu0
      %v796 = vadd.f32 0.0, %v795
      %797 = vmatmul.bf16.gmra.mxu0 %v362
      %v798 = vpop.f32.mrf.mxu0
      %v799 = vadd.f32 0.0, %v798
      %v800 = vpop.f32.mrf.mxu0
      %v801 = vadd.f32 0.0, %v800
      %802 = vmatmul.bf16.gmra.mxu0 %v363
      %v803 = vpop.f32.mrf.mxu0
      %v804 = vadd.f32 0.0, %v803
      %v805 = vpop.f32.mrf.mxu0
      %v806 = vadd.f32 0.0, %v805
      %807 = vmatmul.bf16.gmra.mxu0 %v364
      %v808 = vpop.f32.mrf.mxu0
      %v809 = vadd.f32 0.0, %v808
      %v810 = vpop.f32.mrf.mxu0
      %v811 = vadd.f32 0.0, %v810
      %812 = vmatmul.bf16.gmra.mxu0 %v365
      %v813 = vpop.f32.mrf.mxu0
      %v814 = vadd.f32 0.0, %v813
      %v815 = vpop.f32.mrf.mxu0
      %v816 = vadd.f32 0.0, %v815
      %817 = vmatmul.bf16.gmra.mxu0 %v366
      %v818 = vpop.f32.mrf.mxu0
      %v819 = vadd.f32 0.0, %v818
      %v820 = vpop.f32.mrf.mxu0
      %v821 = vadd.f32 0.0, %v820
      %822 = vmatmul.bf16.gmra.mxu0 %v367
      %v823 = vpop.f32.mrf.mxu0
      %v824 = vadd.f32 0.0, %v823
      %v825 = vpop.f32.mrf.mxu0
      %v826 = vadd.f32 0.0, %v825
      %827 = vmatmul.bf16.gmra.mxu0 %v368
      %v828 = vpop.f32.mrf.mxu0
      %v829 = vadd.f32 0.0, %v828
      %v830 = vpop.f32.mrf.mxu0
      %v831 = vadd.f32 0.0, %v830
      %832 = vmatmul.bf16.gmra.mxu0 %v369
      %v833 = vpop.f32.mrf.mxu0
      %v834 = vadd.f32 0.0, %v833
      %v835 = vpop.f32.mrf.mxu0
      %v836 = vadd.f32 0.0, %v835
      %837 = vmatmul.bf16.gmra.mxu0 %v370
      %v838 = vpop.f32.mrf.mxu0
      %v839 = vadd.f32 0.0, %v838
      %v840 = vpop.f32.mrf.mxu0
      %v841 = vadd.f32 0.0, %v840
      %842 = vmatmul.bf16.gmra.mxu0 %v718
      %v843 = vpop.f32.mrf.mxu0
      %v844 = vadd.f32 0.0, %v843
      %v845 = vpop.f32.mrf.mxu0
      %v846 = vadd.f32 0.0, %v845
      %847 = vmatmul.bf16.gmra.mxu0 %v719
      %v848 = vpop.f32.mrf.mxu0
      %v849 = vadd.f32 0.0, %v848
      %v850 = vpop.f32.mrf.mxu0
      %v851 = vadd.f32 0.0, %v850
      %852 = vmatmul.bf16.gmra.mxu0 %v720
      %v853 = vpop.f32.mrf.mxu0
      %v854 = vadd.f32 0.0, %v853
      %v855 = vpop.f32.mrf.mxu0
      %v856 = vadd.f32 0.0, %v855
      %857 = vmatmul.bf16.gmra.mxu0 %v721
      %v858 = vpop.f32.mrf.mxu0
      %v859 = vadd.f32 0.0, %v858
      %v860 = vpop.f32.mrf.mxu0
      %v861 = vadd.f32 0.0, %v860
      %862 = vdwg.mxu0
      %v863 = vadd.f32 %v606, %v784
      %v864 = vadd.f32 %v608, %v786
      %v865 = vadd.f32 %v611, %v789
      %v866 = vadd.f32 %v613, %v791
      %v867 = vadd.f32 %v616, %v794
      %v868 = vadd.f32 %v618, %v796
      %v869 = vadd.f32 %v621, %v799
      %v870 = vadd.f32 %v623, %v801
      %v871 = vadd.f32 %v626, %v804
      %v872 = vadd.f32 %v628, %v806
      %v873 = vadd.f32 %v631, %v809
      %v874 = vadd.f32 %v633, %v811
      %v875 = vadd.f32 %v636, %v814
      %v876 = vadd.f32 %v638, %v816
      %v877 = vadd.f32 %v641, %v819
      %v878 = vadd.f32 %v643, %v821
      %v879 = vadd.f32 %v646, %v824
      %v880 = vadd.f32 %v648, %v826
      %v881 = vadd.f32 %v651, %v829
      %v882 = vadd.f32 %v653, %v831
      %v883 = vadd.f32 %v656, %v834
      %v884 = vadd.f32 %v658, %v836
      %v885 = vadd.f32 %v661, %v839
      %v886 = vadd.f32 %v663, %v841
      %v887 = vadd.f32 %v666, %v844
      %v888 = vadd.f32 %v668, %v846
      %v889 = vadd.f32 %v671, %v849
      %v890 = vadd.f32 %v673, %v851
      %v891 = vadd.f32 %v676, %v854
      %v892 = vadd.f32 %v678, %v856
      %v893 = vadd.f32 %v681, %v859
      %v894 = vadd.f32 %v683, %v861
      %v895 = vld [vmem:[%s2] sm:$0x1]
      %v897 = vperm.slane %v895, 0
      %v899 = vadd.f32 %v863, %v897
      %v900 = vadd.f32 %v864, %v897
      %v901 = vadd.f32 %v865, %v897
      %v902 = vadd.f32 %v866, %v897
      %v903 = vadd.f32 %v867, %v897
      %v904 = vadd.f32 %v868, %v897
      %v905 = vadd.f32 %v869, %v897
      %v906 = vadd.f32 %v870, %v897
      %v907 = vadd.f32 %v871, %v897
      %v908 = vadd.f32 %v872, %v897
      %v909 = vadd.f32 %v873, %v897
      %v910 = vadd.f32 %v874, %v897
      %v911 = vadd.f32 %v875, %v897
      %v912 = vadd.f32 %v876, %v897
      %v913 = vadd.f32 %v877, %v897
      %v914 = vadd.f32 %v878, %v897
      %v915 = vadd.f32 %v879, %v897
      %v916 = vadd.f32 %v880, %v897
      %v917 = vadd.f32 %v881, %v897
      %v918 = vadd.f32 %v882, %v897
      %v919 = vadd.f32 %v883, %v897
      %v920 = vadd.f32 %v884, %v897
      %v921 = vadd.f32 %v885, %v897
      %v922 = vadd.f32 %v886, %v897
      %v923 = vadd.f32 %v887, %v897
      %v924 = vadd.f32 %v888, %v897
      %v925 = vadd.f32 %v889, %v897
      %v926 = vadd.f32 %v890, %v897
      %v927 = vadd.f32 %v891, %v897
      %v928 = vadd.f32 %v892, %v897
      %v929 = vadd.f32 %v893, %v897
      %v930 = vadd.f32 %v894, %v897
      %v931 = vmax.f32 %v899, 0.0
      %v932 = vmax.f32 %v900, 0.0
      %v933 = vmax.f32 %v901, 0.0
      %v934 = vmax.f32 %v902, 0.0
      %v935 = vmax.f32 %v903, 0.0
      %v936 = vmax.f32 %v904, 0.0
      %v937 = vmax.f32 %v905, 0.0
      %v938 = vmax.f32 %v906, 0.0
      %v939 = vmax.f32 %v907, 0.0
      %v940 = vmax.f32 %v908, 0.0
      %v941 = vmax.f32 %v909, 0.0
      %v942 = vmax.f32 %v910, 0.0
      %v943 = vmax.f32 %v911, 0.0
      %v944 = vmax.f32 %v912, 0.0
      %v945 = vmax.f32 %v913, 0.0
      %v946 = vmax.f32 %v914, 0.0
      %v947 = vmax.f32 %v915, 0.0
      %v948 = vmax.f32 %v916, 0.0
      %v949 = vmax.f32 %v917, 0.0
      %v950 = vmax.f32 %v918, 0.0
      %v951 = vmax.f32 %v919, 0.0
      %v952 = vmax.f32 %v920, 0.0
      %v953 = vmax.f32 %v921, 0.0
      %v954 = vmax.f32 %v922, 0.0
      %v955 = vmax.f32 %v923, 0.0
      %v956 = vmax.f32 %v924, 0.0
      %v957 = vmax.f32 %v925, 0.0
      %v958 = vmax.f32 %v926, 0.0
      %v959 = vmax.f32 %v927, 0.0
      %v960 = vmax.f32 %v928, 0.0
      %v961 = vmax.f32 %v929, 0.0
      %v962 = vmax.f32 %v930, 0.0
      %963 = vst [vmem:[%s208] sm:$0xff] %v931
      %964 = vst [vmem:[%s208 + $0x8] sm:$0xff] %v932
      %965 = vst [vmem:[%s208 + $0x10] sm:$0xff] %v933
      %966 = vst [vmem:[%s208 + $0x18] sm:$0xff] %v934
      %967 = vst [vmem:[%s208 + $0x20] sm:$0xff] %v935
      %968 = vst [vmem:[%s208 + $0x28] sm:$0xff] %v936
      %969 = vst [vmem:[%s208 + $0x30] sm:$0xff] %v937
      %970 = vst [vmem:[%s208 + $0x38] sm:$0xff] %v938
      %971 = vst [vmem:[%s208 + $0x40] sm:$0xff] %v939
      %972 = vst [vmem:[%s208 + $0x48] sm:$0xff] %v940
      %973 = vst [vmem:[%s208 + $0x50] sm:$0xff] %v941
      %974 = vst [vmem:[%s208 + $0x58] sm:$0xff] %v942
      %975 = vst [vmem:[%s208 + $0x60] sm:$0xff] %v943
      %976 = vst [vmem:[%s208 + $0x68] sm:$0xff] %v944
      %977 = vst [vmem:[%s208 + $0x70] sm:$0xff] %v945
      %978 = vst [vmem:[%s208 + $0x78] sm:$0xff] %v946
      %979 = vst [vmem:[%s208 + $0x80] sm:$0xff] %v947
      %980 = vst [vmem:[%s208 + $0x88] sm:$0xff] %v948
      %981 = vst [vmem:[%s208 + $0x90] sm:$0xff] %v949
      %982 = vst [vmem:[%s208 + $0x98] sm:$0xff] %v950
      %983 = vst [vmem:[%s208 + $0xa0] sm:$0xff] %v951
      %984 = vst [vmem:[%s208 + $0xa8] sm:$0xff] %v952
      %985 = vst [vmem:[%s208 + $0xb0] sm:$0xff] %v953
      %986 = vst [vmem:[%s208 + $0xb8] sm:$0xff] %v954
      %987 = vst [vmem:[%s208 + $0xc0] sm:$0xff] %v955
      %988 = vst [vmem:[%s208 + $0xc8] sm:$0xff] %v956
      %989 = vst [vmem:[%s208 + $0xd0] sm:$0xff] %v957
      %990 = vst [vmem:[%s208 + $0xd8] sm:$0xff] %v958
      %991 = vst [vmem:[%s208 + $0xe0] sm:$0xff] %v959
      %992 = vst [vmem:[%s208 + $0xe8] sm:$0xff] %v960
      %993 = vst [vmem:[%s208 + $0xf0] sm:$0xff] %v961
      %994 = vst [vmem:[%s208 + $0xf8] sm:$0xff] %v962
      %s995 = smul.u32 8, %s19
      %p996 = scmp.lt.s32.totalorder %s18, 1
      %s997 = scalar_select %p996, %s18, 1
      %p998 = scmp.lt.s32.totalorder %s995, 7
      %s999 = scalar_select %p998, %s995, 7
      %s1000 = smul.addr %s997, 32
      %s1001 = sadd.s32 %s999, %s1000
      %s1002 = smul.addr %s1001, 8
      %s1003 = scalar_lea.vmem %s3, %s1002
      // Predicated region
      $region33: #{_lambda_.9} parent=31 // pred_check
        %p1004 = pneg %p116
      $region34: #{_lambda_.9} parent=31 // pred_check_branch
        %1006 = sbr.rel (%p1004) target = $region36
      $region35: #{_lambda_.9} parent=31 // pred_region
        %s1007 = smul.u32 8, %s19
      $region36: #{_lambda_.9} parent=31 // pred_fallthru
        _
    $region32: #{_lambda_.9} parent=5 // pred_fallthru
      _
    %p1008 = scmp.le.s32.totalorder 2, %s9
    // Predicated region
    $region37: #{_lambda_.9} parent=5 // pred_check
      %p1009 = pneg %p1008
    $region38: #{_lambda_.9} parent=5 // pred_check_branch
      %1011 = sbr.rel (%p1009) target = $region40
    $region39: #{_lambda_.9} parent=5 // pred_region
      %s1012 = ssub.s32 %s9, 2
      // Predicated region
      $region41: #{_lambda_.9} parent=39 // pred_check
        %p1013 = pneg %p122
      $region42: #{_lambda_.9} parent=39 // pred_check_branch
        %1015 = sbr.rel (%p1013) target = $region44
      $region43: #{_lambda_.9} parent=39 // pred_region
        %s1016 = smul.u32 8, %s21
        %p1017 = scmp.lt.s32.totalorder %s20, 1
        %s1018 = scalar_select %p1017, %s20, 1
        %p1019 = scmp.lt.s32.totalorder %s1016, 7
        %s1020 = scalar_select %p1019, %s1016, 7
        %s1021 = smul.addr %s1018, 32
        %s1022 = sadd.s32 %s1020, %s1021
        %s1023 = smul.addr %s1022, 8
        %s1024 = scalar_lea.vmem %s3, %s1023
      $region44: #{_lambda_.9} parent=39 // pred_fallthru
        _
    $region40: #{_lambda_.9} parent=5 // pred_fallthru
      _
  $region6: #{_lambda_.9} parent=0 // loop_footer
    %s13 = sadd.s32 1, %s9
  $region7: #{_lambda_.9} parent=0 // loop_footer_branch
    %8 = sbr.rel target = $region3
  $region8: #{_lambda_.9} parent=0 // loop_exit
    _

// kernel: _lambda_.8
$region0: #{_lambda_.8}
  #allocation0 [shape = 'u32[]', space=smem, size = 0x4, offset = 0x4, fixed_abs, tag = 'smem constant byte address 0x4 - core index']
  #allocation1 [shape = 'u32[72,128]{1,0:T(1,128)}', space=vmem, size = 0x9000, scoped, tag = 'internal scratch']
  %s0 = inlined_call_operand.vmem [shape: bf16[8,10,10,128], index: 0, kind: input, shape index: {}]
  %s1 = inlined_call_operand.vmem [shape: bf16[9,128,128], index: 1, kind: input, shape index: {}]
  %s2 = inlined_call_operand.vmem [shape: f32[1,128], index: 2, kind: input, shape index: {}]
  %s3 = inlined_call_operand.vmem [shape: bf16[8,8,8,128], index: 3, kind: output, shape index: {}]
  %s4 = sld [smem:[#allocation0]]
  $region22: #{_lambda_.8} parent=0
    _
  %s6 = ssub.s32 1, %s4
  %s7 = scalar_select 0, %s6, %s4
  // Predicated region
  $region2: #{_lambda_.8} parent=0 // pred_check
    _
  $region3: #{_lambda_.8} parent=0 // pred_check_branch
    %9 = sbr.rel (0) target = $region5
  $region4: #{_lambda_.8} parent=0 // pred_region
    _
  $region5: #{_lambda_.8} parent=0 // pred_fallthru
    _
  // Predicated region
  $region6: #{_lambda_.8} parent=0 // pred_check
    _
  $region7: #{_lambda_.8} parent=0 // pred_check_branch
    %11 = sbr.rel (0) target = $region9
  $region8: #{_lambda_.8} parent=0 // pred_region
    _
  $region9: #{_lambda_.8} parent=0 // pred_fallthru
    _
  // Predicated region
  $region10: #{_lambda_.8} parent=0 // pred_check
    _
  $region11: #{_lambda_.8} parent=0 // pred_check_branch
    %13 = sbr.rel (0) target = $region13
  $region12: #{_lambda_.8} parent=0 // pred_region
    _
  $region13: #{_lambda_.8} parent=0 // pred_fallthru
    _
  %v14 = vld [vmem:[%s0] sm:$0xf]
  %v15 = vld [vmem:[%s0 + $0x4] sm:$0x1]
  %v16 = vld [vmem:[%s0 + $0x8] sm:$0xf]
  %v17 = vld [vmem:[%s0 + $0xc] sm:$0x1]
  %v18 = vld [vmem:[%s0 + $0x10] sm:$0xf]
  %v19 = vld [vmem:[%s0 + $0x14] sm:$0x1]
  %v20 = vld [vmem:[%s0 + $0x18] sm:$0xf]
  %v21 = vld [vmem:[%s0 + $0x1c] sm:$0x1]
  %v22 = vld [vmem:[%s0 + $0x20] sm:$0xf]
  %v23 = vld [vmem:[%s0 + $0x24] sm:$0x1]
  %v24 = vld [vmem:[%s0 + $0x28] sm:$0xf]
  %v25 = vld [vmem:[%s0 + $0x2c] sm:$0x1]
  %v26 = vld [vmem:[%s0 + $0x30] sm:$0xf]
  %v27 = vld [vmem:[%s0 + $0x34] sm:$0x1]
  %v28 = vld [vmem:[%s0 + $0x38] sm:$0xf]
  %v29 = vld [vmem:[%s0 + $0x3c] sm:$0x1]
  %v30 = vld [vmem:[%s0 + $0x40] sm:$0xf]
  %v31 = vld [vmem:[%s0 + $0x44] sm:$0x1]
  %v32 = vld [vmem:[%s0 + $0x48] sm:$0xf]
  %v33 = vld [vmem:[%s0 + $0x4c] sm:$0x1]
  %v34 = vld [vmem:[%s0 + $0x50] sm:$0xf]
  %v35 = vld [vmem:[%s0 + $0x54] sm:$0x1]
  %v36 = vld [vmem:[%s0 + $0x58] sm:$0xf]
  %v37 = vld [vmem:[%s0 + $0x5c] sm:$0x1]
  %v38 = vld [vmem:[%s0 + $0x60] sm:$0xf]
  %v39 = vld [vmem:[%s0 + $0x64] sm:$0x1]
  %v40 = vld [vmem:[%s0 + $0x68] sm:$0xf]
  %v41 = vld [vmem:[%s0 + $0x6c] sm:$0x1]
  %v42 = vld [vmem:[%s0 + $0x70] sm:$0xf]
  %v43 = vld [vmem:[%s0 + $0x74] sm:$0x1]
  %v44 = vld [vmem:[%s0 + $0x78] sm:$0xf]
  %v45 = vld [vmem:[%s0 + $0x7c] sm:$0x1]
  %v46 = vld [vmem:[%s0 + $0x80] sm:$0xf]
  %v47 = vld [vmem:[%s0 + $0x84] sm:$0x1]
  %v48 = vld [vmem:[%s0 + $0x88] sm:$0xf]
  %v49 = vld [vmem:[%s0 + $0x8c] sm:$0x1]
  %v50 = vld [vmem:[%s0 + $0x90] sm:$0xf]
  %v51 = vld [vmem:[%s0 + $0x94] sm:$0x1]
  %v52 = vld [vmem:[%s0 + $0x98] sm:$0xf]
  %v53 = vld [vmem:[%s0 + $0x9c] sm:$0x1]
  %v54 = vld [vmem:[%s0 + $0xa0] sm:$0xf]
  %v55 = vld [vmem:[%s0 + $0xa4] sm:$0x1]
  %v56 = vld [vmem:[%s0 + $0xa8] sm:$0xf]
  %v57 = vld [vmem:[%s0 + $0xac] sm:$0x1]
  %v58 = vld [vmem:[%s0 + $0xb0] sm:$0xf]
  %v59 = vld [vmem:[%s0 + $0xb4] sm:$0x1]
  %v60 = vld [vmem:[%s0 + $0xb8] sm:$0xf]
  %v61 = vld [vmem:[%s0 + $0xbc] sm:$0x1]
  %v62 = vld [vmem:[%s0 + $0xc0] sm:$0xf]
  %v63 = vld [vmem:[%s0 + $0xc4] sm:$0x1]
  %v64 = vld [vmem:[%s0 + $0xc8] sm:$0xf]
  %v65 = vld [vmem:[%s0 + $0xcc] sm:$0x1]
  %v66 = vld [vmem:[%s0 + $0xd0] sm:$0xf]
  %v67 = vld [vmem:[%s0 + $0xd4] sm:$0x1]
  %v68 = vld [vmem:[%s0 + $0xd8] sm:$0xf]
  %v69 = vld [vmem:[%s0 + $0xdc] sm:$0x1]
  %v70 = vld [vmem:[%s0 + $0xe0] sm:$0xf]
  %v71 = vld [vmem:[%s0 + $0xe4] sm:$0x1]
  %v72 = vld [vmem:[%s0 + $0xe8] sm:$0xf]
  %v73 = vld [vmem:[%s0 + $0xec] sm:$0x1]
  %v74 = vld [vmem:[%s0 + $0xf0] sm:$0xf]
  %v75 = vld [vmem:[%s0 + $0xf4] sm:$0x1]
  %v76 = vld [vmem:[%s0 + $0xf8] sm:$0xf]
  %v77 = vld [vmem:[%s0 + $0xfc] sm:$0x1]
  %v78 = vld [vmem:[%s0 + $0x100] sm:$0xf]
  %v79 = vld [vmem:[%s0 + $0x104] sm:$0x1]
  %v80 = vld [vmem:[%s0 + $0x108] sm:$0xf]
  %v81 = vld [vmem:[%s0 + $0x10c] sm:$0x1]
  %v82 = vld [vmem:[%s0 + $0x110] sm:$0xf]
  %v83 = vld [vmem:[%s0 + $0x114] sm:$0x1]
  %v84 = vld [vmem:[%s0 + $0x118] sm:$0xf]
  %v85 = vld [vmem:[%s0 + $0x11c] sm:$0x1]
  %v86 = vld [vmem:[%s0 + $0x120] sm:$0xf]
  %v87 = vld [vmem:[%s0 + $0x124] sm:$0x1]
  %v88 = vld [vmem:[%s0 + $0x128] sm:$0xf]
  %v89 = vld [vmem:[%s0 + $0x12c] sm:$0x1]
  %v90 = vld [vmem:[%s0 + $0x130] sm:$0xf]
  %v91 = vld [vmem:[%s0 + $0x134] sm:$0x1]
  %v92 = vld [vmem:[%s0 + $0x138] sm:$0xf]
  %v93 = vld [vmem:[%s0 + $0x13c] sm:$0x1]
  %v94 = vld [vmem:[%s0 + $0x140] sm:$0xf]
  %v95 = vld [vmem:[%s0 + $0x144] sm:$0x1]
  %v96 = vld [vmem:[%s0 + $0x148] sm:$0xf]
  %v97 = vld [vmem:[%s0 + $0x14c] sm:$0x1]
  %v98 = vld [vmem:[%s0 + $0x150] sm:$0xf]
  %v99 = vld [vmem:[%s0 + $0x154] sm:$0x1]
  %v100 = vld [vmem:[%s0 + $0x158] sm:$0xf]
  %v101 = vld [vmem:[%s0 + $0x15c] sm:$0x1]
  %v102 = vld [vmem:[%s0 + $0x160] sm:$0xf]
  %v103 = vld [vmem:[%s0 + $0x164] sm:$0x1]
  %v104 = vld [vmem:[%s0 + $0x168] sm:$0xf]
  %v105 = vld [vmem:[%s0 + $0x16c] sm:$0x1]
  %v106 = vld [vmem:[%s0 + $0x170] sm:$0xf]
  %v107 = vld [vmem:[%s0 + $0x174] sm:$0x1]
  %v108 = vld [vmem:[%s0 + $0x178] sm:$0xf]
  %v109 = vld [vmem:[%s0 + $0x17c] sm:$0x1]
  %v110 = vld [vmem:[%s0 + $0x180] sm:$0xf]
  %v111 = vld [vmem:[%s0 + $0x184] sm:$0x1]
  %v112 = vld [vmem:[%s0 + $0x188] sm:$0xf]
  %v113 = vld [vmem:[%s0 + $0x18c] sm:$0x1]
  %v114 = vld [vmem:[%s0 + $0x190] sm:$0xf]
  %v115 = vld [vmem:[%s0 + $0x194] sm:$0x1]
  %v116 = vld [vmem:[%s0 + $0x198] sm:$0xf]
  %v117 = vld [vmem:[%s0 + $0x19c] sm:$0x1]
  %v118 = vld [vmem:[%s0 + $0x1a0] sm:$0xf]
  %v119 = vld [vmem:[%s0 + $0x1a4] sm:$0x1]
  %v120 = vld [vmem:[%s0 + $0x1a8] sm:$0xf]
  %v121 = vld [vmem:[%s0 + $0x1ac] sm:$0x1]
  %v122 = vld [vmem:[%s0 + $0x1b0] sm:$0xf]
  %v123 = vld [vmem:[%s0 + $0x1b4] sm:$0x1]
  %v124 = vld [vmem:[%s0 + $0x1b8] sm:$0xf]
  %v125 = vld [vmem:[%s0 + $0x1bc] sm:$0x1]
  %v126 = vld [vmem:[%s0 + $0x1c0] sm:$0xf]
  %v127 = vld [vmem:[%s0 + $0x1c4] sm:$0x1]
  %v128 = vld [vmem:[%s0 + $0x1c8] sm:$0xf]
  %v129 = vld [vmem:[%s0 + $0x1cc] sm:$0x1]
  %v130 = vld [vmem:[%s0 + $0x1d0] sm:$0xf]
  %v131 = vld [vmem:[%s0 + $0x1d4] sm:$0x1]
  %v132 = vld [vmem:[%s0 + $0x1d8] sm:$0xf]
  %v133 = vld [vmem:[%s0 + $0x1dc] sm:$0x1]
  %v134 = vld [vmem:[%s0 + $0x1e0] sm:$0xf]
  %v135 = vld [vmem:[%s0 + $0x1e4] sm:$0x1]
  %v136 = vld [vmem:[%s0 + $0x1e8] sm:$0xf]
  %v137 = vld [vmem:[%s0 + $0x1ec] sm:$0x1]
  %v138 = vld [vmem:[%s0 + $0x1f0] sm:$0xf]
  %v139 = vld [vmem:[%s0 + $0x1f4] sm:$0x1]
  %v140 = vld [vmem:[%s0 + $0x1f8] sm:$0xf]
  %v141 = vld [vmem:[%s0 + $0x1fc] sm:$0x1]
  %v142 = vld [vmem:[%s0 + $0x200] sm:$0xf]
  %v143 = vld [vmem:[%s0 + $0x204] sm:$0x1]
  %v144 = vld [vmem:[%s0 + $0x208] sm:$0xf]
  %v145 = vld [vmem:[%s0 + $0x20c] sm:$0x1]
  %v146 = vld [vmem:[%s0 + $0x210] sm:$0xf]
  %v147 = vld [vmem:[%s0 + $0x214] sm:$0x1]
  %v148 = vld [vmem:[%s0 + $0x218] sm:$0xf]
  %v149 = vld [vmem:[%s0 + $0x21c] sm:$0x1]
  %v150 = vld [vmem:[%s0 + $0x220] sm:$0xf]
  %v151 = vld [vmem:[%s0 + $0x224] sm:$0x1]
  %v152 = vld [vmem:[%s0 + $0x228] sm:$0xf]
  %v153 = vld [vmem:[%s0 + $0x22c] sm:$0x1]
  %v154 = vld [vmem:[%s0 + $0x230] sm:$0xf]
  %v155 = vld [vmem:[%s0 + $0x234] sm:$0x1]
  %v156 = vld [vmem:[%s0 + $0x238] sm:$0xf]
  %v157 = vld [vmem:[%s0 + $0x23c] sm:$0x1]
  %v158 = vld [vmem:[%s0 + $0x240] sm:$0xf]
  %v159 = vld [vmem:[%s0 + $0x244] sm:$0x1]
  %v160 = vld [vmem:[%s0 + $0x248] sm:$0xf]
  %v161 = vld [vmem:[%s0 + $0x24c] sm:$0x1]
  %v162 = vld [vmem:[%s0 + $0x250] sm:$0xf]
  %v163 = vld [vmem:[%s0 + $0x254] sm:$0x1]
  %v164 = vld [vmem:[%s0 + $0x258] sm:$0xf]
  %v165 = vld [vmem:[%s0 + $0x25c] sm:$0x1]
  %v166 = vld [vmem:[%s0 + $0x260] sm:$0xf]
  %v167 = vld [vmem:[%s0 + $0x264] sm:$0x1]
  %v168 = vld [vmem:[%s0 + $0x268] sm:$0xf]
  %v169 = vld [vmem:[%s0 + $0x26c] sm:$0x1]
  %v170 = vld [vmem:[%s0 + $0x270] sm:$0xf]
  %v171 = vld [vmem:[%s0 + $0x274] sm:$0x1]
  %v172 = vld [vmem:[%s0 + $0x278] sm:$0xf]
  %v173 = vld [vmem:[%s0 + $0x27c] sm:$0x1]
  %v174 = vld [vmem:[%s1] sm:$0xf]
  %v175 = vld [vmem:[%s1 + $0x4] sm:$0xf]
  %v176 = vld [vmem:[%s1 + $0x8] sm:$0xf]
  %v177 = vld [vmem:[%s1 + $0xc] sm:$0xf]
  %v178 = vld [vmem:[%s1 + $0x10] sm:$0xf]
  %v179 = vld [vmem:[%s1 + $0x14] sm:$0xf]
  %v180 = vld [vmem:[%s1 + $0x18] sm:$0xf]
  %v181 = vld [vmem:[%s1 + $0x1c] sm:$0xf]
  %v182 = vld [vmem:[%s1 + $0x20] sm:$0xf]
  %v183 = vld [vmem:[%s1 + $0x24] sm:$0xf]
  %v184 = vld [vmem:[%s1 + $0x28] sm:$0xf]
  %v185 = vld [vmem:[%s1 + $0x2c] sm:$0xf]
  %v186 = vld [vmem:[%s1 + $0x30] sm:$0xf]
  %v187 = vld [vmem:[%s1 + $0x34] sm:$0xf]
  %v188 = vld [vmem:[%s1 + $0x38] sm:$0xf]
  %v189 = vld [vmem:[%s1 + $0x3c] sm:$0xf]
  %vm190 = vsmask.f32 3328
  %vm191 = vsmask.f32 7440
  %vm192 = vmor %vm190, %vm191
  %v194 = vshrl.u32 %v14, 16
  %v196 = vrot.slane %v194, 4
  %v197 = vshll.u32 %v14, 16
  %v199 = vrot.slane %v197, 5
  %v200 = vor.u32 %v196, %v199
  %v201 = vrot.slane %v200, 4
  %v203 = vshll.u32 %v15, 16
  %v205 = vrot.slane %v203, 5
  %v206 = vsel %vm192, %v201, %v205
  %v208 = vshrl.u32 %v16, 16
  %v210 = vrot.slane %v208, 4
  %v211 = vshll.u32 %v16, 16
  %v213 = vrot.slane %v211, 5
  %v214 = vor.u32 %v210, %v213
  %v215 = vrot.slane %v214, 4
  %v217 = vshll.u32 %v17, 16
  %v219 = vrot.slane %v217, 5
  %v220 = vsel %vm192, %v215, %v219
  %v222 = vshrl.u32 %v18, 16
  %v224 = vrot.slane %v222, 4
  %v225 = vshll.u32 %v18, 16
  %v227 = vrot.slane %v225, 5
  %v228 = vor.u32 %v224, %v227
  %v229 = vrot.slane %v228, 4
  %v231 = vshll.u32 %v19, 16
  %v233 = vrot.slane %v231, 5
  %v234 = vsel %vm192, %v229, %v233
  %v236 = vshrl.u32 %v20, 16
  %v238 = vrot.slane %v236, 4
  %v239 = vshll.u32 %v20, 16
  %v241 = vrot.slane %v239, 5
  %v242 = vor.u32 %v238, %v241
  %v243 = vrot.slane %v242, 4
  %v245 = vshll.u32 %v21, 16
  %v247 = vrot.slane %v245, 5
  %v248 = vsel %vm192, %v243, %v247
  %v250 = vshrl.u32 %v22, 16
  %v252 = vrot.slane %v250, 4
  %v253 = vshll.u32 %v22, 16
  %v255 = vrot.slane %v253, 5
  %v256 = vor.u32 %v252, %v255
  %v257 = vrot.slane %v256, 4
  %v259 = vshll.u32 %v23, 16
  %v261 = vrot.slane %v259, 5
  %v262 = vsel %vm192, %v257, %v261
  %v264 = vshrl.u32 %v24, 16
  %v266 = vrot.slane %v264, 4
  %v267 = vshll.u32 %v24, 16
  %v269 = vrot.slane %v267, 5
  %v270 = vor.u32 %v266, %v269
  %v271 = vrot.slane %v270, 4
  %v273 = vshll.u32 %v25, 16
  %v275 = vrot.slane %v273, 5
  %v276 = vsel %vm192, %v271, %v275
  %v278 = vshrl.u32 %v26, 16
  %v280 = vrot.slane %v278, 4
  %v281 = vshll.u32 %v26, 16
  %v283 = vrot.slane %v281, 5
  %v284 = vor.u32 %v280, %v283
  %v285 = vrot.slane %v284, 4
  %v287 = vshll.u32 %v27, 16
  %v289 = vrot.slane %v287, 5
  %v290 = vsel %vm192, %v285, %v289
  %v292 = vshrl.u32 %v28, 16
  %v294 = vrot.slane %v292, 4
  %v295 = vshll.u32 %v28, 16
  %v297 = vrot.slane %v295, 5
  %v298 = vor.u32 %v294, %v297
  %v299 = vrot.slane %v298, 4
  %v301 = vshll.u32 %v29, 16
  %v303 = vrot.slane %v301, 5
  %v304 = vsel %vm192, %v299, %v303
  %v306 = vshrl.u32 %v34, 16
  %v308 = vrot.slane %v306, 4
  %v309 = vshll.u32 %v34, 16
  %v311 = vrot.slane %v309, 5
  %v312 = vor.u32 %v308, %v311
  %v313 = vrot.slane %v312, 4
  %v315 = vshll.u32 %v35, 16
  %v317 = vrot.slane %v315, 5
  %v318 = vsel %vm192, %v313, %v317
  %v320 = vshrl.u32 %v36, 16
  %v322 = vrot.slane %v320, 4
  %v323 = vshll.u32 %v36, 16
  %v325 = vrot.slane %v323, 5
  %v326 = vor.u32 %v322, %v325
  %v327 = vrot.slane %v326, 4
  %v329 = vshll.u32 %v37, 16
  %v331 = vrot.slane %v329, 5
  %v332 = vsel %vm192, %v327, %v331
  %v334 = vshrl.u32 %v38, 16
  %v336 = vrot.slane %v334, 4
  %v337 = vshll.u32 %v38, 16
  %v339 = vrot.slane %v337, 5
  %v340 = vor.u32 %v336, %v339
  %v341 = vrot.slane %v340, 4
  %v343 = vshll.u32 %v39, 16
  %v345 = vrot.slane %v343, 5
  %v346 = vsel %vm192, %v341, %v345
  %v348 = vshrl.u32 %v40, 16
  %v350 = vrot.slane %v348, 4
  %v351 = vshll.u32 %v40, 16
  %v353 = vrot.slane %v351, 5
  %v354 = vor.u32 %v350, %v353
  %v355 = vrot.slane %v354, 4
  %v357 = vshll.u32 %v41, 16
  %v359 = vrot.slane %v357, 5
  %v360 = vsel %vm192, %v355, %v359
  %v362 = vshrl.u32 %v42, 16
  %v364 = vrot.slane %v362, 4
  %v365 = vshll.u32 %v42, 16
  %v367 = vrot.slane %v365, 5
  %v368 = vor.u32 %v364, %v367
  %v369 = vrot.slane %v368, 4
  %v371 = vshll.u32 %v43, 16
  %v373 = vrot.slane %v371, 5
  %v374 = vsel %vm192, %v369, %v373
  %v376 = vshrl.u32 %v44, 16
  %v378 = vrot.slane %v376, 4
  %v379 = vshll.u32 %v44, 16
  %v381 = vrot.slane %v379, 5
  %v382 = vor.u32 %v378, %v381
  %v383 = vrot.slane %v382, 4
  %v385 = vshll.u32 %v45, 16
  %v387 = vrot.slane %v385, 5
  %v388 = vsel %vm192, %v383, %v387
  %v390 = vshrl.u32 %v46, 16
  %v392 = vrot.slane %v390, 4
  %v393 = vshll.u32 %v46, 16
  %v395 = vrot.slane %v393, 5
  %v396 = vor.u32 %v392, %v395
  %v397 = vrot.slane %v396, 4
  %v399 = vshll.u32 %v47, 16
  %v401 = vrot.slane %v399, 5
  %v402 = vsel %vm192, %v397, %v401
  %v404 = vshrl.u32 %v48, 16
  %v406 = vrot.slane %v404, 4
  %v407 = vshll.u32 %v48, 16
  %v409 = vrot.slane %v407, 5
  %v410 = vor.u32 %v406, %v409
  %v411 = vrot.slane %v410, 4
  %v413 = vshll.u32 %v49, 16
  %v415 = vrot.slane %v413, 5
  %v416 = vsel %vm192, %v411, %v415
  %v418 = vshrl.u32 %v54, 16
  %v420 = vrot.slane %v418, 4
  %v421 = vshll.u32 %v54, 16
  %v423 = vrot.slane %v421, 5
  %v424 = vor.u32 %v420, %v423
  %v425 = vrot.slane %v424, 4
  %v427 = vshll.u32 %v55, 16
  %v429 = vrot.slane %v427, 5
  %v430 = vsel %vm192, %v425, %v429
  %v432 = vshrl.u32 %v56, 16
  %v434 = vrot.slane %v432, 4
  %v435 = vshll.u32 %v56, 16
  %v437 = vrot.slane %v435, 5
  %v438 = vor.u32 %v434, %v437
  %v439 = vrot.slane %v438, 4
  %v441 = vshll.u32 %v57, 16
  %v443 = vrot.slane %v441, 5
  %v444 = vsel %vm192, %v439, %v443
  %v446 = vshrl.u32 %v58, 16
  %v448 = vrot.slane %v446, 4
  %v449 = vshll.u32 %v58, 16
  %v451 = vrot.slane %v449, 5
  %v452 = vor.u32 %v448, %v451
  %v453 = vrot.slane %v452, 4
  %v455 = vshll.u32 %v59, 16
  %v457 = vrot.slane %v455, 5
  %v458 = vsel %vm192, %v453, %v457
  %v460 = vshrl.u32 %v60, 16
  %v462 = vrot.slane %v460, 4
  %v463 = vshll.u32 %v60, 16
  %v465 = vrot.slane %v463, 5
  %v466 = vor.u32 %v462, %v465
  %v467 = vrot.slane %v466, 4
  %v469 = vshll.u32 %v61, 16
  %v471 = vrot.slane %v469, 5
  %v472 = vsel %vm192, %v467, %v471
  %v474 = vshrl.u32 %v62, 16
  %v476 = vrot.slane %v474, 4
  %v477 = vshll.u32 %v62, 16
  %v479 = vrot.slane %v477, 5
  %v480 = vor.u32 %v476, %v479
  %v481 = vrot.slane %v480, 4
  %v483 = vshll.u32 %v63, 16
  %v485 = vrot.slane %v483, 5
  %v486 = vsel %vm192, %v481, %v485
  %v488 = vshrl.u32 %v64, 16
  %v490 = vrot.slane %v488, 4
  %v491 = vshll.u32 %v64, 16
  %v493 = vrot.slane %v491, 5
  %v494 = vor.u32 %v490, %v493
  %v495 = vrot.slane %v494, 4
  %v497 = vshll.u32 %v65, 16
  %v499 = vrot.slane %v497, 5
  %v500 = vsel %vm192, %v495, %v499
  %v502 = vshrl.u32 %v66, 16
  %v504 = vrot.slane %v502, 4
  %v505 = vshll.u32 %v66, 16
  %v507 = vrot.slane %v505, 5
  %v508 = vor.u32 %v504, %v507
  %v509 = vrot.slane %v508, 4
  %v511 = vshll.u32 %v67, 16
  %v513 = vrot.slane %v511, 5
  %v514 = vsel %vm192, %v509, %v513
  %v516 = vshrl.u32 %v68, 16
  %v518 = vrot.slane %v516, 4
  %v519 = vshll.u32 %v68, 16
  %v521 = vrot.slane %v519, 5
  %v522 = vor.u32 %v518, %v521
  %v523 = vrot.slane %v522, 4
  %v525 = vshll.u32 %v69, 16
  %v527 = vrot.slane %v525, 5
  %v528 = vsel %vm192, %v523, %v527
  %v530 = vshrl.u32 %v74, 16
  %v532 = vrot.slane %v530, 4
  %v533 = vshll.u32 %v74, 16
  %v535 = vrot.slane %v533, 5
  %v536 = vor.u32 %v532, %v535
  %v537 = vrot.slane %v536, 4
  %v539 = vshll.u32 %v75, 16
  %v541 = vrot.slane %v539, 5
  %v542 = vsel %vm192, %v537, %v541
  %v544 = vshrl.u32 %v76, 16
  %v546 = vrot.slane %v544, 4
  %v547 = vshll.u32 %v76, 16
  %v549 = vrot.slane %v547, 5
  %v550 = vor.u32 %v546, %v549
  %v551 = vrot.slane %v550, 4
  %v553 = vshll.u32 %v77, 16
  %v555 = vrot.slane %v553, 5
  %v556 = vsel %vm192, %v551, %v555
  %v558 = vshrl.u32 %v78, 16
  %v560 = vrot.slane %v558, 4
  %v561 = vshll.u32 %v78, 16
  %v563 = vrot.slane %v561, 5
  %v564 = vor.u32 %v560, %v563
  %v565 = vrot.slane %v564, 4
  %v567 = vshll.u32 %v79, 16
  %v569 = vrot.slane %v567, 5
  %v570 = vsel %vm192, %v565, %v569
  %v572 = vshrl.u32 %v80, 16
  %v574 = vrot.slane %v572, 4
  %v575 = vshll.u32 %v80, 16
  %v577 = vrot.slane %v575, 5
  %v578 = vor.u32 %v574, %v577
  %v579 = vrot.slane %v578, 4
  %v581 = vshll.u32 %v81, 16
  %v583 = vrot.slane %v581, 5
  %v584 = vsel %vm192, %v579, %v583
  %v586 = vshrl.u32 %v82, 16
  %v588 = vrot.slane %v586, 4
  %v589 = vshll.u32 %v82, 16
  %v591 = vrot.slane %v589, 5
  %v592 = vor.u32 %v588, %v591
  %v593 = vrot.slane %v592, 4
  %v595 = vshll.u32 %v83, 16
  %v597 = vrot.slane %v595, 5
  %v598 = vsel %vm192, %v593, %v597
  %v600 = vshrl.u32 %v84, 16
  %v602 = vrot.slane %v600, 4
  %v603 = vshll.u32 %v84, 16
  %v605 = vrot.slane %v603, 5
  %v606 = vor.u32 %v602, %v605
  %v607 = vrot.slane %v606, 4
  %v609 = vshll.u32 %v85, 16
  %v611 = vrot.slane %v609, 5
  %v612 = vsel %vm192, %v607, %v611
  %v614 = vshrl.u32 %v86, 16
  %v616 = vrot.slane %v614, 4
  %v617 = vshll.u32 %v86, 16
  %v619 = vrot.slane %v617, 5
  %v620 = vor.u32 %v616, %v619
  %v621 = vrot.slane %v620, 4
  %v623 = vshll.u32 %v87, 16
  %v625 = vrot.slane %v623, 5
  %v626 = vsel %vm192, %v621, %v625
  %v628 = vshrl.u32 %v88, 16
  %v630 = vrot.slane %v628, 4
  %v631 = vshll.u32 %v88, 16
  %v633 = vrot.slane %v631, 5
  %v634 = vor.u32 %v630, %v633
  %v635 = vrot.slane %v634, 4
  %v637 = vshll.u32 %v89, 16
  %v639 = vrot.slane %v637, 5
  %v640 = vsel %vm192, %v635, %v639
  %v642 = vshrl.u32 %v94, 16
  %v644 = vrot.slane %v642, 4
  %v645 = vshll.u32 %v94, 16
  %v647 = vrot.slane %v645, 5
  %v648 = vor.u32 %v644, %v647
  %v649 = vrot.slane %v648, 4
  %v651 = vshll.u32 %v95, 16
  %v653 = vrot.slane %v651, 5
  %v654 = vsel %vm192, %v649, %v653
  %v656 = vshrl.u32 %v96, 16
  %v658 = vrot.slane %v656, 4
  %v659 = vshll.u32 %v96, 16
  %v661 = vrot.slane %v659, 5
  %v662 = vor.u32 %v658, %v661
  %v663 = vrot.slane %v662, 4
  %v665 = vshll.u32 %v97, 16
  %v667 = vrot.slane %v665, 5
  %v668 = vsel %vm192, %v663, %v667
  %v670 = vshrl.u32 %v98, 16
  %v672 = vrot.slane %v670, 4
  %v673 = vshll.u32 %v98, 16
  %v675 = vrot.slane %v673, 5
  %v676 = vor.u32 %v672, %v675
  %v677 = vrot.slane %v676, 4
  %v679 = vshll.u32 %v99, 16
  %v681 = vrot.slane %v679, 5
  %v682 = vsel %vm192, %v677, %v681
  %v684 = vshrl.u32 %v100, 16
  %v686 = vrot.slane %v684, 4
  %v687 = vshll.u32 %v100, 16
  %v689 = vrot.slane %v687, 5
  %v690 = vor.u32 %v686, %v689
  %v691 = vrot.slane %v690, 4
  %v693 = vshll.u32 %v101, 16
  %v695 = vrot.slane %v693, 5
  %v696 = vsel %vm192, %v691, %v695
  %v698 = vshrl.u32 %v102, 16
  %v700 = vrot.slane %v698, 4
  %v701 = vshll.u32 %v102, 16
  %v703 = vrot.slane %v701, 5
  %v704 = vor.u32 %v700, %v703
  %v705 = vrot.slane %v704, 4
  %v707 = vshll.u32 %v103, 16
  %v709 = vrot.slane %v707, 5
  %v710 = vsel %vm192, %v705, %v709
  %v712 = vshrl.u32 %v104, 16
  %v714 = vrot.slane %v712, 4
  %v715 = vshll.u32 %v104, 16
  %v717 = vrot.slane %v715, 5
  %v718 = vor.u32 %v714, %v717
  %v719 = vrot.slane %v718, 4
  %v721 = vshll.u32 %v105, 16
  %v723 = vrot.slane %v721, 5
  %v724 = vsel %vm192, %v719, %v723
  %v726 = vshrl.u32 %v106, 16
  %v728 = vrot.slane %v726, 4
  %v729 = vshll.u32 %v106, 16
  %v731 = vrot.slane %v729, 5
  %v732 = vor.u32 %v728, %v731
  %v733 = vrot.slane %v732, 4
  %v735 = vshll.u32 %v107, 16
  %v737 = vrot.slane %v735, 5
  %v738 = vsel %vm192, %v733, %v737
  %v740 = vshrl.u32 %v108, 16
  %v742 = vrot.slane %v740, 4
  %v743 = vshll.u32 %v108, 16
  %v745 = vrot.slane %v743, 5
  %v746 = vor.u32 %v742, %v745
  %v747 = vrot.slane %v746, 4
  %v749 = vshll.u32 %v109, 16
  %v751 = vrot.slane %v749, 5
  %v752 = vsel %vm192, %v747, %v751
  %v754 = vshrl.u32 %v114, 16
  %v756 = vrot.slane %v754, 4
  %v757 = vshll.u32 %v114, 16
  %v759 = vrot.slane %v757, 5
  %v760 = vor.u32 %v756, %v759
  %v761 = vrot.slane %v760, 4
  %v763 = vshll.u32 %v115, 16
  %v765 = vrot.slane %v763, 5
  %v766 = vsel %vm192, %v761, %v765
  %v768 = vshrl.u32 %v116, 16
  %v770 = vrot.slane %v768, 4
  %v771 = vshll.u32 %v116, 16
  %v773 = vrot.slane %v771, 5
  %v774 = vor.u32 %v770, %v773
  %v775 = vrot.slane %v774, 4
  %v777 = vshll.u32 %v117, 16
  %v779 = vrot.slane %v777, 5
  %v780 = vsel %vm192, %v775, %v779
  %v782 = vshrl.u32 %v118, 16
  %v784 = vrot.slane %v782, 4
  %v785 = vshll.u32 %v118, 16
  %v787 = vrot.slane %v785, 5
  %v788 = vor.u32 %v784, %v787
  %v789 = vrot.slane %v788, 4
  %v791 = vshll.u32 %v119, 16
  %v793 = vrot.slane %v791, 5
  %v794 = vsel %vm192, %v789, %v793
  %v796 = vshrl.u32 %v120, 16
  %v798 = vrot.slane %v796, 4
  %v799 = vshll.u32 %v120, 16
  %v801 = vrot.slane %v799, 5
  %v802 = vor.u32 %v798, %v801
  %v803 = vrot.slane %v802, 4
  %v805 = vshll.u32 %v121, 16
  %v807 = vrot.slane %v805, 5
  %v808 = vsel %vm192, %v803, %v807
  %v810 = vshrl.u32 %v122, 16
  %v812 = vrot.slane %v810, 4
  %v813 = vshll.u32 %v122, 16
  %v815 = vrot.slane %v813, 5
  %v816 = vor.u32 %v812, %v815
  %v817 = vrot.slane %v816, 4
  %v819 = vshll.u32 %v123, 16
  %v821 = vrot.slane %v819, 5
  %v822 = vsel %vm192, %v817, %v821
  %v824 = vshrl.u32 %v124, 16
  %v826 = vrot.slane %v824, 4
  %v827 = vshll.u32 %v124, 16
  %v829 = vrot.slane %v827, 5
  %v830 = vor.u32 %v826, %v829
  %v831 = vrot.slane %v830, 4
  %v833 = vshll.u32 %v125, 16
  %v835 = vrot.slane %v833, 5
  %v836 = vsel %vm192, %v831, %v835
  %v838 = vshrl.u32 %v126, 16
  %v840 = vrot.slane %v838, 4
  %v841 = vshll.u32 %v126, 16
  %v843 = vrot.slane %v841, 5
  %v844 = vor.u32 %v840, %v843
  %v845 = vrot.slane %v844, 4
  %v847 = vshll.u32 %v127, 16
  %v849 = vrot.slane %v847, 5
  %v850 = vsel %vm192, %v845, %v849
  %v852 = vshrl.u32 %v128, 16
  %v854 = vrot.slane %v852, 4
  %v855 = vshll.u32 %v128, 16
  %v857 = vrot.slane %v855, 5
  %v858 = vor.u32 %v854, %v857
  %v859 = vrot.slane %v858, 4
  %v861 = vshll.u32 %v129, 16
  %v863 = vrot.slane %v861, 5
  %v864 = vsel %vm192, %v859, %v863
  %v866 = vshrl.u32 %v134, 16
  %v868 = vrot.slane %v866, 4
  %v869 = vshll.u32 %v134, 16
  %v871 = vrot.slane %v869, 5
  %v872 = vor.u32 %v868, %v871
  %v873 = vrot.slane %v872, 4
  %v875 = vshll.u32 %v135, 16
  %v877 = vrot.slane %v875, 5
  %v878 = vsel %vm192, %v873, %v877
  %v880 = vshrl.u32 %v136, 16
  %v882 = vrot.slane %v880, 4
  %v883 = vshll.u32 %v136, 16
  %v885 = vrot.slane %v883, 5
  %v886 = vor.u32 %v882, %v885
  %v887 = vrot.slane %v886, 4
  %v889 = vshll.u32 %v137, 16
  %v891 = vrot.slane %v889, 5
  %v892 = vsel %vm192, %v887, %v891
  %v894 = vshrl.u32 %v138, 16
  %v896 = vrot.slane %v894, 4
  %v897 = vshll.u32 %v138, 16
  %v899 = vrot.slane %v897, 5
  %v900 = vor.u32 %v896, %v899
  %v901 = vrot.slane %v900, 4
  %v903 = vshll.u32 %v139, 16
  %v905 = vrot.slane %v903, 5
  %v906 = vsel %vm192, %v901, %v905
  %v908 = vshrl.u32 %v140, 16
  %v910 = vrot.slane %v908, 4
  %v911 = vshll.u32 %v140, 16
  %v913 = vrot.slane %v911, 5
  %v914 = vor.u32 %v910, %v913
  %v915 = vrot.slane %v914, 4
  %v917 = vshll.u32 %v141, 16
  %v919 = vrot.slane %v917, 5
  %v920 = vsel %vm192, %v915, %v919
  %v922 = vshrl.u32 %v142, 16
  %v924 = vrot.slane %v922, 4
  %v925 = vshll.u32 %v142, 16
  %v927 = vrot.slane %v925, 5
  %v928 = vor.u32 %v924, %v927
  %v929 = vrot.slane %v928, 4
  %v931 = vshll.u32 %v143, 16
  %v933 = vrot.slane %v931, 5
  %v934 = vsel %vm192, %v929, %v933
  %v936 = vshrl.u32 %v144, 16
  %v938 = vrot.slane %v936, 4
  %v939 = vshll.u32 %v144, 16
  %v941 = vrot.slane %v939, 5
  %v942 = vor.u32 %v938, %v941
  %v943 = vrot.slane %v942, 4
  %v945 = vshll.u32 %v145, 16
  %v947 = vrot.slane %v945, 5
  %v948 = vsel %vm192, %v943, %v947
  %v950 = vshrl.u32 %v146, 16
  %v952 = vrot.slane %v950, 4
  %v953 = vshll.u32 %v146, 16
  %v955 = vrot.slane %v953, 5
  %v956 = vor.u32 %v952, %v955
  %v957 = vrot.slane %v956, 4
  %v959 = vshll.u32 %v147, 16
  %v961 = vrot.slane %v959, 5
  %v962 = vsel %vm192, %v957, %v961
  %v964 = vshrl.u32 %v148, 16
  %v966 = vrot.slane %v964, 4
  %v967 = vshll.u32 %v148, 16
  %v969 = vrot.slane %v967, 5
  %v970 = vor.u32 %v966, %v969
  %v971 = vrot.slane %v970, 4
  %v973 = vshll.u32 %v149, 16
  %v975 = vrot.slane %v973, 5
  %v976 = vsel %vm192, %v971, %v975
  %v978 = vshrl.u32 %v154, 16
  %v980 = vrot.slane %v978, 4
  %v981 = vshll.u32 %v154, 16
  %v983 = vrot.slane %v981, 5
  %v984 = vor.u32 %v980, %v983
  %v985 = vrot.slane %v984, 4
  %v987 = vshll.u32 %v155, 16
  %v989 = vrot.slane %v987, 5
  %v990 = vsel %vm192, %v985, %v989
  %v992 = vshrl.u32 %v156, 16
  %v994 = vrot.slane %v992, 4
  %v995 = vshll.u32 %v156, 16
  %v997 = vrot.slane %v995, 5
  %v998 = vor.u32 %v994, %v997
  %v999 = vrot.slane %v998, 4
  %v1001 = vshll.u32 %v157, 16
  %v1003 = vrot.slane %v1001, 5
  %v1004 = vsel %vm192, %v999, %v1003
  %v1006 = vshrl.u32 %v158, 16
  %v1008 = vrot.slane %v1006, 4
  %v1009 = vshll.u32 %v158, 16
  %v1011 = vrot.slane %v1009, 5
  %v1012 = vor.u32 %v1008, %v1011
  %v1013 = vrot.slane %v1012, 4
  %v1015 = vshll.u32 %v159, 16
  %v1017 = vrot.slane %v1015, 5
  %v1018 = vsel %vm192, %v1013, %v1017
  %v1020 = vshrl.u32 %v160, 16
  %v1022 = vrot.slane %v1020, 4
  %v1023 = vshll.u32 %v160, 16
  %v1025 = vrot.slane %v1023, 5
  %v1026 = vor.u32 %v1022, %v1025
  %v1027 = vrot.slane %v1026, 4
  %v1029 = vshll.u32 %v161, 16
  %v1031 = vrot.slane %v1029, 5
  %v1032 = vsel %vm192, %v1027, %v1031
  %v1034 = vshrl.u32 %v162, 16
  %v1036 = vrot.slane %v1034, 4
  %v1037 = vshll.u32 %v162, 16
  %v1039 = vrot.slane %v1037, 5
  %v1040 = vor.u32 %v1036, %v1039
  %v1041 = vrot.slane %v1040, 4
  %v1043 = vshll.u32 %v163, 16
  %v1045 = vrot.slane %v1043, 5
  %v1046 = vsel %vm192, %v1041, %v1045
  %v1048 = vshrl.u32 %v164, 16
  %v1050 = vrot.slane %v1048, 4
  %v1051 = vshll.u32 %v164, 16
  %v1053 = vrot.slane %v1051, 5
  %v1054 = vor.u32 %v1050, %v1053
  %v1055 = vrot.slane %v1054, 4
  %v1057 = vshll.u32 %v165, 16
  %v1059 = vrot.slane %v1057, 5
  %v1060 = vsel %vm192, %v1055, %v1059
  %v1062 = vshrl.u32 %v166, 16
  %v1064 = vrot.slane %v1062, 4
  %v1065 = vshll.u32 %v166, 16
  %v1067 = vrot.slane %v1065, 5
  %v1068 = vor.u32 %v1064, %v1067
  %v1069 = vrot.slane %v1068, 4
  %v1071 = vshll.u32 %v167, 16
  %v1073 = vrot.slane %v1071, 5
  %v1074 = vsel %vm192, %v1069, %v1073
  %v1076 = vshrl.u32 %v168, 16
  %v1078 = vrot.slane %v1076, 4
  %v1079 = vshll.u32 %v168, 16
  %v1081 = vrot.slane %v1079, 5
  %v1082 = vor.u32 %v1078, %v1081
  %v1083 = vrot.slane %v1082, 4
  %v1085 = vshll.u32 %v169, 16
  %v1087 = vrot.slane %v1085, 5
  %v1088 = vsel %vm192, %v1083, %v1087
  %s1089 = scalar_lea.vmem %s1, 64
  %v1090 = vld [vmem:[%s1089] sm:$0xf]
  %v1091 = vld [vmem:[%s1089 + $0x4] sm:$0xf]
  %v1092 = vld [vmem:[%s1089 + $0x8] sm:$0xf]
  %v1093 = vld [vmem:[%s1089 + $0xc] sm:$0xf]
  %v1094 = vld [vmem:[%s1089 + $0x10] sm:$0xf]
  %v1095 = vld [vmem:[%s1089 + $0x14] sm:$0xf]
  %v1096 = vld [vmem:[%s1089 + $0x18] sm:$0xf]
  %v1097 = vld [vmem:[%s1089 + $0x1c] sm:$0xf]
  %v1098 = vld [vmem:[%s1089 + $0x20] sm:$0xf]
  %v1099 = vld [vmem:[%s1089 + $0x24] sm:$0xf]
  %v1100 = vld [vmem:[%s1089 + $0x28] sm:$0xf]
  %v1101 = vld [vmem:[%s1089 + $0x2c] sm:$0xf]
  %v1102 = vld [vmem:[%s1089 + $0x30] sm:$0xf]
  %v1103 = vld [vmem:[%s1089 + $0x34] sm:$0xf]
  %v1104 = vld [vmem:[%s1089 + $0x38] sm:$0xf]
  %v1105 = vld [vmem:[%s1089 + $0x3c] sm:$0xf]
  %v1106 = vunpack.c.l.b16 %v206
  %v1107 = vunpack.c.l.b16 %v220
  %v1108 = vunpack.c.l.b16 %v234
  %v1109 = vunpack.c.l.b16 %v248
  %v1110 = vunpack.c.l.b16 %v262
  %v1111 = vunpack.c.l.b16 %v276
  %v1112 = vunpack.c.l.b16 %v290
  %v1113 = vunpack.c.l.b16 %v304
  %v1114 = vunpack.c.l.b16 %v318
  %v1115 = vunpack.c.l.b16 %v332
  %v1116 = vunpack.c.l.b16 %v346
  %v1117 = vunpack.c.l.b16 %v360
  %v1118 = vunpack.c.l.b16 %v374
  %v1119 = vunpack.c.l.b16 %v388
  %v1120 = vunpack.c.l.b16 %v402
  %v1121 = vunpack.c.l.b16 %v416
  %v1122 = vunpack.c.l.b16 %v430
  %v1123 = vunpack.c.l.b16 %v444
  %v1124 = vunpack.c.l.b16 %v458
  %v1125 = vunpack.c.l.b16 %v472
  %v1126 = vunpack.c.l.b16 %v486
  %v1127 = vunpack.c.l.b16 %v500
  %v1128 = vunpack.c.l.b16 %v514
  %v1129 = vunpack.c.l.b16 %v528
  %v1130 = vunpack.c.l.b16 %v542
  %v1131 = vunpack.c.l.b16 %v556
  %v1132 = vunpack.c.l.b16 %v570
  %v1133 = vunpack.c.l.b16 %v584
  %v1134 = vunpack.c.l.b16 %v598
  %v1135 = vunpack.c.l.b16 %v612
  %v1136 = vunpack.c.l.b16 %v626
  %v1137 = vunpack.c.l.b16 %v640
  %v1138 = vunpack.c.l.b16 %v654
  %v1139 = vunpack.c.l.b16 %v668
  %v1140 = vunpack.c.l.b16 %v682
  %v1141 = vunpack.c.l.b16 %v696
  %v1142 = vunpack.c.l.b16 %v710
  %v1143 = vunpack.c.l.b16 %v724
  %v1144 = vunpack.c.l.b16 %v738
  %v1145 = vunpack.c.l.b16 %v752
  %v1146 = vunpack.c.l.b16 %v766
  %v1147 = vunpack.c.l.b16 %v780
  %v1148 = vunpack.c.l.b16 %v794
  %v1149 = vunpack.c.l.b16 %v808
  %v1150 = vunpack.c.l.b16 %v822
  %v1151 = vunpack.c.l.b16 %v836
  %v1152 = vunpack.c.l.b16 %v850
  %v1153 = vunpack.c.l.b16 %v864
  %v1154 = vunpack.c.l.b16 %v878
  %v1155 = vunpack.c.l.b16 %v892
  %v1156 = vunpack.c.l.b16 %v906
  %v1157 = vunpack.c.l.b16 %v920
  %v1158 = vunpack.c.l.b16 %v934
  %v1159 = vunpack.c.l.b16 %v948
  %v1160 = vunpack.c.l.b16 %v962
  %v1161 = vunpack.c.l.b16 %v976
  %v1162 = vunpack.c.l.b16 %v990
  %v1163 = vunpack.c.l.b16 %v1004
  %v1164 = vunpack.c.l.b16 %v1018
  %v1165 = vunpack.c.l.b16 %v1032
  %v1166 = vunpack.c.l.b16 %v1046
  %v1167 = vunpack.c.l.b16 %v1060
  %v1168 = vunpack.c.l.b16 %v1074
  %v1169 = vunpack.c.l.b16 %v1088
  %v1170 = vpack.c.b16 %v1107, %v1106
  %v1171 = vpack.c.b16 %v1109, %v1108
  %v1172 = vpack.c.b16 %v1111, %v1110
  %v1173 = vpack.c.b16 %v1113, %v1112
  %v1174 = vpack.c.b16 %v1115, %v1114
  %v1175 = vpack.c.b16 %v1117, %v1116
  %v1176 = vpack.c.b16 %v1119, %v1118
  %v1177 = vpack.c.b16 %v1121, %v1120
  %v1178 = vpack.c.b16 %v1123, %v1122
  %v1179 = vpack.c.b16 %v1125, %v1124
  %v1180 = vpack.c.b16 %v1127, %v1126
  %v1181 = vpack.c.b16 %v1129, %v1128
  %v1182 = vpack.c.b16 %v1131, %v1130
  %v1183 = vpack.c.b16 %v1133, %v1132
  %v1184 = vpack.c.b16 %v1135, %v1134
  %v1185 = vpack.c.b16 %v1137, %v1136
  %v1186 = vpack.c.b16 %v1139, %v1138
  %v1187 = vpack.c.b16 %v1141, %v1140
  %v1188 = vpack.c.b16 %v1143, %v1142
  %v1189 = vpack.c.b16 %v1145, %v1144
  %v1190 = vpack.c.b16 %v1147, %v1146
  %v1191 = vpack.c.b16 %v1149, %v1148
  %v1192 = vpack.c.b16 %v1151, %v1150
  %v1193 = vpack.c.b16 %v1153, %v1152
  %v1194 = vpack.c.b16 %v1155, %v1154
  %v1195 = vpack.c.b16 %v1157, %v1156
  %v1196 = vpack.c.b16 %v1159, %v1158
  %v1197 = vpack.c.b16 %v1161, %v1160
  %v1198 = vpack.c.b16 %v1163, %v1162
  %v1199 = vpack.c.b16 %v1165, %v1164
  %v1200 = vpack.c.b16 %v1167, %v1166
  %v1201 = vpack.c.b16 %v1169, %v1168
  %v1250 = vunpack.c.l.b16 %v1090
  %v1251 = vunpack.c.l.b16 %v1091
  %v1252 = vunpack.c.l.b16 %v1092
  %v1253 = vunpack.c.l.b16 %v1093
  %v1254 = vunpack.c.l.b16 %v1094
  %v1255 = vunpack.c.l.b16 %v1095
  %v1256 = vunpack.c.l.b16 %v1096
  %v1257 = vunpack.c.l.b16 %v1097
  %v1258 = vunpack.c.l.b16 %v1098
  %v1259 = vunpack.c.l.b16 %v1099
  %v1260 = vunpack.c.l.b16 %v1100
  %v1261 = vunpack.c.l.b16 %v1101
  %v1262 = vunpack.c.l.b16 %v1102
  %v1263 = vunpack.c.l.b16 %v1103
  %v1264 = vunpack.c.l.b16 %v1104
  %v1265 = vunpack.c.l.b16 %v1105
  %v1266 = vpack.c.b16 %v1251, %v1250
  %v1267 = vpack.c.b16 %v1253, %v1252
  %v1268 = vpack.c.b16 %v1255, %v1254
  %v1269 = vpack.c.b16 %v1257, %v1256
  %v1270 = vpack.c.b16 %v1259, %v1258
  %v1271 = vpack.c.b16 %v1261, %v1260
  %v1272 = vpack.c.b16 %v1263, %v1262
  %v1273 = vpack.c.b16 %v1265, %v1264
  %1282 = vmatpush.bf16.msra.mxu0 %v1273
  %1283 = vmatpush.bf16.msra.mxu0 %v1272
  %1284 = vmatpush.bf16.msra.mxu0 %v1271
  %1285 = vmatpush.bf16.msra.mxu0 %v1270
  %1286 = vmatpush.bf16.msra.mxu0 %v1269
  %1287 = vmatpush.bf16.msra.mxu0 %v1268
  %1288 = vmatpush.bf16.msra.mxu0 %v1267
  %1289 = vmatpush.bf16.msra.mxu0 %v1266
  %1290 = vmatmul.bf16.gmra.mxu0 %v1170
  %v1291 = vpop.f32.mrf.mxu0
  %v1292 = vadd.f32 0.0, %v1291
  %v1293 = vpop.f32.mrf.mxu0
  %v1294 = vadd.f32 0.0, %v1293
  %1295 = vmatmul.bf16.gmra.mxu0 %v1171
  %v1296 = vpop.f32.mrf.mxu0
  %v1297 = vadd.f32 0.0, %v1296
  %v1298 = vpop.f32.mrf.mxu0
  %v1299 = vadd.f32 0.0, %v1298
  %1300 = vmatmul.bf16.gmra.mxu0 %v1172
  %v1301 = vpop.f32.mrf.mxu0
  %v1302 = vadd.f32 0.0, %v1301
  %v1303 = vpop.f32.mrf.mxu0
  %v1304 = vadd.f32 0.0, %v1303
  %1305 = vmatmul.bf16.gmra.mxu0 %v1173
  %v1306 = vpop.f32.mrf.mxu0
  %v1307 = vadd.f32 0.0, %v1306
  %v1308 = vpop.f32.mrf.mxu0
  %v1309 = vadd.f32 0.0, %v1308
  %1310 = vmatmul.bf16.gmra.mxu0 %v1174
  %v1311 = vpop.f32.mrf.mxu0
  %v1312 = vadd.f32 0.0, %v1311
  %v1313 = vpop.f32.mrf.mxu0
  %v1314 = vadd.f32 0.0, %v1313
  %1315 = vmatmul.bf16.gmra.mxu0 %v1175
  %v1316 = vpop.f32.mrf.mxu0
  %v1317 = vadd.f32 0.0, %v1316
  %v1318 = vpop.f32.mrf.mxu0
  %v1319 = vadd.f32 0.0, %v1318
  %1320 = vmatmul.bf16.gmra.mxu0 %v1176
  %v1321 = vpop.f32.mrf.mxu0
  %v1322 = vadd.f32 0.0, %v1321
  %v1323 = vpop.f32.mrf.mxu0
  %v1324 = vadd.f32 0.0, %v1323
  %1325 = vmatmul.bf16.gmra.mxu0 %v1177
  %v1326 = vpop.f32.mrf.mxu0
  %v1327 = vadd.f32 0.0, %v1326
  %v1328 = vpop.f32.mrf.mxu0
  %v1329 = vadd.f32 0.0, %v1328
  %1330 = vmatmul.bf16.gmra.mxu0 %v1178
  %v1331 = vpop.f32.mrf.mxu0
  %v1332 = vadd.f32 0.0, %v1331
  %v1333 = vpop.f32.mrf.mxu0
  %v1334 = vadd.f32 0.0, %v1333
  %1335 = vmatmul.bf16.gmra.mxu0 %v1179
  %v1336 = vpop.f32.mrf.mxu0
  %v1337 = vadd.f32 0.0, %v1336
  %v1338 = vpop.f32.mrf.mxu0
  %v1339 = vadd.f32 0.0, %v1338
  %1340 = vmatmul.bf16.gmra.mxu0 %v1180
  %v1341 = vpop.f32.mrf.mxu0
  %v1342 = vadd.f32 0.0, %v1341
  %v1343 = vpop.f32.mrf.mxu0
  %v1344 = vadd.f32 0.0, %v1343
  %1345 = vmatmul.bf16.gmra.mxu0 %v1181
  %v1346 = vpop.f32.mrf.mxu0
  %v1347 = vadd.f32 0.0, %v1346
  %v1348 = vpop.f32.mrf.mxu0
  %v1349 = vadd.f32 0.0, %v1348
  %1350 = vmatmul.bf16.gmra.mxu0 %v1182
  %v1351 = vpop.f32.mrf.mxu0
  %v1352 = vadd.f32 0.0, %v1351
  %v1353 = vpop.f32.mrf.mxu0
  %v1354 = vadd.f32 0.0, %v1353
  %1355 = vmatmul.bf16.gmra.mxu0 %v1183
  %v1356 = vpop.f32.mrf.mxu0
  %v1357 = vadd.f32 0.0, %v1356
  %v1358 = vpop.f32.mrf.mxu0
  %v1359 = vadd.f32 0.0, %v1358
  %1360 = vmatmul.bf16.gmra.mxu0 %v1184
  %v1361 = vpop.f32.mrf.mxu0
  %v1362 = vadd.f32 0.0, %v1361
  %v1363 = vpop.f32.mrf.mxu0
  %v1364 = vadd.f32 0.0, %v1363
  %1365 = vmatmul.bf16.gmra.mxu0 %v1185
  %v1366 = vpop.f32.mrf.mxu0
  %v1367 = vadd.f32 0.0, %v1366
  %v1368 = vpop.f32.mrf.mxu0
  %v1369 = vadd.f32 0.0, %v1368
  %1370 = vmatmul.bf16.gmra.mxu0 %v1186
  %v1371 = vpop.f32.mrf.mxu0
  %v1372 = vadd.f32 0.0, %v1371
  %v1373 = vpop.f32.mrf.mxu0
  %v1374 = vadd.f32 0.0, %v1373
  %1375 = vmatmul.bf16.gmra.mxu0 %v1187
  %v1376 = vpop.f32.mrf.mxu0
  %v1377 = vadd.f32 0.0, %v1376
  %v1378 = vpop.f32.mrf.mxu0
  %v1379 = vadd.f32 0.0, %v1378
  %1380 = vmatmul.bf16.gmra.mxu0 %v1188
  %v1381 = vpop.f32.mrf.mxu0
  %v1382 = vadd.f32 0.0, %v1381
  %v1383 = vpop.f32.mrf.mxu0
  %v1384 = vadd.f32 0.0, %v1383
  %1385 = vmatmul.bf16.gmra.mxu0 %v1189
  %v1386 = vpop.f32.mrf.mxu0
  %v1387 = vadd.f32 0.0, %v1386
  %v1388 = vpop.f32.mrf.mxu0
  %v1389 = vadd.f32 0.0, %v1388
  %1390 = vmatmul.bf16.gmra.mxu0 %v1190
  %v1391 = vpop.f32.mrf.mxu0
  %v1392 = vadd.f32 0.0, %v1391
  %v1393 = vpop.f32.mrf.mxu0
  %v1394 = vadd.f32 0.0, %v1393
  %1395 = vmatmul.bf16.gmra.mxu0 %v1191
  %v1396 = vpop.f32.mrf.mxu0
  %v1397 = vadd.f32 0.0, %v1396
  %v1398 = vpop.f32.mrf.mxu0
  %v1399 = vadd.f32 0.0, %v1398
  %1400 = vmatmul.bf16.gmra.mxu0 %v1192
  %v1401 = vpop.f32.mrf.mxu0
  %v1402 = vadd.f32 0.0, %v1401
  %v1403 = vpop.f32.mrf.mxu0
  %v1404 = vadd.f32 0.0, %v1403
  %1405 = vmatmul.bf16.gmra.mxu0 %v1193
  %v1406 = vpop.f32.mrf.mxu0
  %v1407 = vadd.f32 0.0, %v1406
  %v1408 = vpop.f32.mrf.mxu0
  %v1409 = vadd.f32 0.0, %v1408
  %1410 = vmatmul.bf16.gmra.mxu0 %v1194
  %v1411 = vpop.f32.mrf.mxu0
  %v1412 = vadd.f32 0.0, %v1411
  %v1413 = vpop.f32.mrf.mxu0
  %v1414 = vadd.f32 0.0, %v1413
  %1415 = vmatmul.bf16.gmra.mxu0 %v1195
  %v1416 = vpop.f32.mrf.mxu0
  %v1417 = vadd.f32 0.0, %v1416
  %v1418 = vpop.f32.mrf.mxu0
  %v1419 = vadd.f32 0.0, %v1418
  %1420 = vmatmul.bf16.gmra.mxu0 %v1196
  %v1421 = vpop.f32.mrf.mxu0
  %v1422 = vadd.f32 0.0, %v1421
  %v1423 = vpop.f32.mrf.mxu0
  %v1424 = vadd.f32 0.0, %v1423
  %1425 = vmatmul.bf16.gmra.mxu0 %v1197
  %v1426 = vpop.f32.mrf.mxu0
  %v1427 = vadd.f32 0.0, %v1426
  %v1428 = vpop.f32.mrf.mxu0
  %v1429 = vadd.f32 0.0, %v1428
  %1430 = vmatmul.bf16.gmra.mxu0 %v1198
  %v1431 = vpop.f32.mrf.mxu0
  %v1432 = vadd.f32 0.0, %v1431
  %v1433 = vpop.f32.mrf.mxu0
  %v1434 = vadd.f32 0.0, %v1433
  %1435 = vmatmul.bf16.gmra.mxu0 %v1199
  %v1436 = vpop.f32.mrf.mxu0
  %v1437 = vadd.f32 0.0, %v1436
  %v1438 = vpop.f32.mrf.mxu0
  %v1439 = vadd.f32 0.0, %v1438
  %1440 = vmatmul.bf16.gmra.mxu0 %v1200
  %v1441 = vpop.f32.mrf.mxu0
  %v1442 = vadd.f32 0.0, %v1441
  %v1443 = vpop.f32.mrf.mxu0
  %v1444 = vadd.f32 0.0, %v1443
  %1445 = vmatmul.bf16.gmra.mxu0 %v1201
  %v1446 = vpop.f32.mrf.mxu0
  %v1447 = vadd.f32 0.0, %v1446
  %v1448 = vpop.f32.mrf.mxu0
  %v1449 = vadd.f32 0.0, %v1448
  %1450 = vdwg.mxu0
  %v1515 = vunpack.c.l.b16 %v14
  %v1516 = vunpack.c.l.b16 %v16
  %v1517 = vunpack.c.l.b16 %v18
  %v1518 = vunpack.c.l.b16 %v20
  %v1519 = vunpack.c.l.b16 %v22
  %v1520 = vunpack.c.l.b16 %v24
  %v1521 = vunpack.c.l.b16 %v26
  %v1522 = vunpack.c.l.b16 %v28
  %v1523 = vunpack.c.l.b16 %v34
  %v1524 = vunpack.c.l.b16 %v36
  %v1525 = vunpack.c.l.b16 %v38
  %v1526 = vunpack.c.l.b16 %v40
  %v1527 = vunpack.c.l.b16 %v42
  %v1528 = vunpack.c.l.b16 %v44
  %v1529 = vunpack.c.l.b16 %v46
  %v1530 = vunpack.c.l.b16 %v48
  %v1531 = vunpack.c.l.b16 %v54
  %v1532 = vunpack.c.l.b16 %v56
  %v1533 = vunpack.c.l.b16 %v58
  %v1534 = vunpack.c.l.b16 %v60
  %v1535 = vunpack.c.l.b16 %v62
  %v1536 = vunpack.c.l.b16 %v64
  %v1537 = vunpack.c.l.b16 %v66
  %v1538 = vunpack.c.l.b16 %v68
  %v1539 = vunpack.c.l.b16 %v74
  %v1540 = vunpack.c.l.b16 %v76
  %v1541 = vunpack.c.l.b16 %v78
  %v1542 = vunpack.c.l.b16 %v80
  %v1543 = vunpack.c.l.b16 %v82
  %v1544 = vunpack.c.l.b16 %v84
  %v1545 = vunpack.c.l.b16 %v86
  %v1546 = vunpack.c.l.b16 %v88
  %v1547 = vunpack.c.l.b16 %v94
  %v1548 = vunpack.c.l.b16 %v96
  %v1549 = vunpack.c.l.b16 %v98
  %v1550 = vunpack.c.l.b16 %v100
  %v1551 = vunpack.c.l.b16 %v102
  %v1552 = vunpack.c.l.b16 %v104
  %v1553 = vunpack.c.l.b16 %v106
  %v1554 = vunpack.c.l.b16 %v108
  %v1555 = vunpack.c.l.b16 %v114
  %v1556 = vunpack.c.l.b16 %v116
  %v1557 = vunpack.c.l.b16 %v118
  %v1558 = vunpack.c.l.b16 %v120
  %v1559 = vunpack.c.l.b16 %v122
  %v1560 = vunpack.c.l.b16 %v124
  %v1561 = vunpack.c.l.b16 %v126
  %v1562 = vunpack.c.l.b16 %v128
  %v1563 = vunpack.c.l.b16 %v134
  %v1564 = vunpack.c.l.b16 %v136
  %v1565 = vunpack.c.l.b16 %v138
  %v1566 = vunpack.c.l.b16 %v140
  %v1567 = vunpack.c.l.b16 %v142
  %v1568 = vunpack.c.l.b16 %v144
  %v1569 = vunpack.c.l.b16 %v146
  %v1570 = vunpack.c.l.b16 %v148
  %v1571 = vunpack.c.l.b16 %v154
  %v1572 = vunpack.c.l.b16 %v156
  %v1573 = vunpack.c.l.b16 %v158
  %v1574 = vunpack.c.l.b16 %v160
  %v1575 = vunpack.c.l.b16 %v162
  %v1576 = vunpack.c.l.b16 %v164
  %v1577 = vunpack.c.l.b16 %v166
  %v1578 = vunpack.c.l.b16 %v168
  %v1579 = vpack.c.b16 %v1516, %v1515
  %v1580 = vpack.c.b16 %v1518, %v1517
  %v1581 = vpack.c.b16 %v1520, %v1519
  %v1582 = vpack.c.b16 %v1522, %v1521
  %v1583 = vpack.c.b16 %v1524, %v1523
  %v1584 = vpack.c.b16 %v1526, %v1525
  %v1585 = vpack.c.b16 %v1528, %v1527
  %v1586 = vpack.c.b16 %v1530, %v1529
  %v1587 = vpack.c.b16 %v1532, %v1531
  %v1588 = vpack.c.b16 %v1534, %v1533
  %v1589 = vpack.c.b16 %v1536, %v1535
  %v1590 = vpack.c.b16 %v1538, %v1537
  %v1591 = vpack.c.b16 %v1540, %v1539
  %v1592 = vpack.c.b16 %v1542, %v1541
  %v1593 = vpack.c.b16 %v1544, %v1543
  %v1594 = vpack.c.b16 %v1546, %v1545
  %v1595 = vpack.c.b16 %v1548, %v1547
  %v1596 = vpack.c.b16 %v1550, %v1549
  %v1597 = vpack.c.b16 %v1552, %v1551
  %v1598 = vpack.c.b16 %v1554, %v1553
  %v1599 = vpack.c.b16 %v1556, %v1555
  %v1600 = vpack.c.b16 %v1558, %v1557
  %v1601 = vpack.c.b16 %v1560, %v1559
  %v1602 = vpack.c.b16 %v1562, %v1561
  %v1603 = vpack.c.b16 %v1564, %v1563
  %v1604 = vpack.c.b16 %v1566, %v1565
  %v1605 = vpack.c.b16 %v1568, %v1567
  %v1606 = vpack.c.b16 %v1570, %v1569
  %v1607 = vpack.c.b16 %v1572, %v1571
  %v1608 = vpack.c.b16 %v1574, %v1573
  %v1609 = vpack.c.b16 %v1576, %v1575
  %v1610 = vpack.c.b16 %v1578, %v1577
  %v1659 = vunpack.c.l.b16 %v174
  %v1660 = vunpack.c.l.b16 %v175
  %v1661 = vunpack.c.l.b16 %v176
  %v1662 = vunpack.c.l.b16 %v177
  %v1663 = vunpack.c.l.b16 %v178
  %v1664 = vunpack.c.l.b16 %v179
  %v1665 = vunpack.c.l.b16 %v180
  %v1666 = vunpack.c.l.b16 %v181
  %v1667 = vunpack.c.l.b16 %v182
  %v1668 = vunpack.c.l.b16 %v183
  %v1669 = vunpack.c.l.b16 %v184
  %v1670 = vunpack.c.l.b16 %v185
  %v1671 = vunpack.c.l.b16 %v186
  %v1672 = vunpack.c.l.b16 %v187
  %v1673 = vunpack.c.l.b16 %v188
  %v1674 = vunpack.c.l.b16 %v189
  %v1675 = vpack.c.b16 %v1660, %v1659
  %v1676 = vpack.c.b16 %v1662, %v1661
  %v1677 = vpack.c.b16 %v1664, %v1663
  %v1678 = vpack.c.b16 %v1666, %v1665
  %v1679 = vpack.c.b16 %v1668, %v1667
  %v1680 = vpack.c.b16 %v1670, %v1669
  %v1681 = vpack.c.b16 %v1672, %v1671
  %v1682 = vpack.c.b16 %v1674, %v1673
  %1691 = vmatpush.bf16.msra.mxu0 %v1682
  %1692 = vmatpush.bf16.msra.mxu0 %v1681
  %1693 = vmatpush.bf16.msra.mxu0 %v1680
  %1694 = vmatpush.bf16.msra.mxu0 %v1679
  %1695 = vmatpush.bf16.msra.mxu0 %v1678
  %1696 = vmatpush.bf16.msra.mxu0 %v1677
  %1697 = vmatpush.bf16.msra.mxu0 %v1676
  %1698 = vmatpush.bf16.msra.mxu0 %v1675
  %1699 = vmatmul.bf16.gmra.mxu0 %v1579
  %v1700 = vpop.f32.mrf.mxu0
  %v1701 = vadd.f32 %v1292, %v1700
  %v1702 = vpop.f32.mrf.mxu0
  %v1703 = vadd.f32 %v1294, %v1702
  %1704 = vmatmul.bf16.gmra.mxu0 %v1580
  %v1705 = vpop.f32.mrf.mxu0
  %v1706 = vadd.f32 %v1297, %v1705
  %v1707 = vpop.f32.mrf.mxu0
  %v1708 = vadd.f32 %v1299, %v1707
  %1709 = vmatmul.bf16.gmra.mxu0 %v1581
  %v1710 = vpop.f32.mrf.mxu0
  %v1711 = vadd.f32 %v1302, %v1710
  %v1712 = vpop.f32.mrf.mxu0
  %v1713 = vadd.f32 %v1304, %v1712
  %1714 = vmatmul.bf16.gmra.mxu0 %v1582
  %v1715 = vpop.f32.mrf.mxu0
  %v1716 = vadd.f32 %v1307, %v1715
  %v1717 = vpop.f32.mrf.mxu0
  %v1718 = vadd.f32 %v1309, %v1717
  %1719 = vmatmul.bf16.gmra.mxu0 %v1583
  %v1720 = vpop.f32.mrf.mxu0
  %v1721 = vadd.f32 %v1312, %v1720
  %v1722 = vpop.f32.mrf.mxu0
  %v1723 = vadd.f32 %v1314, %v1722
  %1724 = vmatmul.bf16.gmra.mxu0 %v1584
  %v1725 = vpop.f32.mrf.mxu0
  %v1726 = vadd.f32 %v1317, %v1725
  %v1727 = vpop.f32.mrf.mxu0
  %v1728 = vadd.f32 %v1319, %v1727
  %1729 = vmatmul.bf16.gmra.mxu0 %v1585
  %v1730 = vpop.f32.mrf.mxu0
  %v1731 = vadd.f32 %v1322, %v1730
  %v1732 = vpop.f32.mrf.mxu0
  %v1733 = vadd.f32 %v1324, %v1732
  %1734 = vmatmul.bf16.gmra.mxu0 %v1586
  %v1735 = vpop.f32.mrf.mxu0
  %v1736 = vadd.f32 %v1327, %v1735
  %v1737 = vpop.f32.mrf.mxu0
  %v1738 = vadd.f32 %v1329, %v1737
  %1739 = vmatmul.bf16.gmra.mxu0 %v1587
  %v1740 = vpop.f32.mrf.mxu0
  %v1741 = vadd.f32 %v1332, %v1740
  %v1742 = vpop.f32.mrf.mxu0
  %v1743 = vadd.f32 %v1334, %v1742
  %1744 = vmatmul.bf16.gmra.mxu0 %v1588
  %v1745 = vpop.f32.mrf.mxu0
  %v1746 = vadd.f32 %v1337, %v1745
  %v1747 = vpop.f32.mrf.mxu0
  %v1748 = vadd.f32 %v1339, %v1747
  %1749 = vmatmul.bf16.gmra.mxu0 %v1589
  %v1750 = vpop.f32.mrf.mxu0
  %v1751 = vadd.f32 %v1342, %v1750
  %v1752 = vpop.f32.mrf.mxu0
  %v1753 = vadd.f32 %v1344, %v1752
  %1754 = vmatmul.bf16.gmra.mxu0 %v1590
  %v1755 = vpop.f32.mrf.mxu0
  %v1756 = vadd.f32 %v1347, %v1755
  %v1757 = vpop.f32.mrf.mxu0
  %v1758 = vadd.f32 %v1349, %v1757
  %1759 = vmatmul.bf16.gmra.mxu0 %v1591
  %v1760 = vpop.f32.mrf.mxu0
  %v1761 = vadd.f32 %v1352, %v1760
  %v1762 = vpop.f32.mrf.mxu0
  %v1763 = vadd.f32 %v1354, %v1762
  %1764 = vmatmul.bf16.gmra.mxu0 %v1592
  %v1765 = vpop.f32.mrf.mxu0
  %v1766 = vadd.f32 %v1357, %v1765
  %v1767 = vpop.f32.mrf.mxu0
  %v1768 = vadd.f32 %v1359, %v1767
  %1769 = vmatmul.bf16.gmra.mxu0 %v1593
  %v1770 = vpop.f32.mrf.mxu0
  %v1771 = vadd.f32 %v1362, %v1770
  %v1772 = vpop.f32.mrf.mxu0
  %v1773 = vadd.f32 %v1364, %v1772
  %1774 = vmatmul.bf16.gmra.mxu0 %v1594
  %v1775 = vpop.f32.mrf.mxu0
  %v1776 = vadd.f32 %v1367, %v1775
  %v1777 = vpop.f32.mrf.mxu0
  %v1778 = vadd.f32 %v1369, %v1777
  %1779 = vmatmul.bf16.gmra.mxu0 %v1595
  %v1780 = vpop.f32.mrf.mxu0
  %v1781 = vadd.f32 %v1372, %v1780
  %v1782 = vpop.f32.mrf.mxu0
  %v1783 = vadd.f32 %v1374, %v1782
  %1784 = vmatmul.bf16.gmra.mxu0 %v1596
  %v1785 = vpop.f32.mrf.mxu0
  %v1786 = vadd.f32 %v1377, %v1785
  %v1787 = vpop.f32.mrf.mxu0
  %v1788 = vadd.f32 %v1379, %v1787
  %1789 = vmatmul.bf16.gmra.mxu0 %v1597
  %v1790 = vpop.f32.mrf.mxu0
  %v1791 = vadd.f32 %v1382, %v1790
  %v1792 = vpop.f32.mrf.mxu0
  %v1793 = vadd.f32 %v1384, %v1792
  %1794 = vmatmul.bf16.gmra.mxu0 %v1598
  %v1795 = vpop.f32.mrf.mxu0
  %v1796 = vadd.f32 %v1387, %v1795
  %v1797 = vpop.f32.mrf.mxu0
  %v1798 = vadd.f32 %v1389, %v1797
  %1799 = vmatmul.bf16.gmra.mxu0 %v1599
  %v1800 = vpop.f32.mrf.mxu0
  %v1801 = vadd.f32 %v1392, %v1800
  %v1802 = vpop.f32.mrf.mxu0
  %v1803 = vadd.f32 %v1394, %v1802
  %1804 = vmatmul.bf16.gmra.mxu0 %v1600
  %v1805 = vpop.f32.mrf.mxu0
  %v1806 = vadd.f32 %v1397, %v1805
  %v1807 = vpop.f32.mrf.mxu0
  %v1808 = vadd.f32 %v1399, %v1807
  %1809 = vmatmul.bf16.gmra.mxu0 %v1601
  %v1810 = vpop.f32.mrf.mxu0
  %v1811 = vadd.f32 %v1402, %v1810
  %v1812 = vpop.f32.mrf.mxu0
  %v1813 = vadd.f32 %v1404, %v1812
  %1814 = vmatmul.bf16.gmra.mxu0 %v1602
  %v1815 = vpop.f32.mrf.mxu0
  %v1816 = vadd.f32 %v1407, %v1815
  %v1817 = vpop.f32.mrf.mxu0
  %v1818 = vadd.f32 %v1409, %v1817
  %1819 = vmatmul.bf16.gmra.mxu0 %v1603
  %v1820 = vpop.f32.mrf.mxu0
  %v1821 = vadd.f32 %v1412, %v1820
  %v1822 = vpop.f32.mrf.mxu0
  %v1823 = vadd.f32 %v1414, %v1822
  %1824 = vmatmul.bf16.gmra.mxu0 %v1604
  %v1825 = vpop.f32.mrf.mxu0
  %v1826 = vadd.f32 %v1417, %v1825
  %v1827 = vpop.f32.mrf.mxu0
  %v1828 = vadd.f32 %v1419, %v1827
  %1829 = vmatmul.bf16.gmra.mxu0 %v1605
  %v1830 = vpop.f32.mrf.mxu0
  %v1831 = vadd.f32 %v1422, %v1830
  %v1832 = vpop.f32.mrf.mxu0
  %v1833 = vadd.f32 %v1424, %v1832
  %1834 = vmatmul.bf16.gmra.mxu0 %v1606
  %v1835 = vpop.f32.mrf.mxu0
  %v1836 = vadd.f32 %v1427, %v1835
  %v1837 = vpop.f32.mrf.mxu0
  %v1838 = vadd.f32 %v1429, %v1837
  %1839 = vmatmul.bf16.gmra.mxu0 %v1607
  %v1840 = vpop.f32.mrf.mxu0
  %v1841 = vadd.f32 %v1432, %v1840
  %v1842 = vpop.f32.mrf.mxu0
  %v1843 = vadd.f32 %v1434, %v1842
  %1844 = vmatmul.bf16.gmra.mxu0 %v1608
  %v1845 = vpop.f32.mrf.mxu0
  %v1846 = vadd.f32 %v1437, %v1845
  %v1847 = vpop.f32.mrf.mxu0
  %v1848 = vadd.f32 %v1439, %v1847
  %1849 = vmatmul.bf16.gmra.mxu0 %v1609
  %v1850 = vpop.f32.mrf.mxu0
  %v1851 = vadd.f32 %v1442, %v1850
  %v1852 = vpop.f32.mrf.mxu0
  %v1853 = vadd.f32 %v1444, %v1852
  %1854 = vmatmul.bf16.gmra.mxu0 %v1610
  %v1855 = vpop.f32.mrf.mxu0
  %v1856 = vadd.f32 %v1447, %v1855
  %v1857 = vpop.f32.mrf.mxu0
  %v1858 = vadd.f32 %v1449, %v1857
  %1859 = vdwg.mxu0
  %vm1924 = vcmask 1042432
  %vm1925 = vcmask 1046532
  %vm1926 = vmor %vm1924, %vm1925
  %v1927 = vrot.slane %v14, 5
  %v1928 = vrot.slane %v1927, 4
  %v1929 = vrot.slane %v15, 5
  %v1930 = vsel %vm1926, %v1928, %v1929
  %v1931 = vrot.slane %v16, 5
  %v1932 = vrot.slane %v1931, 4
  %v1933 = vrot.slane %v17, 5
  %v1934 = vsel %vm1926, %v1932, %v1933
  %v1935 = vrot.slane %v18, 5
  %v1936 = vrot.slane %v1935, 4
  %v1937 = vrot.slane %v19, 5
  %v1938 = vsel %vm1926, %v1936, %v1937
  %v1939 = vrot.slane %v20, 5
  %v1940 = vrot.slane %v1939, 4
  %v1941 = vrot.slane %v21, 5
  %v1942 = vsel %vm1926, %v1940, %v1941
  %v1943 = vrot.slane %v22, 5
  %v1944 = vrot.slane %v1943, 4
  %v1945 = vrot.slane %v23, 5
  %v1946 = vsel %vm1926, %v1944, %v1945
  %v1947 = vrot.slane %v24, 5
  %v1948 = vrot.slane %v1947, 4
  %v1949 = vrot.slane %v25, 5
  %v1950 = vsel %vm1926, %v1948, %v1949
  %v1951 = vrot.slane %v26, 5
  %v1952 = vrot.slane %v1951, 4
  %v1953 = vrot.slane %v27, 5
  %v1954 = vsel %vm1926, %v1952, %v1953
  %v1955 = vrot.slane %v28, 5
  %v1956 = vrot.slane %v1955, 4
  %v1957 = vrot.slane %v29, 5
  %v1958 = vsel %vm1926, %v1956, %v1957
  %v1959 = vrot.slane %v34, 5
  %v1960 = vrot.slane %v1959, 4
  %v1961 = vrot.slane %v35, 5
  %v1962 = vsel %vm1926, %v1960, %v1961
  %v1963 = vrot.slane %v36, 5
  %v1964 = vrot.slane %v1963, 4
  %v1965 = vrot.slane %v37, 5
  %v1966 = vsel %vm1926, %v1964, %v1965
  %v1967 = vrot.slane %v38, 5
  %v1968 = vrot.slane %v1967, 4
  %v1969 = vrot.slane %v39, 5
  %v1970 = vsel %vm1926, %v1968, %v1969
  %v1971 = vrot.slane %v40, 5
  %v1972 = vrot.slane %v1971, 4
  %v1973 = vrot.slane %v41, 5
  %v1974 = vsel %vm1926, %v1972, %v1973
  %v1975 = vrot.slane %v42, 5
  %v1976 = vrot.slane %v1975, 4
  %v1977 = vrot.slane %v43, 5
  %v1978 = vsel %vm1926, %v1976, %v1977
  %v1979 = vrot.slane %v44, 5
  %v1980 = vrot.slane %v1979, 4
  %v1981 = vrot.slane %v45, 5
  %v1982 = vsel %vm1926, %v1980, %v1981
  %v1983 = vrot.slane %v46, 5
  %v1984 = vrot.slane %v1983, 4
  %v1985 = vrot.slane %v47, 5
  %v1986 = vsel %vm1926, %v1984, %v1985
  %v1987 = vrot.slane %v48, 5
  %v1988 = vrot.slane %v1987, 4
  %v1989 = vrot.slane %v49, 5
  %v1990 = vsel %vm1926, %v1988, %v1989
  %v1991 = vrot.slane %v54, 5
  %v1992 = vrot.slane %v1991, 4
  %v1993 = vrot.slane %v55, 5
  %v1994 = vsel %vm1926, %v1992, %v1993
  %v1995 = vrot.slane %v56, 5
  %v1996 = vrot.slane %v1995, 4
  %v1997 = vrot.slane %v57, 5
  %v1998 = vsel %vm1926, %v1996, %v1997
  %v1999 = vrot.slane %v58, 5
  %v2000 = vrot.slane %v1999, 4
  %v2001 = vrot.slane %v59, 5
  %v2002 = vsel %vm1926, %v2000, %v2001
  %v2003 = vrot.slane %v60, 5
  %v2004 = vrot.slane %v2003, 4
  %v2005 = vrot.slane %v61, 5
  %v2006 = vsel %vm1926, %v2004, %v2005
  %v2007 = vrot.slane %v62, 5
  %v2008 = vrot.slane %v2007, 4
  %v2009 = vrot.slane %v63, 5
  %v2010 = vsel %vm1926, %v2008, %v2009
  %v2011 = vrot.slane %v64, 5
  %v2012 = vrot.slane %v2011, 4
  %v2013 = vrot.slane %v65, 5
  %v2014 = vsel %vm1926, %v2012, %v2013
  %v2015 = vrot.slane %v66, 5
  %v2016 = vrot.slane %v2015, 4
  %v2017 = vrot.slane %v67, 5
  %v2018 = vsel %vm1926, %v2016, %v2017
  %v2019 = vrot.slane %v68, 5
  %v2020 = vrot.slane %v2019, 4
  %v2021 = vrot.slane %v69, 5
  %v2022 = vsel %vm1926, %v2020, %v2021
  %v2023 = vrot.slane %v74, 5
  %v2024 = vrot.slane %v2023, 4
  %v2025 = vrot.slane %v75, 5
  %v2026 = vsel %vm1926, %v2024, %v2025
  %v2027 = vrot.slane %v76, 5
  %v2028 = vrot.slane %v2027, 4
  %v2029 = vrot.slane %v77, 5
  %v2030 = vsel %vm1926, %v2028, %v2029
  %v2031 = vrot.slane %v78, 5
  %v2032 = vrot.slane %v2031, 4
  %v2033 = vrot.slane %v79, 5
  %v2034 = vsel %vm1926, %v2032, %v2033
  %v2035 = vrot.slane %v80, 5
  %v2036 = vrot.slane %v2035, 4
  %v2037 = vrot.slane %v81, 5
  %v2038 = vsel %vm1926, %v2036, %v2037
  %v2039 = vrot.slane %v82, 5
  %v2040 = vrot.slane %v2039, 4
  %v2041 = vrot.slane %v83, 5
  %v2042 = vsel %vm1926, %v2040, %v2041
  %v2043 = vrot.slane %v84, 5
  %v2044 = vrot.slane %v2043, 4
  %v2045 = vrot.slane %v85, 5
  %v2046 = vsel %vm1926, %v2044, %v2045
  %v2047 = vrot.slane %v86, 5
  %v2048 = vrot.slane %v2047, 4
  %v2049 = vrot.slane %v87, 5
  %v2050 = vsel %vm1926, %v2048, %v2049
  %v2051 = vrot.slane %v88, 5
  %v2052 = vrot.slane %v2051, 4
  %v2053 = vrot.slane %v89, 5
  %v2054 = vsel %vm1926, %v2052, %v2053
  %v2055 = vrot.slane %v94, 5
  %v2056 = vrot.slane %v2055, 4
  %v2057 = vrot.slane %v95, 5
  %v2058 = vsel %vm1926, %v2056, %v2057
  %v2059 = vrot.slane %v96, 5
  %v2060 = vrot.slane %v2059, 4
  %v2061 = vrot.slane %v97, 5
  %v2062 = vsel %vm1926, %v2060, %v2061
  %v2063 = vrot.slane %v98, 5
  %v2064 = vrot.slane %v2063, 4
  %v2065 = vrot.slane %v99, 5
  %v2066 = vsel %vm1926, %v2064, %v2065
  %v2067 = vrot.slane %v100, 5
  %v2068 = vrot.slane %v2067, 4
  %v2069 = vrot.slane %v101, 5
  %v2070 = vsel %vm1926, %v2068, %v2069
  %v2071 = vrot.slane %v102, 5
  %v2072 = vrot.slane %v2071, 4
  %v2073 = vrot.slane %v103, 5
  %v2074 = vsel %vm1926, %v2072, %v2073
  %v2075 = vrot.slane %v104, 5
  %v2076 = vrot.slane %v2075, 4
  %v2077 = vrot.slane %v105, 5
  %v2078 = vsel %vm1926, %v2076, %v2077
  %v2079 = vrot.slane %v106, 5
  %v2080 = vrot.slane %v2079, 4
  %v2081 = vrot.slane %v107, 5
  %v2082 = vsel %vm1926, %v2080, %v2081
  %v2083 = vrot.slane %v108, 5
  %v2084 = vrot.slane %v2083, 4
  %v2085 = vrot.slane %v109, 5
  %v2086 = vsel %vm1926, %v2084, %v2085
  %v2087 = vrot.slane %v114, 5
  %v2088 = vrot.slane %v2087, 4
  %v2089 = vrot.slane %v115, 5
  %v2090 = vsel %vm1926, %v2088, %v2089
  %v2091 = vrot.slane %v116, 5
  %v2092 = vrot.slane %v2091, 4
  %v2093 = vrot.slane %v117, 5
  %v2094 = vsel %vm1926, %v2092, %v2093
  %v2095 = vrot.slane %v118, 5
  %v2096 = vrot.slane %v2095, 4
  %v2097 = vrot.slane %v119, 5
  %v2098 = vsel %vm1926, %v2096, %v2097
  %v2099 = vrot.slane %v120, 5
  %v2100 = vrot.slane %v2099, 4
  %v2101 = vrot.slane %v121, 5
  %v2102 = vsel %vm1926, %v2100, %v2101
  %v2103 = vrot.slane %v122, 5
  %v2104 = vrot.slane %v2103, 4
  %v2105 = vrot.slane %v123, 5
  %v2106 = vsel %vm1926, %v2104, %v2105
  %v2107 = vrot.slane %v124, 5
  %v2108 = vrot.slane %v2107, 4
  %v2109 = vrot.slane %v125, 5
  %v2110 = vsel %vm1926, %v2108, %v2109
  %v2111 = vrot.slane %v126, 5
  %v2112 = vrot.slane %v2111, 4
  %v2113 = vrot.slane %v127, 5
  %v2114 = vsel %vm1926, %v2112, %v2113
  %v2115 = vrot.slane %v128, 5
  %v2116 = vrot.slane %v2115, 4
  %v2117 = vrot.slane %v129, 5
  %v2118 = vsel %vm1926, %v2116, %v2117
  %v2119 = vrot.slane %v134, 5
  %v2120 = vrot.slane %v2119, 4
  %v2121 = vrot.slane %v135, 5
  %v2122 = vsel %vm1926, %v2120, %v2121
  %v2123 = vrot.slane %v136, 5
  %v2124 = vrot.slane %v2123, 4
  %v2125 = vrot.slane %v137, 5
  %v2126 = vsel %vm1926, %v2124, %v2125
  %v2127 = vrot.slane %v138, 5
  %v2128 = vrot.slane %v2127, 4
  %v2129 = vrot.slane %v139, 5
  %v2130 = vsel %vm1926, %v2128, %v2129
  %v2131 = vrot.slane %v140, 5
  %v2132 = vrot.slane %v2131, 4
  %v2133 = vrot.slane %v141, 5
  %v2134 = vsel %vm1926, %v2132, %v2133
  %v2135 = vrot.slane %v142, 5
  %v2136 = vrot.slane %v2135, 4
  %v2137 = vrot.slane %v143, 5
  %v2138 = vsel %vm1926, %v2136, %v2137
  %v2139 = vrot.slane %v144, 5
  %v2140 = vrot.slane %v2139, 4
  %v2141 = vrot.slane %v145, 5
  %v2142 = vsel %vm1926, %v2140, %v2141
  %v2143 = vrot.slane %v146, 5
  %v2144 = vrot.slane %v2143, 4
  %v2145 = vrot.slane %v147, 5
  %v2146 = vsel %vm1926, %v2144, %v2145
  %v2147 = vrot.slane %v148, 5
  %v2148 = vrot.slane %v2147, 4
  %v2149 = vrot.slane %v149, 5
  %v2150 = vsel %vm1926, %v2148, %v2149
  %v2151 = vrot.slane %v154, 5
  %v2152 = vrot.slane %v2151, 4
  %v2153 = vrot.slane %v155, 5
  %v2154 = vsel %vm1926, %v2152, %v2153
  %v2155 = vrot.slane %v156, 5
  %v2156 = vrot.slane %v2155, 4
  %v2157 = vrot.slane %v157, 5
  %v2158 = vsel %vm1926, %v2156, %v2157
  %v2159 = vrot.slane %v158, 5
  %v2160 = vrot.slane %v2159, 4
  %v2161 = vrot.slane %v159, 5
  %v2162 = vsel %vm1926, %v2160, %v2161
  %v2163 = vrot.slane %v160, 5
  %v2164 = vrot.slane %v2163, 4
  %v2165 = vrot.slane %v161, 5
  %v2166 = vsel %vm1926, %v2164, %v2165
  %v2167 = vrot.slane %v162, 5
  %v2168 = vrot.slane %v2167, 4
  %v2169 = vrot.slane %v163, 5
  %v2170 = vsel %vm1926, %v2168, %v2169
  %v2171 = vrot.slane %v164, 5
  %v2172 = vrot.slane %v2171, 4
  %v2173 = vrot.slane %v165, 5
  %v2174 = vsel %vm1926, %v2172, %v2173
  %v2175 = vrot.slane %v166, 5
  %v2176 = vrot.slane %v2175, 4
  %v2177 = vrot.slane %v167, 5
  %v2178 = vsel %vm1926, %v2176, %v2177
  %v2179 = vrot.slane %v168, 5
  %v2180 = vrot.slane %v2179, 4
  %v2181 = vrot.slane %v169, 5
  %v2182 = vsel %vm1926, %v2180, %v2181
  %s2183 = scalar_lea.vmem %s1, 128
  %v2184 = vld [vmem:[%s2183] sm:$0xf]
  %v2185 = vld [vmem:[%s2183 + $0x4] sm:$0xf]
  %v2186 = vld [vmem:[%s2183 + $0x8] sm:$0xf]
  %v2187 = vld [vmem:[%s2183 + $0xc] sm:$0xf]
  %v2188 = vld [vmem:[%s2183 + $0x10] sm:$0xf]
  %v2189 = vld [vmem:[%s2183 + $0x14] sm:$0xf]
  %v2190 = vld [vmem:[%s2183 + $0x18] sm:$0xf]
  %v2191 = vld [vmem:[%s2183 + $0x1c] sm:$0xf]
  %v2192 = vld [vmem:[%s2183 + $0x20] sm:$0xf]
  %v2193 = vld [vmem:[%s2183 + $0x24] sm:$0xf]
  %v2194 = vld [vmem:[%s2183 + $0x28] sm:$0xf]
  %v2195 = vld [vmem:[%s2183 + $0x2c] sm:$0xf]
  %v2196 = vld [vmem:[%s2183 + $0x30] sm:$0xf]
  %v2197 = vld [vmem:[%s2183 + $0x34] sm:$0xf]
  %v2198 = vld [vmem:[%s2183 + $0x38] sm:$0xf]
  %v2199 = vld [vmem:[%s2183 + $0x3c] sm:$0xf]
  %v2200 = vunpack.c.l.b16 %v1930
  %v2201 = vunpack.c.l.b16 %v1934
  %v2202 = vunpack.c.l.b16 %v1938
  %v2203 = vunpack.c.l.b16 %v1942
  %v2204 = vunpack.c.l.b16 %v1946
  %v2205 = vunpack.c.l.b16 %v1950
  %v2206 = vunpack.c.l.b16 %v1954
  %v2207 = vunpack.c.l.b16 %v1958
  %v2208 = vunpack.c.l.b16 %v1962
  %v2209 = vunpack.c.l.b16 %v1966
  %v2210 = vunpack.c.l.b16 %v1970
  %v2211 = vunpack.c.l.b16 %v1974
  %v2212 = vunpack.c.l.b16 %v1978
  %v2213 = vunpack.c.l.b16 %v1982
  %v2214 = vunpack.c.l.b16 %v1986
  %v2215 = vunpack.c.l.b16 %v1990
  %v2216 = vunpack.c.l.b16 %v1994
  %v2217 = vunpack.c.l.b16 %v1998
  %v2218 = vunpack.c.l.b16 %v2002
  %v2219 = vunpack.c.l.b16 %v2006
  %v2220 = vunpack.c.l.b16 %v2010
  %v2221 = vunpack.c.l.b16 %v2014
  %v2222 = vunpack.c.l.b16 %v2018
  %v2223 = vunpack.c.l.b16 %v2022
  %v2224 = vunpack.c.l.b16 %v2026
  %v2225 = vunpack.c.l.b16 %v2030
  %v2226 = vunpack.c.l.b16 %v2034
  %v2227 = vunpack.c.l.b16 %v2038
  %v2228 = vunpack.c.l.b16 %v2042
  %v2229 = vunpack.c.l.b16 %v2046
  %v2230 = vunpack.c.l.b16 %v2050
  %v2231 = vunpack.c.l.b16 %v2054
  %v2232 = vunpack.c.l.b16 %v2058
  %v2233 = vunpack.c.l.b16 %v2062
  %v2234 = vunpack.c.l.b16 %v2066
  %v2235 = vunpack.c.l.b16 %v2070
  %v2236 = vunpack.c.l.b16 %v2074
  %v2237 = vunpack.c.l.b16 %v2078
  %v2238 = vunpack.c.l.b16 %v2082
  %v2239 = vunpack.c.l.b16 %v2086
  %v2240 = vunpack.c.l.b16 %v2090
  %v2241 = vunpack.c.l.b16 %v2094
  %v2242 = vunpack.c.l.b16 %v2098
  %v2243 = vunpack.c.l.b16 %v2102
  %v2244 = vunpack.c.l.b16 %v2106
  %v2245 = vunpack.c.l.b16 %v2110
  %v2246 = vunpack.c.l.b16 %v2114
  %v2247 = vunpack.c.l.b16 %v2118
  %v2248 = vunpack.c.l.b16 %v2122
  %v2249 = vunpack.c.l.b16 %v2126
  %v2250 = vunpack.c.l.b16 %v2130
  %v2251 = vunpack.c.l.b16 %v2134
  %v2252 = vunpack.c.l.b16 %v2138
  %v2253 = vunpack.c.l.b16 %v2142
  %v2254 = vunpack.c.l.b16 %v2146
  %v2255 = vunpack.c.l.b16 %v2150
  %v2256 = vunpack.c.l.b16 %v2154
  %v2257 = vunpack.c.l.b16 %v2158
  %v2258 = vunpack.c.l.b16 %v2162
  %v2259 = vunpack.c.l.b16 %v2166
  %v2260 = vunpack.c.l.b16 %v2170
  %v2261 = vunpack.c.l.b16 %v2174
  %v2262 = vunpack.c.l.b16 %v2178
  %v2263 = vunpack.c.l.b16 %v2182
  %v2264 = vpack.c.b16 %v2201, %v2200
  %v2265 = vpack.c.b16 %v2203, %v2202
  %v2266 = vpack.c.b16 %v2205, %v2204
  %v2267 = vpack.c.b16 %v2207, %v2206
  %v2268 = vpack.c.b16 %v2209, %v2208
  %v2269 = vpack.c.b16 %v2211, %v2210
  %v2270 = vpack.c.b16 %v2213, %v2212
  %v2271 = vpack.c.b16 %v2215, %v2214
  %v2272 = vpack.c.b16 %v2217, %v2216
  %v2273 = vpack.c.b16 %v2219, %v2218
  %v2274 = vpack.c.b16 %v2221, %v2220
  %v2275 = vpack.c.b16 %v2223, %v2222
  %v2276 = vpack.c.b16 %v2225, %v2224
  %v2277 = vpack.c.b16 %v2227, %v2226
  %v2278 = vpack.c.b16 %v2229, %v2228
  %v2279 = vpack.c.b16 %v2231, %v2230
  %v2280 = vpack.c.b16 %v2233, %v2232
  %v2281 = vpack.c.b16 %v2235, %v2234
  %v2282 = vpack.c.b16 %v2237, %v2236
  %v2283 = vpack.c.b16 %v2239, %v2238
  %v2284 = vpack.c.b16 %v2241, %v2240
  %v2285 = vpack.c.b16 %v2243, %v2242
  %v2286 = vpack.c.b16 %v2245, %v2244
  %v2287 = vpack.c.b16 %v2247, %v2246
  %v2288 = vpack.c.b16 %v2249, %v2248
  %v2289 = vpack.c.b16 %v2251, %v2250
  %v2290 = vpack.c.b16 %v2253, %v2252
  %v2291 = vpack.c.b16 %v2255, %v2254
  %v2292 = vpack.c.b16 %v2257, %v2256
  %v2293 = vpack.c.b16 %v2259, %v2258
  %v2294 = vpack.c.b16 %v2261, %v2260
  %v2295 = vpack.c.b16 %v2263, %v2262
  %v2344 = vunpack.c.l.b16 %v2184
  %v2345 = vunpack.c.l.b16 %v2185
  %v2346 = vunpack.c.l.b16 %v2186
  %v2347 = vunpack.c.l.b16 %v2187
  %v2348 = vunpack.c.l.b16 %v2188
  %v2349 = vunpack.c.l.b16 %v2189
  %v2350 = vunpack.c.l.b16 %v2190
  %v2351 = vunpack.c.l.b16 %v2191
  %v2352 = vunpack.c.l.b16 %v2192
  %v2353 = vunpack.c.l.b16 %v2193
  %v2354 = vunpack.c.l.b16 %v2194
  %v2355 = vunpack.c.l.b16 %v2195
  %v2356 = vunpack.c.l.b16 %v2196
  %v2357 = vunpack.c.l.b16 %v2197
  %v2358 = vunpack.c.l.b16 %v2198
  %v2359 = vunpack.c.l.b16 %v2199
  %v2360 = vpack.c.b16 %v2345, %v2344
  %v2361 = vpack.c.b16 %v2347, %v2346
  %v2362 = vpack.c.b16 %v2349, %v2348
  %v2363 = vpack.c.b16 %v2351, %v2350
  %v2364 = vpack.c.b16 %v2353, %v2352
  %v2365 = vpack.c.b16 %v2355, %v2354
  %v2366 = vpack.c.b16 %v2357, %v2356
  %v2367 = vpack.c.b16 %v2359, %v2358
  %2376 = vmatpush.bf16.msra.mxu0 %v2367
  %2377 = vmatpush.bf16.msra.mxu0 %v2366
  %2378 = vmatpush.bf16.msra.mxu0 %v2365
  %2379 = vmatpush.bf16.msra.mxu0 %v2364
  %2380 = vmatpush.bf16.msra.mxu0 %v2363
  %2381 = vmatpush.bf16.msra.mxu0 %v2362
  %2382 = vmatpush.bf16.msra.mxu0 %v2361
  %2383 = vmatpush.bf16.msra.mxu0 %v2360
  %2384 = vmatmul.bf16.gmra.mxu0 %v2264
  %v2385 = vpop.f32.mrf.mxu0
  %v2386 = vadd.f32 0.0, %v2385
  %v2387 = vpop.f32.mrf.mxu0
  %v2388 = vadd.f32 0.0, %v2387
  %2389 = vmatmul.bf16.gmra.mxu0 %v2265
  %v2390 = vpop.f32.mrf.mxu0
  %v2391 = vadd.f32 0.0, %v2390
  %v2392 = vpop.f32.mrf.mxu0
  %v2393 = vadd.f32 0.0, %v2392
  %2394 = vmatmul.bf16.gmra.mxu0 %v2266
  %v2395 = vpop.f32.mrf.mxu0
  %v2396 = vadd.f32 0.0, %v2395
  %v2397 = vpop.f32.mrf.mxu0
  %v2398 = vadd.f32 0.0, %v2397
  %2399 = vmatmul.bf16.gmra.mxu0 %v2267
  %v2400 = vpop.f32.mrf.mxu0
  %v2401 = vadd.f32 0.0, %v2400
  %v2402 = vpop.f32.mrf.mxu0
  %v2403 = vadd.f32 0.0, %v2402
  %2404 = vmatmul.bf16.gmra.mxu0 %v2268
  %v2405 = vpop.f32.mrf.mxu0
  %v2406 = vadd.f32 0.0, %v2405
  %v2407 = vpop.f32.mrf.mxu0
  %v2408 = vadd.f32 0.0, %v2407
  %2409 = vmatmul.bf16.gmra.mxu0 %v2269
  %v2410 = vpop.f32.mrf.mxu0
  %v2411 = vadd.f32 0.0, %v2410
  %v2412 = vpop.f32.mrf.mxu0
  %v2413 = vadd.f32 0.0, %v2412
  %2414 = vmatmul.bf16.gmra.mxu0 %v2270
  %v2415 = vpop.f32.mrf.mxu0
  %v2416 = vadd.f32 0.0, %v2415
  %v2417 = vpop.f32.mrf.mxu0
  %v2418 = vadd.f32 0.0, %v2417
  %2419 = vmatmul.bf16.gmra.mxu0 %v2271
  %v2420 = vpop.f32.mrf.mxu0
  %v2421 = vadd.f32 0.0, %v2420
  %v2422 = vpop.f32.mrf.mxu0
  %v2423 = vadd.f32 0.0, %v2422
  %2424 = vmatmul.bf16.gmra.mxu0 %v2272
  %v2425 = vpop.f32.mrf.mxu0
  %v2426 = vadd.f32 0.0, %v2425
  %v2427 = vpop.f32.mrf.mxu0
  %v2428 = vadd.f32 0.0, %v2427
  %2429 = vmatmul.bf16.gmra.mxu0 %v2273
  %v2430 = vpop.f32.mrf.mxu0
  %v2431 = vadd.f32 0.0, %v2430
  %v2432 = vpop.f32.mrf.mxu0
  %v2433 = vadd.f32 0.0, %v2432
  %2434 = vmatmul.bf16.gmra.mxu0 %v2274
  %v2435 = vpop.f32.mrf.mxu0
  %v2436 = vadd.f32 0.0, %v2435
  %v2437 = vpop.f32.mrf.mxu0
  %v2438 = vadd.f32 0.0, %v2437
  %2439 = vmatmul.bf16.gmra.mxu0 %v2275
  %v2440 = vpop.f32.mrf.mxu0
  %v2441 = vadd.f32 0.0, %v2440
  %v2442 = vpop.f32.mrf.mxu0
  %v2443 = vadd.f32 0.0, %v2442
  %2444 = vmatmul.bf16.gmra.mxu0 %v2276
  %v2445 = vpop.f32.mrf.mxu0
  %v2446 = vadd.f32 0.0, %v2445
  %v2447 = vpop.f32.mrf.mxu0
  %v2448 = vadd.f32 0.0, %v2447
  %2449 = vmatmul.bf16.gmra.mxu0 %v2277
  %v2450 = vpop.f32.mrf.mxu0
  %v2451 = vadd.f32 0.0, %v2450
  %v2452 = vpop.f32.mrf.mxu0
  %v2453 = vadd.f32 0.0, %v2452
  %2454 = vmatmul.bf16.gmra.mxu0 %v2278
  %v2455 = vpop.f32.mrf.mxu0
  %v2456 = vadd.f32 0.0, %v2455
  %v2457 = vpop.f32.mrf.mxu0
  %v2458 = vadd.f32 0.0, %v2457
  %2459 = vmatmul.bf16.gmra.mxu0 %v2279
  %v2460 = vpop.f32.mrf.mxu0
  %v2461 = vadd.f32 0.0, %v2460
  %v2462 = vpop.f32.mrf.mxu0
  %v2463 = vadd.f32 0.0, %v2462
  %2464 = vmatmul.bf16.gmra.mxu0 %v2280
  %v2465 = vpop.f32.mrf.mxu0
  %v2466 = vadd.f32 0.0, %v2465
  %v2467 = vpop.f32.mrf.mxu0
  %v2468 = vadd.f32 0.0, %v2467
  %2469 = vmatmul.bf16.gmra.mxu0 %v2281
  %v2470 = vpop.f32.mrf.mxu0
  %v2471 = vadd.f32 0.0, %v2470
  %v2472 = vpop.f32.mrf.mxu0
  %v2473 = vadd.f32 0.0, %v2472
  %2474 = vmatmul.bf16.gmra.mxu0 %v2282
  %v2475 = vpop.f32.mrf.mxu0
  %v2476 = vadd.f32 0.0, %v2475
  %v2477 = vpop.f32.mrf.mxu0
  %v2478 = vadd.f32 0.0, %v2477
  %2479 = vmatmul.bf16.gmra.mxu0 %v2283
  %v2480 = vpop.f32.mrf.mxu0
  %v2481 = vadd.f32 0.0, %v2480
  %v2482 = vpop.f32.mrf.mxu0
  %v2483 = vadd.f32 0.0, %v2482
  %2484 = vmatmul.bf16.gmra.mxu0 %v2284
  %v2485 = vpop.f32.mrf.mxu0
  %v2486 = vadd.f32 0.0, %v2485
  %v2487 = vpop.f32.mrf.mxu0
  %v2488 = vadd.f32 0.0, %v2487
  %2489 = vmatmul.bf16.gmra.mxu0 %v2285
  %v2490 = vpop.f32.mrf.mxu0
  %v2491 = vadd.f32 0.0, %v2490
  %v2492 = vpop.f32.mrf.mxu0
  %v2493 = vadd.f32 0.0, %v2492
  %2494 = vmatmul.bf16.gmra.mxu0 %v2286
  %v2495 = vpop.f32.mrf.mxu0
  %v2496 = vadd.f32 0.0, %v2495
  %v2497 = vpop.f32.mrf.mxu0
  %v2498 = vadd.f32 0.0, %v2497
  %2499 = vmatmul.bf16.gmra.mxu0 %v2287
  %v2500 = vpop.f32.mrf.mxu0
  %v2501 = vadd.f32 0.0, %v2500
  %v2502 = vpop.f32.mrf.mxu0
  %v2503 = vadd.f32 0.0, %v2502
  %2504 = vmatmul.bf16.gmra.mxu0 %v2288
  %v2505 = vpop.f32.mrf.mxu0
  %v2506 = vadd.f32 0.0, %v2505
  %v2507 = vpop.f32.mrf.mxu0
  %v2508 = vadd.f32 0.0, %v2507
  %2509 = vmatmul.bf16.gmra.mxu0 %v2289
  %v2510 = vpop.f32.mrf.mxu0
  %v2511 = vadd.f32 0.0, %v2510
  %v2512 = vpop.f32.mrf.mxu0
  %v2513 = vadd.f32 0.0, %v2512
  %2514 = vmatmul.bf16.gmra.mxu0 %v2290
  %v2515 = vpop.f32.mrf.mxu0
  %v2516 = vadd.f32 0.0, %v2515
  %v2517 = vpop.f32.mrf.mxu0
  %v2518 = vadd.f32 0.0, %v2517
  %2519 = vmatmul.bf16.gmra.mxu0 %v2291
  %v2520 = vpop.f32.mrf.mxu0
  %v2521 = vadd.f32 0.0, %v2520
  %v2522 = vpop.f32.mrf.mxu0
  %v2523 = vadd.f32 0.0, %v2522
  %2524 = vmatmul.bf16.gmra.mxu0 %v2292
  %v2525 = vpop.f32.mrf.mxu0
  %v2526 = vadd.f32 0.0, %v2525
  %v2527 = vpop.f32.mrf.mxu0
  %v2528 = vadd.f32 0.0, %v2527
  %2529 = vmatmul.bf16.gmra.mxu0 %v2293
  %v2530 = vpop.f32.mrf.mxu0
  %v2531 = vadd.f32 0.0, %v2530
  %v2532 = vpop.f32.mrf.mxu0
  %v2533 = vadd.f32 0.0, %v2532
  %2534 = vmatmul.bf16.gmra.mxu0 %v2294
  %v2535 = vpop.f32.mrf.mxu0
  %v2536 = vadd.f32 0.0, %v2535
  %v2537 = vpop.f32.mrf.mxu0
  %v2538 = vadd.f32 0.0, %v2537
  %2539 = vmatmul.bf16.gmra.mxu0 %v2295
  %v2540 = vpop.f32.mrf.mxu0
  %v2541 = vadd.f32 0.0, %v2540
  %v2542 = vpop.f32.mrf.mxu0
  %v2543 = vadd.f32 0.0, %v2542
  %2544 = vdwg.mxu0
  %v2545 = vadd.f32 %v1701, %v2386
  %v2546 = vadd.f32 %v1703, %v2388
  %v2547 = vadd.f32 %v1706, %v2391
  %v2548 = vadd.f32 %v1708, %v2393
  %v2549 = vadd.f32 %v1711, %v2396
  %v2550 = vadd.f32 %v1713, %v2398
  %v2551 = vadd.f32 %v1716, %v2401
  %v2552 = vadd.f32 %v1718, %v2403
  %v2553 = vadd.f32 %v1721, %v2406
  %v2554 = vadd.f32 %v1723, %v2408
  %v2555 = vadd.f32 %v1726, %v2411
  %v2556 = vadd.f32 %v1728, %v2413
  %v2557 = vadd.f32 %v1731, %v2416
  %v2558 = vadd.f32 %v1733, %v2418
  %v2559 = vadd.f32 %v1736, %v2421
  %v2560 = vadd.f32 %v1738, %v2423
  %v2561 = vadd.f32 %v1741, %v2426
  %v2562 = vadd.f32 %v1743, %v2428
  %v2563 = vadd.f32 %v1746, %v2431
  %v2564 = vadd.f32 %v1748, %v2433
  %v2565 = vadd.f32 %v1751, %v2436
  %v2566 = vadd.f32 %v1753, %v2438
  %v2567 = vadd.f32 %v1756, %v2441
  %v2568 = vadd.f32 %v1758, %v2443
  %v2569 = vadd.f32 %v1761, %v2446
  %v2570 = vadd.f32 %v1763, %v2448
  %v2571 = vadd.f32 %v1766, %v2451
  %v2572 = vadd.f32 %v1768, %v2453
  %v2573 = vadd.f32 %v1771, %v2456
  %v2574 = vadd.f32 %v1773, %v2458
  %v2575 = vadd.f32 %v1776, %v2461
  %v2576 = vadd.f32 %v1778, %v2463
  %v2577 = vadd.f32 %v1781, %v2466
  %v2578 = vadd.f32 %v1783, %v2468
  %v2579 = vadd.f32 %v1786, %v2471
  %v2580 = vadd.f32 %v1788, %v2473
  %v2581 = vadd.f32 %v1791, %v2476
  %v2582 = vadd.f32 %v1793, %v2478
  %v2583 = vadd.f32 %v1796, %v2481
  %v2584 = vadd.f32 %v1798, %v2483
  %v2585 = vadd.f32 %v1801, %v2486
  %v2586 = vadd.f32 %v1803, %v2488
  %v2587 = vadd.f32 %v1806, %v2491
  %v2588 = vadd.f32 %v1808, %v2493
  %v2589 = vadd.f32 %v1811, %v2496
  %v2590 = vadd.f32 %v1813, %v2498
  %v2591 = vadd.f32 %v1816, %v2501
  %v2592 = vadd.f32 %v1818, %v2503
  %v2593 = vadd.f32 %v1821, %v2506
  %v2594 = vadd.f32 %v1823, %v2508
  %v2595 = vadd.f32 %v1826, %v2511
  %v2596 = vadd.f32 %v1828, %v2513
  %v2597 = vadd.f32 %v1831, %v2516
  %v2598 = vadd.f32 %v1833, %v2518
  %v2599 = vadd.f32 %v1836, %v2521
  %v2600 = vadd.f32 %v1838, %v2523
  %v2601 = vadd.f32 %v1841, %v2526
  %v2602 = vadd.f32 %v1843, %v2528
  %v2603 = vadd.f32 %v1846, %v2531
  %v2604 = vadd.f32 %v1848, %v2533
  %v2605 = vadd.f32 %v1851, %v2536
  %v2606 = vadd.f32 %v1853, %v2538
  %v2607 = vadd.f32 %v1856, %v2541
  %v2608 = vadd.f32 %v1858, %v2543
  %s2609 = scalar_lea.vmem %s1, 192
  %v2610 = vld [vmem:[%s2609] sm:$0xf]
  %v2611 = vld [vmem:[%s2609 + $0x4] sm:$0xf]
  %v2612 = vld [vmem:[%s2609 + $0x8] sm:$0xf]
  %v2613 = vld [vmem:[%s2609 + $0xc] sm:$0xf]
  %v2614 = vld [vmem:[%s2609 + $0x10] sm:$0xf]
  %v2615 = vld [vmem:[%s2609 + $0x14] sm:$0xf]
  %v2616 = vld [vmem:[%s2609 + $0x18] sm:$0xf]
  %v2617 = vld [vmem:[%s2609 + $0x1c] sm:$0xf]
  %v2618 = vld [vmem:[%s2609 + $0x20] sm:$0xf]
  %v2619 = vld [vmem:[%s2609 + $0x24] sm:$0xf]
  %v2620 = vld [vmem:[%s2609 + $0x28] sm:$0xf]
  %v2621 = vld [vmem:[%s2609 + $0x2c] sm:$0xf]
  %v2622 = vld [vmem:[%s2609 + $0x30] sm:$0xf]
  %v2623 = vld [vmem:[%s2609 + $0x34] sm:$0xf]
  %v2624 = vld [vmem:[%s2609 + $0x38] sm:$0xf]
  %v2625 = vld [vmem:[%s2609 + $0x3c] sm:$0xf]
  %v2634 = vunpack.c.l.b16 %v30
  %v2635 = vunpack.c.l.b16 %v50
  %v2636 = vunpack.c.l.b16 %v70
  %v2637 = vunpack.c.l.b16 %v90
  %v2638 = vunpack.c.l.b16 %v110
  %v2639 = vunpack.c.l.b16 %v130
  %v2640 = vunpack.c.l.b16 %v150
  %v2641 = vunpack.c.l.b16 %v170
  %v2642 = vpack.c.b16 %v1517, %v1516
  %v2643 = vpack.c.b16 %v1519, %v1518
  %v2644 = vpack.c.b16 %v1521, %v1520
  %v2645 = vpack.c.b16 %v2634, %v1522
  %v2646 = vpack.c.b16 %v1525, %v1524
  %v2647 = vpack.c.b16 %v1527, %v1526
  %v2648 = vpack.c.b16 %v1529, %v1528
  %v2649 = vpack.c.b16 %v2635, %v1530
  %v2650 = vpack.c.b16 %v1533, %v1532
  %v2651 = vpack.c.b16 %v1535, %v1534
  %v2652 = vpack.c.b16 %v1537, %v1536
  %v2653 = vpack.c.b16 %v2636, %v1538
  %v2654 = vpack.c.b16 %v1541, %v1540
  %v2655 = vpack.c.b16 %v1543, %v1542
  %v2656 = vpack.c.b16 %v1545, %v1544
  %v2657 = vpack.c.b16 %v2637, %v1546
  %v2658 = vpack.c.b16 %v1549, %v1548
  %v2659 = vpack.c.b16 %v1551, %v1550
  %v2660 = vpack.c.b16 %v1553, %v1552
  %v2661 = vpack.c.b16 %v2638, %v1554
  %v2662 = vpack.c.b16 %v1557, %v1556
  %v2663 = vpack.c.b16 %v1559, %v1558
  %v2664 = vpack.c.b16 %v1561, %v1560
  %v2665 = vpack.c.b16 %v2639, %v1562
  %v2666 = vpack.c.b16 %v1565, %v1564
  %v2667 = vpack.c.b16 %v1567, %v1566
  %v2668 = vpack.c.b16 %v1569, %v1568
  %v2669 = vpack.c.b16 %v2640, %v1570
  %v2670 = vpack.c.b16 %v1573, %v1572
  %v2671 = vpack.c.b16 %v1575, %v1574
  %v2672 = vpack.c.b16 %v1577, %v1576
  %v2673 = vpack.c.b16 %v2641, %v1578
  %v2722 = vunpack.c.l.b16 %v2610
  %v2723 = vunpack.c.l.b16 %v2611
  %v2724 = vunpack.c.l.b16 %v2612
  %v2725 = vunpack.c.l.b16 %v2613
  %v2726 = vunpack.c.l.b16 %v2614
  %v2727 = vunpack.c.l.b16 %v2615
  %v2728 = vunpack.c.l.b16 %v2616
  %v2729 = vunpack.c.l.b16 %v2617
  %v2730 = vunpack.c.l.b16 %v2618
  %v2731 = vunpack.c.l.b16 %v2619
  %v2732 = vunpack.c.l.b16 %v2620
  %v2733 = vunpack.c.l.b16 %v2621
  %v2734 = vunpack.c.l.b16 %v2622
  %v2735 = vunpack.c.l.b16 %v2623
  %v2736 = vunpack.c.l.b16 %v2624
  %v2737 = vunpack.c.l.b16 %v2625
  %v2738 = vpack.c.b16 %v2723, %v2722
  %v2739 = vpack.c.b16 %v2725, %v2724
  %v2740 = vpack.c.b16 %v2727, %v2726
  %v2741 = vpack.c.b16 %v2729, %v2728
  %v2742 = vpack.c.b16 %v2731, %v2730
  %v2743 = vpack.c.b16 %v2733, %v2732
  %v2744 = vpack.c.b16 %v2735, %v2734
  %v2745 = vpack.c.b16 %v2737, %v2736
  %2754 = vmatpush.bf16.msra.mxu0 %v2745
  %2755 = vmatpush.bf16.msra.mxu0 %v2744
  %2756 = vmatpush.bf16.msra.mxu0 %v2743
  %2757 = vmatpush.bf16.msra.mxu0 %v2742
  %2758 = vmatpush.bf16.msra.mxu0 %v2741
  %2759 = vmatpush.bf16.msra.mxu0 %v2740
  %2760 = vmatpush.bf16.msra.mxu0 %v2739
  %2761 = vmatpush.bf16.msra.mxu0 %v2738
  %2762 = vmatmul.bf16.gmra.mxu0 %v2642
  %v2763 = vpop.f32.mrf.mxu0
  %v2764 = vadd.f32 0.0, %v2763
  %v2765 = vpop.f32.mrf.mxu0
  %v2766 = vadd.f32 0.0, %v2765
  %2767 = vmatmul.bf16.gmra.mxu0 %v2643
  %v2768 = vpop.f32.mrf.mxu0
  %v2769 = vadd.f32 0.0, %v2768
  %v2770 = vpop.f32.mrf.mxu0
  %v2771 = vadd.f32 0.0, %v2770
  %2772 = vmatmul.bf16.gmra.mxu0 %v2644
  %v2773 = vpop.f32.mrf.mxu0
  %v2774 = vadd.f32 0.0, %v2773
  %v2775 = vpop.f32.mrf.mxu0
  %v2776 = vadd.f32 0.0, %v2775
  %2777 = vmatmul.bf16.gmra.mxu0 %v2645
  %v2778 = vpop.f32.mrf.mxu0
  %v2779 = vadd.f32 0.0, %v2778
  %v2780 = vpop.f32.mrf.mxu0
  %v2781 = vadd.f32 0.0, %v2780
  %2782 = vmatmul.bf16.gmra.mxu0 %v2646
  %v2783 = vpop.f32.mrf.mxu0
  %v2784 = vadd.f32 0.0, %v2783
  %v2785 = vpop.f32.mrf.mxu0
  %v2786 = vadd.f32 0.0, %v2785
  %2787 = vmatmul.bf16.gmra.mxu0 %v2647
  %v2788 = vpop.f32.mrf.mxu0
  %v2789 = vadd.f32 0.0, %v2788
  %v2790 = vpop.f32.mrf.mxu0
  %v2791 = vadd.f32 0.0, %v2790
  %2792 = vmatmul.bf16.gmra.mxu0 %v2648
  %v2793 = vpop.f32.mrf.mxu0
  %v2794 = vadd.f32 0.0, %v2793
  %v2795 = vpop.f32.mrf.mxu0
  %v2796 = vadd.f32 0.0, %v2795
  %2797 = vmatmul.bf16.gmra.mxu0 %v2649
  %v2798 = vpop.f32.mrf.mxu0
  %v2799 = vadd.f32 0.0, %v2798
  %v2800 = vpop.f32.mrf.mxu0
  %v2801 = vadd.f32 0.0, %v2800
  %2802 = vmatmul.bf16.gmra.mxu0 %v2650
  %v2803 = vpop.f32.mrf.mxu0
  %v2804 = vadd.f32 0.0, %v2803
  %v2805 = vpop.f32.mrf.mxu0
  %v2806 = vadd.f32 0.0, %v2805
  %2807 = vmatmul.bf16.gmra.mxu0 %v2651
  %v2808 = vpop.f32.mrf.mxu0
  %v2809 = vadd.f32 0.0, %v2808
  %v2810 = vpop.f32.mrf.mxu0
  %v2811 = vadd.f32 0.0, %v2810
  %2812 = vmatmul.bf16.gmra.mxu0 %v2652
  %v2813 = vpop.f32.mrf.mxu0
  %v2814 = vadd.f32 0.0, %v2813
  %v2815 = vpop.f32.mrf.mxu0
  %v2816 = vadd.f32 0.0, %v2815
  %2817 = vmatmul.bf16.gmra.mxu0 %v2653
  %v2818 = vpop.f32.mrf.mxu0
  %v2819 = vadd.f32 0.0, %v2818
  %v2820 = vpop.f32.mrf.mxu0
  %v2821 = vadd.f32 0.0, %v2820
  %2822 = vmatmul.bf16.gmra.mxu0 %v2654
  %v2823 = vpop.f32.mrf.mxu0
  %v2824 = vadd.f32 0.0, %v2823
  %v2825 = vpop.f32.mrf.mxu0
  %v2826 = vadd.f32 0.0, %v2825
  %2827 = vmatmul.bf16.gmra.mxu0 %v2655
  %v2828 = vpop.f32.mrf.mxu0
  %v2829 = vadd.f32 0.0, %v2828
  %v2830 = vpop.f32.mrf.mxu0
  %v2831 = vadd.f32 0.0, %v2830
  %2832 = vmatmul.bf16.gmra.mxu0 %v2656
  %v2833 = vpop.f32.mrf.mxu0
  %v2834 = vadd.f32 0.0, %v2833
  %v2835 = vpop.f32.mrf.mxu0
  %v2836 = vadd.f32 0.0, %v2835
  %2837 = vmatmul.bf16.gmra.mxu0 %v2657
  %v2838 = vpop.f32.mrf.mxu0
  %v2839 = vadd.f32 0.0, %v2838
  %v2840 = vpop.f32.mrf.mxu0
  %v2841 = vadd.f32 0.0, %v2840
  %2842 = vmatmul.bf16.gmra.mxu0 %v2658
  %v2843 = vpop.f32.mrf.mxu0
  %v2844 = vadd.f32 0.0, %v2843
  %v2845 = vpop.f32.mrf.mxu0
  %v2846 = vadd.f32 0.0, %v2845
  %2847 = vmatmul.bf16.gmra.mxu0 %v2659
  %v2848 = vpop.f32.mrf.mxu0
  %v2849 = vadd.f32 0.0, %v2848
  %v2850 = vpop.f32.mrf.mxu0
  %v2851 = vadd.f32 0.0, %v2850
  %2852 = vmatmul.bf16.gmra.mxu0 %v2660
  %v2853 = vpop.f32.mrf.mxu0
  %v2854 = vadd.f32 0.0, %v2853
  %v2855 = vpop.f32.mrf.mxu0
  %v2856 = vadd.f32 0.0, %v2855
  %2857 = vmatmul.bf16.gmra.mxu0 %v2661
  %v2858 = vpop.f32.mrf.mxu0
  %v2859 = vadd.f32 0.0, %v2858
  %v2860 = vpop.f32.mrf.mxu0
  %v2861 = vadd.f32 0.0, %v2860
  %2862 = vmatmul.bf16.gmra.mxu0 %v2662
  %v2863 = vpop.f32.mrf.mxu0
  %v2864 = vadd.f32 0.0, %v2863
  %v2865 = vpop.f32.mrf.mxu0
  %v2866 = vadd.f32 0.0, %v2865
  %2867 = vmatmul.bf16.gmra.mxu0 %v2663
  %v2868 = vpop.f32.mrf.mxu0
  %v2869 = vadd.f32 0.0, %v2868
  %v2870 = vpop.f32.mrf.mxu0
  %v2871 = vadd.f32 0.0, %v2870
  %2872 = vmatmul.bf16.gmra.mxu0 %v2664
  %v2873 = vpop.f32.mrf.mxu0
  %v2874 = vadd.f32 0.0, %v2873
  %v2875 = vpop.f32.mrf.mxu0
  %v2876 = vadd.f32 0.0, %v2875
  %2877 = vmatmul.bf16.gmra.mxu0 %v2665
  %v2878 = vpop.f32.mrf.mxu0
  %v2879 = vadd.f32 0.0, %v2878
  %v2880 = vpop.f32.mrf.mxu0
  %v2881 = vadd.f32 0.0, %v2880
  %2882 = vmatmul.bf16.gmra.mxu0 %v2666
  %v2883 = vpop.f32.mrf.mxu0
  %v2884 = vadd.f32 0.0, %v2883
  %v2885 = vpop.f32.mrf.mxu0
  %v2886 = vadd.f32 0.0, %v2885
  %2887 = vmatmul.bf16.gmra.mxu0 %v2667
  %v2888 = vpop.f32.mrf.mxu0
  %v2889 = vadd.f32 0.0, %v2888
  %v2890 = vpop.f32.mrf.mxu0
  %v2891 = vadd.f32 0.0, %v2890
  %2892 = vmatmul.bf16.gmra.mxu0 %v2668
  %v2893 = vpop.f32.mrf.mxu0
  %v2894 = vadd.f32 0.0, %v2893
  %v2895 = vpop.f32.mrf.mxu0
  %v2896 = vadd.f32 0.0, %v2895
  %2897 = vmatmul.bf16.gmra.mxu0 %v2669
  %v2898 = vpop.f32.mrf.mxu0
  %v2899 = vadd.f32 0.0, %v2898
  %v2900 = vpop.f32.mrf.mxu0
  %v2901 = vadd.f32 0.0, %v2900
  %2902 = vmatmul.bf16.gmra.mxu0 %v2670
  %v2903 = vpop.f32.mrf.mxu0
  %v2904 = vadd.f32 0.0, %v2903
  %v2905 = vpop.f32.mrf.mxu0
  %v2906 = vadd.f32 0.0, %v2905
  %2907 = vmatmul.bf16.gmra.mxu0 %v2671
  %v2908 = vpop.f32.mrf.mxu0
  %v2909 = vadd.f32 0.0, %v2908
  %v2910 = vpop.f32.mrf.mxu0
  %v2911 = vadd.f32 0.0, %v2910
  %2912 = vmatmul.bf16.gmra.mxu0 %v2672
  %v2913 = vpop.f32.mrf.mxu0
  %v2914 = vadd.f32 0.0, %v2913
  %v2915 = vpop.f32.mrf.mxu0
  %v2916 = vadd.f32 0.0, %v2915
  %2917 = vmatmul.bf16.gmra.mxu0 %v2673
  %v2918 = vpop.f32.mrf.mxu0
  %v2919 = vadd.f32 0.0, %v2918
  %v2920 = vpop.f32.mrf.mxu0
  %v2921 = vadd.f32 0.0, %v2920
  %2922 = vdwg.mxu0
  %v2923 = vadd.f32 %v2545, %v2764
  %v2924 = vadd.f32 %v2546, %v2766
  %v2925 = vadd.f32 %v2547, %v2769
  %v2926 = vadd.f32 %v2548, %v2771
  %v2927 = vadd.f32 %v2549, %v2774
  %v2928 = vadd.f32 %v2550, %v2776
  %v2929 = vadd.f32 %v2551, %v2779
  %v2930 = vadd.f32 %v2552, %v2781
  %v2931 = vadd.f32 %v2553, %v2784
  %v2932 = vadd.f32 %v2554, %v2786
  %v2933 = vadd.f32 %v2555, %v2789
  %v2934 = vadd.f32 %v2556, %v2791
  %v2935 = vadd.f32 %v2557, %v2794
  %v2936 = vadd.f32 %v2558, %v2796
  %v2937 = vadd.f32 %v2559, %v2799
  %v2938 = vadd.f32 %v2560, %v2801
  %v2939 = vadd.f32 %v2561, %v2804
  %v2940 = vadd.f32 %v2562, %v2806
  %v2941 = vadd.f32 %v2563, %v2809
  %v2942 = vadd.f32 %v2564, %v2811
  %v2943 = vadd.f32 %v2565, %v2814
  %v2944 = vadd.f32 %v2566, %v2816
  %v2945 = vadd.f32 %v2567, %v2819
  %v2946 = vadd.f32 %v2568, %v2821
  %v2947 = vadd.f32 %v2569, %v2824
  %v2948 = vadd.f32 %v2570, %v2826
  %v2949 = vadd.f32 %v2571, %v2829
  %v2950 = vadd.f32 %v2572, %v2831
  %v2951 = vadd.f32 %v2573, %v2834
  %v2952 = vadd.f32 %v2574, %v2836
  %v2953 = vadd.f32 %v2575, %v2839
  %v2954 = vadd.f32 %v2576, %v2841
  %v2955 = vadd.f32 %v2577, %v2844
  %v2956 = vadd.f32 %v2578, %v2846
  %v2957 = vadd.f32 %v2579, %v2849
  %v2958 = vadd.f32 %v2580, %v2851
  %v2959 = vadd.f32 %v2581, %v2854
  %v2960 = vadd.f32 %v2582, %v2856
  %v2961 = vadd.f32 %v2583, %v2859
  %v2962 = vadd.f32 %v2584, %v2861
  %v2963 = vadd.f32 %v2585, %v2864
  %v2964 = vadd.f32 %v2586, %v2866
  %v2965 = vadd.f32 %v2587, %v2869
  %v2966 = vadd.f32 %v2588, %v2871
  %v2967 = vadd.f32 %v2589, %v2874
  %v2968 = vadd.f32 %v2590, %v2876
  %v2969 = vadd.f32 %v2591, %v2879
  %v2970 = vadd.f32 %v2592, %v2881
  %v2971 = vadd.f32 %v2593, %v2884
  %v2972 = vadd.f32 %v2594, %v2886
  %v2973 = vadd.f32 %v2595, %v2889
  %v2974 = vadd.f32 %v2596, %v2891
  %v2975 = vadd.f32 %v2597, %v2894
  %v2976 = vadd.f32 %v2598, %v2896
  %v2977 = vadd.f32 %v2599, %v2899
  %v2978 = vadd.f32 %v2600, %v2901
  %v2979 = vadd.f32 %v2601, %v2904
  %v2980 = vadd.f32 %v2602, %v2906
  %v2981 = vadd.f32 %v2603, %v2909
  %v2982 = vadd.f32 %v2604, %v2911
  %v2983 = vadd.f32 %v2605, %v2914
  %v2984 = vadd.f32 %v2606, %v2916
  %v2985 = vadd.f32 %v2607, %v2919
  %v2986 = vadd.f32 %v2608, %v2921
  %v2988 = vshrl.u32 %v30, 16
  %v2990 = vrot.slane %v2988, 4
  %v2991 = vshll.u32 %v30, 16
  %v2993 = vrot.slane %v2991, 5
  %v2994 = vor.u32 %v2990, %v2993
  %v2995 = vrot.slane %v2994, 4
  %v2997 = vshll.u32 %v31, 16
  %v2999 = vrot.slane %v2997, 5
  %v3000 = vsel %vm192, %v2995, %v2999
  %v3002 = vshrl.u32 %v50, 16
  %v3004 = vrot.slane %v3002, 4
  %v3005 = vshll.u32 %v50, 16
  %v3007 = vrot.slane %v3005, 5
  %v3008 = vor.u32 %v3004, %v3007
  %v3009 = vrot.slane %v3008, 4
  %v3011 = vshll.u32 %v51, 16
  %v3013 = vrot.slane %v3011, 5
  %v3014 = vsel %vm192, %v3009, %v3013
  %v3016 = vshrl.u32 %v70, 16
  %v3018 = vrot.slane %v3016, 4
  %v3019 = vshll.u32 %v70, 16
  %v3021 = vrot.slane %v3019, 5
  %v3022 = vor.u32 %v3018, %v3021
  %v3023 = vrot.slane %v3022, 4
  %v3025 = vshll.u32 %v71, 16
  %v3027 = vrot.slane %v3025, 5
  %v3028 = vsel %vm192, %v3023, %v3027
  %v3030 = vshrl.u32 %v90, 16
  %v3032 = vrot.slane %v3030, 4
  %v3033 = vshll.u32 %v90, 16
  %v3035 = vrot.slane %v3033, 5
  %v3036 = vor.u32 %v3032, %v3035
  %v3037 = vrot.slane %v3036, 4
  %v3039 = vshll.u32 %v91, 16
  %v3041 = vrot.slane %v3039, 5
  %v3042 = vsel %vm192, %v3037, %v3041
  %v3044 = vshrl.u32 %v110, 16
  %v3046 = vrot.slane %v3044, 4
  %v3047 = vshll.u32 %v110, 16
  %v3049 = vrot.slane %v3047, 5
  %v3050 = vor.u32 %v3046, %v3049
  %v3051 = vrot.slane %v3050, 4
  %v3053 = vshll.u32 %v111, 16
  %v3055 = vrot.slane %v3053, 5
  %v3056 = vsel %vm192, %v3051, %v3055
  %v3058 = vshrl.u32 %v130, 16
  %v3060 = vrot.slane %v3058, 4
  %v3061 = vshll.u32 %v130, 16
  %v3063 = vrot.slane %v3061, 5
  %v3064 = vor.u32 %v3060, %v3063
  %v3065 = vrot.slane %v3064, 4
  %v3067 = vshll.u32 %v131, 16
  %v3069 = vrot.slane %v3067, 5
  %v3070 = vsel %vm192, %v3065, %v3069
  %v3072 = vshrl.u32 %v150, 16
  %v3074 = vrot.slane %v3072, 4
  %v3075 = vshll.u32 %v150, 16
  %v3077 = vrot.slane %v3075, 5
  %v3078 = vor.u32 %v3074, %v3077
  %v3079 = vrot.slane %v3078, 4
  %v3081 = vshll.u32 %v151, 16
  %v3083 = vrot.slane %v3081, 5
  %v3084 = vsel %vm192, %v3079, %v3083
  %v3086 = vshrl.u32 %v170, 16
  %v3088 = vrot.slane %v3086, 4
  %v3089 = vshll.u32 %v170, 16
  %v3091 = vrot.slane %v3089, 5
  %v3092 = vor.u32 %v3088, %v3091
  %v3093 = vrot.slane %v3092, 4
  %v3095 = vshll.u32 %v171, 16
  %v3097 = vrot.slane %v3095, 5
  %v3098 = vsel %vm192, %v3093, %v3097
  %s3099 = scalar_lea.vmem %s1, 256
  %v3100 = vld [vmem:[%s3099] sm:$0xf]
  %v3101 = vld [vmem:[%s3099 + $0x4] sm:$0xf]
  %v3102 = vld [vmem:[%s3099 + $0x8] sm:$0xf]
  %v3103 = vld [vmem:[%s3099 + $0xc] sm:$0xf]
  %v3104 = vld [vmem:[%s3099 + $0x10] sm:$0xf]
  %v3105 = vld [vmem:[%s3099 + $0x14] sm:$0xf]
  %v3106 = vld [vmem:[%s3099 + $0x18] sm:$0xf]
  %v3107 = vld [vmem:[%s3099 + $0x1c] sm:$0xf]
  %v3108 = vld [vmem:[%s3099 + $0x20] sm:$0xf]
  %v3109 = vld [vmem:[%s3099 + $0x24] sm:$0xf]
  %v3110 = vld [vmem:[%s3099 + $0x28] sm:$0xf]
  %v3111 = vld [vmem:[%s3099 + $0x2c] sm:$0xf]
  %v3112 = vld [vmem:[%s3099 + $0x30] sm:$0xf]
  %v3113 = vld [vmem:[%s3099 + $0x34] sm:$0xf]
  %v3114 = vld [vmem:[%s3099 + $0x38] sm:$0xf]
  %v3115 = vld [vmem:[%s3099 + $0x3c] sm:$0xf]
  %v3116 = vunpack.c.l.b16 %v3000
  %v3117 = vunpack.c.l.b16 %v3014
  %v3118 = vunpack.c.l.b16 %v3028
  %v3119 = vunpack.c.l.b16 %v3042
  %v3120 = vunpack.c.l.b16 %v3056
  %v3121 = vunpack.c.l.b16 %v3070
  %v3122 = vunpack.c.l.b16 %v3084
  %v3123 = vunpack.c.l.b16 %v3098
  %v3124 = vpack.c.b16 %v1108, %v1107
  %v3125 = vpack.c.b16 %v1110, %v1109
  %v3126 = vpack.c.b16 %v1112, %v1111
  %v3127 = vpack.c.b16 %v3116, %v1113
  %v3128 = vpack.c.b16 %v1116, %v1115
  %v3129 = vpack.c.b16 %v1118, %v1117
  %v3130 = vpack.c.b16 %v1120, %v1119
  %v3131 = vpack.c.b16 %v3117, %v1121
  %v3132 = vpack.c.b16 %v1124, %v1123
  %v3133 = vpack.c.b16 %v1126, %v1125
  %v3134 = vpack.c.b16 %v1128, %v1127
  %v3135 = vpack.c.b16 %v3118, %v1129
  %v3136 = vpack.c.b16 %v1132, %v1131
  %v3137 = vpack.c.b16 %v1134, %v1133
  %v3138 = vpack.c.b16 %v1136, %v1135
  %v3139 = vpack.c.b16 %v3119, %v1137
  %v3140 = vpack.c.b16 %v1140, %v1139
  %v3141 = vpack.c.b16 %v1142, %v1141
  %v3142 = vpack.c.b16 %v1144, %v1143
  %v3143 = vpack.c.b16 %v3120, %v1145
  %v3144 = vpack.c.b16 %v1148, %v1147
  %v3145 = vpack.c.b16 %v1150, %v1149
  %v3146 = vpack.c.b16 %v1152, %v1151
  %v3147 = vpack.c.b16 %v3121, %v1153
  %v3148 = vpack.c.b16 %v1156, %v1155
  %v3149 = vpack.c.b16 %v1158, %v1157
  %v3150 = vpack.c.b16 %v1160, %v1159
  %v3151 = vpack.c.b16 %v3122, %v1161
  %v3152 = vpack.c.b16 %v1164, %v1163
  %v3153 = vpack.c.b16 %v1166, %v1165
  %v3154 = vpack.c.b16 %v1168, %v1167
  %v3155 = vpack.c.b16 %v3123, %v1169
  %v3204 = vunpack.c.l.b16 %v3100
  %v3205 = vunpack.c.l.b16 %v3101
  %v3206 = vunpack.c.l.b16 %v3102
  %v3207 = vunpack.c.l.b16 %v3103
  %v3208 = vunpack.c.l.b16 %v3104
  %v3209 = vunpack.c.l.b16 %v3105
  %v3210 = vunpack.c.l.b16 %v3106
  %v3211 = vunpack.c.l.b16 %v3107
  %v3212 = vunpack.c.l.b16 %v3108
  %v3213 = vunpack.c.l.b16 %v3109
  %v3214 = vunpack.c.l.b16 %v3110
  %v3215 = vunpack.c.l.b16 %v3111
  %v3216 = vunpack.c.l.b16 %v3112
  %v3217 = vunpack.c.l.b16 %v3113
  %v3218 = vunpack.c.l.b16 %v3114
  %v3219 = vunpack.c.l.b16 %v3115
  %v3220 = vpack.c.b16 %v3205, %v3204
  %v3221 = vpack.c.b16 %v3207, %v3206
  %v3222 = vpack.c.b16 %v3209, %v3208
  %v3223 = vpack.c.b16 %v3211, %v3210
  %v3224 = vpack.c.b16 %v3213, %v3212
  %v3225 = vpack.c.b16 %v3215, %v3214
  %v3226 = vpack.c.b16 %v3217, %v3216
  %v3227 = vpack.c.b16 %v3219, %v3218
  %3236 = vmatpush.bf16.msra.mxu0 %v3227
  %3237 = vmatpush.bf16.msra.mxu0 %v3226
  %3238 = vmatpush.bf16.msra.mxu0 %v3225
  %3239 = vmatpush.bf16.msra.mxu0 %v3224
  %3240 = vmatpush.bf16.msra.mxu0 %v3223
  %3241 = vmatpush.bf16.msra.mxu0 %v3222
  %3242 = vmatpush.bf16.msra.mxu0 %v3221
  %3243 = vmatpush.bf16.msra.mxu0 %v3220
  %3244 = vmatmul.bf16.gmra.mxu0 %v3124
  %v3245 = vpop.f32.mrf.mxu0
  %v3246 = vadd.f32 0.0, %v3245
  %v3247 = vpop.f32.mrf.mxu0
  %v3248 = vadd.f32 0.0, %v3247
  %3249 = vmatmul.bf16.gmra.mxu0 %v3125
  %v3250 = vpop.f32.mrf.mxu0
  %v3251 = vadd.f32 0.0, %v3250
  %v3252 = vpop.f32.mrf.mxu0
  %v3253 = vadd.f32 0.0, %v3252
  %3254 = vmatmul.bf16.gmra.mxu0 %v3126
  %v3255 = vpop.f32.mrf.mxu0
  %v3256 = vadd.f32 0.0, %v3255
  %v3257 = vpop.f32.mrf.mxu0
  %v3258 = vadd.f32 0.0, %v3257
  %3259 = vmatmul.bf16.gmra.mxu0 %v3127
  %v3260 = vpop.f32.mrf.mxu0
  %v3261 = vadd.f32 0.0, %v3260
  %v3262 = vpop.f32.mrf.mxu0
  %v3263 = vadd.f32 0.0, %v3262
  %3264 = vmatmul.bf16.gmra.mxu0 %v3128
  %v3265 = vpop.f32.mrf.mxu0
  %v3266 = vadd.f32 0.0, %v3265
  %v3267 = vpop.f32.mrf.mxu0
  %v3268 = vadd.f32 0.0, %v3267
  %3269 = vmatmul.bf16.gmra.mxu0 %v3129
  %v3270 = vpop.f32.mrf.mxu0
  %v3271 = vadd.f32 0.0, %v3270
  %v3272 = vpop.f32.mrf.mxu0
  %v3273 = vadd.f32 0.0, %v3272
  %3274 = vmatmul.bf16.gmra.mxu0 %v3130
  %v3275 = vpop.f32.mrf.mxu0
  %v3276 = vadd.f32 0.0, %v3275
  %v3277 = vpop.f32.mrf.mxu0
  %v3278 = vadd.f32 0.0, %v3277
  %3279 = vmatmul.bf16.gmra.mxu0 %v3131
  %v3280 = vpop.f32.mrf.mxu0
  %v3281 = vadd.f32 0.0, %v3280
  %v3282 = vpop.f32.mrf.mxu0
  %v3283 = vadd.f32 0.0, %v3282
  %3284 = vmatmul.bf16.gmra.mxu0 %v3132
  %v3285 = vpop.f32.mrf.mxu0
  %v3286 = vadd.f32 0.0, %v3285
  %v3287 = vpop.f32.mrf.mxu0
  %v3288 = vadd.f32 0.0, %v3287
  %3289 = vmatmul.bf16.gmra.mxu0 %v3133
  %v3290 = vpop.f32.mrf.mxu0
  %v3291 = vadd.f32 0.0, %v3290
  %v3292 = vpop.f32.mrf.mxu0
  %v3293 = vadd.f32 0.0, %v3292
  %3294 = vmatmul.bf16.gmra.mxu0 %v3134
  %v3295 = vpop.f32.mrf.mxu0
  %v3296 = vadd.f32 0.0, %v3295
  %v3297 = vpop.f32.mrf.mxu0
  %v3298 = vadd.f32 0.0, %v3297
  %3299 = vmatmul.bf16.gmra.mxu0 %v3135
  %v3300 = vpop.f32.mrf.mxu0
  %v3301 = vadd.f32 0.0, %v3300
  %v3302 = vpop.f32.mrf.mxu0
  %v3303 = vadd.f32 0.0, %v3302
  %3304 = vmatmul.bf16.gmra.mxu0 %v3136
  %v3305 = vpop.f32.mrf.mxu0
  %v3306 = vadd.f32 0.0, %v3305
  %v3307 = vpop.f32.mrf.mxu0
  %v3308 = vadd.f32 0.0, %v3307
  %3309 = vmatmul.bf16.gmra.mxu0 %v3137
  %v3310 = vpop.f32.mrf.mxu0
  %v3311 = vadd.f32 0.0, %v3310
  %v3312 = vpop.f32.mrf.mxu0
  %v3313 = vadd.f32 0.0, %v3312
  %3314 = vmatmul.bf16.gmra.mxu0 %v3138
  %v3315 = vpop.f32.mrf.mxu0
  %v3316 = vadd.f32 0.0, %v3315
  %v3317 = vpop.f32.mrf.mxu0
  %v3318 = vadd.f32 0.0, %v3317
  %3319 = vmatmul.bf16.gmra.mxu0 %v3139
  %v3320 = vpop.f32.mrf.mxu0
  %v3321 = vadd.f32 0.0, %v3320
  %v3322 = vpop.f32.mrf.mxu0
  %v3323 = vadd.f32 0.0, %v3322
  %3324 = vmatmul.bf16.gmra.mxu0 %v3140
  %v3325 = vpop.f32.mrf.mxu0
  %v3326 = vadd.f32 0.0, %v3325
  %v3327 = vpop.f32.mrf.mxu0
  %v3328 = vadd.f32 0.0, %v3327
  %3329 = vmatmul.bf16.gmra.mxu0 %v3141
  %v3330 = vpop.f32.mrf.mxu0
  %v3331 = vadd.f32 0.0, %v3330
  %v3332 = vpop.f32.mrf.mxu0
  %v3333 = vadd.f32 0.0, %v3332
  %3334 = vmatmul.bf16.gmra.mxu0 %v3142
  %v3335 = vpop.f32.mrf.mxu0
  %v3336 = vadd.f32 0.0, %v3335
  %v3337 = vpop.f32.mrf.mxu0
  %v3338 = vadd.f32 0.0, %v3337
  %3339 = vmatmul.bf16.gmra.mxu0 %v3143
  %v3340 = vpop.f32.mrf.mxu0
  %v3341 = vadd.f32 0.0, %v3340
  %v3342 = vpop.f32.mrf.mxu0
  %v3343 = vadd.f32 0.0, %v3342
  %3344 = vmatmul.bf16.gmra.mxu0 %v3144
  %v3345 = vpop.f32.mrf.mxu0
  %v3346 = vadd.f32 0.0, %v3345
  %v3347 = vpop.f32.mrf.mxu0
  %v3348 = vadd.f32 0.0, %v3347
  %3349 = vmatmul.bf16.gmra.mxu0 %v3145
  %v3350 = vpop.f32.mrf.mxu0
  %v3351 = vadd.f32 0.0, %v3350
  %v3352 = vpop.f32.mrf.mxu0
  %v3353 = vadd.f32 0.0, %v3352
  %3354 = vmatmul.bf16.gmra.mxu0 %v3146
  %v3355 = vpop.f32.mrf.mxu0
  %v3356 = vadd.f32 0.0, %v3355
  %v3357 = vpop.f32.mrf.mxu0
  %v3358 = vadd.f32 0.0, %v3357
  %3359 = vmatmul.bf16.gmra.mxu0 %v3147
  %v3360 = vpop.f32.mrf.mxu0
  %v3361 = vadd.f32 0.0, %v3360
  %v3362 = vpop.f32.mrf.mxu0
  %v3363 = vadd.f32 0.0, %v3362
  %3364 = vmatmul.bf16.gmra.mxu0 %v3148
  %v3365 = vpop.f32.mrf.mxu0
  %v3366 = vadd.f32 0.0, %v3365
  %v3367 = vpop.f32.mrf.mxu0
  %v3368 = vadd.f32 0.0, %v3367
  %3369 = vmatmul.bf16.gmra.mxu0 %v3149
  %v3370 = vpop.f32.mrf.mxu0
  %v3371 = vadd.f32 0.0, %v3370
  %v3372 = vpop.f32.mrf.mxu0
  %v3373 = vadd.f32 0.0, %v3372
  %3374 = vmatmul.bf16.gmra.mxu0 %v3150
  %v3375 = vpop.f32.mrf.mxu0
  %v3376 = vadd.f32 0.0, %v3375
  %v3377 = vpop.f32.mrf.mxu0
  %v3378 = vadd.f32 0.0, %v3377
  %3379 = vmatmul.bf16.gmra.mxu0 %v3151
  %v3380 = vpop.f32.mrf.mxu0
  %v3381 = vadd.f32 0.0, %v3380
  %v3382 = vpop.f32.mrf.mxu0
  %v3383 = vadd.f32 0.0, %v3382
  %3384 = vmatmul.bf16.gmra.mxu0 %v3152
  %v3385 = vpop.f32.mrf.mxu0
  %v3386 = vadd.f32 0.0, %v3385
  %v3387 = vpop.f32.mrf.mxu0
  %v3388 = vadd.f32 0.0, %v3387
  %3389 = vmatmul.bf16.gmra.mxu0 %v3153
  %v3390 = vpop.f32.mrf.mxu0
  %v3391 = vadd.f32 0.0, %v3390
  %v3392 = vpop.f32.mrf.mxu0
  %v3393 = vadd.f32 0.0, %v3392
  %3394 = vmatmul.bf16.gmra.mxu0 %v3154
  %v3395 = vpop.f32.mrf.mxu0
  %v3396 = vadd.f32 0.0, %v3395
  %v3397 = vpop.f32.mrf.mxu0
  %v3398 = vadd.f32 0.0, %v3397
  %3399 = vmatmul.bf16.gmra.mxu0 %v3155
  %v3400 = vpop.f32.mrf.mxu0
  %v3401 = vadd.f32 0.0, %v3400
  %v3402 = vpop.f32.mrf.mxu0
  %v3403 = vadd.f32 0.0, %v3402
  %3404 = vdwg.mxu0
  %v3405 = vadd.f32 %v2923, %v3246
  %v3406 = vadd.f32 %v2924, %v3248
  %v3407 = vadd.f32 %v2925, %v3251
  %v3408 = vadd.f32 %v2926, %v3253
  %v3409 = vadd.f32 %v2927, %v3256
  %v3410 = vadd.f32 %v2928, %v3258
  %v3411 = vadd.f32 %v2929, %v3261
  %v3412 = vadd.f32 %v2930, %v3263
  %v3413 = vadd.f32 %v2931, %v3266
  %v3414 = vadd.f32 %v2932, %v3268
  %v3415 = vadd.f32 %v2933, %v3271
  %v3416 = vadd.f32 %v2934, %v3273
  %v3417 = vadd.f32 %v2935, %v3276
  %v3418 = vadd.f32 %v2936, %v3278
  %v3419 = vadd.f32 %v2937, %v3281
  %v3420 = vadd.f32 %v2938, %v3283
  %v3421 = vadd.f32 %v2939, %v3286
  %v3422 = vadd.f32 %v2940, %v3288
  %v3423 = vadd.f32 %v2941, %v3291
  %v3424 = vadd.f32 %v2942, %v3293
  %v3425 = vadd.f32 %v2943, %v3296
  %v3426 = vadd.f32 %v2944, %v3298
  %v3427 = vadd.f32 %v2945, %v3301
  %v3428 = vadd.f32 %v2946, %v3303
  %v3429 = vadd.f32 %v2947, %v3306
  %v3430 = vadd.f32 %v2948, %v3308
  %v3431 = vadd.f32 %v2949, %v3311
  %v3432 = vadd.f32 %v2950, %v3313
  %v3433 = vadd.f32 %v2951, %v3316
  %v3434 = vadd.f32 %v2952, %v3318
  %v3435 = vadd.f32 %v2953, %v3321
  %v3436 = vadd.f32 %v2954, %v3323
  %v3437 = vadd.f32 %v2955, %v3326
  %v3438 = vadd.f32 %v2956, %v3328
  %v3439 = vadd.f32 %v2957, %v3331
  %v3440 = vadd.f32 %v2958, %v3333
  %v3441 = vadd.f32 %v2959, %v3336
  %v3442 = vadd.f32 %v2960, %v3338
  %v3443 = vadd.f32 %v2961, %v3341
  %v3444 = vadd.f32 %v2962, %v3343
  %v3445 = vadd.f32 %v2963, %v3346
  %v3446 = vadd.f32 %v2964, %v3348
  %v3447 = vadd.f32 %v2965, %v3351
  %v3448 = vadd.f32 %v2966, %v3353
  %v3449 = vadd.f32 %v2967, %v3356
  %v3450 = vadd.f32 %v2968, %v3358
  %v3451 = vadd.f32 %v2969, %v3361
  %v3452 = vadd.f32 %v2970, %v3363
  %v3453 = vadd.f32 %v2971, %v3366
  %v3454 = vadd.f32 %v2972, %v3368
  %v3455 = vadd.f32 %v2973, %v3371
  %v3456 = vadd.f32 %v2974, %v3373
  %v3457 = vadd.f32 %v2975, %v3376
  %v3458 = vadd.f32 %v2976, %v3378
  %v3459 = vadd.f32 %v2977, %v3381
  %v3460 = vadd.f32 %v2978, %v3383
  %v3461 = vadd.f32 %v2979, %v3386
  %v3462 = vadd.f32 %v2980, %v3388
  %v3463 = vadd.f32 %v2981, %v3391
  %v3464 = vadd.f32 %v2982, %v3393
  %v3465 = vadd.f32 %v2983, %v3396
  %v3466 = vadd.f32 %v2984, %v3398
  %v3467 = vadd.f32 %v2985, %v3401
  %v3468 = vadd.f32 %v2986, %v3403
  %v3477 = vrot.slane %v30, 5
  %v3478 = vrot.slane %v3477, 4
  %v3479 = vrot.slane %v31, 5
  %v3480 = vsel %vm1926, %v3478, %v3479
  %v3481 = vrot.slane %v50, 5
  %v3482 = vrot.slane %v3481, 4
  %v3483 = vrot.slane %v51, 5
  %v3484 = vsel %vm1926, %v3482, %v3483
  %v3485 = vrot.slane %v70, 5
  %v3486 = vrot.slane %v3485, 4
  %v3487 = vrot.slane %v71, 5
  %v3488 = vsel %vm1926, %v3486, %v3487
  %v3489 = vrot.slane %v90, 5
  %v3490 = vrot.slane %v3489, 4
  %v3491 = vrot.slane %v91, 5
  %v3492 = vsel %vm1926, %v3490, %v3491
  %v3493 = vrot.slane %v110, 5
  %v3494 = vrot.slane %v3493, 4
  %v3495 = vrot.slane %v111, 5
  %v3496 = vsel %vm1926, %v3494, %v3495
  %v3497 = vrot.slane %v130, 5
  %v3498 = vrot.slane %v3497, 4
  %v3499 = vrot.slane %v131, 5
  %v3500 = vsel %vm1926, %v3498, %v3499
  %v3501 = vrot.slane %v150, 5
  %v3502 = vrot.slane %v3501, 4
  %v3503 = vrot.slane %v151, 5
  %v3504 = vsel %vm1926, %v3502, %v3503
  %v3505 = vrot.slane %v170, 5
  %v3506 = vrot.slane %v3505, 4
  %v3507 = vrot.slane %v171, 5
  %v3508 = vsel %vm1926, %v3506, %v3507
  %s3509 = scalar_lea.vmem %s1, 320
  %v3510 = vld [vmem:[%s3509] sm:$0xf]
  %v3511 = vld [vmem:[%s3509 + $0x4] sm:$0xf]
  %v3512 = vld [vmem:[%s3509 + $0x8] sm:$0xf]
  %v3513 = vld [vmem:[%s3509 + $0xc] sm:$0xf]
  %v3514 = vld [vmem:[%s3509 + $0x10] sm:$0xf]
  %v3515 = vld [vmem:[%s3509 + $0x14] sm:$0xf]
  %v3516 = vld [vmem:[%s3509 + $0x18] sm:$0xf]
  %v3517 = vld [vmem:[%s3509 + $0x1c] sm:$0xf]
  %v3518 = vld [vmem:[%s3509 + $0x20] sm:$0xf]
  %v3519 = vld [vmem:[%s3509 + $0x24] sm:$0xf]
  %v3520 = vld [vmem:[%s3509 + $0x28] sm:$0xf]
  %v3521 = vld [vmem:[%s3509 + $0x2c] sm:$0xf]
  %v3522 = vld [vmem:[%s3509 + $0x30] sm:$0xf]
  %v3523 = vld [vmem:[%s3509 + $0x34] sm:$0xf]
  %v3524 = vld [vmem:[%s3509 + $0x38] sm:$0xf]
  %v3525 = vld [vmem:[%s3509 + $0x3c] sm:$0xf]
  %v3526 = vunpack.c.l.b16 %v3480
  %v3527 = vunpack.c.l.b16 %v3484
  %v3528 = vunpack.c.l.b16 %v3488
  %v3529 = vunpack.c.l.b16 %v3492
  %v3530 = vunpack.c.l.b16 %v3496
  %v3531 = vunpack.c.l.b16 %v3500
  %v3532 = vunpack.c.l.b16 %v3504
  %v3533 = vunpack.c.l.b16 %v3508
  %v3534 = vpack.c.b16 %v2202, %v2201
  %v3535 = vpack.c.b16 %v2204, %v2203
  %v3536 = vpack.c.b16 %v2206, %v2205
  %v3537 = vpack.c.b16 %v3526, %v2207
  %v3538 = vpack.c.b16 %v2210, %v2209
  %v3539 = vpack.c.b16 %v2212, %v2211
  %v3540 = vpack.c.b16 %v2214, %v2213
  %v3541 = vpack.c.b16 %v3527, %v2215
  %v3542 = vpack.c.b16 %v2218, %v2217
  %v3543 = vpack.c.b16 %v2220, %v2219
  %v3544 = vpack.c.b16 %v2222, %v2221
  %v3545 = vpack.c.b16 %v3528, %v2223
  %v3546 = vpack.c.b16 %v2226, %v2225
  %v3547 = vpack.c.b16 %v2228, %v2227
  %v3548 = vpack.c.b16 %v2230, %v2229
  %v3549 = vpack.c.b16 %v3529, %v2231
  %v3550 = vpack.c.b16 %v2234, %v2233
  %v3551 = vpack.c.b16 %v2236, %v2235
  %v3552 = vpack.c.b16 %v2238, %v2237
  %v3553 = vpack.c.b16 %v3530, %v2239
  %v3554 = vpack.c.b16 %v2242, %v2241
  %v3555 = vpack.c.b16 %v2244, %v2243
  %v3556 = vpack.c.b16 %v2246, %v2245
  %v3557 = vpack.c.b16 %v3531, %v2247
  %v3558 = vpack.c.b16 %v2250, %v2249
  %v3559 = vpack.c.b16 %v2252, %v2251
  %v3560 = vpack.c.b16 %v2254, %v2253
  %v3561 = vpack.c.b16 %v3532, %v2255
  %v3562 = vpack.c.b16 %v2258, %v2257
  %v3563 = vpack.c.b16 %v2260, %v2259
  %v3564 = vpack.c.b16 %v2262, %v2261
  %v3565 = vpack.c.b16 %v3533, %v2263
  %v3614 = vunpack.c.l.b16 %v3510
  %v3615 = vunpack.c.l.b16 %v3511
  %v3616 = vunpack.c.l.b16 %v3512
  %v3617 = vunpack.c.l.b16 %v3513
  %v3618 = vunpack.c.l.b16 %v3514
  %v3619 = vunpack.c.l.b16 %v3515
  %v3620 = vunpack.c.l.b16 %v3516
  %v3621 = vunpack.c.l.b16 %v3517
  %v3622 = vunpack.c.l.b16 %v3518
  %v3623 = vunpack.c.l.b16 %v3519
  %v3624 = vunpack.c.l.b16 %v3520
  %v3625 = vunpack.c.l.b16 %v3521
  %v3626 = vunpack.c.l.b16 %v3522
  %v3627 = vunpack.c.l.b16 %v3523
  %v3628 = vunpack.c.l.b16 %v3524
  %v3629 = vunpack.c.l.b16 %v3525
  %v3630 = vpack.c.b16 %v3615, %v3614
  %v3631 = vpack.c.b16 %v3617, %v3616
  %v3632 = vpack.c.b16 %v3619, %v3618
  %v3633 = vpack.c.b16 %v3621, %v3620
  %v3634 = vpack.c.b16 %v3623, %v3622
  %v3635 = vpack.c.b16 %v3625, %v3624
  %v3636 = vpack.c.b16 %v3627, %v3626
  %v3637 = vpack.c.b16 %v3629, %v3628
  %3646 = vmatpush.bf16.msra.mxu0 %v3637
  %3647 = vmatpush.bf16.msra.mxu0 %v3636
  %3648 = vmatpush.bf16.msra.mxu0 %v3635
  %3649 = vmatpush.bf16.msra.mxu0 %v3634
  %3650 = vmatpush.bf16.msra.mxu0 %v3633
  %3651 = vmatpush.bf16.msra.mxu0 %v3632
  %3652 = vmatpush.bf16.msra.mxu0 %v3631
  %3653 = vmatpush.bf16.msra.mxu0 %v3630
  %3654 = vmatmul.bf16.gmra.mxu0 %v3534
  %v3655 = vpop.f32.mrf.mxu0
  %v3656 = vadd.f32 0.0, %v3655
  %v3657 = vpop.f32.mrf.mxu0
  %v3658 = vadd.f32 0.0, %v3657
  %3659 = vmatmul.bf16.gmra.mxu0 %v3535
  %v3660 = vpop.f32.mrf.mxu0
  %v3661 = vadd.f32 0.0, %v3660
  %v3662 = vpop.f32.mrf.mxu0
  %v3663 = vadd.f32 0.0, %v3662
  %3664 = vmatmul.bf16.gmra.mxu0 %v3536
  %v3665 = vpop.f32.mrf.mxu0
  %v3666 = vadd.f32 0.0, %v3665
  %v3667 = vpop.f32.mrf.mxu0
  %v3668 = vadd.f32 0.0, %v3667
  %3669 = vmatmul.bf16.gmra.mxu0 %v3537
  %v3670 = vpop.f32.mrf.mxu0
  %v3671 = vadd.f32 0.0, %v3670
  %v3672 = vpop.f32.mrf.mxu0
  %v3673 = vadd.f32 0.0, %v3672
  %3674 = vmatmul.bf16.gmra.mxu0 %v3538
  %v3675 = vpop.f32.mrf.mxu0
  %v3676 = vadd.f32 0.0, %v3675
  %v3677 = vpop.f32.mrf.mxu0
  %v3678 = vadd.f32 0.0, %v3677
  %3679 = vmatmul.bf16.gmra.mxu0 %v3539
  %v3680 = vpop.f32.mrf.mxu0
  %v3681 = vadd.f32 0.0, %v3680
  %v3682 = vpop.f32.mrf.mxu0
  %v3683 = vadd.f32 0.0, %v3682
  %3684 = vmatmul.bf16.gmra.mxu0 %v3540
  %v3685 = vpop.f32.mrf.mxu0
  %v3686 = vadd.f32 0.0, %v3685
  %v3687 = vpop.f32.mrf.mxu0
  %v3688 = vadd.f32 0.0, %v3687
  %3689 = vmatmul.bf16.gmra.mxu0 %v3541
  %v3690 = vpop.f32.mrf.mxu0
  %v3691 = vadd.f32 0.0, %v3690
  %v3692 = vpop.f32.mrf.mxu0
  %v3693 = vadd.f32 0.0, %v3692
  %3694 = vmatmul.bf16.gmra.mxu0 %v3542
  %v3695 = vpop.f32.mrf.mxu0
  %v3696 = vadd.f32 0.0, %v3695
  %v3697 = vpop.f32.mrf.mxu0
  %v3698 = vadd.f32 0.0, %v3697
  %3699 = vmatmul.bf16.gmra.mxu0 %v3543
  %v3700 = vpop.f32.mrf.mxu0
  %v3701 = vadd.f32 0.0, %v3700
  %v3702 = vpop.f32.mrf.mxu0
  %v3703 = vadd.f32 0.0, %v3702
  %3704 = vmatmul.bf16.gmra.mxu0 %v3544
  %v3705 = vpop.f32.mrf.mxu0
  %v3706 = vadd.f32 0.0, %v3705
  %v3707 = vpop.f32.mrf.mxu0
  %v3708 = vadd.f32 0.0, %v3707
  %3709 = vmatmul.bf16.gmra.mxu0 %v3545
  %v3710 = vpop.f32.mrf.mxu0
  %v3711 = vadd.f32 0.0, %v3710
  %v3712 = vpop.f32.mrf.mxu0
  %v3713 = vadd.f32 0.0, %v3712
  %3714 = vmatmul.bf16.gmra.mxu0 %v3546
  %v3715 = vpop.f32.mrf.mxu0
  %v3716 = vadd.f32 0.0, %v3715
  %v3717 = vpop.f32.mrf.mxu0
  %v3718 = vadd.f32 0.0, %v3717
  %3719 = vmatmul.bf16.gmra.mxu0 %v3547
  %v3720 = vpop.f32.mrf.mxu0
  %v3721 = vadd.f32 0.0, %v3720
  %v3722 = vpop.f32.mrf.mxu0
  %v3723 = vadd.f32 0.0, %v3722
  %3724 = vmatmul.bf16.gmra.mxu0 %v3548
  %v3725 = vpop.f32.mrf.mxu0
  %v3726 = vadd.f32 0.0, %v3725
  %v3727 = vpop.f32.mrf.mxu0
  %v3728 = vadd.f32 0.0, %v3727
  %3729 = vmatmul.bf16.gmra.mxu0 %v3549
  %v3730 = vpop.f32.mrf.mxu0
  %v3731 = vadd.f32 0.0, %v3730
  %v3732 = vpop.f32.mrf.mxu0
  %v3733 = vadd.f32 0.0, %v3732
  %3734 = vmatmul.bf16.gmra.mxu0 %v3550
  %v3735 = vpop.f32.mrf.mxu0
  %v3736 = vadd.f32 0.0, %v3735
  %v3737 = vpop.f32.mrf.mxu0
  %v3738 = vadd.f32 0.0, %v3737
  %3739 = vmatmul.bf16.gmra.mxu0 %v3551
  %v3740 = vpop.f32.mrf.mxu0
  %v3741 = vadd.f32 0.0, %v3740
  %v3742 = vpop.f32.mrf.mxu0
  %v3743 = vadd.f32 0.0, %v3742
  %3744 = vmatmul.bf16.gmra.mxu0 %v3552
  %v3745 = vpop.f32.mrf.mxu0
  %v3746 = vadd.f32 0.0, %v3745
  %v3747 = vpop.f32.mrf.mxu0
  %v3748 = vadd.f32 0.0, %v3747
  %3749 = vmatmul.bf16.gmra.mxu0 %v3553
  %v3750 = vpop.f32.mrf.mxu0
  %v3751 = vadd.f32 0.0, %v3750
  %v3752 = vpop.f32.mrf.mxu0
  %v3753 = vadd.f32 0.0, %v3752
  %3754 = vmatmul.bf16.gmra.mxu0 %v3554
  %v3755 = vpop.f32.mrf.mxu0
  %v3756 = vadd.f32 0.0, %v3755
  %v3757 = vpop.f32.mrf.mxu0
  %v3758 = vadd.f32 0.0, %v3757
  %3759 = vmatmul.bf16.gmra.mxu0 %v3555
  %v3760 = vpop.f32.mrf.mxu0
  %v3761 = vadd.f32 0.0, %v3760
  %v3762 = vpop.f32.mrf.mxu0
  %v3763 = vadd.f32 0.0, %v3762
  %3764 = vmatmul.bf16.gmra.mxu0 %v3556
  %v3765 = vpop.f32.mrf.mxu0
  %v3766 = vadd.f32 0.0, %v3765
  %v3767 = vpop.f32.mrf.mxu0
  %v3768 = vadd.f32 0.0, %v3767
  %3769 = vmatmul.bf16.gmra.mxu0 %v3557
  %v3770 = vpop.f32.mrf.mxu0
  %v3771 = vadd.f32 0.0, %v3770
  %v3772 = vpop.f32.mrf.mxu0
  %v3773 = vadd.f32 0.0, %v3772
  %3774 = vmatmul.bf16.gmra.mxu0 %v3558
  %v3775 = vpop.f32.mrf.mxu0
  %v3776 = vadd.f32 0.0, %v3775
  %v3777 = vpop.f32.mrf.mxu0
  %v3778 = vadd.f32 0.0, %v3777
  %3779 = vmatmul.bf16.gmra.mxu0 %v3559
  %v3780 = vpop.f32.mrf.mxu0
  %v3781 = vadd.f32 0.0, %v3780
  %v3782 = vpop.f32.mrf.mxu0
  %v3783 = vadd.f32 0.0, %v3782
  %3784 = vmatmul.bf16.gmra.mxu0 %v3560
  %v3785 = vpop.f32.mrf.mxu0
  %v3786 = vadd.f32 0.0, %v3785
  %v3787 = vpop.f32.mrf.mxu0
  %v3788 = vadd.f32 0.0, %v3787
  %3789 = vmatmul.bf16.gmra.mxu0 %v3561
  %v3790 = vpop.f32.mrf.mxu0
  %v3791 = vadd.f32 0.0, %v3790
  %v3792 = vpop.f32.mrf.mxu0
  %v3793 = vadd.f32 0.0, %v3792
  %3794 = vmatmul.bf16.gmra.mxu0 %v3562
  %v3795 = vpop.f32.mrf.mxu0
  %v3796 = vadd.f32 0.0, %v3795
  %v3797 = vpop.f32.mrf.mxu0
  %v3798 = vadd.f32 0.0, %v3797
  %3799 = vmatmul.bf16.gmra.mxu0 %v3563
  %v3800 = vpop.f32.mrf.mxu0
  %v3801 = vadd.f32 0.0, %v3800
  %v3802 = vpop.f32.mrf.mxu0
  %v3803 = vadd.f32 0.0, %v3802
  %3804 = vmatmul.bf16.gmra.mxu0 %v3564
  %v3805 = vpop.f32.mrf.mxu0
  %v3806 = vadd.f32 0.0, %v3805
  %v3807 = vpop.f32.mrf.mxu0
  %v3808 = vadd.f32 0.0, %v3807
  %3809 = vmatmul.bf16.gmra.mxu0 %v3565
  %v3810 = vpop.f32.mrf.mxu0
  %v3811 = vadd.f32 0.0, %v3810
  %v3812 = vpop.f32.mrf.mxu0
  %v3813 = vadd.f32 0.0, %v3812
  %3814 = vdwg.mxu0
  %v3815 = vadd.f32 %v3405, %v3656
  %v3816 = vadd.f32 %v3406, %v3658
  %v3817 = vadd.f32 %v3407, %v3661
  %v3818 = vadd.f32 %v3408, %v3663
  %v3819 = vadd.f32 %v3409, %v3666
  %v3820 = vadd.f32 %v3410, %v3668
  %v3821 = vadd.f32 %v3411, %v3671
  %v3822 = vadd.f32 %v3412, %v3673
  %v3823 = vadd.f32 %v3413, %v3676
  %v3824 = vadd.f32 %v3414, %v3678
  %v3825 = vadd.f32 %v3415, %v3681
  %v3826 = vadd.f32 %v3416, %v3683
  %v3827 = vadd.f32 %v3417, %v3686
  %v3828 = vadd.f32 %v3418, %v3688
  %v3829 = vadd.f32 %v3419, %v3691
  %v3830 = vadd.f32 %v3420, %v3693
  %v3831 = vadd.f32 %v3421, %v3696
  %v3832 = vadd.f32 %v3422, %v3698
  %v3833 = vadd.f32 %v3423, %v3701
  %v3834 = vadd.f32 %v3424, %v3703
  %v3835 = vadd.f32 %v3425, %v3706
  %v3836 = vadd.f32 %v3426, %v3708
  %v3837 = vadd.f32 %v3427, %v3711
  %v3838 = vadd.f32 %v3428, %v3713
  %v3839 = vadd.f32 %v3429, %v3716
  %v3840 = vadd.f32 %v3430, %v3718
  %v3841 = vadd.f32 %v3431, %v3721
  %v3842 = vadd.f32 %v3432, %v3723
  %v3843 = vadd.f32 %v3433, %v3726
  %v3844 = vadd.f32 %v3434, %v3728
  %v3845 = vadd.f32 %v3435, %v3731
  %v3846 = vadd.f32 %v3436, %v3733
  %v3847 = vadd.f32 %v3437, %v3736
  %v3848 = vadd.f32 %v3438, %v3738
  %v3849 = vadd.f32 %v3439, %v3741
  %v3850 = vadd.f32 %v3440, %v3743
  %v3851 = vadd.f32 %v3441, %v3746
  %v3852 = vadd.f32 %v3442, %v3748
  %v3853 = vadd.f32 %v3443, %v3751
  %v3854 = vadd.f32 %v3444, %v3753
  %v3855 = vadd.f32 %v3445, %v3756
  %v3856 = vadd.f32 %v3446, %v3758
  %v3857 = vadd.f32 %v3447, %v3761
  %v3858 = vadd.f32 %v3448, %v3763
  %v3859 = vadd.f32 %v3449, %v3766
  %v3860 = vadd.f32 %v3450, %v3768
  %v3861 = vadd.f32 %v3451, %v3771
  %v3862 = vadd.f32 %v3452, %v3773
  %v3863 = vadd.f32 %v3453, %v3776
  %v3864 = vadd.f32 %v3454, %v3778
  %v3865 = vadd.f32 %v3455, %v3781
  %v3866 = vadd.f32 %v3456, %v3783
  %v3867 = vadd.f32 %v3457, %v3786
  %v3868 = vadd.f32 %v3458, %v3788
  %v3869 = vadd.f32 %v3459, %v3791
  %v3870 = vadd.f32 %v3460, %v3793
  %v3871 = vadd.f32 %v3461, %v3796
  %v3872 = vadd.f32 %v3462, %v3798
  %v3873 = vadd.f32 %v3463, %v3801
  %v3874 = vadd.f32 %v3464, %v3803
  %v3875 = vadd.f32 %v3465, %v3806
  %v3876 = vadd.f32 %v3466, %v3808
  %v3877 = vadd.f32 %v3467, %v3811
  %v3878 = vadd.f32 %v3468, %v3813
  %s3879 = scalar_lea.vmem %s1, 384
  %v3880 = vld [vmem:[%s3879] sm:$0xf]
  %v3881 = vld [vmem:[%s3879 + $0x4] sm:$0xf]
  %v3882 = vld [vmem:[%s3879 + $0x8] sm:$0xf]
  %v3883 = vld [vmem:[%s3879 + $0xc] sm:$0xf]
  %v3884 = vld [vmem:[%s3879 + $0x10] sm:$0xf]
  %v3885 = vld [vmem:[%s3879 + $0x14] sm:$0xf]
  %v3886 = vld [vmem:[%s3879 + $0x18] sm:$0xf]
  %v3887 = vld [vmem:[%s3879 + $0x1c] sm:$0xf]
  %v3888 = vld [vmem:[%s3879 + $0x20] sm:$0xf]
  %v3889 = vld [vmem:[%s3879 + $0x24] sm:$0xf]
  %v3890 = vld [vmem:[%s3879 + $0x28] sm:$0xf]
  %v3891 = vld [vmem:[%s3879 + $0x2c] sm:$0xf]
  %v3892 = vld [vmem:[%s3879 + $0x30] sm:$0xf]
  %v3893 = vld [vmem:[%s3879 + $0x34] sm:$0xf]
  %v3894 = vld [vmem:[%s3879 + $0x38] sm:$0xf]
  %v3895 = vld [vmem:[%s3879 + $0x3c] sm:$0xf]
  %v3904 = vunpack.c.l.b16 %v32
  %v3905 = vunpack.c.l.b16 %v52
  %v3906 = vunpack.c.l.b16 %v72
  %v3907 = vunpack.c.l.b16 %v92
  %v3908 = vunpack.c.l.b16 %v112
  %v3909 = vunpack.c.l.b16 %v132
  %v3910 = vunpack.c.l.b16 %v152
  %v3911 = vunpack.c.l.b16 %v172
  %v3912 = vpack.c.b16 %v3904, %v2634
  %v3913 = vpack.c.b16 %v3905, %v2635
  %v3914 = vpack.c.b16 %v3906, %v2636
  %v3915 = vpack.c.b16 %v3907, %v2637
  %v3916 = vpack.c.b16 %v3908, %v2638
  %v3917 = vpack.c.b16 %v3909, %v2639
  %v3918 = vpack.c.b16 %v3910, %v2640
  %v3919 = vpack.c.b16 %v3911, %v2641
  %v3944 = vunpack.c.l.b16 %v3880
  %v3945 = vunpack.c.l.b16 %v3881
  %v3946 = vunpack.c.l.b16 %v3882
  %v3947 = vunpack.c.l.b16 %v3883
  %v3948 = vunpack.c.l.b16 %v3884
  %v3949 = vunpack.c.l.b16 %v3885
  %v3950 = vunpack.c.l.b16 %v3886
  %v3951 = vunpack.c.l.b16 %v3887
  %v3952 = vunpack.c.l.b16 %v3888
  %v3953 = vunpack.c.l.b16 %v3889
  %v3954 = vunpack.c.l.b16 %v3890
  %v3955 = vunpack.c.l.b16 %v3891
  %v3956 = vunpack.c.l.b16 %v3892
  %v3957 = vunpack.c.l.b16 %v3893
  %v3958 = vunpack.c.l.b16 %v3894
  %v3959 = vunpack.c.l.b16 %v3895
  %v3960 = vpack.c.b16 %v3945, %v3944
  %v3961 = vpack.c.b16 %v3947, %v3946
  %v3962 = vpack.c.b16 %v3949, %v3948
  %v3963 = vpack.c.b16 %v3951, %v3950
  %v3964 = vpack.c.b16 %v3953, %v3952
  %v3965 = vpack.c.b16 %v3955, %v3954
  %v3966 = vpack.c.b16 %v3957, %v3956
  %v3967 = vpack.c.b16 %v3959, %v3958
  %3976 = vmatpush.bf16.msra.mxu0 %v3967
  %3977 = vmatpush.bf16.msra.mxu0 %v3966
  %3978 = vmatpush.bf16.msra.mxu0 %v3965
  %3979 = vmatpush.bf16.msra.mxu0 %v3964
  %3980 = vmatpush.bf16.msra.mxu0 %v3963
  %3981 = vmatpush.bf16.msra.mxu0 %v3962
  %3982 = vmatpush.bf16.msra.mxu0 %v3961
  %3983 = vmatpush.bf16.msra.mxu0 %v3960
  %3984 = vmatmul.bf16.gmra.mxu0 %v1580
  %v3985 = vpop.f32.mrf.mxu0
  %v3986 = vadd.f32 0.0, %v3985
  %v3987 = vpop.f32.mrf.mxu0
  %v3988 = vadd.f32 0.0, %v3987
  %3989 = vmatmul.bf16.gmra.mxu0 %v1581
  %v3990 = vpop.f32.mrf.mxu0
  %v3991 = vadd.f32 0.0, %v3990
  %v3992 = vpop.f32.mrf.mxu0
  %v3993 = vadd.f32 0.0, %v3992
  %3994 = vmatmul.bf16.gmra.mxu0 %v1582
  %v3995 = vpop.f32.mrf.mxu0
  %v3996 = vadd.f32 0.0, %v3995
  %v3997 = vpop.f32.mrf.mxu0
  %v3998 = vadd.f32 0.0, %v3997
  %3999 = vmatmul.bf16.gmra.mxu0 %v3912
  %v4000 = vpop.f32.mrf.mxu0
  %v4001 = vadd.f32 0.0, %v4000
  %v4002 = vpop.f32.mrf.mxu0
  %v4003 = vadd.f32 0.0, %v4002
  %4004 = vmatmul.bf16.gmra.mxu0 %v1584
  %v4005 = vpop.f32.mrf.mxu0
  %v4006 = vadd.f32 0.0, %v4005
  %v4007 = vpop.f32.mrf.mxu0
  %v4008 = vadd.f32 0.0, %v4007
  %4009 = vmatmul.bf16.gmra.mxu0 %v1585
  %v4010 = vpop.f32.mrf.mxu0
  %v4011 = vadd.f32 0.0, %v4010
  %v4012 = vpop.f32.mrf.mxu0
  %v4013 = vadd.f32 0.0, %v4012
  %4014 = vmatmul.bf16.gmra.mxu0 %v1586
  %v4015 = vpop.f32.mrf.mxu0
  %v4016 = vadd.f32 0.0, %v4015
  %v4017 = vpop.f32.mrf.mxu0
  %v4018 = vadd.f32 0.0, %v4017
  %4019 = vmatmul.bf16.gmra.mxu0 %v3913
  %v4020 = vpop.f32.mrf.mxu0
  %v4021 = vadd.f32 0.0, %v4020
  %v4022 = vpop.f32.mrf.mxu0
  %v4023 = vadd.f32 0.0, %v4022
  %4024 = vmatmul.bf16.gmra.mxu0 %v1588
  %v4025 = vpop.f32.mrf.mxu0
  %v4026 = vadd.f32 0.0, %v4025
  %v4027 = vpop.f32.mrf.mxu0
  %v4028 = vadd.f32 0.0, %v4027
  %4029 = vmatmul.bf16.gmra.mxu0 %v1589
  %v4030 = vpop.f32.mrf.mxu0
  %v4031 = vadd.f32 0.0, %v4030
  %v4032 = vpop.f32.mrf.mxu0
  %v4033 = vadd.f32 0.0, %v4032
  %4034 = vmatmul.bf16.gmra.mxu0 %v1590
  %v4035 = vpop.f32.mrf.mxu0
  %v4036 = vadd.f32 0.0, %v4035
  %v4037 = vpop.f32.mrf.mxu0
  %v4038 = vadd.f32 0.0, %v4037
  %4039 = vmatmul.bf16.gmra.mxu0 %v3914
  %v4040 = vpop.f32.mrf.mxu0
  %v4041 = vadd.f32 0.0, %v4040
  %v4042 = vpop.f32.mrf.mxu0
  %v4043 = vadd.f32 0.0, %v4042
  %4044 = vmatmul.bf16.gmra.mxu0 %v1592
  %v4045 = vpop.f32.mrf.mxu0
  %v4046 = vadd.f32 0.0, %v4045
  %v4047 = vpop.f32.mrf.mxu0
  %v4048 = vadd.f32 0.0, %v4047
  %4049 = vmatmul.bf16.gmra.mxu0 %v1593
  %v4050 = vpop.f32.mrf.mxu0
  %v4051 = vadd.f32 0.0, %v4050
  %v4052 = vpop.f32.mrf.mxu0
  %v4053 = vadd.f32 0.0, %v4052
  %4054 = vmatmul.bf16.gmra.mxu0 %v1594
  %v4055 = vpop.f32.mrf.mxu0
  %v4056 = vadd.f32 0.0, %v4055
  %v4057 = vpop.f32.mrf.mxu0
  %v4058 = vadd.f32 0.0, %v4057
  %4059 = vmatmul.bf16.gmra.mxu0 %v3915
  %v4060 = vpop.f32.mrf.mxu0
  %v4061 = vadd.f32 0.0, %v4060
  %v4062 = vpop.f32.mrf.mxu0
  %v4063 = vadd.f32 0.0, %v4062
  %4064 = vmatmul.bf16.gmra.mxu0 %v1596
  %v4065 = vpop.f32.mrf.mxu0
  %v4066 = vadd.f32 0.0, %v4065
  %v4067 = vpop.f32.mrf.mxu0
  %v4068 = vadd.f32 0.0, %v4067
  %4069 = vmatmul.bf16.gmra.mxu0 %v1597
  %v4070 = vpop.f32.mrf.mxu0
  %v4071 = vadd.f32 0.0, %v4070
  %v4072 = vpop.f32.mrf.mxu0
  %v4073 = vadd.f32 0.0, %v4072
  %4074 = vmatmul.bf16.gmra.mxu0 %v1598
  %v4075 = vpop.f32.mrf.mxu0
  %v4076 = vadd.f32 0.0, %v4075
  %v4077 = vpop.f32.mrf.mxu0
  %v4078 = vadd.f32 0.0, %v4077
  %4079 = vmatmul.bf16.gmra.mxu0 %v3916
  %v4080 = vpop.f32.mrf.mxu0
  %v4081 = vadd.f32 0.0, %v4080
  %v4082 = vpop.f32.mrf.mxu0
  %v4083 = vadd.f32 0.0, %v4082
  %4084 = vmatmul.bf16.gmra.mxu0 %v1600
  %v4085 = vpop.f32.mrf.mxu0
  %v4086 = vadd.f32 0.0, %v4085
  %v4087 = vpop.f32.mrf.mxu0
  %v4088 = vadd.f32 0.0, %v4087
  %4089 = vmatmul.bf16.gmra.mxu0 %v1601
  %v4090 = vpop.f32.mrf.mxu0
  %v4091 = vadd.f32 0.0, %v4090
  %v4092 = vpop.f32.mrf.mxu0
  %v4093 = vadd.f32 0.0, %v4092
  %4094 = vmatmul.bf16.gmra.mxu0 %v1602
  %v4095 = vpop.f32.mrf.mxu0
  %v4096 = vadd.f32 0.0, %v4095
  %v4097 = vpop.f32.mrf.mxu0
  %v4098 = vadd.f32 0.0, %v4097
  %4099 = vmatmul.bf16.gmra.mxu0 %v3917
  %v4100 = vpop.f32.mrf.mxu0
  %v4101 = vadd.f32 0.0, %v4100
  %v4102 = vpop.f32.mrf.mxu0
  %v4103 = vadd.f32 0.0, %v4102
  %4104 = vmatmul.bf16.gmra.mxu0 %v1604
  %v4105 = vpop.f32.mrf.mxu0
  %v4106 = vadd.f32 0.0, %v4105
  %v4107 = vpop.f32.mrf.mxu0
  %v4108 = vadd.f32 0.0, %v4107
  %4109 = vmatmul.bf16.gmra.mxu0 %v1605
  %v4110 = vpop.f32.mrf.mxu0
  %v4111 = vadd.f32 0.0, %v4110
  %v4112 = vpop.f32.mrf.mxu0
  %v4113 = vadd.f32 0.0, %v4112
  %4114 = vmatmul.bf16.gmra.mxu0 %v1606
  %v4115 = vpop.f32.mrf.mxu0
  %v4116 = vadd.f32 0.0, %v4115
  %v4117 = vpop.f32.mrf.mxu0
  %v4118 = vadd.f32 0.0, %v4117
  %4119 = vmatmul.bf16.gmra.mxu0 %v3918
  %v4120 = vpop.f32.mrf.mxu0
  %v4121 = vadd.f32 0.0, %v4120
  %v4122 = vpop.f32.mrf.mxu0
  %v4123 = vadd.f32 0.0, %v4122
  %4124 = vmatmul.bf16.gmra.mxu0 %v1608
  %v4125 = vpop.f32.mrf.mxu0
  %v4126 = vadd.f32 0.0, %v4125
  %v4127 = vpop.f32.mrf.mxu0
  %v4128 = vadd.f32 0.0, %v4127
  %4129 = vmatmul.bf16.gmra.mxu0 %v1609
  %v4130 = vpop.f32.mrf.mxu0
  %v4131 = vadd.f32 0.0, %v4130
  %v4132 = vpop.f32.mrf.mxu0
  %v4133 = vadd.f32 0.0, %v4132
  %4134 = vmatmul.bf16.gmra.mxu0 %v1610
  %v4135 = vpop.f32.mrf.mxu0
  %v4136 = vadd.f32 0.0, %v4135
  %v4137 = vpop.f32.mrf.mxu0
  %v4138 = vadd.f32 0.0, %v4137
  %4139 = vmatmul.bf16.gmra.mxu0 %v3919
  %v4140 = vpop.f32.mrf.mxu0
  %v4141 = vadd.f32 0.0, %v4140
  %v4142 = vpop.f32.mrf.mxu0
  %v4143 = vadd.f32 0.0, %v4142
  %4144 = vdwg.mxu0
  %v4145 = vadd.f32 %v3815, %v3986
  %v4146 = vadd.f32 %v3816, %v3988
  %v4147 = vadd.f32 %v3817, %v3991
  %v4148 = vadd.f32 %v3818, %v3993
  %v4149 = vadd.f32 %v3819, %v3996
  %v4150 = vadd.f32 %v3820, %v3998
  %v4151 = vadd.f32 %v3821, %v4001
  %v4152 = vadd.f32 %v3822, %v4003
  %v4153 = vadd.f32 %v3823, %v4006
  %v4154 = vadd.f32 %v3824, %v4008
  %v4155 = vadd.f32 %v3825, %v4011
  %v4156 = vadd.f32 %v3826, %v4013
  %v4157 = vadd.f32 %v3827, %v4016
  %v4158 = vadd.f32 %v3828, %v4018
  %v4159 = vadd.f32 %v3829, %v4021
  %v4160 = vadd.f32 %v3830, %v4023
  %v4161 = vadd.f32 %v3831, %v4026
  %v4162 = vadd.f32 %v3832, %v4028
  %v4163 = vadd.f32 %v3833, %v4031
  %v4164 = vadd.f32 %v3834, %v4033
  %v4165 = vadd.f32 %v3835, %v4036
  %v4166 = vadd.f32 %v3836, %v4038
  %v4167 = vadd.f32 %v3837, %v4041
  %v4168 = vadd.f32 %v3838, %v4043
  %v4169 = vadd.f32 %v3839, %v4046
  %v4170 = vadd.f32 %v3840, %v4048
  %v4171 = vadd.f32 %v3841, %v4051
  %v4172 = vadd.f32 %v3842, %v4053
  %v4173 = vadd.f32 %v3843, %v4056
  %v4174 = vadd.f32 %v3844, %v4058
  %v4175 = vadd.f32 %v3845, %v4061
  %v4176 = vadd.f32 %v3846, %v4063
  %v4177 = vadd.f32 %v3847, %v4066
  %v4178 = vadd.f32 %v3848, %v4068
  %v4179 = vadd.f32 %v3849, %v4071
  %v4180 = vadd.f32 %v3850, %v4073
  %v4181 = vadd.f32 %v3851, %v4076
  %v4182 = vadd.f32 %v3852, %v4078
  %v4183 = vadd.f32 %v3853, %v4081
  %v4184 = vadd.f32 %v3854, %v4083
  %v4185 = vadd.f32 %v3855, %v4086
  %v4186 = vadd.f32 %v3856, %v4088
  %v4187 = vadd.f32 %v3857, %v4091
  %v4188 = vadd.f32 %v3858, %v4093
  %v4189 = vadd.f32 %v3859, %v4096
  %v4190 = vadd.f32 %v3860, %v4098
  %v4191 = vadd.f32 %v3861, %v4101
  %v4192 = vadd.f32 %v3862, %v4103
  %v4193 = vadd.f32 %v3863, %v4106
  %v4194 = vadd.f32 %v3864, %v4108
  %v4195 = vadd.f32 %v3865, %v4111
  %v4196 = vadd.f32 %v3866, %v4113
  %v4197 = vadd.f32 %v3867, %v4116
  %v4198 = vadd.f32 %v3868, %v4118
  %v4199 = vadd.f32 %v3869, %v4121
  %v4200 = vadd.f32 %v3870, %v4123
  %v4201 = vadd.f32 %v3871, %v4126
  %v4202 = vadd.f32 %v3872, %v4128
  %v4203 = vadd.f32 %v3873, %v4131
  %v4204 = vadd.f32 %v3874, %v4133
  %v4205 = vadd.f32 %v3875, %v4136
  %v4206 = vadd.f32 %v3876, %v4138
  %v4207 = vadd.f32 %v3877, %v4141
  %v4208 = vadd.f32 %v3878, %v4143
  %v4210 = vshrl.u32 %v32, 16
  %v4212 = vrot.slane %v4210, 4
  %v4213 = vshll.u32 %v32, 16
  %v4215 = vrot.slane %v4213, 5
  %v4216 = vor.u32 %v4212, %v4215
  %v4217 = vrot.slane %v4216, 4
  %v4219 = vshll.u32 %v33, 16
  %v4221 = vrot.slane %v4219, 5
  %v4222 = vsel %vm192, %v4217, %v4221
  %v4224 = vshrl.u32 %v52, 16
  %v4226 = vrot.slane %v4224, 4
  %v4227 = vshll.u32 %v52, 16
  %v4229 = vrot.slane %v4227, 5
  %v4230 = vor.u32 %v4226, %v4229
  %v4231 = vrot.slane %v4230, 4
  %v4233 = vshll.u32 %v53, 16
  %v4235 = vrot.slane %v4233, 5
  %v4236 = vsel %vm192, %v4231, %v4235
  %v4238 = vshrl.u32 %v72, 16
  %v4240 = vrot.slane %v4238, 4
  %v4241 = vshll.u32 %v72, 16
  %v4243 = vrot.slane %v4241, 5
  %v4244 = vor.u32 %v4240, %v4243
  %v4245 = vrot.slane %v4244, 4
  %v4247 = vshll.u32 %v73, 16
  %v4249 = vrot.slane %v4247, 5
  %v4250 = vsel %vm192, %v4245, %v4249
  %v4252 = vshrl.u32 %v92, 16
  %v4254 = vrot.slane %v4252, 4
  %v4255 = vshll.u32 %v92, 16
  %v4257 = vrot.slane %v4255, 5
  %v4258 = vor.u32 %v4254, %v4257
  %v4259 = vrot.slane %v4258, 4
  %v4261 = vshll.u32 %v93, 16
  %v4263 = vrot.slane %v4261, 5
  %v4264 = vsel %vm192, %v4259, %v4263
  %v4266 = vshrl.u32 %v112, 16
  %v4268 = vrot.slane %v4266, 4
  %v4269 = vshll.u32 %v112, 16
  %v4271 = vrot.slane %v4269, 5
  %v4272 = vor.u32 %v4268, %v4271
  %v4273 = vrot.slane %v4272, 4
  %v4275 = vshll.u32 %v113, 16
  %v4277 = vrot.slane %v4275, 5
  %v4278 = vsel %vm192, %v4273, %v4277
  %v4280 = vshrl.u32 %v132, 16
  %v4282 = vrot.slane %v4280, 4
  %v4283 = vshll.u32 %v132, 16
  %v4285 = vrot.slane %v4283, 5
  %v4286 = vor.u32 %v4282, %v4285
  %v4287 = vrot.slane %v4286, 4
  %v4289 = vshll.u32 %v133, 16
  %v4291 = vrot.slane %v4289, 5
  %v4292 = vsel %vm192, %v4287, %v4291
  %v4294 = vshrl.u32 %v152, 16
  %v4296 = vrot.slane %v4294, 4
  %v4297 = vshll.u32 %v152, 16
  %v4299 = vrot.slane %v4297, 5
  %v4300 = vor.u32 %v4296, %v4299
  %v4301 = vrot.slane %v4300, 4
  %v4303 = vshll.u32 %v153, 16
  %v4305 = vrot.slane %v4303, 5
  %v4306 = vsel %vm192, %v4301, %v4305
  %v4308 = vshrl.u32 %v172, 16
  %v4310 = vrot.slane %v4308, 4
  %v4311 = vshll.u32 %v172, 16
  %v4313 = vrot.slane %v4311, 5
  %v4314 = vor.u32 %v4310, %v4313
  %v4315 = vrot.slane %v4314, 4
  %v4317 = vshll.u32 %v173, 16
  %v4319 = vrot.slane %v4317, 5
  %v4320 = vsel %vm192, %v4315, %v4319
  %s4321 = scalar_lea.vmem %s1, 448
  %v4322 = vld [vmem:[%s4321] sm:$0xf]
  %v4323 = vld [vmem:[%s4321 + $0x4] sm:$0xf]
  %v4324 = vld [vmem:[%s4321 + $0x8] sm:$0xf]
  %v4325 = vld [vmem:[%s4321 + $0xc] sm:$0xf]
  %v4326 = vld [vmem:[%s4321 + $0x10] sm:$0xf]
  %v4327 = vld [vmem:[%s4321 + $0x14] sm:$0xf]
  %v4328 = vld [vmem:[%s4321 + $0x18] sm:$0xf]
  %v4329 = vld [vmem:[%s4321 + $0x1c] sm:$0xf]
  %v4330 = vld [vmem:[%s4321 + $0x20] sm:$0xf]
  %v4331 = vld [vmem:[%s4321 + $0x24] sm:$0xf]
  %v4332 = vld [vmem:[%s4321 + $0x28] sm:$0xf]
  %v4333 = vld [vmem:[%s4321 + $0x2c] sm:$0xf]
  %v4334 = vld [vmem:[%s4321 + $0x30] sm:$0xf]
  %v4335 = vld [vmem:[%s4321 + $0x34] sm:$0xf]
  %v4336 = vld [vmem:[%s4321 + $0x38] sm:$0xf]
  %v4337 = vld [vmem:[%s4321 + $0x3c] sm:$0xf]
  %v4338 = vunpack.c.l.b16 %v4222
  %v4339 = vunpack.c.l.b16 %v4236
  %v4340 = vunpack.c.l.b16 %v4250
  %v4341 = vunpack.c.l.b16 %v4264
  %v4342 = vunpack.c.l.b16 %v4278
  %v4343 = vunpack.c.l.b16 %v4292
  %v4344 = vunpack.c.l.b16 %v4306
  %v4345 = vunpack.c.l.b16 %v4320
  %v4346 = vpack.c.b16 %v4338, %v3116
  %v4347 = vpack.c.b16 %v4339, %v3117
  %v4348 = vpack.c.b16 %v4340, %v3118
  %v4349 = vpack.c.b16 %v4341, %v3119
  %v4350 = vpack.c.b16 %v4342, %v3120
  %v4351 = vpack.c.b16 %v4343, %v3121
  %v4352 = vpack.c.b16 %v4344, %v3122
  %v4353 = vpack.c.b16 %v4345, %v3123
  %v4378 = vunpack.c.l.b16 %v4322
  %v4379 = vunpack.c.l.b16 %v4323
  %v4380 = vunpack.c.l.b16 %v4324
  %v4381 = vunpack.c.l.b16 %v4325
  %v4382 = vunpack.c.l.b16 %v4326
  %v4383 = vunpack.c.l.b16 %v4327
  %v4384 = vunpack.c.l.b16 %v4328
  %v4385 = vunpack.c.l.b16 %v4329
  %v4386 = vunpack.c.l.b16 %v4330
  %v4387 = vunpack.c.l.b16 %v4331
  %v4388 = vunpack.c.l.b16 %v4332
  %v4389 = vunpack.c.l.b16 %v4333
  %v4390 = vunpack.c.l.b16 %v4334
  %v4391 = vunpack.c.l.b16 %v4335
  %v4392 = vunpack.c.l.b16 %v4336
  %v4393 = vunpack.c.l.b16 %v4337
  %v4394 = vpack.c.b16 %v4379, %v4378
  %v4395 = vpack.c.b16 %v4381, %v4380
  %v4396 = vpack.c.b16 %v4383, %v4382
  %v4397 = vpack.c.b16 %v4385, %v4384
  %v4398 = vpack.c.b16 %v4387, %v4386
  %v4399 = vpack.c.b16 %v4389, %v4388
  %v4400 = vpack.c.b16 %v4391, %v4390
  %v4401 = vpack.c.b16 %v4393, %v4392
  %4410 = vmatpush.bf16.msra.mxu0 %v4401
  %4411 = vmatpush.bf16.msra.mxu0 %v4400
  %4412 = vmatpush.bf16.msra.mxu0 %v4399
  %4413 = vmatpush.bf16.msra.mxu0 %v4398
  %4414 = vmatpush.bf16.msra.mxu0 %v4397
  %4415 = vmatpush.bf16.msra.mxu0 %v4396
  %4416 = vmatpush.bf16.msra.mxu0 %v4395
  %4417 = vmatpush.bf16.msra.mxu0 %v4394
  %4418 = vmatmul.bf16.gmra.mxu0 %v1171
  %v4419 = vpop.f32.mrf.mxu0
  %v4420 = vadd.f32 0.0, %v4419
  %v4421 = vpop.f32.mrf.mxu0
  %v4422 = vadd.f32 0.0, %v4421
  %4423 = vmatmul.bf16.gmra.mxu0 %v1172
  %v4424 = vpop.f32.mrf.mxu0
  %v4425 = vadd.f32 0.0, %v4424
  %v4426 = vpop.f32.mrf.mxu0
  %v4427 = vadd.f32 0.0, %v4426
  %4428 = vmatmul.bf16.gmra.mxu0 %v1173
  %v4429 = vpop.f32.mrf.mxu0
  %v4430 = vadd.f32 0.0, %v4429
  %v4431 = vpop.f32.mrf.mxu0
  %v4432 = vadd.f32 0.0, %v4431
  %4433 = vmatmul.bf16.gmra.mxu0 %v4346
  %v4434 = vpop.f32.mrf.mxu0
  %v4435 = vadd.f32 0.0, %v4434
  %v4436 = vpop.f32.mrf.mxu0
  %v4437 = vadd.f32 0.0, %v4436
  %4438 = vmatmul.bf16.gmra.mxu0 %v1175
  %v4439 = vpop.f32.mrf.mxu0
  %v4440 = vadd.f32 0.0, %v4439
  %v4441 = vpop.f32.mrf.mxu0
  %v4442 = vadd.f32 0.0, %v4441
  %4443 = vmatmul.bf16.gmra.mxu0 %v1176
  %v4444 = vpop.f32.mrf.mxu0
  %v4445 = vadd.f32 0.0, %v4444
  %v4446 = vpop.f32.mrf.mxu0
  %v4447 = vadd.f32 0.0, %v4446
  %4448 = vmatmul.bf16.gmra.mxu0 %v1177
  %v4449 = vpop.f32.mrf.mxu0
  %v4450 = vadd.f32 0.0, %v4449
  %v4451 = vpop.f32.mrf.mxu0
  %v4452 = vadd.f32 0.0, %v4451
  %4453 = vmatmul.bf16.gmra.mxu0 %v4347
  %v4454 = vpop.f32.mrf.mxu0
  %v4455 = vadd.f32 0.0, %v4454
  %v4456 = vpop.f32.mrf.mxu0
  %v4457 = vadd.f32 0.0, %v4456
  %4458 = vmatmul.bf16.gmra.mxu0 %v1179
  %v4459 = vpop.f32.mrf.mxu0
  %v4460 = vadd.f32 0.0, %v4459
  %v4461 = vpop.f32.mrf.mxu0
  %v4462 = vadd.f32 0.0, %v4461
  %4463 = vmatmul.bf16.gmra.mxu0 %v1180
  %v4464 = vpop.f32.mrf.mxu0
  %v4465 = vadd.f32 0.0, %v4464
  %v4466 = vpop.f32.mrf.mxu0
  %v4467 = vadd.f32 0.0, %v4466
  %4468 = vmatmul.bf16.gmra.mxu0 %v1181
  %v4469 = vpop.f32.mrf.mxu0
  %v4470 = vadd.f32 0.0, %v4469
  %v4471 = vpop.f32.mrf.mxu0
  %v4472 = vadd.f32 0.0, %v4471
  %4473 = vmatmul.bf16.gmra.mxu0 %v4348
  %v4474 = vpop.f32.mrf.mxu0
  %v4475 = vadd.f32 0.0, %v4474
  %v4476 = vpop.f32.mrf.mxu0
  %v4477 = vadd.f32 0.0, %v4476
  %4478 = vmatmul.bf16.gmra.mxu0 %v1183
  %v4479 = vpop.f32.mrf.mxu0
  %v4480 = vadd.f32 0.0, %v4479
  %v4481 = vpop.f32.mrf.mxu0
  %v4482 = vadd.f32 0.0, %v4481
  %4483 = vmatmul.bf16.gmra.mxu0 %v1184
  %v4484 = vpop.f32.mrf.mxu0
  %v4485 = vadd.f32 0.0, %v4484
  %v4486 = vpop.f32.mrf.mxu0
  %v4487 = vadd.f32 0.0, %v4486
  %4488 = vmatmul.bf16.gmra.mxu0 %v1185
  %v4489 = vpop.f32.mrf.mxu0
  %v4490 = vadd.f32 0.0, %v4489
  %v4491 = vpop.f32.mrf.mxu0
  %v4492 = vadd.f32 0.0, %v4491
  %4493 = vmatmul.bf16.gmra.mxu0 %v4349
  %v4494 = vpop.f32.mrf.mxu0
  %v4495 = vadd.f32 0.0, %v4494
  %v4496 = vpop.f32.mrf.mxu0
  %v4497 = vadd.f32 0.0, %v4496
  %4498 = vmatmul.bf16.gmra.mxu0 %v1187
  %v4499 = vpop.f32.mrf.mxu0
  %v4500 = vadd.f32 0.0, %v4499
  %v4501 = vpop.f32.mrf.mxu0
  %v4502 = vadd.f32 0.0, %v4501
  %4503 = vmatmul.bf16.gmra.mxu0 %v1188
  %v4504 = vpop.f32.mrf.mxu0
  %v4505 = vadd.f32 0.0, %v4504
  %v4506 = vpop.f32.mrf.mxu0
  %v4507 = vadd.f32 0.0, %v4506
  %4508 = vmatmul.bf16.gmra.mxu0 %v1189
  %v4509 = vpop.f32.mrf.mxu0
  %v4510 = vadd.f32 0.0, %v4509
  %v4511 = vpop.f32.mrf.mxu0
  %v4512 = vadd.f32 0.0, %v4511
  %4513 = vmatmul.bf16.gmra.mxu0 %v4350
  %v4514 = vpop.f32.mrf.mxu0
  %v4515 = vadd.f32 0.0, %v4514
  %v4516 = vpop.f32.mrf.mxu0
  %v4517 = vadd.f32 0.0, %v4516
  %4518 = vmatmul.bf16.gmra.mxu0 %v1191
  %v4519 = vpop.f32.mrf.mxu0
  %v4520 = vadd.f32 0.0, %v4519
  %v4521 = vpop.f32.mrf.mxu0
  %v4522 = vadd.f32 0.0, %v4521
  %4523 = vmatmul.bf16.gmra.mxu0 %v1192
  %v4524 = vpop.f32.mrf.mxu0
  %v4525 = vadd.f32 0.0, %v4524
  %v4526 = vpop.f32.mrf.mxu0
  %v4527 = vadd.f32 0.0, %v4526
  %4528 = vmatmul.bf16.gmra.mxu0 %v1193
  %v4529 = vpop.f32.mrf.mxu0
  %v4530 = vadd.f32 0.0, %v4529
  %v4531 = vpop.f32.mrf.mxu0
  %v4532 = vadd.f32 0.0, %v4531
  %4533 = vmatmul.bf16.gmra.mxu0 %v4351
  %v4534 = vpop.f32.mrf.mxu0
  %v4535 = vadd.f32 0.0, %v4534
  %v4536 = vpop.f32.mrf.mxu0
  %v4537 = vadd.f32 0.0, %v4536
  %4538 = vmatmul.bf16.gmra.mxu0 %v1195
  %v4539 = vpop.f32.mrf.mxu0
  %v4540 = vadd.f32 0.0, %v4539
  %v4541 = vpop.f32.mrf.mxu0
  %v4542 = vadd.f32 0.0, %v4541
  %4543 = vmatmul.bf16.gmra.mxu0 %v1196
  %v4544 = vpop.f32.mrf.mxu0
  %v4545 = vadd.f32 0.0, %v4544
  %v4546 = vpop.f32.mrf.mxu0
  %v4547 = vadd.f32 0.0, %v4546
  %4548 = vmatmul.bf16.gmra.mxu0 %v1197
  %v4549 = vpop.f32.mrf.mxu0
  %v4550 = vadd.f32 0.0, %v4549
  %v4551 = vpop.f32.mrf.mxu0
  %v4552 = vadd.f32 0.0, %v4551
  %4553 = vmatmul.bf16.gmra.mxu0 %v4352
  %v4554 = vpop.f32.mrf.mxu0
  %v4555 = vadd.f32 0.0, %v4554
  %v4556 = vpop.f32.mrf.mxu0
  %v4557 = vadd.f32 0.0, %v4556
  %4558 = vmatmul.bf16.gmra.mxu0 %v1199
  %v4559 = vpop.f32.mrf.mxu0
  %v4560 = vadd.f32 0.0, %v4559
  %v4561 = vpop.f32.mrf.mxu0
  %v4562 = vadd.f32 0.0, %v4561
  %4563 = vmatmul.bf16.gmra.mxu0 %v1200
  %v4564 = vpop.f32.mrf.mxu0
  %v4565 = vadd.f32 0.0, %v4564
  %v4566 = vpop.f32.mrf.mxu0
  %v4567 = vadd.f32 0.0, %v4566
  %4568 = vmatmul.bf16.gmra.mxu0 %v1201
  %v4569 = vpop.f32.mrf.mxu0
  %v4570 = vadd.f32 0.0, %v4569
  %v4571 = vpop.f32.mrf.mxu0
  %v4572 = vadd.f32 0.0, %v4571
  %4573 = vmatmul.bf16.gmra.mxu0 %v4353
  %v4574 = vpop.f32.mrf.mxu0
  %v4575 = vadd.f32 0.0, %v4574
  %v4576 = vpop.f32.mrf.mxu0
  %v4577 = vadd.f32 0.0, %v4576
  %4578 = vdwg.mxu0
  %v4579 = vadd.f32 %v4145, %v4420
  %v4580 = vadd.f32 %v4146, %v4422
  %v4581 = vadd.f32 %v4147, %v4425
  %v4582 = vadd.f32 %v4148, %v4427
  %v4583 = vadd.f32 %v4149, %v4430
  %v4584 = vadd.f32 %v4150, %v4432
  %v4585 = vadd.f32 %v4151, %v4435
  %v4586 = vadd.f32 %v4152, %v4437
  %v4587 = vadd.f32 %v4153, %v4440
  %v4588 = vadd.f32 %v4154, %v4442
  %v4589 = vadd.f32 %v4155, %v4445
  %v4590 = vadd.f32 %v4156, %v4447
  %v4591 = vadd.f32 %v4157, %v4450
  %v4592 = vadd.f32 %v4158, %v4452
  %v4593 = vadd.f32 %v4159, %v4455
  %v4594 = vadd.f32 %v4160, %v4457
  %v4595 = vadd.f32 %v4161, %v4460
  %v4596 = vadd.f32 %v4162, %v4462
  %v4597 = vadd.f32 %v4163, %v4465
  %v4598 = vadd.f32 %v4164, %v4467
  %v4599 = vadd.f32 %v4165, %v4470
  %v4600 = vadd.f32 %v4166, %v4472
  %v4601 = vadd.f32 %v4167, %v4475
  %v4602 = vadd.f32 %v4168, %v4477
  %v4603 = vadd.f32 %v4169, %v4480
  %v4604 = vadd.f32 %v4170, %v4482
  %v4605 = vadd.f32 %v4171, %v4485
  %v4606 = vadd.f32 %v4172, %v4487
  %v4607 = vadd.f32 %v4173, %v4490
  %v4608 = vadd.f32 %v4174, %v4492
  %v4609 = vadd.f32 %v4175, %v4495
  %v4610 = vadd.f32 %v4176, %v4497
  %v4611 = vadd.f32 %v4177, %v4500
  %v4612 = vadd.f32 %v4178, %v4502
  %v4613 = vadd.f32 %v4179, %v4505
  %v4614 = vadd.f32 %v4180, %v4507
  %v4615 = vadd.f32 %v4181, %v4510
  %v4616 = vadd.f32 %v4182, %v4512
  %v4617 = vadd.f32 %v4183, %v4515
  %v4618 = vadd.f32 %v4184, %v4517
  %v4619 = vadd.f32 %v4185, %v4520
  %v4620 = vadd.f32 %v4186, %v4522
  %v4621 = vadd.f32 %v4187, %v4525
  %v4622 = vadd.f32 %v4188, %v4527
  %v4623 = vadd.f32 %v4189, %v4530
  %v4624 = vadd.f32 %v4190, %v4532
  %v4625 = vadd.f32 %v4191, %v4535
  %v4626 = vadd.f32 %v4192, %v4537
  %v4627 = vadd.f32 %v4193, %v4540
  %v4628 = vadd.f32 %v4194, %v4542
  %v4629 = vadd.f32 %v4195, %v4545
  %v4630 = vadd.f32 %v4196, %v4547
  %v4631 = vadd.f32 %v4197, %v4550
  %v4632 = vadd.f32 %v4198, %v4552
  %v4633 = vadd.f32 %v4199, %v4555
  %v4634 = vadd.f32 %v4200, %v4557
  %v4635 = vadd.f32 %v4201, %v4560
  %v4636 = vadd.f32 %v4202, %v4562
  %v4637 = vadd.f32 %v4203, %v4565
  %v4638 = vadd.f32 %v4204, %v4567
  %v4639 = vadd.f32 %v4205, %v4570
  %v4640 = vadd.f32 %v4206, %v4572
  %v4641 = vadd.f32 %v4207, %v4575
  %v4642 = vadd.f32 %v4208, %v4577
  %v4651 = vrot.slane %v32, 5
  %v4652 = vrot.slane %v4651, 4
  %v4653 = vrot.slane %v33, 5
  %v4654 = vsel %vm1926, %v4652, %v4653
  %v4655 = vrot.slane %v52, 5
  %v4656 = vrot.slane %v4655, 4
  %v4657 = vrot.slane %v53, 5
  %v4658 = vsel %vm1926, %v4656, %v4657
  %v4659 = vrot.slane %v72, 5
  %v4660 = vrot.slane %v4659, 4
  %v4661 = vrot.slane %v73, 5
  %v4662 = vsel %vm1926, %v4660, %v4661
  %v4663 = vrot.slane %v92, 5
  %v4664 = vrot.slane %v4663, 4
  %v4665 = vrot.slane %v93, 5
  %v4666 = vsel %vm1926, %v4664, %v4665
  %v4667 = vrot.slane %v112, 5
  %v4668 = vrot.slane %v4667, 4
  %v4669 = vrot.slane %v113, 5
  %v4670 = vsel %vm1926, %v4668, %v4669
  %v4671 = vrot.slane %v132, 5
  %v4672 = vrot.slane %v4671, 4
  %v4673 = vrot.slane %v133, 5
  %v4674 = vsel %vm1926, %v4672, %v4673
  %v4675 = vrot.slane %v152, 5
  %v4676 = vrot.slane %v4675, 4
  %v4677 = vrot.slane %v153, 5
  %v4678 = vsel %vm1926, %v4676, %v4677
  %v4679 = vrot.slane %v172, 5
  %v4680 = vrot.slane %v4679, 4
  %v4681 = vrot.slane %v173, 5
  %v4682 = vsel %vm1926, %v4680, %v4681
  %s4683 = scalar_lea.vmem %s1, 512
  %v4684 = vld [vmem:[%s4683] sm:$0xf]
  %v4685 = vld [vmem:[%s4683 + $0x4] sm:$0xf]
  %v4686 = vld [vmem:[%s4683 + $0x8] sm:$0xf]
  %v4687 = vld [vmem:[%s4683 + $0xc] sm:$0xf]
  %v4688 = vld [vmem:[%s4683 + $0x10] sm:$0xf]
  %v4689 = vld [vmem:[%s4683 + $0x14] sm:$0xf]
  %v4690 = vld [vmem:[%s4683 + $0x18] sm:$0xf]
  %v4691 = vld [vmem:[%s4683 + $0x1c] sm:$0xf]
  %v4692 = vld [vmem:[%s4683 + $0x20] sm:$0xf]
  %v4693 = vld [vmem:[%s4683 + $0x24] sm:$0xf]
  %v4694 = vld [vmem:[%s4683 + $0x28] sm:$0xf]
  %v4695 = vld [vmem:[%s4683 + $0x2c] sm:$0xf]
  %v4696 = vld [vmem:[%s4683 + $0x30] sm:$0xf]
  %v4697 = vld [vmem:[%s4683 + $0x34] sm:$0xf]
  %v4698 = vld [vmem:[%s4683 + $0x38] sm:$0xf]
  %v4699 = vld [vmem:[%s4683 + $0x3c] sm:$0xf]
  %v4700 = vunpack.c.l.b16 %v4654
  %v4701 = vunpack.c.l.b16 %v4658
  %v4702 = vunpack.c.l.b16 %v4662
  %v4703 = vunpack.c.l.b16 %v4666
  %v4704 = vunpack.c.l.b16 %v4670
  %v4705 = vunpack.c.l.b16 %v4674
  %v4706 = vunpack.c.l.b16 %v4678
  %v4707 = vunpack.c.l.b16 %v4682
  %v4708 = vpack.c.b16 %v4700, %v3526
  %v4709 = vpack.c.b16 %v4701, %v3527
  %v4710 = vpack.c.b16 %v4702, %v3528
  %v4711 = vpack.c.b16 %v4703, %v3529
  %v4712 = vpack.c.b16 %v4704, %v3530
  %v4713 = vpack.c.b16 %v4705, %v3531
  %v4714 = vpack.c.b16 %v4706, %v3532
  %v4715 = vpack.c.b16 %v4707, %v3533
  %v4740 = vunpack.c.l.b16 %v4684
  %v4741 = vunpack.c.l.b16 %v4685
  %v4742 = vunpack.c.l.b16 %v4686
  %v4743 = vunpack.c.l.b16 %v4687
  %v4744 = vunpack.c.l.b16 %v4688
  %v4745 = vunpack.c.l.b16 %v4689
  %v4746 = vunpack.c.l.b16 %v4690
  %v4747 = vunpack.c.l.b16 %v4691
  %v4748 = vunpack.c.l.b16 %v4692
  %v4749 = vunpack.c.l.b16 %v4693
  %v4750 = vunpack.c.l.b16 %v4694
  %v4751 = vunpack.c.l.b16 %v4695
  %v4752 = vunpack.c.l.b16 %v4696
  %v4753 = vunpack.c.l.b16 %v4697
  %v4754 = vunpack.c.l.b16 %v4698
  %v4755 = vunpack.c.l.b16 %v4699
  %v4756 = vpack.c.b16 %v4741, %v4740
  %v4757 = vpack.c.b16 %v4743, %v4742
  %v4758 = vpack.c.b16 %v4745, %v4744
  %v4759 = vpack.c.b16 %v4747, %v4746
  %v4760 = vpack.c.b16 %v4749, %v4748
  %v4761 = vpack.c.b16 %v4751, %v4750
  %v4762 = vpack.c.b16 %v4753, %v4752
  %v4763 = vpack.c.b16 %v4755, %v4754
  %4772 = vmatpush.bf16.msra.mxu0 %v4763
  %4773 = vmatpush.bf16.msra.mxu0 %v4762
  %4774 = vmatpush.bf16.msra.mxu0 %v4761
  %4775 = vmatpush.bf16.msra.mxu0 %v4760
  %4776 = vmatpush.bf16.msra.mxu0 %v4759
  %4777 = vmatpush.bf16.msra.mxu0 %v4758
  %4778 = vmatpush.bf16.msra.mxu0 %v4757
  %4779 = vmatpush.bf16.msra.mxu0 %v4756
  %4780 = vmatmul.bf16.gmra.mxu0 %v2265
  %v4781 = vpop.f32.mrf.mxu0
  %v4782 = vadd.f32 0.0, %v4781
  %v4783 = vpop.f32.mrf.mxu0
  %v4784 = vadd.f32 0.0, %v4783
  %4785 = vmatmul.bf16.gmra.mxu0 %v2266
  %v4786 = vpop.f32.mrf.mxu0
  %v4787 = vadd.f32 0.0, %v4786
  %v4788 = vpop.f32.mrf.mxu0
  %v4789 = vadd.f32 0.0, %v4788
  %4790 = vmatmul.bf16.gmra.mxu0 %v2267
  %v4791 = vpop.f32.mrf.mxu0
  %v4792 = vadd.f32 0.0, %v4791
  %v4793 = vpop.f32.mrf.mxu0
  %v4794 = vadd.f32 0.0, %v4793
  %4795 = vmatmul.bf16.gmra.mxu0 %v4708
  %v4796 = vpop.f32.mrf.mxu0
  %v4797 = vadd.f32 0.0, %v4796
  %v4798 = vpop.f32.mrf.mxu0
  %v4799 = vadd.f32 0.0, %v4798
  %4800 = vmatmul.bf16.gmra.mxu0 %v2269
  %v4801 = vpop.f32.mrf.mxu0
  %v4802 = vadd.f32 0.0, %v4801
  %v4803 = vpop.f32.mrf.mxu0
  %v4804 = vadd.f32 0.0, %v4803
  %4805 = vmatmul.bf16.gmra.mxu0 %v2270
  %v4806 = vpop.f32.mrf.mxu0
  %v4807 = vadd.f32 0.0, %v4806
  %v4808 = vpop.f32.mrf.mxu0
  %v4809 = vadd.f32 0.0, %v4808
  %4810 = vmatmul.bf16.gmra.mxu0 %v2271
  %v4811 = vpop.f32.mrf.mxu0
  %v4812 = vadd.f32 0.0, %v4811
  %v4813 = vpop.f32.mrf.mxu0
  %v4814 = vadd.f32 0.0, %v4813
  %4815 = vmatmul.bf16.gmra.mxu0 %v4709
  %v4816 = vpop.f32.mrf.mxu0
  %v4817 = vadd.f32 0.0, %v4816
  %v4818 = vpop.f32.mrf.mxu0
  %v4819 = vadd.f32 0.0, %v4818
  %4820 = vmatmul.bf16.gmra.mxu0 %v2273
  %v4821 = vpop.f32.mrf.mxu0
  %v4822 = vadd.f32 0.0, %v4821
  %v4823 = vpop.f32.mrf.mxu0
  %v4824 = vadd.f32 0.0, %v4823
  %4825 = vmatmul.bf16.gmra.mxu0 %v2274
  %v4826 = vpop.f32.mrf.mxu0
  %v4827 = vadd.f32 0.0, %v4826
  %v4828 = vpop.f32.mrf.mxu0
  %v4829 = vadd.f32 0.0, %v4828
  %4830 = vmatmul.bf16.gmra.mxu0 %v2275
  %v4831 = vpop.f32.mrf.mxu0
  %v4832 = vadd.f32 0.0, %v4831
  %v4833 = vpop.f32.mrf.mxu0
  %v4834 = vadd.f32 0.0, %v4833
  %4835 = vmatmul.bf16.gmra.mxu0 %v4710
  %v4836 = vpop.f32.mrf.mxu0
  %v4837 = vadd.f32 0.0, %v4836
  %v4838 = vpop.f32.mrf.mxu0
  %v4839 = vadd.f32 0.0, %v4838
  %4840 = vmatmul.bf16.gmra.mxu0 %v2277
  %v4841 = vpop.f32.mrf.mxu0
  %v4842 = vadd.f32 0.0, %v4841
  %v4843 = vpop.f32.mrf.mxu0
  %v4844 = vadd.f32 0.0, %v4843
  %4845 = vmatmul.bf16.gmra.mxu0 %v2278
  %v4846 = vpop.f32.mrf.mxu0
  %v4847 = vadd.f32 0.0, %v4846
  %v4848 = vpop.f32.mrf.mxu0
  %v4849 = vadd.f32 0.0, %v4848
  %4850 = vmatmul.bf16.gmra.mxu0 %v2279
  %v4851 = vpop.f32.mrf.mxu0
  %v4852 = vadd.f32 0.0, %v4851
  %v4853 = vpop.f32.mrf.mxu0
  %v4854 = vadd.f32 0.0, %v4853
  %4855 = vmatmul.bf16.gmra.mxu0 %v4711
  %v4856 = vpop.f32.mrf.mxu0
  %v4857 = vadd.f32 0.0, %v4856
  %v4858 = vpop.f32.mrf.mxu0
  %v4859 = vadd.f32 0.0, %v4858
  %4860 = vmatmul.bf16.gmra.mxu0 %v2281
  %v4861 = vpop.f32.mrf.mxu0
  %v4862 = vadd.f32 0.0, %v4861
  %v4863 = vpop.f32.mrf.mxu0
  %v4864 = vadd.f32 0.0, %v4863
  %4865 = vmatmul.bf16.gmra.mxu0 %v2282
  %v4866 = vpop.f32.mrf.mxu0
  %v4867 = vadd.f32 0.0, %v4866
  %v4868 = vpop.f32.mrf.mxu0
  %v4869 = vadd.f32 0.0, %v4868
  %4870 = vmatmul.bf16.gmra.mxu0 %v2283
  %v4871 = vpop.f32.mrf.mxu0
  %v4872 = vadd.f32 0.0, %v4871
  %v4873 = vpop.f32.mrf.mxu0
  %v4874 = vadd.f32 0.0, %v4873
  %4875 = vmatmul.bf16.gmra.mxu0 %v4712
  %v4876 = vpop.f32.mrf.mxu0
  %v4877 = vadd.f32 0.0, %v4876
  %v4878 = vpop.f32.mrf.mxu0
  %v4879 = vadd.f32 0.0, %v4878
  %4880 = vmatmul.bf16.gmra.mxu0 %v2285
  %v4881 = vpop.f32.mrf.mxu0
  %v4882 = vadd.f32 0.0, %v4881
  %v4883 = vpop.f32.mrf.mxu0
  %v4884 = vadd.f32 0.0, %v4883
  %4885 = vmatmul.bf16.gmra.mxu0 %v2286
  %v4886 = vpop.f32.mrf.mxu0
  %v4887 = vadd.f32 0.0, %v4886
  %v4888 = vpop.f32.mrf.mxu0
  %v4889 = vadd.f32 0.0, %v4888
  %4890 = vmatmul.bf16.gmra.mxu0 %v2287
  %v4891 = vpop.f32.mrf.mxu0
  %v4892 = vadd.f32 0.0, %v4891
  %v4893 = vpop.f32.mrf.mxu0
  %v4894 = vadd.f32 0.0, %v4893
  %4895 = vmatmul.bf16.gmra.mxu0 %v4713
  %v4896 = vpop.f32.mrf.mxu0
  %v4897 = vadd.f32 0.0, %v4896
  %v4898 = vpop.f32.mrf.mxu0
  %v4899 = vadd.f32 0.0, %v4898
  %4900 = vmatmul.bf16.gmra.mxu0 %v2289
  %v4901 = vpop.f32.mrf.mxu0
  %v4902 = vadd.f32 0.0, %v4901
  %v4903 = vpop.f32.mrf.mxu0
  %v4904 = vadd.f32 0.0, %v4903
  %4905 = vmatmul.bf16.gmra.mxu0 %v2290
  %v4906 = vpop.f32.mrf.mxu0
  %v4907 = vadd.f32 0.0, %v4906
  %v4908 = vpop.f32.mrf.mxu0
  %v4909 = vadd.f32 0.0, %v4908
  %4910 = vmatmul.bf16.gmra.mxu0 %v2291
  %v4911 = vpop.f32.mrf.mxu0
  %v4912 = vadd.f32 0.0, %v4911
  %v4913 = vpop.f32.mrf.mxu0
  %v4914 = vadd.f32 0.0, %v4913
  %4915 = vmatmul.bf16.gmra.mxu0 %v4714
  %v4916 = vpop.f32.mrf.mxu0
  %v4917 = vadd.f32 0.0, %v4916
  %v4918 = vpop.f32.mrf.mxu0
  %v4919 = vadd.f32 0.0, %v4918
  %4920 = vmatmul.bf16.gmra.mxu0 %v2293
  %v4921 = vpop.f32.mrf.mxu0
  %v4922 = vadd.f32 0.0, %v4921
  %v4923 = vpop.f32.mrf.mxu0
  %v4924 = vadd.f32 0.0, %v4923
  %4925 = vmatmul.bf16.gmra.mxu0 %v2294
  %v4926 = vpop.f32.mrf.mxu0
  %v4927 = vadd.f32 0.0, %v4926
  %v4928 = vpop.f32.mrf.mxu0
  %v4929 = vadd.f32 0.0, %v4928
  %4930 = vmatmul.bf16.gmra.mxu0 %v2295
  %v4931 = vpop.f32.mrf.mxu0
  %v4932 = vadd.f32 0.0, %v4931
  %v4933 = vpop.f32.mrf.mxu0
  %v4934 = vadd.f32 0.0, %v4933
  %4935 = vmatmul.bf16.gmra.mxu0 %v4715
  %v4936 = vpop.f32.mrf.mxu0
  %v4937 = vadd.f32 0.0, %v4936
  %v4938 = vpop.f32.mrf.mxu0
  %v4939 = vadd.f32 0.0, %v4938
  %4940 = vdwg.mxu0
  %v4941 = vadd.f32 %v4579, %v4782
  %v4942 = vadd.f32 %v4580, %v4784
  %v4943 = vadd.f32 %v4581, %v4787
  %v4944 = vadd.f32 %v4582, %v4789
  %v4945 = vadd.f32 %v4583, %v4792
  %v4946 = vadd.f32 %v4584, %v4794
  %v4947 = vadd.f32 %v4585, %v4797
  %v4948 = vadd.f32 %v4586, %v4799
  %v4949 = vadd.f32 %v4587, %v4802
  %v4950 = vadd.f32 %v4588, %v4804
  %v4951 = vadd.f32 %v4589, %v4807
  %v4952 = vadd.f32 %v4590, %v4809
  %v4953 = vadd.f32 %v4591, %v4812
  %v4954 = vadd.f32 %v4592, %v4814
  %v4955 = vadd.f32 %v4593, %v4817
  %v4956 = vadd.f32 %v4594, %v4819
  %v4957 = vadd.f32 %v4595, %v4822
  %v4958 = vadd.f32 %v4596, %v4824
  %v4959 = vadd.f32 %v4597, %v4827
  %v4960 = vadd.f32 %v4598, %v4829
  %v4961 = vadd.f32 %v4599, %v4832
  %v4962 = vadd.f32 %v4600, %v4834
  %v4963 = vadd.f32 %v4601, %v4837
  %v4964 = vadd.f32 %v4602, %v4839
  %v4965 = vadd.f32 %v4603, %v4842
  %v4966 = vadd.f32 %v4604, %v4844
  %v4967 = vadd.f32 %v4605, %v4847
  %v4968 = vadd.f32 %v4606, %v4849
  %v4969 = vadd.f32 %v4607, %v4852
  %v4970 = vadd.f32 %v4608, %v4854
  %v4971 = vadd.f32 %v4609, %v4857
  %v4972 = vadd.f32 %v4610, %v4859
  %v4973 = vadd.f32 %v4611, %v4862
  %v4974 = vadd.f32 %v4612, %v4864
  %v4975 = vadd.f32 %v4613, %v4867
  %v4976 = vadd.f32 %v4614, %v4869
  %v4977 = vadd.f32 %v4615, %v4872
  %v4978 = vadd.f32 %v4616, %v4874
  %v4979 = vadd.f32 %v4617, %v4877
  %v4980 = vadd.f32 %v4618, %v4879
  %v4981 = vadd.f32 %v4619, %v4882
  %v4982 = vadd.f32 %v4620, %v4884
  %v4983 = vadd.f32 %v4621, %v4887
  %v4984 = vadd.f32 %v4622, %v4889
  %v4985 = vadd.f32 %v4623, %v4892
  %v4986 = vadd.f32 %v4624, %v4894
  %v4987 = vadd.f32 %v4625, %v4897
  %v4988 = vadd.f32 %v4626, %v4899
  %v4989 = vadd.f32 %v4627, %v4902
  %v4990 = vadd.f32 %v4628, %v4904
  %v4991 = vadd.f32 %v4629, %v4907
  %v4992 = vadd.f32 %v4630, %v4909
  %v4993 = vadd.f32 %v4631, %v4912
  %v4994 = vadd.f32 %v4632, %v4914
  %v4995 = vadd.f32 %v4633, %v4917
  %v4996 = vadd.f32 %v4634, %v4919
  %v4997 = vadd.f32 %v4635, %v4922
  %v4998 = vadd.f32 %v4636, %v4924
  %v4999 = vadd.f32 %v4637, %v4927
  %v5000 = vadd.f32 %v4638, %v4929
  %v5001 = vadd.f32 %v4639, %v4932
  %v5002 = vadd.f32 %v4640, %v4934
  %v5003 = vadd.f32 %v4641, %v4937
  %v5004 = vadd.f32 %v4642, %v4939
  %v5005 = vld [vmem:[%s2] sm:$0x1]
  %v5007 = vperm.slane %v5005, 0
  %v5009 = vadd.f32 %v4941, %v5007
  %v5010 = vadd.f32 %v4942, %v5007
  %v5011 = vadd.f32 %v4943, %v5007
  %v5012 = vadd.f32 %v4944, %v5007
  %v5013 = vadd.f32 %v4945, %v5007
  %v5014 = vadd.f32 %v4946, %v5007
  %v5015 = vadd.f32 %v4947, %v5007
  %v5016 = vadd.f32 %v4948, %v5007
  %v5017 = vadd.f32 %v4949, %v5007
  %v5018 = vadd.f32 %v4950, %v5007
  %v5019 = vadd.f32 %v4951, %v5007
  %v5020 = vadd.f32 %v4952, %v5007
  %v5021 = vadd.f32 %v4953, %v5007
  %v5022 = vadd.f32 %v4954, %v5007
  %v5023 = vadd.f32 %v4955, %v5007
  %v5024 = vadd.f32 %v4956, %v5007
  %v5025 = vadd.f32 %v4957, %v5007
  %v5026 = vadd.f32 %v4958, %v5007
  %v5027 = vadd.f32 %v4959, %v5007
  %v5028 = vadd.f32 %v4960, %v5007
  %v5029 = vadd.f32 %v4961, %v5007
  %v5030 = vadd.f32 %v4962, %v5007
  %v5031 = vadd.f32 %v4963, %v5007
  %v5032 = vadd.f32 %v4964, %v5007
  %v5033 = vadd.f32 %v4965, %v5007
  %v5034 = vadd.f32 %v4966, %v5007
  %v5035 = vadd.f32 %v4967, %v5007
  %v5036 = vadd.f32 %v4968, %v5007
  %v5037 = vadd.f32 %v4969, %v5007
  %v5038 = vadd.f32 %v4970, %v5007
  %v5039 = vadd.f32 %v4971, %v5007
  %v5040 = vadd.f32 %v4972, %v5007
  %v5041 = vadd.f32 %v4973, %v5007
  %v5042 = vadd.f32 %v4974, %v5007
  %v5043 = vadd.f32 %v4975, %v5007
  %v5044 = vadd.f32 %v4976, %v5007
  %v5045 = vadd.f32 %v4977, %v5007
  %v5046 = vadd.f32 %v4978, %v5007
  %v5047 = vadd.f32 %v4979, %v5007
  %v5048 = vadd.f32 %v4980, %v5007
  %v5049 = vadd.f32 %v4981, %v5007
  %v5050 = vadd.f32 %v4982, %v5007
  %v5051 = vadd.f32 %v4983, %v5007
  %v5052 = vadd.f32 %v4984, %v5007
  %v5053 = vadd.f32 %v4985, %v5007
  %v5054 = vadd.f32 %v4986, %v5007
  %v5055 = vadd.f32 %v4987, %v5007
  %v5056 = vadd.f32 %v4988, %v5007
  %v5057 = vadd.f32 %v4989, %v5007
  %v5058 = vadd.f32 %v4990, %v5007
  %v5059 = vadd.f32 %v4991, %v5007
  %v5060 = vadd.f32 %v4992, %v5007
  %v5061 = vadd.f32 %v4993, %v5007
  %v5062 = vadd.f32 %v4994, %v5007
  %v5063 = vadd.f32 %v4995, %v5007
  %v5064 = vadd.f32 %v4996, %v5007
  %v5065 = vadd.f32 %v4997, %v5007
  %v5066 = vadd.f32 %v4998, %v5007
  %v5067 = vadd.f32 %v4999, %v5007
  %v5068 = vadd.f32 %v5000, %v5007
  %v5069 = vadd.f32 %v5001, %v5007
  %v5070 = vadd.f32 %v5002, %v5007
  %v5071 = vadd.f32 %v5003, %v5007
  %v5072 = vadd.f32 %v5004, %v5007
  %v5073 = vmax.f32 %v5009, 0.0
  %v5074 = vmax.f32 %v5010, 0.0
  %v5075 = vmax.f32 %v5011, 0.0
  %v5076 = vmax.f32 %v5012, 0.0
  %v5077 = vmax.f32 %v5013, 0.0
  %v5078 = vmax.f32 %v5014, 0.0
  %v5079 = vmax.f32 %v5015, 0.0
  %v5080 = vmax.f32 %v5016, 0.0
  %v5081 = vmax.f32 %v5017, 0.0
  %v5082 = vmax.f32 %v5018, 0.0
  %v5083 = vmax.f32 %v5019, 0.0
  %v5084 = vmax.f32 %v5020, 0.0
  %v5085 = vmax.f32 %v5021, 0.0
  %v5086 = vmax.f32 %v5022, 0.0
  %v5087 = vmax.f32 %v5023, 0.0
  %v5088 = vmax.f32 %v5024, 0.0
  %v5089 = vmax.f32 %v5025, 0.0
  %v5090 = vmax.f32 %v5026, 0.0
  %v5091 = vmax.f32 %v5027, 0.0
  %v5092 = vmax.f32 %v5028, 0.0
  %v5093 = vmax.f32 %v5029, 0.0
  %v5094 = vmax.f32 %v5030, 0.0
  %v5095 = vmax.f32 %v5031, 0.0
  %v5096 = vmax.f32 %v5032, 0.0
  %v5097 = vmax.f32 %v5033, 0.0
  %v5098 = vmax.f32 %v5034, 0.0
  %v5099 = vmax.f32 %v5035, 0.0
  %v5100 = vmax.f32 %v5036, 0.0
  %v5101 = vmax.f32 %v5037, 0.0
  %v5102 = vmax.f32 %v5038, 0.0
  %v5103 = vmax.f32 %v5039, 0.0
  %v5104 = vmax.f32 %v5040, 0.0
  %v5105 = vmax.f32 %v5041, 0.0
  %v5106 = vmax.f32 %v5042, 0.0
  %v5107 = vmax.f32 %v5043, 0.0
  %v5108 = vmax.f32 %v5044, 0.0
  %v5109 = vmax.f32 %v5045, 0.0
  %v5110 = vmax.f32 %v5046, 0.0
  %v5111 = vmax.f32 %v5047, 0.0
  %v5112 = vmax.f32 %v5048, 0.0
  %v5113 = vmax.f32 %v5049, 0.0
  %v5114 = vmax.f32 %v5050, 0.0
  %v5115 = vmax.f32 %v5051, 0.0
  %v5116 = vmax.f32 %v5052, 0.0
  %v5117 = vmax.f32 %v5053, 0.0
  %v5118 = vmax.f32 %v5054, 0.0
  %v5119 = vmax.f32 %v5055, 0.0
  %v5120 = vmax.f32 %v5056, 0.0
  %v5121 = vmax.f32 %v5057, 0.0
  %v5122 = vmax.f32 %v5058, 0.0
  %v5123 = vmax.f32 %v5059, 0.0
  %v5124 = vmax.f32 %v5060, 0.0
  %v5125 = vmax.f32 %v5061, 0.0
  %v5126 = vmax.f32 %v5062, 0.0
  %v5127 = vmax.f32 %v5063, 0.0
  %v5128 = vmax.f32 %v5064, 0.0
  %v5129 = vmax.f32 %v5065, 0.0
  %v5130 = vmax.f32 %v5066, 0.0
  %v5131 = vmax.f32 %v5067, 0.0
  %v5132 = vmax.f32 %v5068, 0.0
  %v5133 = vmax.f32 %v5069, 0.0
  %v5134 = vmax.f32 %v5070, 0.0
  %v5135 = vmax.f32 %v5071, 0.0
  %v5136 = vmax.f32 %v5072, 0.0
  %v5137 = vpack.c.bf16 %v5073, %v5073
  %v5138 = vpack.c.bf16 %v5074, %v5074
  %v5139 = vpack.c.bf16 %v5075, %v5075
  %v5140 = vpack.c.bf16 %v5076, %v5076
  %v5141 = vpack.c.bf16 %v5077, %v5077
  %v5142 = vpack.c.bf16 %v5078, %v5078
  %v5143 = vpack.c.bf16 %v5079, %v5079
  %v5144 = vpack.c.bf16 %v5080, %v5080
  %v5145 = vpack.c.bf16 %v5081, %v5081
  %v5146 = vpack.c.bf16 %v5082, %v5082
  %v5147 = vpack.c.bf16 %v5083, %v5083
  %v5148 = vpack.c.bf16 %v5084, %v5084
  %v5149 = vpack.c.bf16 %v5085, %v5085
  %v5150 = vpack.c.bf16 %v5086, %v5086
  %v5151 = vpack.c.bf16 %v5087, %v5087
  %v5152 = vpack.c.bf16 %v5088, %v5088
  %v5153 = vpack.c.bf16 %v5089, %v5089
  %v5154 = vpack.c.bf16 %v5090, %v5090
  %v5155 = vpack.c.bf16 %v5091, %v5091
  %v5156 = vpack.c.bf16 %v5092, %v5092
  %v5157 = vpack.c.bf16 %v5093, %v5093
  %v5158 = vpack.c.bf16 %v5094, %v5094
  %v5159 = vpack.c.bf16 %v5095, %v5095
  %v5160 = vpack.c.bf16 %v5096, %v5096
  %v5161 = vpack.c.bf16 %v5097, %v5097
  %v5162 = vpack.c.bf16 %v5098, %v5098
  %v5163 = vpack.c.bf16 %v5099, %v5099
  %v5164 = vpack.c.bf16 %v5100, %v5100
  %v5165 = vpack.c.bf16 %v5101, %v5101
  %v5166 = vpack.c.bf16 %v5102, %v5102
  %v5167 = vpack.c.bf16 %v5103, %v5103
  %v5168 = vpack.c.bf16 %v5104, %v5104
  %v5169 = vpack.c.bf16 %v5105, %v5105
  %v5170 = vpack.c.bf16 %v5106, %v5106
  %v5171 = vpack.c.bf16 %v5107, %v5107
  %v5172 = vpack.c.bf16 %v5108, %v5108
  %v5173 = vpack.c.bf16 %v5109, %v5109
  %v5174 = vpack.c.bf16 %v5110, %v5110
  %v5175 = vpack.c.bf16 %v5111, %v5111
  %v5176 = vpack.c.bf16 %v5112, %v5112
  %v5177 = vpack.c.bf16 %v5113, %v5113
  %v5178 = vpack.c.bf16 %v5114, %v5114
  %v5179 = vpack.c.bf16 %v5115, %v5115
  %v5180 = vpack.c.bf16 %v5116, %v5116
  %v5181 = vpack.c.bf16 %v5117, %v5117
  %v5182 = vpack.c.bf16 %v5118, %v5118
  %v5183 = vpack.c.bf16 %v5119, %v5119
  %v5184 = vpack.c.bf16 %v5120, %v5120
  %v5185 = vpack.c.bf16 %v5121, %v5121
  %v5186 = vpack.c.bf16 %v5122, %v5122
  %v5187 = vpack.c.bf16 %v5123, %v5123
  %v5188 = vpack.c.bf16 %v5124, %v5124
  %v5189 = vpack.c.bf16 %v5125, %v5125
  %v5190 = vpack.c.bf16 %v5126, %v5126
  %v5191 = vpack.c.bf16 %v5127, %v5127
  %v5192 = vpack.c.bf16 %v5128, %v5128
  %v5193 = vpack.c.bf16 %v5129, %v5129
  %v5194 = vpack.c.bf16 %v5130, %v5130
  %v5195 = vpack.c.bf16 %v5131, %v5131
  %v5196 = vpack.c.bf16 %v5132, %v5132
  %v5197 = vpack.c.bf16 %v5133, %v5133
  %v5198 = vpack.c.bf16 %v5134, %v5134
  %v5199 = vpack.c.bf16 %v5135, %v5135
  %v5200 = vpack.c.bf16 %v5136, %v5136
  %5201 = vst [vmem:[%s3] sm:$0xf] %v5137
  %5202 = vst [vmem:[%s3 + $0x4] sm:$0xf] %v5138
  %5203 = vst [vmem:[%s3 + $0x8] sm:$0xf] %v5139
  %5204 = vst [vmem:[%s3 + $0xc] sm:$0xf] %v5140
  %5205 = vst [vmem:[%s3 + $0x10] sm:$0xf] %v5141
  %5206 = vst [vmem:[%s3 + $0x14] sm:$0xf] %v5142
  %5207 = vst [vmem:[%s3 + $0x18] sm:$0xf] %v5143
  %5208 = vst [vmem:[%s3 + $0x1c] sm:$0xf] %v5144
  %5209 = vst [vmem:[%s3 + $0x20] sm:$0xf] %v5145
  %5210 = vst [vmem:[%s3 + $0x24] sm:$0xf] %v5146
  %5211 = vst [vmem:[%s3 + $0x28] sm:$0xf] %v5147
  %5212 = vst [vmem:[%s3 + $0x2c] sm:$0xf] %v5148
  %5213 = vst [vmem:[%s3 + $0x30] sm:$0xf] %v5149
  %5214 = vst [vmem:[%s3 + $0x34] sm:$0xf] %v5150
  %5215 = vst [vmem:[%s3 + $0x38] sm:$0xf] %v5151
  %5216 = vst [vmem:[%s3 + $0x3c] sm:$0xf] %v5152
  %5217 = vst [vmem:[%s3 + $0x40] sm:$0xf] %v5153
  %5218 = vst [vmem:[%s3 + $0x44] sm:$0xf] %v5154
  %5219 = vst [vmem:[%s3 + $0x48] sm:$0xf] %v5155
  %5220 = vst [vmem:[%s3 + $0x4c] sm:$0xf] %v5156
  %5221 = vst [vmem:[%s3 + $0x50] sm:$0xf] %v5157
  %5222 = vst [vmem:[%s3 + $0x54] sm:$0xf] %v5158
  %5223 = vst [vmem:[%s3 + $0x58] sm:$0xf] %v5159
  %5224 = vst [vmem:[%s3 + $0x5c] sm:$0xf] %v5160
  %5225 = vst [vmem:[%s3 + $0x60] sm:$0xf] %v5161
  %5226 = vst [vmem:[%s3 + $0x64] sm:$0xf] %v5162
  %5227 = vst [vmem:[%s3 + $0x68] sm:$0xf] %v5163
  %5228 = vst [vmem:[%s3 + $0x6c] sm:$0xf] %v5164
  %5229 = vst [vmem:[%s3 + $0x70] sm:$0xf] %v5165
  %5230 = vst [vmem:[%s3 + $0x74] sm:$0xf] %v5166
  %5231 = vst [vmem:[%s3 + $0x78] sm:$0xf] %v5167
  %5232 = vst [vmem:[%s3 + $0x7c] sm:$0xf] %v5168
  %5233 = vst [vmem:[%s3 + $0x80] sm:$0xf] %v5169
  %5234 = vst [vmem:[%s3 + $0x84] sm:$0xf] %v5170
  %5235 = vst [vmem:[%s3 + $0x88] sm:$0xf] %v5171
  %5236 = vst [vmem:[%s3 + $0x8c] sm:$0xf] %v5172
  %5237 = vst [vmem:[%s3 + $0x90] sm:$0xf] %v5173
  %5238 = vst [vmem:[%s3 + $0x94] sm:$0xf] %v5174
  %5239 = vst [vmem:[%s3 + $0x98] sm:$0xf] %v5175
  %5240 = vst [vmem:[%s3 + $0x9c] sm:$0xf] %v5176
  %5241 = vst [vmem:[%s3 + $0xa0] sm:$0xf] %v5177
  %5242 = vst [vmem:[%s3 + $0xa4] sm:$0xf] %v5178
  %5243 = vst [vmem:[%s3 + $0xa8] sm:$0xf] %v5179
  %5244 = vst [vmem:[%s3 + $0xac] sm:$0xf] %v5180
  %5245 = vst [vmem:[%s3 + $0xb0] sm:$0xf] %v5181
  %5246 = vst [vmem:[%s3 + $0xb4] sm:$0xf] %v5182
  %5247 = vst [vmem:[%s3 + $0xb8] sm:$0xf] %v5183
  %5248 = vst [vmem:[%s3 + $0xbc] sm:$0xf] %v5184
  %5249 = vst [vmem:[%s3 + $0xc0] sm:$0xf] %v5185
  %5250 = vst [vmem:[%s3 + $0xc4] sm:$0xf] %v5186
  %5251 = vst [vmem:[%s3 + $0xc8] sm:$0xf] %v5187
  %5252 = vst [vmem:[%s3 + $0xcc] sm:$0xf] %v5188
  %5253 = vst [vmem:[%s3 + $0xd0] sm:$0xf] %v5189
  %5254 = vst [vmem:[%s3 + $0xd4] sm:$0xf] %v5190
  %5255 = vst [vmem:[%s3 + $0xd8] sm:$0xf] %v5191
  %5256 = vst [vmem:[%s3 + $0xdc] sm:$0xf] %v5192
  %5257 = vst [vmem:[%s3 + $0xe0] sm:$0xf] %v5193
  %5258 = vst [vmem:[%s3 + $0xe4] sm:$0xf] %v5194
  %5259 = vst [vmem:[%s3 + $0xe8] sm:$0xf] %v5195
  %5260 = vst [vmem:[%s3 + $0xec] sm:$0xf] %v5196
  %5261 = vst [vmem:[%s3 + $0xf0] sm:$0xf] %v5197
  %5262 = vst [vmem:[%s3 + $0xf4] sm:$0xf] %v5198
  %5263 = vst [vmem:[%s3 + $0xf8] sm:$0xf] %v5199
  %5264 = vst [vmem:[%s3 + $0xfc] sm:$0xf] %v5200
  // Predicated region
  $region14: #{_lambda_.8} parent=0 // pred_check
    _
  $region15: #{_lambda_.8} parent=0 // pred_check_branch
    %5266 = sbr.rel (0) target = $region17
  $region16: #{_lambda_.8} parent=0 // pred_region
    _
  $region17: #{_lambda_.8} parent=0 // pred_fallthru
    _
  // Predicated region
  $region18: #{_lambda_.8} parent=0 // pred_check
    _
  $region19: #{_lambda_.8} parent=0 // pred_check_branch
    %5268 = sbr.rel (0) target = $region21
  $region20: #{_lambda_.8} parent=0 // pred_region
    _
  $region21: #{_lambda_.8} parent=0 // pred_fallthru
    _

</llo_original>
